<compile_context>
chip_gen: v6e
topology: v6e:2x2x1
jax: 0.10.0
libtpu: 0.0.40
codegen_flags: <defaults>
</compile_context>

<pallas_src>
import functools
import math

import jax
import jax.numpy as jnp
from jax.experimental import pallas as pl
from jax.experimental.pallas import tpu as pltpu


C1 = 128          # conv1 output channels (lane-dense)
C2 = 128          # conv2 output channels (lane-dense)
K1 = 128          # conv1 matmul K: 27 taps x 3 ch = 81, zero-padded to 128
N_GROUPS = 14     # conv2 tap pairs (27 taps -> 13 pairs + 1 half-zero pair)
FEAT_DIM = 400    # logical I3D feature width (MSE denominator)
FEAT_PAD = 512    # lane-dense padded feature width (padded columns are zero)
VMEM_LIMIT = 48 * 1024 * 1024


# ---------------------------------------------------------------------------
# conv1: 3x3x3 / stride-2 / pad-1 conv as ONE lane-dense K=128 matmul
# ---------------------------------------------------------------------------
def _conv1_kernel(p_ref, w_ref, b_ref, o_ref):
    acc = jnp.dot(p_ref[...], w_ref[...], preferred_element_type=jnp.float32)
    acc = acc + b_ref[...]                       # fp32 (1, C1) broadcast
    o_ref[...] = jnp.maximum(acc, 0.0).astype(o_ref.dtype)


def conv1_mm(patches, w1, b1, *, r_tile):
    """patches: (M, R1, 128) bf16 -> (M, R1, C1) bf16 (bias + ReLU fused)."""
    m, r1, k = patches.shape
    return pl.pallas_call(
        _conv1_kernel,
        out_shape=jax.ShapeDtypeStruct((m, r1, C1), jnp.bfloat16),
        grid_spec=pltpu.PrefetchScalarGridSpec(
            num_scalar_prefetch=0,
            grid=(m, r1 // r_tile),
            in_specs=[
                pl.BlockSpec((None, r_tile, k), lambda i, j: (i, j, 0)),
                # weight/bias block indices are constant across the grid.
                pl.BlockSpec((k, C1), lambda i, j: (0, 0)),
                pl.BlockSpec((1, C1), lambda i, j: (0, 0)),
            ],
            out_specs=pl.BlockSpec((None, r_tile, C1), lambda i, j: (i, j, 0)),
        ),
        compiler_params=pltpu.CompilerParams(
            dimension_semantics=("parallel", "parallel"),
            vmem_limit_bytes=VMEM_LIMIT),
    )(patches, w1, b1)


def conv1_im2col(v):
    """v: (M, T, H, W, 3) bf16 -> (M, 8*T2*H2*W2, K1) bf16 patch rows.

    Rows are ordered (t%2, h%2, w%2, t//2, h//2, w//2) so that conv1's output
    is, after a free row-major reshape, exactly conv2's unpadded phase-packed
    input xq[n, phase, a, b, c, :] = h1[n, 2a+pt, 2b+ph, 2c+pw, :].
    """
    m, t, h, w, cin = v.shape
    t1, h1, w1 = t // 2, h // 2, w // 2
    t2, h2, w2 = t1 // 2, h1 // 2, w1 // 2
    vp = jnp.pad(v, ((0, 0), (1, 1), (1, 1), (1, 1), (0, 0)))
    taps = []
    for dt in range(3):
        for dh in range(3):
            for dw in range(3):
                taps.append(jax.lax.slice(
                    vp,
                    (0, dt, dh, dw, 0),
                    (m, dt + 2 * (t1 - 1) + 1, dh + 2 * (h1 - 1) + 1,
                     dw + 2 * (w1 - 1) + 1, cin),
                    (1, 2, 2, 2, 1)))
    p = jnp.concatenate(taps, axis=-1)                       # (M,T1,H1,W1,81)
    p = p.reshape(m, t2, 2, h2, 2, w2, 2, 27 * cin)
    p = p.transpose(0, 2, 4, 6, 1, 3, 5, 7)                  # phases major
    p = p.reshape(m, 8 * t2 * h2 * w2, 27 * cin)
    return jnp.pad(p, ((0, 0), (0, 0), (0, K1 - 27 * cin)))  # K 81 -> 128


# ---------------------------------------------------------------------------
# conv2 (3x3x3, s2, p1) with tap-paired K=256 matmuls, fused bias + ReLU + GAP
# ---------------------------------------------------------------------------
def _conv2_gap_kernel(xq_ref, w_ref, b_ref, o_ref,
                      slab_ref, pair_ref, acc_ref, *, t2, h2, w2):
    s = t2 * h2 * w2
    c1 = xq_ref.shape[-1]

    # Build the zero-padded halo slab in VMEM (no HBM repack of conv1 output):
    #   slab[p, j, k, l] = h1[2j - ptb, 2k - phb, 2l - pwb]  (0 when OOB)
    slab_ref[...] = jnp.zeros(slab_ref.shape, slab_ref.dtype)
    for p in range(8):
        ptb, phb, pwb = (p >> 2) & 1, (p >> 1) & 1, p & 1
        slab_ref[p, pl.ds(ptb, t2), pl.ds(phb, h2), pl.ds(pwb, w2), :] = xq_ref[p]

    # fold the bias into the fp32 scratch accumulator init
    acc_ref[...] = jnp.broadcast_to(b_ref[...], (s, acc_ref.shape[-1]))

    def tap_patch(tap):
        dt, rem = divmod(tap, 9)
        dh, dw = divmod(rem, 3)
        p = ((dt + 1) % 2) * 4 + ((dh + 1) % 2) * 2 + ((dw + 1) % 2)
        win = slab_ref[p, pl.ds(dt // 2, t2), pl.ds(dh // 2, h2),
                       pl.ds(dw // 2, w2), :]
        return win.reshape(s, c1)

    # 14 tap-pair matmuls with K = 2*C1 = 256 (fills the v6e/v7x MXU depth);
    # each pair is assembled once into a (S, 256) VMEM scratch.
    for g in range(N_GROUPS):
        ta = 2 * g
        tb = min(2 * g + 1, 26)          # group 13's second half has 0 weights
        pair_ref[:, :c1] = tap_patch(ta)
        pair_ref[:, c1:] = tap_patch(tb)
        acc_ref[...] += jnp.dot(pair_ref[...], w_ref[g],
                                preferred_element_type=jnp.float32)

    # fused ReLU + global-average-pool partial sum: conv2 activations never
    # touch HBM, only the (1, C2) pooled sum per sample is written.
    o_ref[...] = jnp.sum(jnp.maximum(acc_ref[...], 0.0), axis=0, keepdims=True)


def conv2_gap(xq, w2g, b2):
    """xq: (M, 8, T2, H2, W2, C1) bf16 -> pooled relu-conv2 SUM (M, C2) fp32."""
    m, _, t2, h2, w2, c1 = xq.shape
    s = t2 * h2 * w2
    kernel = functools.partial(_conv2_gap_kernel, t2=t2, h2=h2, w2=w2)
    out = pl.pallas_call(
        kernel,
        out_shape=jax.ShapeDtypeStruct((m, 1, C2), jnp.float32),
        grid_spec=pltpu.PrefetchScalarGridSpec(
            num_scalar_prefetch=0,
            grid=(m,),
            in_specs=[
                pl.BlockSpec((None, 8, t2, h2, w2, c1),
                             lambda i: (i, 0, 0, 0, 0, 0)),
                pl.BlockSpec(w2g.shape, lambda i: (0, 0, 0)),
                pl.BlockSpec(b2.shape, lambda i: (0, 0)),
            ],
            out_specs=pl.BlockSpec((None, 1, C2), lambda i: (i, 0, 0)),
            scratch_shapes=[
                pltpu.VMEM((8, t2 + 1, h2 + 1, w2 + 1, c1), jnp.bfloat16),
                pltpu.VMEM((s, 2 * c1), jnp.bfloat16),
                pltpu.VMEM((s, C2), jnp.float32),
            ],
        ),
        compiler_params=pltpu.CompilerParams(
            dimension_semantics=("parallel",),
            vmem_limit_bytes=VMEM_LIMIT),
    )(xq, w2g, b2)
    return out.reshape(m, C2)


# ---------------------------------------------------------------------------
# Linear head (400-d, padded to 512) + MSE between the two batch halves
# ---------------------------------------------------------------------------
def _head_mse_kernel(p_ref, wh_ref, bh_ref, o_ref, *, inv_pool, n_half, n_feat):
    pooled = p_ref[...] * inv_pool                               # (2N, C2) fp32
    feats = jnp.dot(pooled.astype(jnp.bfloat16), wh_ref[...],
                    preferred_element_type=jnp.float32) + bh_ref[...]
    d = feats[:n_half, :] - feats[n_half:, :]                    # (N, FEAT_PAD)
    row = jnp.sum(d * d, axis=1, keepdims=True)                  # (N, 1)
    tot = jnp.sum(row, axis=0, keepdims=True)                    # (1, 1)
    # padded feature columns are exactly zero on both branches, so divide by
    # the logical element count N * FEAT_DIM (matches F.mse_loss).
    o_ref[...] = tot * (1.0 / (n_half * n_feat))


def head_mse(pooled_sums, wh, bh, *, pool_count, n_half):
    m, c = pooled_sums.shape
    kernel = functools.partial(_head_mse_kernel, inv_pool=1.0 / pool_count,
                               n_half=n_half, n_feat=FEAT_DIM)
    out = pl.pallas_call(
        kernel,
        out_shape=jax.ShapeDtypeStruct((1, 1), jnp.float32),
        grid_spec=pltpu.PrefetchScalarGridSpec(
            num_scalar_prefetch=0,
            grid=(1,),
            in_specs=[
                pl.BlockSpec((m, c), lambda i: (0, 0)),
                pl.BlockSpec(wh.shape, lambda i: (0, 0)),
                pl.BlockSpec(bh.shape, lambda i: (0, 0)),
            ],
            out_specs=pl.BlockSpec((1, 1), lambda i: (0, 0)),
        ),
        compiler_params=pltpu.CompilerParams(
            dimension_semantics=("arbitrary",),
            vmem_limit_bytes=VMEM_LIMIT),
    )(pooled_sums, wh, bh)
    return out[0, 0]


# ---------------------------------------------------------------------------
# Synthetic I3D feature extractor + MSE forward
# ---------------------------------------------------------------------------
def _detector_features_loss(x, target, params):
    n = x.shape[0]
    t, h, w = x.shape[2], x.shape[3], x.shape[4]
    assert t % 4 == 0 and h % 4 == 0 and w % 4 == 0
    t2, h2, w2 = t // 4, h // 4, w // 4

    # target path is under torch.no_grad() in the reference -> stop_gradient;
    # x and target run through the detector as one concatenated batch.
    v = jnp.concatenate([x, jax.lax.stop_gradient(target)], axis=0)
    v = jnp.transpose(v, (0, 2, 3, 4, 1)).astype(jnp.bfloat16)   # NCTHW->NTHWC

    # conv1: lane-dense K=128 matmul; rows pre-ordered so the output is
    # conv2's phase-packed input after a free reshape (no HBM repack).
    patches = conv1_im2col(v)                                    # (2N, R1, 128)
    r1 = patches.shape[1]
    r_tile = math.gcd(r1, 1024)
    h1q = conv1_mm(patches, params["w1"], params["b1"], r_tile=r_tile)
    h1q = h1q.reshape(2 * n, 8, t2, h2, w2, C1)                  # free reshape

    # conv2 (tap-paired K=256) fused with the global-average-pool sum.
    pooled = conv2_gap(h1q, params["w2"], params["b2"])          # (2N, 128)

    return head_mse(pooled, params["wh"], params["bh"],
                    pool_count=t2 * h2 * w2, n_half=n)


i3d_forward = jax.jit(_detector_features_loss)


def init_params(key):
    k1, k2, k3, k4, k5, k6 = jax.random.split(key, 6)
    # conv1 weights in tap-major / channel-minor order, K padded 81 -> 128.
    w1 = 0.05 * jax.random.normal(k1, (27, 3, C1), jnp.float32)
    w1 = jnp.pad(w1.reshape(81, C1), ((0, K1 - 81), (0, 0)))
    b1 = 0.01 * jax.random.normal(k2, (1, C1), jnp.float32)
    # conv2 weights grouped into 14 tap-pairs of K=256 (28th tap is zero).
    w2 = 0.01 * jax.random.normal(k3, (27, C1, C2), jnp.float32)
    w2 = jnp.pad(w2, ((0, 1), (0, 0), (0, 0))).reshape(N_GROUPS, 2 * C1, C2)
    b2 = 0.01 * jax.random.normal(k4, (1, C2), jnp.float32)
    # lane-dense head: zero-pad 400 -> 512 output columns.
    wh = 0.05 * jax.random.normal(k5, (C2, FEAT_DIM), jnp.float32)
    bh = 0.01 * jax.random.normal(k6, (1, FEAT_DIM), jnp.float32)
    wh = jnp.pad(wh, ((0, 0), (0, FEAT_PAD - FEAT_DIM)))
    bh = jnp.pad(bh, ((0, 0), (0, FEAT_PAD - FEAT_DIM)))
    return {
        "w1": w1.astype(jnp.bfloat16), "b1": b1,
        "w2": w2.astype(jnp.bfloat16), "b2": b2,
        "wh": wh.astype(jnp.bfloat16), "bh": bh,
    }


if __name__ == "__main__":
    key = jax.random.PRNGKey(0)
    kx, kt, kp = jax.random.split(key, 3)

    # small video clips: batch=2, channels=3, frames=8, 16x16 spatial (NCTHW)
    N, C, T, H, W = 2, 3, 8, 16, 16
    x = jax.random.normal(kx, (N, C, T, H, W), jnp.float32)
    target = jax.random.normal(kt, (N, C, T, H, W), jnp.float32)
    params = init_params(kp)

    loss = i3d_forward(x, target, params)
    jax.block_until_ready(loss)
    assert loss.shape == () and bool(jnp.isfinite(loss))
    print("KERNEL_OK")
</pallas_src>

<mosaic_0001>
module attributes {stable_mosaic.version = 11 : i64} {
  func.func @_conv1_kernel(%arg0: i32, %arg1: i32, %arg2: memref<1x256x128xbf16, #tpu.memory_space<vmem>>, %arg3: memref<128x128xbf16, #tpu.memory_space<vmem>>, %arg4: memref<1x128xf32, #tpu.memory_space<vmem>>, %arg5: memref<1x256x128xbf16, #tpu.memory_space<vmem>>) attributes {dimension_semantics = [#tpu.dimension_semantics<parallel>, #tpu.dimension_semantics<parallel>], iteration_bounds = array<i64: 4, 1>, scalar_prefetch = 0 : i64, scratch_operands = 0 : i64, tpu.core_type = #tpu.core_type<tc>, window_params = [{transform_indices = @transform_0, window_bounds = array<i64: 1, 256, 128>}, {pipeline_mode = #tpu.pipeline_mode<synchronous>, transform_indices = @transform_1, window_bounds = array<i64: 128, 128>}, {pipeline_mode = #tpu.pipeline_mode<synchronous>, transform_indices = @transform_2, window_bounds = array<i64: 1, 128>}, {transform_indices = @transform_3, window_bounds = array<i64: 1, 256, 128>}]} {
    %c0 = arith.constant 0 : index
    %c0_0 = arith.constant 0 : index
    %c0_1 = arith.constant 0 : index
    %0 = vector.load %arg2[%c0, %c0_0, %c0_1] : memref<1x256x128xbf16, #tpu.memory_space<vmem>>, vector<1x256x128xbf16>
    %1 = vector.shape_cast %0 : vector<1x256x128xbf16> to vector<256x128xbf16>
    %c0_2 = arith.constant 0 : index
    %c0_3 = arith.constant 0 : index
    %2 = vector.load %arg3[%c0_2, %c0_3] : memref<128x128xbf16, #tpu.memory_space<vmem>>, vector<128x128xbf16>
    %cst = arith.constant dense<0.000000e+00> : vector<256x128xf32>
    %3 = tpu.matmul %1, %2, %cst {dimension_numbers = #tpu.dot_dimension_numbers<[1], [0], [0], [1], [0, 0, 1, 1], [], []>} : vector<256x128xbf16>, vector<128x128xbf16>, vector<256x128xf32> -> vector<256x128xf32>
    %c0_4 = arith.constant 0 : index
    %c0_5 = arith.constant 0 : index
    %4 = vector.load %arg4[%c0_4, %c0_5] : memref<1x128xf32, #tpu.memory_space<vmem>>, vector<1x128xf32>
    %5 = vector.broadcast %4 : vector<1x128xf32> to vector<256x128xf32>
    %6 = arith.addf %3, %5 : vector<256x128xf32>
    %cst_6 = arith.constant 0.000000e+00 : f32
    %7 = vector.broadcast %cst_6 : f32 to vector<256x128xf32>
    %8 = arith.maximumf %6, %7 : vector<256x128xf32>
    %9 = arith.truncf %8 : vector<256x128xf32> to vector<256x128xbf16>
    %c0_7 = arith.constant 0 : index
    %c0_8 = arith.constant 0 : index
    %c0_9 = arith.constant 0 : index
    %10 = vector.load %arg5[%c0_7, %c0_8, %c0_9] : memref<1x256x128xbf16, #tpu.memory_space<vmem>>, vector<1x256x128xbf16>
    %11 = vector.shape_cast %10 : vector<1x256x128xbf16> to vector<256x128xbf16>
    %12 = vector.shape_cast %9 : vector<256x128xbf16> to vector<1x256x128xbf16>
    tpu.vector_store %arg5[%c0_7, %c0_8, %c0_9], %12 {strides = array<i32>} : memref<1x256x128xbf16, #tpu.memory_space<vmem>>, vector<1x256x128xbf16>,
    return
  }
  func.func @transform_0(%arg0: i32, %arg1: i32) -> (i32, i32, i32) {
    %c0_i32 = arith.constant 0 : i32
    %c0_i32_0 = arith.constant 0 : i32
    return %arg0, %arg1, %c0_i32 : i32, i32, i32
  }
  func.func @transform_1(%arg0: i32, %arg1: i32) -> (i32, i32) {
    %c0_i32 = arith.constant 0 : i32
    %c0_i32_0 = arith.constant 0 : i32
    %c0_i32_1 = arith.constant 0 : i32
    return %c0_i32, %c0_i32_0 : i32, i32
  }
  func.func @transform_2(%arg0: i32, %arg1: i32) -> (i32, i32) {
    %c0_i32 = arith.constant 0 : i32
    %c0_i32_0 = arith.constant 0 : i32
    %c0_i32_1 = arith.constant 0 : i32
    return %c0_i32, %c0_i32_0 : i32, i32
  }
  func.func @transform_3(%arg0: i32, %arg1: i32) -> (i32, i32, i32) {
    %c0_i32 = arith.constant 0 : i32
    %c0_i32_0 = arith.constant 0 : i32
    return %arg0, %arg1, %c0_i32 : i32, i32, i32
  }
}

module attributes {stable_mosaic.version = 11 : i64} {
  func.func @_head_mse_kernel(%arg0: i32, %arg1: memref<4x128xf32, #tpu.memory_space<vmem>>, %arg2: memref<128x512xbf16, #tpu.memory_space<vmem>>, %arg3: memref<1x512xf32, #tpu.memory_space<vmem>>, %arg4: memref<1x1xf32, #tpu.memory_space<vmem>>) attributes {dimension_semantics = [#tpu.dimension_semantics<arbitrary>], iteration_bounds = array<i64: 1>, scalar_prefetch = 0 : i64, scratch_operands = 0 : i64, tpu.core_type = #tpu.core_type<tc>, window_params = [{pipeline_mode = #tpu.pipeline_mode<synchronous>, transform_indices = @transform_0, window_bounds = array<i64: 4, 128>}, {pipeline_mode = #tpu.pipeline_mode<synchronous>, transform_indices = @transform_1, window_bounds = array<i64: 128, 512>}, {pipeline_mode = #tpu.pipeline_mode<synchronous>, transform_indices = @transform_2, window_bounds = array<i64: 1, 512>}, {pipeline_mode = #tpu.pipeline_mode<synchronous>, transform_indices = @transform_3, window_bounds = array<i64: 1, 1>}]} {
    %c0 = arith.constant 0 : index
    %c0_0 = arith.constant 0 : index
    %0 = vector.load %arg1[%c0, %c0_0] : memref<4x128xf32, #tpu.memory_space<vmem>>, vector<4x128xf32>
    %cst = arith.constant 3.125000e-02 : f32
    %1 = vector.broadcast %cst : f32 to vector<4x128xf32>
    %2 = arith.mulf %0, %1 : vector<4x128xf32>
    %3 = arith.truncf %2 : vector<4x128xf32> to vector<4x128xbf16>
    %c0_1 = arith.constant 0 : index
    %c0_2 = arith.constant 0 : index
    %4 = vector.load %arg2[%c0_1, %c0_2] : memref<128x512xbf16, #tpu.memory_space<vmem>>, vector<128x512xbf16>
    %cst_3 = arith.constant dense<0.000000e+00> : vector<4x512xf32>
    %5 = tpu.matmul %3, %4, %cst_3 {dimension_numbers = #tpu.dot_dimension_numbers<[1], [0], [0], [1], [0, 0, 1, 1], [], []>} : vector<4x128xbf16>, vector<128x512xbf16>, vector<4x512xf32> -> vector<4x512xf32>
    %c0_4 = arith.constant 0 : index
    %c0_5 = arith.constant 0 : index
    %6 = vector.load %arg3[%c0_4, %c0_5] : memref<1x512xf32, #tpu.memory_space<vmem>>, vector<1x512xf32>
    %7 = vector.broadcast %6 : vector<1x512xf32> to vector<4x512xf32>
    %8 = arith.addf %5, %7 : vector<4x512xf32>
    %9 = vector.extract_strided_slice %8 {offsets = [0, 0], sizes = [2, 512], strides = [1, 1]} : vector<4x512xf32> to vector<2x512xf32>
    %10 = vector.extract_strided_slice %8 {offsets = [2, 0], sizes = [2, 512], strides = [1, 1]} : vector<4x512xf32> to vector<2x512xf32>
    %11 = arith.subf %9, %10 : vector<2x512xf32>
    %12 = arith.mulf %11, %11 : vector<2x512xf32>
    %cst_6 = arith.constant dense<0.000000e+00> : vector<2xf32>
    %13 = vector.multi_reduction <add>, %12, %cst_6 [1] : vector<2x512xf32> to vector<2xf32>
    %14 = vector.shape_cast %13 : vector<2xf32> to vector<2x1xf32>
    %cst_7 = arith.constant dense<0.000000e+00> : vector<1xf32>
    %15 = vector.multi_reduction <add>, %14, %cst_7 [0] : vector<2x1xf32> to vector<1xf32>
    %16 = vector.shape_cast %15 : vector<1xf32> to vector<1x1xf32>
    %cst_8 = arith.constant 1.250000e-03 : f32
    %17 = vector.broadcast %cst_8 : f32 to vector<1x1xf32>
    %18 = arith.mulf %16, %17 : vector<1x1xf32>
    %c0_9 = arith.constant 0 : index
    %c0_10 = arith.constant 0 : index
    %19 = vector.load %arg4[%c0_9, %c0_10] : memref<1x1xf32, #tpu.memory_space<vmem>>, vector<1x1xf32>
    tpu.vector_store %arg4[%c0_9, %c0_10], %18 {strides = array<i32>} : memref<1x1xf32, #tpu.memory_space<vmem>>, vector<1x1xf32>,
    return
  }
  func.func @transform_0(%arg0: i32) -> (i32, i32) {
    %c0_i32 = arith.constant 0 : i32
    %c0_i32_0 = arith.constant 0 : i32
    %c0_i32_1 = arith.constant 0 : i32
    return %c0_i32, %c0_i32_0 : i32, i32
  }
  func.func @transform_1(%arg0: i32) -> (i32, i32) {
    %c0_i32 = arith.constant 0 : i32
    %c0_i32_0 = arith.constant 0 : i32
    %c0_i32_1 = arith.constant 0 : i32
    return %c0_i32, %c0_i32_0 : i32, i32
  }
  func.func @transform_2(%arg0: i32) -> (i32, i32) {
    %c0_i32 = arith.constant 0 : i32
    %c0_i32_0 = arith.constant 0 : i32
    %c0_i32_1 = arith.constant 0 : i32
    return %c0_i32, %c0_i32_0 : i32, i32
  }
  func.func @transform_3(%arg0: i32) -> (i32, i32) {
    %c0_i32 = arith.constant 0 : i32
    %c0_i32_0 = arith.constant 0 : i32
    %c0_i32_1 = arith.constant 0 : i32
    return %c0_i32, %c0_i32_0 : i32, i32
  }
}

module attributes {stable_mosaic.version = 11 : i64} {
  func.func @_conv2_gap_kernel(%arg0: i32, %arg1: memref<1x8x2x4x4x128xbf16, #tpu.memory_space<vmem>>, %arg2: memref<14x256x128xbf16, #tpu.memory_space<vmem>>, %arg3: memref<1x128xf32, #tpu.memory_space<vmem>>, %arg4: memref<1x1x128xf32, #tpu.memory_space<vmem>>, %arg5: memref<8x3x5x5x128xbf16, #tpu.memory_space<vmem>>, %arg6: memref<32x256xbf16, #tpu.memory_space<vmem>>, %arg7: memref<32x128xf32, #tpu.memory_space<vmem>>) attributes {dimension_semantics = [#tpu.dimension_semantics<parallel>], iteration_bounds = array<i64: 4>, scalar_prefetch = 0 : i64, scratch_operands = 3 : i64, tpu.core_type = #tpu.core_type<tc>, window_params = [{transform_indices = @transform_0, window_bounds = array<i64: 1, 8, 2, 4, 4, 128>}, {pipeline_mode = #tpu.pipeline_mode<synchronous>, transform_indices = @transform_1, window_bounds = array<i64: 14, 256, 128>}, {pipeline_mode = #tpu.pipeline_mode<synchronous>, transform_indices = @transform_2, window_bounds = array<i64: 1, 128>}, {transform_indices = @transform_3, window_bounds = array<i64: 1, 1, 128>}]} {
    %cst = arith.constant 0.000000e+00 : bf16
    %0 = vector.broadcast %cst : bf16 to vector<8x3x5x5x128xbf16>
    %c0 = arith.constant 0 : index
    %c0_0 = arith.constant 0 : index
    %c0_1 = arith.constant 0 : index
    %c0_2 = arith.constant 0 : index
    %c0_3 = arith.constant 0 : index
    %1 = vector.load %arg5[%c0, %c0_0, %c0_1, %c0_2, %c0_3] : memref<8x3x5x5x128xbf16, #tpu.memory_space<vmem>>, vector<8x3x5x5x128xbf16>
    tpu.vector_store %arg5[%c0, %c0_0, %c0_1, %c0_2, %c0_3], %0 {strides = array<i32>} : memref<8x3x5x5x128xbf16, #tpu.memory_space<vmem>>, vector<8x3x5x5x128xbf16>,
    %c0_4 = arith.constant 0 : index
    %c0_5 = arith.constant 0 : index
    %c0_6 = arith.constant 0 : index
    %c0_7 = arith.constant 0 : index
    %c0_8 = arith.constant 0 : index
    %c0_9 = arith.constant 0 : index
    %2 = vector.load %arg1[%c0_4, %c0_5, %c0_6, %c0_7, %c0_8, %c0_9] : memref<1x8x2x4x4x128xbf16, #tpu.memory_space<vmem>>, vector<1x1x2x4x4x128xbf16>
    %3 = vector.shape_cast %2 : vector<1x1x2x4x4x128xbf16> to vector<2x4x4x128xbf16>
    %c0_10 = arith.constant 0 : index
    %c0_11 = arith.constant 0 : index
    %c0_12 = arith.constant 0 : index
    %c0_13 = arith.constant 0 : index
    %c0_14 = arith.constant 0 : index
    %4 = vector.load %arg5[%c0_10, %c0_11, %c0_12, %c0_13, %c0_14] : memref<8x3x5x5x128xbf16, #tpu.memory_space<vmem>>, vector<1x2x4x4x128xbf16>
    %5 = vector.shape_cast %4 : vector<1x2x4x4x128xbf16> to vector<2x4x4x128xbf16>
    %6 = vector.shape_cast %3 : vector<2x4x4x128xbf16> to vector<1x2x4x4x128xbf16>
    tpu.vector_store %arg5[%c0_10, %c0_11, %c0_12, %c0_13, %c0_14], %6 {strides = array<i32>} : memref<8x3x5x5x128xbf16, #tpu.memory_space<vmem>>, vector<1x2x4x4x128xbf16>,
    %c0_15 = arith.constant 0 : index
    %c1 = arith.constant 1 : index
    %c0_16 = arith.constant 0 : index
    %c0_17 = arith.constant 0 : index
    %c0_18 = arith.constant 0 : index
    %c0_19 = arith.constant 0 : index
    %7 = vector.load %arg1[%c0_15, %c1, %c0_16, %c0_17, %c0_18, %c0_19] : memref<1x8x2x4x4x128xbf16, #tpu.memory_space<vmem>>, vector<1x1x2x4x4x128xbf16>
    %8 = vector.shape_cast %7 : vector<1x1x2x4x4x128xbf16> to vector<2x4x4x128xbf16>
    %c1_20 = arith.constant 1 : index
    %c0_21 = arith.constant 0 : index
    %c0_22 = arith.constant 0 : index
    %c1_23 = arith.constant 1 : index
    %c0_24 = arith.constant 0 : index
    %9 = vector.load %arg5[%c1_20, %c0_21, %c0_22, %c1_23, %c0_24] : memref<8x3x5x5x128xbf16, #tpu.memory_space<vmem>>, vector<1x2x4x4x128xbf16>
    %10 = vector.shape_cast %9 : vector<1x2x4x4x128xbf16> to vector<2x4x4x128xbf16>
    %11 = vector.shape_cast %8 : vector<2x4x4x128xbf16> to vector<1x2x4x4x128xbf16>
    tpu.vector_store %arg5[%c1_20, %c0_21, %c0_22, %c1_23, %c0_24], %11 {strides = array<i32>} : memref<8x3x5x5x128xbf16, #tpu.memory_space<vmem>>, vector<1x2x4x4x128xbf16>,
    %c0_25 = arith.constant 0 : index
    %c2 = arith.constant 2 : index
    %c0_26 = arith.constant 0 : index
    %c0_27 = arith.constant 0 : index
    %c0_28 = arith.constant 0 : index
    %c0_29 = arith.constant 0 : index
    %12 = vector.load %arg1[%c0_25, %c2, %c0_26, %c0_27, %c0_28, %c0_29] : memref<1x8x2x4x4x128xbf16, #tpu.memory_space<vmem>>, vector<1x1x2x4x4x128xbf16>
    %13 = vector.shape_cast %12 : vector<1x1x2x4x4x128xbf16> to vector<2x4x4x128xbf16>
    %c2_30 = arith.constant 2 : index
    %c0_31 = arith.constant 0 : index
    %c1_32 = arith.constant 1 : index
    %c0_33 = arith.constant 0 : index
    %c0_34 = arith.constant 0 : index
    %14 = vector.load %arg5[%c2_30, %c0_31, %c1_32, %c0_33, %c0_34] : memref<8x3x5x5x128xbf16, #tpu.memory_space<vmem>>, vector<1x2x4x4x128xbf16>
    %15 = vector.shape_cast %14 : vector<1x2x4x4x128xbf16> to vector<2x4x4x128xbf16>
    %16 = vector.shape_cast %13 : vector<2x4x4x128xbf16> to vector<1x2x4x4x128xbf16>
    tpu.vector_store %arg5[%c2_30, %c0_31, %c1_32, %c0_33, %c0_34], %16 {strides = array<i32>} : memref<8x3x5x5x128xbf16, #tpu.memory_space<vmem>>, vector<1x2x4x4x128xbf16>,
    %c0_35 = arith.constant 0 : index
    %c3 = arith.constant 3 : index
    %c0_36 = arith.constant 0 : index
    %c0_37 = arith.constant 0 : index
    %c0_38 = arith.constant 0 : index
    %c0_39 = arith.constant 0 : index
    %17 = vector.load %arg1[%c0_35, %c3, %c0_36, %c0_37, %c0_38, %c0_39] : memref<1x8x2x4x4x128xbf16, #tpu.memory_space<vmem>>, vector<1x1x2x4x4x128xbf16>
    %18 = vector.shape_cast %17 : vector<1x1x2x4x4x128xbf16> to vector<2x4x4x128xbf16>
    %c3_40 = arith.constant 3 : index
    %c0_41 = arith.constant 0 : index
    %c1_42 = arith.constant 1 : index
    %c1_43 = arith.constant 1 : index
    %c0_44 = arith.constant 0 : index
    %19 = vector.load %arg5[%c3_40, %c0_41, %c1_42, %c1_43, %c0_44] : memref<8x3x5x5x128xbf16, #tpu.memory_space<vmem>>, vector<1x2x4x4x128xbf16>
    %20 = vector.shape_cast %19 : vector<1x2x4x4x128xbf16> to vector<2x4x4x128xbf16>
    %21 = vector.shape_cast %18 : vector<2x4x4x128xbf16> to vector<1x2x4x4x128xbf16>
    tpu.vector_store %arg5[%c3_40, %c0_41, %c1_42, %c1_43, %c0_44], %21 {strides = array<i32>} : memref<8x3x5x5x128xbf16, #tpu.memory_space<vmem>>, vector<1x2x4x4x128xbf16>,
    %c0_45 = arith.constant 0 : index
    %c4 = arith.constant 4 : index
    %c0_46 = arith.constant 0 : index
    %c0_47 = arith.constant 0 : index
    %c0_48 = arith.constant 0 : index
    %c0_49 = arith.constant 0 : index
    %22 = vector.load %arg1[%c0_45, %c4, %c0_46, %c0_47, %c0_48, %c0_49] : memref<1x8x2x4x4x128xbf16, #tpu.memory_space<vmem>>, vector<1x1x2x4x4x128xbf16>
    %23 = vector.shape_cast %22 : vector<1x1x2x4x4x128xbf16> to vector<2x4x4x128xbf16>
    %c4_50 = arith.constant 4 : index
    %c1_51 = arith.constant 1 : index
    %c0_52 = arith.constant 0 : index
    %c0_53 = arith.constant 0 : index
    %c0_54 = arith.constant 0 : index
    %24 = vector.load %arg5[%c4_50, %c1_51, %c0_52, %c0_53, %c0_54] : memref<8x3x5x5x128xbf16, #tpu.memory_space<vmem>>, vector<1x2x4x4x128xbf16>
    %25 = vector.shape_cast %24 : vector<1x2x4x4x128xbf16> to vector<2x4x4x128xbf16>
    %26 = vector.shape_cast %23 : vector<2x4x4x128xbf16> to vector<1x2x4x4x128xbf16>
    tpu.vector_store %arg5[%c4_50, %c1_51, %c0_52, %c0_53, %c0_54], %26 {strides = array<i32>} : memref<8x3x5x5x128xbf16, #tpu.memory_space<vmem>>, vector<1x2x4x4x128xbf16>,
    %c0_55 = arith.constant 0 : index
    %c5 = arith.constant 5 : index
    %c0_56 = arith.constant 0 : index
    %c0_57 = arith.constant 0 : index
    %c0_58 = arith.constant 0 : index
    %c0_59 = arith.constant 0 : index
    %27 = vector.load %arg1[%c0_55, %c5, %c0_56, %c0_57, %c0_58, %c0_59] : memref<1x8x2x4x4x128xbf16, #tpu.memory_space<vmem>>, vector<1x1x2x4x4x128xbf16>
    %28 = vector.shape_cast %27 : vector<1x1x2x4x4x128xbf16> to vector<2x4x4x128xbf16>
    %c5_60 = arith.constant 5 : index
    %c1_61 = arith.constant 1 : index
    %c0_62 = arith.constant 0 : index
    %c1_63 = arith.constant 1 : index
    %c0_64 = arith.constant 0 : index
    %29 = vector.load %arg5[%c5_60, %c1_61, %c0_62, %c1_63, %c0_64] : memref<8x3x5x5x128xbf16, #tpu.memory_space<vmem>>, vector<1x2x4x4x128xbf16>
    %30 = vector.shape_cast %29 : vector<1x2x4x4x128xbf16> to vector<2x4x4x128xbf16>
    %31 = vector.shape_cast %28 : vector<2x4x4x128xbf16> to vector<1x2x4x4x128xbf16>
    tpu.vector_store %arg5[%c5_60, %c1_61, %c0_62, %c1_63, %c0_64], %31 {strides = array<i32>} : memref<8x3x5x5x128xbf16, #tpu.memory_space<vmem>>, vector<1x2x4x4x128xbf16>,
    %c0_65 = arith.constant 0 : index
    %c6 = arith.constant 6 : index
    %c0_66 = arith.constant 0 : index
    %c0_67 = arith.constant 0 : index
    %c0_68 = arith.constant 0 : index
    %c0_69 = arith.constant 0 : index
    %32 = vector.load %arg1[%c0_65, %c6, %c0_66, %c0_67, %c0_68, %c0_69] : memref<1x8x2x4x4x128xbf16, #tpu.memory_space<vmem>>, vector<1x1x2x4x4x128xbf16>
    %33 = vector.shape_cast %32 : vector<1x1x2x4x4x128xbf16> to vector<2x4x4x128xbf16>
    %c6_70 = arith.constant 6 : index
    %c1_71 = arith.constant 1 : index
    %c1_72 = arith.constant 1 : index
    %c0_73 = arith.constant 0 : index
    %c0_74 = arith.constant 0 : index
    %34 = vector.load %arg5[%c6_70, %c1_71, %c1_72, %c0_73, %c0_74] : memref<8x3x5x5x128xbf16, #tpu.memory_space<vmem>>, vector<1x2x4x4x128xbf16>
    %35 = vector.shape_cast %34 : vector<1x2x4x4x128xbf16> to vector<2x4x4x128xbf16>
    %36 = vector.shape_cast %33 : vector<2x4x4x128xbf16> to vector<1x2x4x4x128xbf16>
    tpu.vector_store %arg5[%c6_70, %c1_71, %c1_72, %c0_73, %c0_74], %36 {strides = array<i32>} : memref<8x3x5x5x128xbf16, #tpu.memory_space<vmem>>, vector<1x2x4x4x128xbf16>,
    %c0_75 = arith.constant 0 : index
    %c7 = arith.constant 7 : index
    %c0_76 = arith.constant 0 : index
    %c0_77 = arith.constant 0 : index
    %c0_78 = arith.constant 0 : index
    %c0_79 = arith.constant 0 : index
    %37 = vector.load %arg1[%c0_75, %c7, %c0_76, %c0_77, %c0_78, %c0_79] : memref<1x8x2x4x4x128xbf16, #tpu.memory_space<vmem>>, vector<1x1x2x4x4x128xbf16>
    %38 = vector.shape_cast %37 : vector<1x1x2x4x4x128xbf16> to vector<2x4x4x128xbf16>
    %c7_80 = arith.constant 7 : index
    %c1_81 = arith.constant 1 : index
    %c1_82 = arith.constant 1 : index
    %c1_83 = arith.constant 1 : index
    %c0_84 = arith.constant 0 : index
    %39 = vector.load %arg5[%c7_80, %c1_81, %c1_82, %c1_83, %c0_84] : memref<8x3x5x5x128xbf16, #tpu.memory_space<vmem>>, vector<1x2x4x4x128xbf16>
    %40 = vector.shape_cast %39 : vector<1x2x4x4x128xbf16> to vector<2x4x4x128xbf16>
    %41 = vector.shape_cast %38 : vector<2x4x4x128xbf16> to vector<1x2x4x4x128xbf16>
    tpu.vector_store %arg5[%c7_80, %c1_81, %c1_82, %c1_83, %c0_84], %41 {strides = array<i32>} : memref<8x3x5x5x128xbf16, #tpu.memory_space<vmem>>, vector<1x2x4x4x128xbf16>,
    %c0_85 = arith.constant 0 : index
    %c0_86 = arith.constant 0 : index
    %42 = vector.load %arg3[%c0_85, %c0_86] : memref<1x128xf32, #tpu.memory_space<vmem>>, vector<1x128xf32>
    %43 = vector.shape_cast %42 : vector<1x128xf32> to vector<1x128xf32>
    %44 = vector.broadcast %43 : vector<1x128xf32> to vector<32x128xf32>
    %c0_87 = arith.constant 0 : index
    %c0_88 = arith.constant 0 : index
    %45 = vector.load %arg7[%c0_87, %c0_88] : memref<32x128xf32, #tpu.memory_space<vmem>>, vector<32x128xf32>
    tpu.vector_store %arg7[%c0_87, %c0_88], %44 {strides = array<i32>} : memref<32x128xf32, #tpu.memory_space<vmem>>, vector<32x128xf32>,
    %c7_89 = arith.constant 7 : index
    %c0_90 = arith.constant 0 : index
    %c0_91 = arith.constant 0 : index
    %c0_92 = arith.constant 0 : index
    %c0_93 = arith.constant 0 : index
    %46 = vector.load %arg5[%c7_89, %c0_90, %c0_91, %c0_92, %c0_93] : memref<8x3x5x5x128xbf16, #tpu.memory_space<vmem>>, vector<1x2x4x4x128xbf16>
    %47 = vector.shape_cast %46 : vector<1x2x4x4x128xbf16> to vector<2x4x4x128xbf16>
    %48 = vector.shape_cast %47 : vector<2x4x4x128xbf16> to vector<32x128xbf16>
    %c0_94 = arith.constant 0 : index
    %c0_95 = arith.constant 0 : index
    %49 = vector.load %arg6[%c0_94, %c0_95] : memref<32x256xbf16, #tpu.memory_space<vmem>>, vector<32x128xbf16>
    tpu.vector_store %arg6[%c0_94, %c0_95], %48 {strides = array<i32>} : memref<32x256xbf16, #tpu.memory_space<vmem>>, vector<32x128xbf16>,
    %c6_96 = arith.constant 6 : index
    %c0_97 = arith.constant 0 : index
    %c0_98 = arith.constant 0 : index
    %c0_99 = arith.constant 0 : index
    %c0_100 = arith.constant 0 : index
    %50 = vector.load %arg5[%c6_96, %c0_97, %c0_98, %c0_99, %c0_100] : memref<8x3x5x5x128xbf16, #tpu.memory_space<vmem>>, vector<1x2x4x4x128xbf16>
    %51 = vector.shape_cast %50 : vector<1x2x4x4x128xbf16> to vector<2x4x4x128xbf16>
    %52 = vector.shape_cast %51 : vector<2x4x4x128xbf16> to vector<32x128xbf16>
    %c0_101 = arith.constant 0 : index
    %c128 = arith.constant 128 : index
    %53 = vector.load %arg6[%c0_101, %c128] : memref<32x256xbf16, #tpu.memory_space<vmem>>, vector<32x128xbf16>
    tpu.vector_store %arg6[%c0_101, %c128], %52 {strides = array<i32>} : memref<32x256xbf16, #tpu.memory_space<vmem>>, vector<32x128xbf16>,
    %c0_102 = arith.constant 0 : index
    %c0_103 = arith.constant 0 : index
    %54 = vector.load %arg7[%c0_102, %c0_103] : memref<32x128xf32, #tpu.memory_space<vmem>>, vector<32x128xf32>
    %c0_104 = arith.constant 0 : index
    %c0_105 = arith.constant 0 : index
    %55 = vector.load %arg6[%c0_104, %c0_105] : memref<32x256xbf16, #tpu.memory_space<vmem>>, vector<32x256xbf16>
    %c0_106 = arith.constant 0 : index
    %c0_107 = arith.constant 0 : index
    %c0_108 = arith.constant 0 : index
    %56 = vector.load %arg2[%c0_106, %c0_107, %c0_108] : memref<14x256x128xbf16, #tpu.memory_space<vmem>>, vector<1x256x128xbf16>
    %57 = vector.shape_cast %56 : vector<1x256x128xbf16> to vector<256x128xbf16>
    %cst_109 = arith.constant dense<0.000000e+00> : vector<32x128xf32>
    %58 = tpu.matmul %55, %57, %cst_109 {dimension_numbers = #tpu.dot_dimension_numbers<[1], [0], [0], [1], [0, 0, 1, 1], [], []>} : vector<32x256xbf16>, vector<256x128xbf16>, vector<32x128xf32> -> vector<32x128xf32>
    %59 = arith.addf %54, %58 : vector<32x128xf32>
    %c0_110 = arith.constant 0 : index
    %c0_111 = arith.constant 0 : index
    %60 = vector.load %arg7[%c0_110, %c0_111] : memref<32x128xf32, #tpu.memory_space<vmem>>, vector<32x128xf32>
    tpu.vector_store %arg7[%c0_110, %c0_111], %59 {strides = array<i32>} : memref<32x128xf32, #tpu.memory_space<vmem>>, vector<32x128xf32>,
    %c7_112 = arith.constant 7 : index
    %c0_113 = arith.constant 0 : index
    %c0_114 = arith.constant 0 : index
    %c1_115 = arith.constant 1 : index
    %c0_116 = arith.constant 0 : index
    %61 = vector.load %arg5[%c7_112, %c0_113, %c0_114, %c1_115, %c0_116] : memref<8x3x5x5x128xbf16, #tpu.memory_space<vmem>>, vector<1x2x4x4x128xbf16>
    %62 = vector.shape_cast %61 : vector<1x2x4x4x128xbf16> to vector<2x4x4x128xbf16>
    %63 = vector.shape_cast %62 : vector<2x4x4x128xbf16> to vector<32x128xbf16>
    %c0_117 = arith.constant 0 : index
    %c0_118 = arith.constant 0 : index
    %64 = vector.load %arg6[%c0_117, %c0_118] : memref<32x256xbf16, #tpu.memory_space<vmem>>, vector<32x128xbf16>
    tpu.vector_store %arg6[%c0_117, %c0_118], %63 {strides = array<i32>} : memref<32x256xbf16, #tpu.memory_space<vmem>>, vector<32x128xbf16>,
    %c5_119 = arith.constant 5 : index
    %c0_120 = arith.constant 0 : index
    %c0_121 = arith.constant 0 : index
    %c0_122 = arith.constant 0 : index
    %c0_123 = arith.constant 0 : index
    %65 = vector.load %arg5[%c5_119, %c0_120, %c0_121, %c0_122, %c0_123] : memref<8x3x5x5x128xbf16, #tpu.memory_space<vmem>>, vector<1x2x4x4x128xbf16>
    %66 = vector.shape_cast %65 : vector<1x2x4x4x128xbf16> to vector<2x4x4x128xbf16>
    %67 = vector.shape_cast %66 : vector<2x4x4x128xbf16> to vector<32x128xbf16>
    %c0_124 = arith.constant 0 : index
    %c128_125 = arith.constant 128 : index
    %68 = vector.load %arg6[%c0_124, %c128_125] : memref<32x256xbf16, #tpu.memory_space<vmem>>, vector<32x128xbf16>
    tpu.vector_store %arg6[%c0_124, %c128_125], %67 {strides = array<i32>} : memref<32x256xbf16, #tpu.memory_space<vmem>>, vector<32x128xbf16>,
    %c0_126 = arith.constant 0 : index
    %c0_127 = arith.constant 0 : index
    %69 = vector.load %arg7[%c0_126, %c0_127] : memref<32x128xf32, #tpu.memory_space<vmem>>, vector<32x128xf32>
    %c0_128 = arith.constant 0 : index
    %c0_129 = arith.constant 0 : index
    %70 = vector.load %arg6[%c0_128, %c0_129] : memref<32x256xbf16, #tpu.memory_space<vmem>>, vector<32x256xbf16>
    %c1_130 = arith.constant 1 : index
    %c0_131 = arith.constant 0 : index
    %c0_132 = arith.constant 0 : index
    %71 = vector.load %arg2[%c1_130, %c0_131, %c0_132] : memref<14x256x128xbf16, #tpu.memory_space<vmem>>, vector<1x256x128xbf16>
    %72 = vector.shape_cast %71 : vector<1x256x128xbf16> to vector<256x128xbf16>
    %cst_133 = arith.constant dense<0.000000e+00> : vector<32x128xf32>
    %73 = tpu.matmul %70, %72, %cst_133 {dimension_numbers = #tpu.dot_dimension_numbers<[1], [0], [0], [1], [0, 0, 1, 1], [], []>} : vector<32x256xbf16>, vector<256x128xbf16>, vector<32x128xf32> -> vector<32x128xf32>
    %74 = arith.addf %69, %73 : vector<32x128xf32>
    %c0_134 = arith.constant 0 : index
    %c0_135 = arith.constant 0 : index
    %75 = vector.load %arg7[%c0_134, %c0_135] : memref<32x128xf32, #tpu.memory_space<vmem>>, vector<32x128xf32>
    tpu.vector_store %arg7[%c0_134, %c0_135], %74 {strides = array<i32>} : memref<32x128xf32, #tpu.memory_space<vmem>>, vector<32x128xf32>,
    %c4_136 = arith.constant 4 : index
    %c0_137 = arith.constant 0 : index
    %c0_138 = arith.constant 0 : index
    %c0_139 = arith.constant 0 : index
    %c0_140 = arith.constant 0 : index
    %76 = vector.load %arg5[%c4_136, %c0_137, %c0_138, %c0_139, %c0_140] : memref<8x3x5x5x128xbf16, #tpu.memory_space<vmem>>, vector<1x2x4x4x128xbf16>
    %77 = vector.shape_cast %76 : vector<1x2x4x4x128xbf16> to vector<2x4x4x128xbf16>
    %78 = vector.shape_cast %77 : vector<2x4x4x128xbf16> to vector<32x128xbf16>
    %c0_141 = arith.constant 0 : index
    %c0_142 = arith.constant 0 : index
    %79 = vector.load %arg6[%c0_141, %c0_142] : memref<32x256xbf16, #tpu.memory_space<vmem>>, vector<32x128xbf16>
    tpu.vector_store %arg6[%c0_141, %c0_142], %78 {strides = array<i32>} : memref<32x256xbf16, #tpu.memory_space<vmem>>, vector<32x128xbf16>,
    %c5_143 = arith.constant 5 : index
    %c0_144 = arith.constant 0 : index
    %c0_145 = arith.constant 0 : index
    %c1_146 = arith.constant 1 : index
    %c0_147 = arith.constant 0 : index
    %80 = vector.load %arg5[%c5_143, %c0_144, %c0_145, %c1_146, %c0_147] : memref<8x3x5x5x128xbf16, #tpu.memory_space<vmem>>, vector<1x2x4x4x128xbf16>
    %81 = vector.shape_cast %80 : vector<1x2x4x4x128xbf16> to vector<2x4x4x128xbf16>
    %82 = vector.shape_cast %81 : vector<2x4x4x128xbf16> to vector<32x128xbf16>
    %c0_148 = arith.constant 0 : index
    %c128_149 = arith.constant 128 : index
    %83 = vector.load %arg6[%c0_148, %c128_149] : memref<32x256xbf16, #tpu.memory_space<vmem>>, vector<32x128xbf16>
    tpu.vector_store %arg6[%c0_148, %c128_149], %82 {strides = array<i32>} : memref<32x256xbf16, #tpu.memory_space<vmem>>, vector<32x128xbf16>,
    %c0_150 = arith.constant 0 : index
    %c0_151 = arith.constant 0 : index
    %84 = vector.load %arg7[%c0_150, %c0_151] : memref<32x128xf32, #tpu.memory_space<vmem>>, vector<32x128xf32>
    %c0_152 = arith.constant 0 : index
    %c0_153 = arith.constant 0 : index
    %85 = vector.load %arg6[%c0_152, %c0_153] : memref<32x256xbf16, #tpu.memory_space<vmem>>, vector<32x256xbf16>
    %c2_154 = arith.constant 2 : index
    %c0_155 = arith.constant 0 : index
    %c0_156 = arith.constant 0 : index
    %86 = vector.load %arg2[%c2_154, %c0_155, %c0_156] : memref<14x256x128xbf16, #tpu.memory_space<vmem>>, vector<1x256x128xbf16>
    %87 = vector.shape_cast %86 : vector<1x256x128xbf16> to vector<256x128xbf16>
    %cst_157 = arith.constant dense<0.000000e+00> : vector<32x128xf32>
    %88 = tpu.matmul %85, %87, %cst_157 {dimension_numbers = #tpu.dot_dimension_numbers<[1], [0], [0], [1], [0, 0, 1, 1], [], []>} : vector<32x256xbf16>, vector<256x128xbf16>, vector<32x128xf32> -> vector<32x128xf32>
    %89 = arith.addf %84, %88 : vector<32x128xf32>
    %c0_158 = arith.constant 0 : index
    %c0_159 = arith.constant 0 : index
    %90 = vector.load %arg7[%c0_158, %c0_159] : memref<32x128xf32, #tpu.memory_space<vmem>>, vector<32x128xf32>
    tpu.vector_store %arg7[%c0_158, %c0_159], %89 {strides = array<i32>} : memref<32x128xf32, #tpu.memory_space<vmem>>, vector<32x128xf32>,
    %c7_160 = arith.constant 7 : index
    %c0_161 = arith.constant 0 : index
    %c1_162 = arith.constant 1 : index
    %c0_163 = arith.constant 0 : index
    %c0_164 = arith.constant 0 : index
    %91 = vector.load %arg5[%c7_160, %c0_161, %c1_162, %c0_163, %c0_164] : memref<8x3x5x5x128xbf16, #tpu.memory_space<vmem>>, vector<1x2x4x4x128xbf16>
    %92 = vector.shape_cast %91 : vector<1x2x4x4x128xbf16> to vector<2x4x4x128xbf16>
    %93 = vector.shape_cast %92 : vector<2x4x4x128xbf16> to vector<32x128xbf16>
    %c0_165 = arith.constant 0 : index
    %c0_166 = arith.constant 0 : index
    %94 = vector.load %arg6[%c0_165, %c0_166] : memref<32x256xbf16, #tpu.memory_space<vmem>>, vector<32x128xbf16>
    tpu.vector_store %arg6[%c0_165, %c0_166], %93 {strides = array<i32>} : memref<32x256xbf16, #tpu.memory_space<vmem>>, vector<32x128xbf16>,
    %c6_167 = arith.constant 6 : index
    %c0_168 = arith.constant 0 : index
    %c1_169 = arith.constant 1 : index
    %c0_170 = arith.constant 0 : index
    %c0_171 = arith.constant 0 : index
    %95 = vector.load %arg5[%c6_167, %c0_168, %c1_169, %c0_170, %c0_171] : memref<8x3x5x5x128xbf16, #tpu.memory_space<vmem>>, vector<1x2x4x4x128xbf16>
    %96 = vector.shape_cast %95 : vector<1x2x4x4x128xbf16> to vector<2x4x4x128xbf16>
    %97 = vector.shape_cast %96 : vector<2x4x4x128xbf16> to vector<32x128xbf16>
    %c0_172 = arith.constant 0 : index
    %c128_173 = arith.constant 128 : index
    %98 = vector.load %arg6[%c0_172, %c128_173] : memref<32x256xbf16, #tpu.memory_space<vmem>>, vector<32x128xbf16>
    tpu.vector_store %arg6[%c0_172, %c128_173], %97 {strides = array<i32>} : memref<32x256xbf16, #tpu.memory_space<vmem>>, vector<32x128xbf16>,
    %c0_174 = arith.constant 0 : index
    %c0_175 = arith.constant 0 : index
    %99 = vector.load %arg7[%c0_174, %c0_175] : memref<32x128xf32, #tpu.memory_space<vmem>>, vector<32x128xf32>
    %c0_176 = arith.constant 0 : index
    %c0_177 = arith.constant 0 : index
    %100 = vector.load %arg6[%c0_176, %c0_177] : memref<32x256xbf16, #tpu.memory_space<vmem>>, vector<32x256xbf16>
    %c3_178 = arith.constant 3 : index
    %c0_179 = arith.constant 0 : index
    %c0_180 = arith.constant 0 : index
    %101 = vector.load %arg2[%c3_178, %c0_179, %c0_180] : memref<14x256x128xbf16, #tpu.memory_space<vmem>>, vector<1x256x128xbf16>
    %102 = vector.shape_cast %101 : vector<1x256x128xbf16> to vector<256x128xbf16>
    %cst_181 = arith.constant dense<0.000000e+00> : vector<32x128xf32>
    %103 = tpu.matmul %100, %102, %cst_181 {dimension_numbers = #tpu.dot_dimension_numbers<[1], [0], [0], [1], [0, 0, 1, 1], [], []>} : vector<32x256xbf16>, vector<256x128xbf16>, vector<32x128xf32> -> vector<32x128xf32>
    %104 = arith.addf %99, %103 : vector<32x128xf32>
    %c0_182 = arith.constant 0 : index
    %c0_183 = arith.constant 0 : index
    %105 = vector.load %arg7[%c0_182, %c0_183] : memref<32x128xf32, #tpu.memory_space<vmem>>, vector<32x128xf32>
    tpu.vector_store %arg7[%c0_182, %c0_183], %104 {strides = array<i32>} : memref<32x128xf32, #tpu.memory_space<vmem>>, vector<32x128xf32>,
    %c7_184 = arith.constant 7 : index
    %c0_185 = arith.constant 0 : index
    %c1_186 = arith.constant 1 : index
    %c1_187 = arith.constant 1 : index
    %c0_188 = arith.constant 0 : index
    %106 = vector.load %arg5[%c7_184, %c0_185, %c1_186, %c1_187, %c0_188] : memref<8x3x5x5x128xbf16, #tpu.memory_space<vmem>>, vector<1x2x4x4x128xbf16>
    %107 = vector.shape_cast %106 : vector<1x2x4x4x128xbf16> to vector<2x4x4x128xbf16>
    %108 = vector.shape_cast %107 : vector<2x4x4x128xbf16> to vector<32x128xbf16>
    %c0_189 = arith.constant 0 : index
    %c0_190 = arith.constant 0 : index
    %109 = vector.load %arg6[%c0_189, %c0_190] : memref<32x256xbf16, #tpu.memory_space<vmem>>, vector<32x128xbf16>
    tpu.vector_store %arg6[%c0_189, %c0_190], %108 {strides = array<i32>} : memref<32x256xbf16, #tpu.memory_space<vmem>>, vector<32x128xbf16>,
    %c3_191 = arith.constant 3 : index
    %c0_192 = arith.constant 0 : index
    %c0_193 = arith.constant 0 : index
    %c0_194 = arith.constant 0 : index
    %c0_195 = arith.constant 0 : index
    %110 = vector.load %arg5[%c3_191, %c0_192, %c0_193, %c0_194, %c0_195] : memref<8x3x5x5x128xbf16, #tpu.memory_space<vmem>>, vector<1x2x4x4x128xbf16>
    %111 = vector.shape_cast %110 : vector<1x2x4x4x128xbf16> to vector<2x4x4x128xbf16>
    %112 = vector.shape_cast %111 : vector<2x4x4x128xbf16> to vector<32x128xbf16>
    %c0_196 = arith.constant 0 : index
    %c128_197 = arith.constant 128 : index
    %113 = vector.load %arg6[%c0_196, %c128_197] : memref<32x256xbf16, #tpu.memory_space<vmem>>, vector<32x128xbf16>
    tpu.vector_store %arg6[%c0_196, %c128_197], %112 {strides = array<i32>} : memref<32x256xbf16, #tpu.memory_space<vmem>>, vector<32x128xbf16>,
    %c0_198 = arith.constant 0 : index
    %c0_199 = arith.constant 0 : index
    %114 = vector.load %arg7[%c0_198, %c0_199] : memref<32x128xf32, #tpu.memory_space<vmem>>, vector<32x128xf32>
    %c0_200 = arith.constant 0 : index
    %c0_201 = arith.constant 0 : index
    %115 = vector.load %arg6[%c0_200, %c0_201] : memref<32x256xbf16, #tpu.memory_space<vmem>>, vector<32x256xbf16>
    %c4_202 = arith.constant 4 : index
    %c0_203 = arith.constant 0 : index
    %c0_204 = arith.constant 0 : index
    %116 = vector.load %arg2[%c4_202, %c0_203, %c0_204] : memref<14x256x128xbf16, #tpu.memory_space<vmem>>, vector<1x256x128xbf16>
    %117 = vector.shape_cast %116 : vector<1x256x128xbf16> to vector<256x128xbf16>
    %cst_205 = arith.constant dense<0.000000e+00> : vector<32x128xf32>
    %118 = tpu.matmul %115, %117, %cst_205 {dimension_numbers = #tpu.dot_dimension_numbers<[1], [0], [0], [1], [0, 0, 1, 1], [], []>} : vector<32x256xbf16>, vector<256x128xbf16>, vector<32x128xf32> -> vector<32x128xf32>
    %119 = arith.addf %114, %118 : vector<32x128xf32>
    %c0_206 = arith.constant 0 : index
    %c0_207 = arith.constant 0 : index
    %120 = vector.load %arg7[%c0_206, %c0_207] : memref<32x128xf32, #tpu.memory_space<vmem>>, vector<32x128xf32>
    tpu.vector_store %arg7[%c0_206, %c0_207], %119 {strides = array<i32>} : memref<32x128xf32, #tpu.memory_space<vmem>>, vector<32x128xf32>,
    %c2_208 = arith.constant 2 : index
    %c0_209 = arith.constant 0 : index
    %c0_210 = arith.constant 0 : index
    %c0_211 = arith.constant 0 : index
    %c0_212 = arith.constant 0 : index
    %121 = vector.load %arg5[%c2_208, %c0_209, %c0_210, %c0_211, %c0_212] : memref<8x3x5x5x128xbf16, #tpu.memory_space<vmem>>, vector<1x2x4x4x128xbf16>
    %122 = vector.shape_cast %121 : vector<1x2x4x4x128xbf16> to vector<2x4x4x128xbf16>
    %123 = vector.shape_cast %122 : vector<2x4x4x128xbf16> to vector<32x128xbf16>
    %c0_213 = arith.constant 0 : index
    %c0_214 = arith.constant 0 : index
    %124 = vector.load %arg6[%c0_213, %c0_214] : memref<32x256xbf16, #tpu.memory_space<vmem>>, vector<32x128xbf16>
    tpu.vector_store %arg6[%c0_213, %c0_214], %123 {strides = array<i32>} : memref<32x256xbf16, #tpu.memory_space<vmem>>, vector<32x128xbf16>,
    %c3_215 = arith.constant 3 : index
    %c0_216 = arith.constant 0 : index
    %c0_217 = arith.constant 0 : index
    %c1_218 = arith.constant 1 : index
    %c0_219 = arith.constant 0 : index
    %125 = vector.load %arg5[%c3_215, %c0_216, %c0_217, %c1_218, %c0_219] : memref<8x3x5x5x128xbf16, #tpu.memory_space<vmem>>, vector<1x2x4x4x128xbf16>
    %126 = vector.shape_cast %125 : vector<1x2x4x4x128xbf16> to vector<2x4x4x128xbf16>
    %127 = vector.shape_cast %126 : vector<2x4x4x128xbf16> to vector<32x128xbf16>
    %c0_220 = arith.constant 0 : index
    %c128_221 = arith.constant 128 : index
    %128 = vector.load %arg6[%c0_220, %c128_221] : memref<32x256xbf16, #tpu.memory_space<vmem>>, vector<32x128xbf16>
    tpu.vector_store %arg6[%c0_220, %c128_221], %127 {strides = array<i32>} : memref<32x256xbf16, #tpu.memory_space<vmem>>, vector<32x128xbf16>,
    %c0_222 = arith.constant 0 : index
    %c0_223 = arith.constant 0 : index
    %129 = vector.load %arg7[%c0_222, %c0_223] : memref<32x128xf32, #tpu.memory_space<vmem>>, vector<32x128xf32>
    %c0_224 = arith.constant 0 : index
    %c0_225 = arith.constant 0 : index
    %130 = vector.load %arg6[%c0_224, %c0_225] : memref<32x256xbf16, #tpu.memory_space<vmem>>, vector<32x256xbf16>
    %c5_226 = arith.constant 5 : index
    %c0_227 = arith.constant 0 : index
    %c0_228 = arith.constant 0 : index
    %131 = vector.load %arg2[%c5_226, %c0_227, %c0_228] : memref<14x256x128xbf16, #tpu.memory_space<vmem>>, vector<1x256x128xbf16>
    %132 = vector.shape_cast %131 : vector<1x256x128xbf16> to vector<256x128xbf16>
    %cst_229 = arith.constant dense<0.000000e+00> : vector<32x128xf32>
    %133 = tpu.matmul %130, %132, %cst_229 {dimension_numbers = #tpu.dot_dimension_numbers<[1], [0], [0], [1], [0, 0, 1, 1], [], []>} : vector<32x256xbf16>, vector<256x128xbf16>, vector<32x128xf32> -> vector<32x128xf32>
    %134 = arith.addf %129, %133 : vector<32x128xf32>
    %c0_230 = arith.constant 0 : index
    %c0_231 = arith.constant 0 : index
    %135 = vector.load %arg7[%c0_230, %c0_231] : memref<32x128xf32, #tpu.memory_space<vmem>>, vector<32x128xf32>
    tpu.vector_store %arg7[%c0_230, %c0_231], %134 {strides = array<i32>} : memref<32x128xf32, #tpu.memory_space<vmem>>, vector<32x128xf32>,
    %c1_232 = arith.constant 1 : index
    %c0_233 = arith.constant 0 : index
    %c0_234 = arith.constant 0 : index
    %c0_235 = arith.constant 0 : index
    %c0_236 = arith.constant 0 : index
    %136 = vector.load %arg5[%c1_232, %c0_233, %c0_234, %c0_235, %c0_236] : memref<8x3x5x5x128xbf16, #tpu.memory_space<vmem>>, vector<1x2x4x4x128xbf16>
    %137 = vector.shape_cast %136 : vector<1x2x4x4x128xbf16> to vector<2x4x4x128xbf16>
    %138 = vector.shape_cast %137 : vector<2x4x4x128xbf16> to vector<32x128xbf16>
    %c0_237 = arith.constant 0 : index
    %c0_238 = arith.constant 0 : index
    %139 = vector.load %arg6[%c0_237, %c0_238] : memref<32x256xbf16, #tpu.memory_space<vmem>>, vector<32x128xbf16>
    tpu.vector_store %arg6[%c0_237, %c0_238], %138 {strides = array<i32>} : memref<32x256xbf16, #tpu.memory_space<vmem>>, vector<32x128xbf16>,
    %c0_239 = arith.constant 0 : index
    %c0_240 = arith.constant 0 : index
    %c0_241 = arith.constant 0 : index
    %c0_242 = arith.constant 0 : index
    %c0_243 = arith.constant 0 : index
    %140 = vector.load %arg5[%c0_239, %c0_240, %c0_241, %c0_242, %c0_243] : memref<8x3x5x5x128xbf16, #tpu.memory_space<vmem>>, vector<1x2x4x4x128xbf16>
    %141 = vector.shape_cast %140 : vector<1x2x4x4x128xbf16> to vector<2x4x4x128xbf16>
    %142 = vector.shape_cast %141 : vector<2x4x4x128xbf16> to vector<32x128xbf16>
    %c0_244 = arith.constant 0 : index
    %c128_245 = arith.constant 128 : index
    %143 = vector.load %arg6[%c0_244, %c128_245] : memref<32x256xbf16, #tpu.memory_space<vmem>>, vector<32x128xbf16>
    tpu.vector_store %arg6[%c0_244, %c128_245], %142 {strides = array<i32>} : memref<32x256xbf16, #tpu.memory_space<vmem>>, vector<32x128xbf16>,
    %c0_246 = arith.constant 0 : index
    %c0_247 = arith.constant 0 : index
    %144 = vector.load %arg7[%c0_246, %c0_247] : memref<32x128xf32, #tpu.memory_space<vmem>>, vector<32x128xf32>
    %c0_248 = arith.constant 0 : index
    %c0_249 = arith.constant 0 : index
    %145 = vector.load %arg6[%c0_248, %c0_249] : memref<32x256xbf16, #tpu.memory_space<vmem>>, vector<32x256xbf16>
    %c6_250 = arith.constant 6 : index
    %c0_251 = arith.constant 0 : index
    %c0_252 = arith.constant 0 : index
    %146 = vector.load %arg2[%c6_250, %c0_251, %c0_252] : memref<14x256x128xbf16, #tpu.memory_space<vmem>>, vector<1x256x128xbf16>
    %147 = vector.shape_cast %146 : vector<1x256x128xbf16> to vector<256x128xbf16>
    %cst_253 = arith.constant dense<0.000000e+00> : vector<32x128xf32>
    %148 = tpu.matmul %145, %147, %cst_253 {dimension_numbers = #tpu.dot_dimension_numbers<[1], [0], [0], [1], [0, 0, 1, 1], [], []>} : vector<32x256xbf16>, vector<256x128xbf16>, vector<32x128xf32> -> vector<32x128xf32>
    %149 = arith.addf %144, %148 : vector<32x128xf32>
    %c0_254 = arith.constant 0 : index
    %c0_255 = arith.constant 0 : index
    %150 = vector.load %arg7[%c0_254, %c0_255] : memref<32x128xf32, #tpu.memory_space<vmem>>, vector<32x128xf32>
    tpu.vector_store %arg7[%c0_254, %c0_255], %149 {strides = array<i32>} : memref<32x128xf32, #tpu.memory_space<vmem>>, vector<32x128xf32>,
    %c1_256 = arith.constant 1 : index
    %c0_257 = arith.constant 0 : index
    %c0_258 = arith.constant 0 : index
    %c1_259 = arith.constant 1 : index
    %c0_260 = arith.constant 0 : index
    %151 = vector.load %arg5[%c1_256, %c0_257, %c0_258, %c1_259, %c0_260] : memref<8x3x5x5x128xbf16, #tpu.memory_space<vmem>>, vector<1x2x4x4x128xbf16>
    %152 = vector.shape_cast %151 : vector<1x2x4x4x128xbf16> to vector<2x4x4x128xbf16>
    %153 = vector.shape_cast %152 : vector<2x4x4x128xbf16> to vector<32x128xbf16>
    %c0_261 = arith.constant 0 : index
    %c0_262 = arith.constant 0 : index
    %154 = vector.load %arg6[%c0_261, %c0_262] : memref<32x256xbf16, #tpu.memory_space<vmem>>, vector<32x128xbf16>
    tpu.vector_store %arg6[%c0_261, %c0_262], %153 {strides = array<i32>} : memref<32x256xbf16, #tpu.memory_space<vmem>>, vector<32x128xbf16>,
    %c3_263 = arith.constant 3 : index
    %c0_264 = arith.constant 0 : index
    %c1_265 = arith.constant 1 : index
    %c0_266 = arith.constant 0 : index
    %c0_267 = arith.constant 0 : index
    %155 = vector.load %arg5[%c3_263, %c0_264, %c1_265, %c0_266, %c0_267] : memref<8x3x5x5x128xbf16, #tpu.memory_space<vmem>>, vector<1x2x4x4x128xbf16>
    %156 = vector.shape_cast %155 : vector<1x2x4x4x128xbf16> to vector<2x4x4x128xbf16>
    %157 = vector.shape_cast %156 : vector<2x4x4x128xbf16> to vector<32x128xbf16>
    %c0_268 = arith.constant 0 : index
    %c128_269 = arith.constant 128 : index
    %158 = vector.load %arg6[%c0_268, %c128_269] : memref<32x256xbf16, #tpu.memory_space<vmem>>, vector<32x128xbf16>
    tpu.vector_store %arg6[%c0_268, %c128_269], %157 {strides = array<i32>} : memref<32x256xbf16, #tpu.memory_space<vmem>>, vector<32x128xbf16>,
    %c0_270 = arith.constant 0 : index
    %c0_271 = arith.constant 0 : index
    %159 = vector.load %arg7[%c0_270, %c0_271] : memref<32x128xf32, #tpu.memory_space<vmem>>, vector<32x128xf32>
    %c0_272 = arith.constant 0 : index
    %c0_273 = arith.constant 0 : index
    %160 = vector.load %arg6[%c0_272, %c0_273] : memref<32x256xbf16, #tpu.memory_space<vmem>>, vector<32x256xbf16>
    %c7_274 = arith.constant 7 : index
    %c0_275 = arith.constant 0 : index
    %c0_276 = arith.constant 0 : index
    %161 = vector.load %arg2[%c7_274, %c0_275, %c0_276] : memref<14x256x128xbf16, #tpu.memory_space<vmem>>, vector<1x256x128xbf16>
    %162 = vector.shape_cast %161 : vector<1x256x128xbf16> to vector<256x128xbf16>
    %cst_277 = arith.constant dense<0.000000e+00> : vector<32x128xf32>
    %163 = tpu.matmul %160, %162, %cst_277 {dimension_numbers = #tpu.dot_dimension_numbers<[1], [0], [0], [1], [0, 0, 1, 1], [], []>} : vector<32x256xbf16>, vector<256x128xbf16>, vector<32x128xf32> -> vector<32x128xf32>
    %164 = arith.addf %159, %163 : vector<32x128xf32>
    %c0_278 = arith.constant 0 : index
    %c0_279 = arith.constant 0 : index
    %165 = vector.load %arg7[%c0_278, %c0_279] : memref<32x128xf32, #tpu.memory_space<vmem>>, vector<32x128xf32>
    tpu.vector_store %arg7[%c0_278, %c0_279], %164 {strides = array<i32>} : memref<32x128xf32, #tpu.memory_space<vmem>>, vector<32x128xf32>,
    %c2_280 = arith.constant 2 : index
    %c0_281 = arith.constant 0 : index
    %c1_282 = arith.constant 1 : index
    %c0_283 = arith.constant 0 : index
    %c0_284 = arith.constant 0 : index
    %166 = vector.load %arg5[%c2_280, %c0_281, %c1_282, %c0_283, %c0_284] : memref<8x3x5x5x128xbf16, #tpu.memory_space<vmem>>, vector<1x2x4x4x128xbf16>
    %167 = vector.shape_cast %166 : vector<1x2x4x4x128xbf16> to vector<2x4x4x128xbf16>
    %168 = vector.shape_cast %167 : vector<2x4x4x128xbf16> to vector<32x128xbf16>
    %c0_285 = arith.constant 0 : index
    %c0_286 = arith.constant 0 : index
    %169 = vector.load %arg6[%c0_285, %c0_286] : memref<32x256xbf16, #tpu.memory_space<vmem>>, vector<32x128xbf16>
    tpu.vector_store %arg6[%c0_285, %c0_286], %168 {strides = array<i32>} : memref<32x256xbf16, #tpu.memory_space<vmem>>, vector<32x128xbf16>,
    %c3_287 = arith.constant 3 : index
    %c0_288 = arith.constant 0 : index
    %c1_289 = arith.constant 1 : index
    %c1_290 = arith.constant 1 : index
    %c0_291 = arith.constant 0 : index
    %170 = vector.load %arg5[%c3_287, %c0_288, %c1_289, %c1_290, %c0_291] : memref<8x3x5x5x128xbf16, #tpu.memory_space<vmem>>, vector<1x2x4x4x128xbf16>
    %171 = vector.shape_cast %170 : vector<1x2x4x4x128xbf16> to vector<2x4x4x128xbf16>
    %172 = vector.shape_cast %171 : vector<2x4x4x128xbf16> to vector<32x128xbf16>
    %c0_292 = arith.constant 0 : index
    %c128_293 = arith.constant 128 : index
    %173 = vector.load %arg6[%c0_292, %c128_293] : memref<32x256xbf16, #tpu.memory_space<vmem>>, vector<32x128xbf16>
    tpu.vector_store %arg6[%c0_292, %c128_293], %172 {strides = array<i32>} : memref<32x256xbf16, #tpu.memory_space<vmem>>, vector<32x128xbf16>,
    %c0_294 = arith.constant 0 : index
    %c0_295 = arith.constant 0 : index
    %174 = vector.load %arg7[%c0_294, %c0_295] : memref<32x128xf32, #tpu.memory_space<vmem>>, vector<32x128xf32>
    %c0_296 = arith.constant 0 : index
    %c0_297 = arith.constant 0 : index
    %175 = vector.load %arg6[%c0_296, %c0_297] : memref<32x256xbf16, #tpu.memory_space<vmem>>, vector<32x256xbf16>
    %c8 = arith.constant 8 : index
    %c0_298 = arith.constant 0 : index
    %c0_299 = arith.constant 0 : index
    %176 = vector.load %arg2[%c8, %c0_298, %c0_299] : memref<14x256x128xbf16, #tpu.memory_space<vmem>>, vector<1x256x128xbf16>
    %177 = vector.shape_cast %176 : vector<1x256x128xbf16> to vector<256x128xbf16>
    %cst_300 = arith.constant dense<0.000000e+00> : vector<32x128xf32>
    %178 = tpu.matmul %175, %177, %cst_300 {dimension_numbers = #tpu.dot_dimension_numbers<[1], [0], [0], [1], [0, 0, 1, 1], [], []>} : vector<32x256xbf16>, vector<256x128xbf16>, vector<32x128xf32> -> vector<32x128xf32>
    %179 = arith.addf %174, %178 : vector<32x128xf32>
    %c0_301 = arith.constant 0 : index
    %c0_302 = arith.constant 0 : index
    %180 = vector.load %arg7[%c0_301, %c0_302] : memref<32x128xf32, #tpu.memory_space<vmem>>, vector<32x128xf32>
    tpu.vector_store %arg7[%c0_301, %c0_302], %179 {strides = array<i32>} : memref<32x128xf32, #tpu.memory_space<vmem>>, vector<32x128xf32>,
    %c7_303 = arith.constant 7 : index
    %c1_304 = arith.constant 1 : index
    %c0_305 = arith.constant 0 : index
    %c0_306 = arith.constant 0 : index
    %c0_307 = arith.constant 0 : index
    %181 = vector.load %arg5[%c7_303, %c1_304, %c0_305, %c0_306, %c0_307] : memref<8x3x5x5x128xbf16, #tpu.memory_space<vmem>>, vector<1x2x4x4x128xbf16>
    %182 = vector.shape_cast %181 : vector<1x2x4x4x128xbf16> to vector<2x4x4x128xbf16>
    %183 = vector.shape_cast %182 : vector<2x4x4x128xbf16> to vector<32x128xbf16>
    %c0_308 = arith.constant 0 : index
    %c0_309 = arith.constant 0 : index
    %184 = vector.load %arg6[%c0_308, %c0_309] : memref<32x256xbf16, #tpu.memory_space<vmem>>, vector<32x128xbf16>
    tpu.vector_store %arg6[%c0_308, %c0_309], %183 {strides = array<i32>} : memref<32x256xbf16, #tpu.memory_space<vmem>>, vector<32x128xbf16>,
    %c6_310 = arith.constant 6 : index
    %c1_311 = arith.constant 1 : index
    %c0_312 = arith.constant 0 : index
    %c0_313 = arith.constant 0 : index
    %c0_314 = arith.constant 0 : index
    %185 = vector.load %arg5[%c6_310, %c1_311, %c0_312, %c0_313, %c0_314] : memref<8x3x5x5x128xbf16, #tpu.memory_space<vmem>>, vector<1x2x4x4x128xbf16>
    %186 = vector.shape_cast %185 : vector<1x2x4x4x128xbf16> to vector<2x4x4x128xbf16>
    %187 = vector.shape_cast %186 : vector<2x4x4x128xbf16> to vector<32x128xbf16>
    %c0_315 = arith.constant 0 : index
    %c128_316 = arith.constant 128 : index
    %188 = vector.load %arg6[%c0_315, %c128_316] : memref<32x256xbf16, #tpu.memory_space<vmem>>, vector<32x128xbf16>
    tpu.vector_store %arg6[%c0_315, %c128_316], %187 {strides = array<i32>} : memref<32x256xbf16, #tpu.memory_space<vmem>>, vector<32x128xbf16>,
    %c0_317 = arith.constant 0 : index
    %c0_318 = arith.constant 0 : index
    %189 = vector.load %arg7[%c0_317, %c0_318] : memref<32x128xf32, #tpu.memory_space<vmem>>, vector<32x128xf32>
    %c0_319 = arith.constant 0 : index
    %c0_320 = arith.constant 0 : index
    %190 = vector.load %arg6[%c0_319, %c0_320] : memref<32x256xbf16, #tpu.memory_space<vmem>>, vector<32x256xbf16>
    %c9 = arith.constant 9 : index
    %c0_321 = arith.constant 0 : index
    %c0_322 = arith.constant 0 : index
    %191 = vector.load %arg2[%c9, %c0_321, %c0_322] : memref<14x256x128xbf16, #tpu.memory_space<vmem>>, vector<1x256x128xbf16>
    %192 = vector.shape_cast %191 : vector<1x256x128xbf16> to vector<256x128xbf16>
    %cst_323 = arith.constant dense<0.000000e+00> : vector<32x128xf32>
    %193 = tpu.matmul %190, %192, %cst_323 {dimension_numbers = #tpu.dot_dimension_numbers<[1], [0], [0], [1], [0, 0, 1, 1], [], []>} : vector<32x256xbf16>, vector<256x128xbf16>, vector<32x128xf32> -> vector<32x128xf32>
    %194 = arith.addf %189, %193 : vector<32x128xf32>
    %c0_324 = arith.constant 0 : index
    %c0_325 = arith.constant 0 : index
    %195 = vector.load %arg7[%c0_324, %c0_325] : memref<32x128xf32, #tpu.memory_space<vmem>>, vector<32x128xf32>
    tpu.vector_store %arg7[%c0_324, %c0_325], %194 {strides = array<i32>} : memref<32x128xf32, #tpu.memory_space<vmem>>, vector<32x128xf32>,
    %c7_326 = arith.constant 7 : index
    %c1_327 = arith.constant 1 : index
    %c0_328 = arith.constant 0 : index
    %c1_329 = arith.constant 1 : index
    %c0_330 = arith.constant 0 : index
    %196 = vector.load %arg5[%c7_326, %c1_327, %c0_328, %c1_329, %c0_330] : memref<8x3x5x5x128xbf16, #tpu.memory_space<vmem>>, vector<1x2x4x4x128xbf16>
    %197 = vector.shape_cast %196 : vector<1x2x4x4x128xbf16> to vector<2x4x4x128xbf16>
    %198 = vector.shape_cast %197 : vector<2x4x4x128xbf16> to vector<32x128xbf16>
    %c0_331 = arith.constant 0 : index
    %c0_332 = arith.constant 0 : index
    %199 = vector.load %arg6[%c0_331, %c0_332] : memref<32x256xbf16, #tpu.memory_space<vmem>>, vector<32x128xbf16>
    tpu.vector_store %arg6[%c0_331, %c0_332], %198 {strides = array<i32>} : memref<32x256xbf16, #tpu.memory_space<vmem>>, vector<32x128xbf16>,
    %c5_333 = arith.constant 5 : index
    %c1_334 = arith.constant 1 : index
    %c0_335 = arith.constant 0 : index
    %c0_336 = arith.constant 0 : index
    %c0_337 = arith.constant 0 : index
    %200 = vector.load %arg5[%c5_333, %c1_334, %c0_335, %c0_336, %c0_337] : memref<8x3x5x5x128xbf16, #tpu.memory_space<vmem>>, vector<1x2x4x4x128xbf16>
    %201 = vector.shape_cast %200 : vector<1x2x4x4x128xbf16> to vector<2x4x4x128xbf16>
    %202 = vector.shape_cast %201 : vector<2x4x4x128xbf16> to vector<32x128xbf16>
    %c0_338 = arith.constant 0 : index
    %c128_339 = arith.constant 128 : index
    %203 = vector.load %arg6[%c0_338, %c128_339] : memref<32x256xbf16, #tpu.memory_space<vmem>>, vector<32x128xbf16>
    tpu.vector_store %arg6[%c0_338, %c128_339], %202 {strides = array<i32>} : memref<32x256xbf16, #tpu.memory_space<vmem>>, vector<32x128xbf16>,
    %c0_340 = arith.constant 0 : index
    %c0_341 = arith.constant 0 : index
    %204 = vector.load %arg7[%c0_340, %c0_341] : memref<32x128xf32, #tpu.memory_space<vmem>>, vector<32x128xf32>
    %c0_342 = arith.constant 0 : index
    %c0_343 = arith.constant 0 : index
    %205 = vector.load %arg6[%c0_342, %c0_343] : memref<32x256xbf16, #tpu.memory_space<vmem>>, vector<32x256xbf16>
    %c10 = arith.constant 10 : index
    %c0_344 = arith.constant 0 : index
    %c0_345 = arith.constant 0 : index
    %206 = vector.load %arg2[%c10, %c0_344, %c0_345] : memref<14x256x128xbf16, #tpu.memory_space<vmem>>, vector<1x256x128xbf16>
    %207 = vector.shape_cast %206 : vector<1x256x128xbf16> to vector<256x128xbf16>
    %cst_346 = arith.constant dense<0.000000e+00> : vector<32x128xf32>
    %208 = tpu.matmul %205, %207, %cst_346 {dimension_numbers = #tpu.dot_dimension_numbers<[1], [0], [0], [1], [0, 0, 1, 1], [], []>} : vector<32x256xbf16>, vector<256x128xbf16>, vector<32x128xf32> -> vector<32x128xf32>
    %209 = arith.addf %204, %208 : vector<32x128xf32>
    %c0_347 = arith.constant 0 : index
    %c0_348 = arith.constant 0 : index
    %210 = vector.load %arg7[%c0_347, %c0_348] : memref<32x128xf32, #tpu.memory_space<vmem>>, vector<32x128xf32>
    tpu.vector_store %arg7[%c0_347, %c0_348], %209 {strides = array<i32>} : memref<32x128xf32, #tpu.memory_space<vmem>>, vector<32x128xf32>,
    %c4_349 = arith.constant 4 : index
    %c1_350 = arith.constant 1 : index
    %c0_351 = arith.constant 0 : index
    %c0_352 = arith.constant 0 : index
    %c0_353 = arith.constant 0 : index
    %211 = vector.load %arg5[%c4_349, %c1_350, %c0_351, %c0_352, %c0_353] : memref<8x3x5x5x128xbf16, #tpu.memory_space<vmem>>, vector<1x2x4x4x128xbf16>
    %212 = vector.shape_cast %211 : vector<1x2x4x4x128xbf16> to vector<2x4x4x128xbf16>
    %213 = vector.shape_cast %212 : vector<2x4x4x128xbf16> to vector<32x128xbf16>
    %c0_354 = arith.constant 0 : index
    %c0_355 = arith.constant 0 : index
    %214 = vector.load %arg6[%c0_354, %c0_355] : memref<32x256xbf16, #tpu.memory_space<vmem>>, vector<32x128xbf16>
    tpu.vector_store %arg6[%c0_354, %c0_355], %213 {strides = array<i32>} : memref<32x256xbf16, #tpu.memory_space<vmem>>, vector<32x128xbf16>,
    %c5_356 = arith.constant 5 : index
    %c1_357 = arith.constant 1 : index
    %c0_358 = arith.constant 0 : index
    %c1_359 = arith.constant 1 : index
    %c0_360 = arith.constant 0 : index
    %215 = vector.load %arg5[%c5_356, %c1_357, %c0_358, %c1_359, %c0_360] : memref<8x3x5x5x128xbf16, #tpu.memory_space<vmem>>, vector<1x2x4x4x128xbf16>
    %216 = vector.shape_cast %215 : vector<1x2x4x4x128xbf16> to vector<2x4x4x128xbf16>
    %217 = vector.shape_cast %216 : vector<2x4x4x128xbf16> to vector<32x128xbf16>
    %c0_361 = arith.constant 0 : index
    %c128_362 = arith.constant 128 : index
    %218 = vector.load %arg6[%c0_361, %c128_362] : memref<32x256xbf16, #tpu.memory_space<vmem>>, vector<32x128xbf16>
    tpu.vector_store %arg6[%c0_361, %c128_362], %217 {strides = array<i32>} : memref<32x256xbf16, #tpu.memory_space<vmem>>, vector<32x128xbf16>,
    %c0_363 = arith.constant 0 : index
    %c0_364 = arith.constant 0 : index
    %219 = vector.load %arg7[%c0_363, %c0_364] : memref<32x128xf32, #tpu.memory_space<vmem>>, vector<32x128xf32>
    %c0_365 = arith.constant 0 : index
    %c0_366 = arith.constant 0 : index
    %220 = vector.load %arg6[%c0_365, %c0_366] : memref<32x256xbf16, #tpu.memory_space<vmem>>, vector<32x256xbf16>
    %c11 = arith.constant 11 : index
    %c0_367 = arith.constant 0 : index
    %c0_368 = arith.constant 0 : index
    %221 = vector.load %arg2[%c11, %c0_367, %c0_368] : memref<14x256x128xbf16, #tpu.memory_space<vmem>>, vector<1x256x128xbf16>
    %222 = vector.shape_cast %221 : vector<1x256x128xbf16> to vector<256x128xbf16>
    %cst_369 = arith.constant dense<0.000000e+00> : vector<32x128xf32>
    %223 = tpu.matmul %220, %222, %cst_369 {dimension_numbers = #tpu.dot_dimension_numbers<[1], [0], [0], [1], [0, 0, 1, 1], [], []>} : vector<32x256xbf16>, vector<256x128xbf16>, vector<32x128xf32> -> vector<32x128xf32>
    %224 = arith.addf %219, %223 : vector<32x128xf32>
    %c0_370 = arith.constant 0 : index
    %c0_371 = arith.constant 0 : index
    %225 = vector.load %arg7[%c0_370, %c0_371] : memref<32x128xf32, #tpu.memory_space<vmem>>, vector<32x128xf32>
    tpu.vector_store %arg7[%c0_370, %c0_371], %224 {strides = array<i32>} : memref<32x128xf32, #tpu.memory_space<vmem>>, vector<32x128xf32>,
    %c7_372 = arith.constant 7 : index
    %c1_373 = arith.constant 1 : index
    %c1_374 = arith.constant 1 : index
    %c0_375 = arith.constant 0 : index
    %c0_376 = arith.constant 0 : index
    %226 = vector.load %arg5[%c7_372, %c1_373, %c1_374, %c0_375, %c0_376] : memref<8x3x5x5x128xbf16, #tpu.memory_space<vmem>>, vector<1x2x4x4x128xbf16>
    %227 = vector.shape_cast %226 : vector<1x2x4x4x128xbf16> to vector<2x4x4x128xbf16>
    %228 = vector.shape_cast %227 : vector<2x4x4x128xbf16> to vector<32x128xbf16>
    %c0_377 = arith.constant 0 : index
    %c0_378 = arith.constant 0 : index
    %229 = vector.load %arg6[%c0_377, %c0_378] : memref<32x256xbf16, #tpu.memory_space<vmem>>, vector<32x128xbf16>
    tpu.vector_store %arg6[%c0_377, %c0_378], %228 {strides = array<i32>} : memref<32x256xbf16, #tpu.memory_space<vmem>>, vector<32x128xbf16>,
    %c6_379 = arith.constant 6 : index
    %c1_380 = arith.constant 1 : index
    %c1_381 = arith.constant 1 : index
    %c0_382 = arith.constant 0 : index
    %c0_383 = arith.constant 0 : index
    %230 = vector.load %arg5[%c6_379, %c1_380, %c1_381, %c0_382, %c0_383] : memref<8x3x5x5x128xbf16, #tpu.memory_space<vmem>>, vector<1x2x4x4x128xbf16>
    %231 = vector.shape_cast %230 : vector<1x2x4x4x128xbf16> to vector<2x4x4x128xbf16>
    %232 = vector.shape_cast %231 : vector<2x4x4x128xbf16> to vector<32x128xbf16>
    %c0_384 = arith.constant 0 : index
    %c128_385 = arith.constant 128 : index
    %233 = vector.load %arg6[%c0_384, %c128_385] : memref<32x256xbf16, #tpu.memory_space<vmem>>, vector<32x128xbf16>
    tpu.vector_store %arg6[%c0_384, %c128_385], %232 {strides = array<i32>} : memref<32x256xbf16, #tpu.memory_space<vmem>>, vector<32x128xbf16>,
    %c0_386 = arith.constant 0 : index
    %c0_387 = arith.constant 0 : index
    %234 = vector.load %arg7[%c0_386, %c0_387] : memref<32x128xf32, #tpu.memory_space<vmem>>, vector<32x128xf32>
    %c0_388 = arith.constant 0 : index
    %c0_389 = arith.constant 0 : index
    %235 = vector.load %arg6[%c0_388, %c0_389] : memref<32x256xbf16, #tpu.memory_space<vmem>>, vector<32x256xbf16>
    %c12 = arith.constant 12 : index
    %c0_390 = arith.constant 0 : index
    %c0_391 = arith.constant 0 : index
    %236 = vector.load %arg2[%c12, %c0_390, %c0_391] : memref<14x256x128xbf16, #tpu.memory_space<vmem>>, vector<1x256x128xbf16>
    %237 = vector.shape_cast %236 : vector<1x256x128xbf16> to vector<256x128xbf16>
    %cst_392 = arith.constant dense<0.000000e+00> : vector<32x128xf32>
    %238 = tpu.matmul %235, %237, %cst_392 {dimension_numbers = #tpu.dot_dimension_numbers<[1], [0], [0], [1], [0, 0, 1, 1], [], []>} : vector<32x256xbf16>, vector<256x128xbf16>, vector<32x128xf32> -> vector<32x128xf32>
    %239 = arith.addf %234, %238 : vector<32x128xf32>
    %c0_393 = arith.constant 0 : index
    %c0_394 = arith.constant 0 : index
    %240 = vector.load %arg7[%c0_393, %c0_394] : memref<32x128xf32, #tpu.memory_space<vmem>>, vector<32x128xf32>
    tpu.vector_store %arg7[%c0_393, %c0_394], %239 {strides = array<i32>} : memref<32x128xf32, #tpu.memory_space<vmem>>, vector<32x128xf32>,
    %c7_395 = arith.constant 7 : index
    %c1_396 = arith.constant 1 : index
    %c1_397 = arith.constant 1 : index
    %c1_398 = arith.constant 1 : index
    %c0_399 = arith.constant 0 : index
    %241 = vector.load %arg5[%c7_395, %c1_396, %c1_397, %c1_398, %c0_399] : memref<8x3x5x5x128xbf16, #tpu.memory_space<vmem>>, vector<1x2x4x4x128xbf16>
    %242 = vector.shape_cast %241 : vector<1x2x4x4x128xbf16> to vector<2x4x4x128xbf16>
    %243 = vector.shape_cast %242 : vector<2x4x4x128xbf16> to vector<32x128xbf16>
    %c0_400 = arith.constant 0 : index
    %c0_401 = arith.constant 0 : index
    %244 = vector.load %arg6[%c0_400, %c0_401] : memref<32x256xbf16, #tpu.memory_space<vmem>>, vector<32x128xbf16>
    tpu.vector_store %arg6[%c0_400, %c0_401], %243 {strides = array<i32>} : memref<32x256xbf16, #tpu.memory_space<vmem>>, vector<32x128xbf16>,
    %c7_402 = arith.constant 7 : index
    %c1_403 = arith.constant 1 : index
    %c1_404 = arith.constant 1 : index
    %c1_405 = arith.constant 1 : index
    %c0_406 = arith.constant 0 : index
    %245 = vector.load %arg5[%c7_402, %c1_403, %c1_404, %c1_405, %c0_406] : memref<8x3x5x5x128xbf16, #tpu.memory_space<vmem>>, vector<1x2x4x4x128xbf16>
    %246 = vector.shape_cast %245 : vector<1x2x4x4x128xbf16> to vector<2x4x4x128xbf16>
    %247 = vector.shape_cast %246 : vector<2x4x4x128xbf16> to vector<32x128xbf16>
    %c0_407 = arith.constant 0 : index
    %c128_408 = arith.constant 128 : index
    %248 = vector.load %arg6[%c0_407, %c128_408] : memref<32x256xbf16, #tpu.memory_space<vmem>>, vector<32x128xbf16>
    tpu.vector_store %arg6[%c0_407, %c128_408], %247 {strides = array<i32>} : memref<32x256xbf16, #tpu.memory_space<vmem>>, vector<32x128xbf16>,
    %c0_409 = arith.constant 0 : index
    %c0_410 = arith.constant 0 : index
    %249 = vector.load %arg7[%c0_409, %c0_410] : memref<32x128xf32, #tpu.memory_space<vmem>>, vector<32x128xf32>
    %c0_411 = arith.constant 0 : index
    %c0_412 = arith.constant 0 : index
    %250 = vector.load %arg6[%c0_411, %c0_412] : memref<32x256xbf16, #tpu.memory_space<vmem>>, vector<32x256xbf16>
    %c13 = arith.constant 13 : index
    %c0_413 = arith.constant 0 : index
    %c0_414 = arith.constant 0 : index
    %251 = vector.load %arg2[%c13, %c0_413, %c0_414] : memref<14x256x128xbf16, #tpu.memory_space<vmem>>, vector<1x256x128xbf16>
    %252 = vector.shape_cast %251 : vector<1x256x128xbf16> to vector<256x128xbf16>
    %cst_415 = arith.constant dense<0.000000e+00> : vector<32x128xf32>
    %253 = tpu.matmul %250, %252, %cst_415 {dimension_numbers = #tpu.dot_dimension_numbers<[1], [0], [0], [1], [0, 0, 1, 1], [], []>} : vector<32x256xbf16>, vector<256x128xbf16>, vector<32x128xf32> -> vector<32x128xf32>
    %254 = arith.addf %249, %253 : vector<32x128xf32>
    %c0_416 = arith.constant 0 : index
    %c0_417 = arith.constant 0 : index
    %255 = vector.load %arg7[%c0_416, %c0_417] : memref<32x128xf32, #tpu.memory_space<vmem>>, vector<32x128xf32>
    tpu.vector_store %arg7[%c0_416, %c0_417], %254 {strides = array<i32>} : memref<32x128xf32, #tpu.memory_space<vmem>>, vector<32x128xf32>,
    %c0_418 = arith.constant 0 : index
    %c0_419 = arith.constant 0 : index
    %256 = vector.load %arg7[%c0_418, %c0_419] : memref<32x128xf32, #tpu.memory_space<vmem>>, vector<32x128xf32>
    %cst_420 = arith.constant 0.000000e+00 : f32
    %257 = vector.broadcast %cst_420 : f32 to vector<32x128xf32>
    %258 = arith.maximumf %256, %257 : vector<32x128xf32>
    %cst_421 = arith.constant dense<0.000000e+00> : vector<128xf32>
    %259 = vector.multi_reduction <add>, %258, %cst_421 [0] : vector<32x128xf32> to vector<128xf32>
    %260 = vector.shape_cast %259 : vector<128xf32> to vector<1x128xf32>
    %c0_422 = arith.constant 0 : index
    %c0_423 = arith.constant 0 : index
    %c0_424 = arith.constant 0 : index
    %261 = vector.load %arg4[%c0_422, %c0_423, %c0_424] : memref<1x1x128xf32, #tpu.memory_space<vmem>>, vector<1x1x128xf32>
    %262 = vector.shape_cast %261 : vector<1x1x128xf32> to vector<1x128xf32>
    %263 = vector.shape_cast %260 : vector<1x128xf32> to vector<1x1x128xf32>
    tpu.vector_store %arg4[%c0_422, %c0_423, %c0_424], %263 {strides = array<i32>} : memref<1x1x128xf32, #tpu.memory_space<vmem>>, vector<1x1x128xf32>,
    return
  }
  func.func @transform_0(%arg0: i32) -> (i32, i32, i32, i32, i32, i32) {
    %c0_i32 = arith.constant 0 : i32
    %c0_i32_0 = arith.constant 0 : i32
    %c0_i32_1 = arith.constant 0 : i32
    %c0_i32_2 = arith.constant 0 : i32
    %c0_i32_3 = arith.constant 0 : i32
    %c0_i32_4 = arith.constant 0 : i32
    return %arg0, %c0_i32, %c0_i32_0, %c0_i32_1, %c0_i32_2, %c0_i32_3 : i32, i32, i32, i32, i32, i32
  }
  func.func @transform_1(%arg0: i32) -> (i32, i32, i32) {
    %c0_i32 = arith.constant 0 : i32
    %c0_i32_0 = arith.constant 0 : i32
    %c0_i32_1 = arith.constant 0 : i32
    %c0_i32_2 = arith.constant 0 : i32
    return %c0_i32, %c0_i32_0, %c0_i32_1 : i32, i32, i32
  }
  func.func @transform_2(%arg0: i32) -> (i32, i32) {
    %c0_i32 = arith.constant 0 : i32
    %c0_i32_0 = arith.constant 0 : i32
    %c0_i32_1 = arith.constant 0 : i32
    return %c0_i32, %c0_i32_0 : i32, i32
  }
  func.func @transform_3(%arg0: i32) -> (i32, i32, i32) {
    %c0_i32 = arith.constant 0 : i32
    %c0_i32_0 = arith.constant 0 : i32
    %c0_i32_1 = arith.constant 0 : i32
    return %arg0, %c0_i32, %c0_i32_0 : i32, i32, i32
  }
}

</mosaic_0001>

<llo_original>
// kernel: _detector_features_loss.3
$region0: #{_detector_features_loss.3}
  #allocation0 [shape = 'u32[]', space=smem, size = 0x4, offset = 0x4, fixed_abs, tag = 'smem constant byte address 0x4 - core index']
  #allocation1 [shape = 'u32[144,128]{1,0:T(1,128)}', space=vmem, size = 0x12000, scoped, tag = 'internal scratch']
  %s0 = inlined_call_operand.vmem [shape: bf16[4,256,128], index: 0, kind: input, shape index: {}]
  %s1 = inlined_call_operand.vmem [shape: bf16[128,128], index: 1, kind: input, shape index: {}]
  %s2 = inlined_call_operand.vmem [shape: f32[1,128], index: 2, kind: input, shape index: {}]
  %s3 = inlined_call_operand.vmem [shape: bf16[4,256,128], index: 3, kind: output, shape index: {}]
  %s4 = sld [smem:[#allocation0]]
  $region45: #{_detector_features_loss.3} parent=0
    _
  %s6 = ssub.s32 1, %s4
  %s7 = scalar_select 0, %s6, %s4
  loop: start=0, step=1, limit=6
  $region2: #{_detector_features_loss.3} parent=0 // loop_pre_header
    _
  $region3: #{_detector_features_loss.3} parent=0 // loop_header
    %s9 = sphi 0, %s13
    %p10 = scmp.ge.s32.totalorder %s9, 6
    %s16 = sphi 0, %s28
    %s17 = sphi 0, %s24
    %s18 = sphi 0, %s16
    %s19 = sphi 0, %s17
    %s20 = sphi 0, %s18
    %s21 = sphi 0, %s19
    %s33 = sphi 0, %s35
    %s36 = sphi 0, %s33
    %s37 = sphi 0, %s36
    %s53 = sphi 0, %s37
    %s57 = sphi 0, %s57
    %s59 = sphi 0, %s57
    %s60 = sphi 0, %s59
    %s74 = sphi 0, %s60
    %s78 = sphi 0, %s78
    %s80 = sphi 0, %s78
    %s81 = sphi 0, %s80
    %s95 = sphi 0, %s81
    %s103 = sphi 0, %s105
    %s106 = sphi 0, %s103
    %s107 = sphi 0, %s106
    %s123 = sphi 0, %s107
  $region4: #{_detector_features_loss.3} parent=0 // loop_header_branch
    %12 = sbr.rel (%p10) target = $region8
  $region5: #{_detector_features_loss.3} parent=0 // loop_body
    %s14 = ssub.s32 %s9, 1
    %s15 = ssub.s32 %s9, 2
    %s22 = sadd.s32 1, %s17
    %p23 = scmp.ge.s32.totalorder %s22, 1
    %s24 = scalar_select %p23, 0, %s22
    %s25 = sadd.s32 1, %s16
    %s26 = scalar_select %p23, %s25, %s16
    %p27 = scmp.ge.s32.totalorder %s26, 4
    %s28 = scalar_select %p27, 0, %s26
    %s29 = ssub.s32 %s16, %s28
    %s30 = ssub.s32 %s17, %s24
    %s31 = sor.u32 %s29, %s30
    %p32 = scmp.eq.s32.totalorder %s31, 0
    %s34 = sadd.s32 %s33, 1
    %s35 = scalar_select %p32, %s33, %s34
    %p38 = pneg %p32
    %p39 = scmp.eq.s32.totalorder %s9, 3
    %p40 = por %p38, %p39
    %p41 = scmp.ne.s32.totalorder %s33, %s36
    %p42 = scmp.eq.s32.totalorder %s9, 0
    %p43 = por %p41, %p42
    %p44 = scmp.ne.s32.totalorder %s33, %s36
    %p45 = scmp.eq.s32.totalorder %s14, 3
    %p46 = por %p44, %p45
    %p47 = scmp.ne.s32.totalorder %s36, %s37
    %p48 = scmp.eq.s32.totalorder %s14, 0
    %p49 = por %p47, %p48
    %p50 = scmp.ne.s32.totalorder %s36, %s37
    %p51 = scmp.eq.s32.totalorder %s15, 3
    %p52 = por %p50, %p51
    %p54 = scmp.ne.s32.totalorder %s37, %s53
    %p55 = scmp.eq.s32.totalorder %s15, 0
    %p56 = por %p54, %p55
    %s58 = sadd.s32 %s57, 1
    %p61 = scmp.eq.s32.totalorder %s9, 3
    %p62 = scmp.ne.s32.totalorder %s57, %s59
    %p63 = scmp.eq.s32.totalorder %s9, 0
    %p64 = por %p62, %p63
    %p65 = scmp.ne.s32.totalorder %s57, %s59
    %p66 = scmp.eq.s32.totalorder %s14, 3
    %p67 = por %p65, %p66
    %p68 = scmp.ne.s32.totalorder %s59, %s60
    %p69 = scmp.eq.s32.totalorder %s14, 0
    %p70 = por %p68, %p69
    %p71 = scmp.ne.s32.totalorder %s59, %s60
    %p72 = scmp.eq.s32.totalorder %s15, 3
    %p73 = por %p71, %p72
    %p75 = scmp.ne.s32.totalorder %s60, %s74
    %p76 = scmp.eq.s32.totalorder %s15, 0
    %p77 = por %p75, %p76
    %s79 = sadd.s32 %s78, 1
    %p82 = scmp.eq.s32.totalorder %s9, 3
    %p83 = scmp.ne.s32.totalorder %s78, %s80
    %p84 = scmp.eq.s32.totalorder %s9, 0
    %p85 = por %p83, %p84
    %p86 = scmp.ne.s32.totalorder %s78, %s80
    %p87 = scmp.eq.s32.totalorder %s14, 3
    %p88 = por %p86, %p87
    %p89 = scmp.ne.s32.totalorder %s80, %s81
    %p90 = scmp.eq.s32.totalorder %s14, 0
    %p91 = por %p89, %p90
    %p92 = scmp.ne.s32.totalorder %s80, %s81
    %p93 = scmp.eq.s32.totalorder %s15, 3
    %p94 = por %p92, %p93
    %p96 = scmp.ne.s32.totalorder %s81, %s95
    %p97 = scmp.eq.s32.totalorder %s15, 0
    %p98 = por %p96, %p97
    %s99 = ssub.s32 %s16, %s28
    %s100 = ssub.s32 %s17, %s24
    %s101 = sor.u32 %s99, %s100
    %p102 = scmp.eq.s32.totalorder %s101, 0
    %s104 = sadd.s32 %s103, 1
    %s105 = scalar_select %p102, %s103, %s104
    %p108 = pneg %p102
    %p109 = scmp.eq.s32.totalorder %s9, 3
    %p110 = por %p108, %p109
    %p111 = scmp.ne.s32.totalorder %s103, %s106
    %p112 = scmp.eq.s32.totalorder %s9, 0
    %p113 = por %p111, %p112
    %p114 = scmp.ne.s32.totalorder %s103, %s106
    %p115 = scmp.eq.s32.totalorder %s14, 3
    %p116 = por %p114, %p115
    %p117 = scmp.ne.s32.totalorder %s106, %s107
    %p118 = scmp.eq.s32.totalorder %s14, 0
    %p119 = por %p117, %p118
    %p120 = scmp.ne.s32.totalorder %s106, %s107
    %p121 = scmp.eq.s32.totalorder %s15, 3
    %p122 = por %p120, %p121
    %p124 = scmp.ne.s32.totalorder %s107, %s123
    %p125 = scmp.eq.s32.totalorder %s15, 0
    %p126 = por %p124, %p125
    %p127 = scmp.le.s32.totalorder 1, %s9
    %p128 = scmp.lt.s32.totalorder %s9, 5
    %p129 = pnand %p127, %p128
    %p130 = pneg %p129
    // Predicated region
    $region9: #{_detector_features_loss.3} parent=5 // pred_check
      _
    $region10: #{_detector_features_loss.3} parent=5 // pred_check_branch
      %132 = sbr.rel (%p129) target = $region12
    $region11: #{_detector_features_loss.3} parent=5 // pred_region
      %s133 = ssub.s32 %s9, 1
      // Predicated region
      $region13: #{_detector_features_loss.3} parent=11 // pred_check
        %p134 = pneg %p70
      $region14: #{_detector_features_loss.3} parent=11 // pred_check_branch
        %136 = sbr.rel (%p134) target = $region16
      $region15: #{_detector_features_loss.3} parent=11 // pred_region
        _
      $region16: #{_detector_features_loss.3} parent=11 // pred_fallthru
        _
      // Predicated region
      $region17: #{_detector_features_loss.3} parent=11 // pred_check
        %p137 = pneg %p91
      $region18: #{_detector_features_loss.3} parent=11 // pred_check_branch
        %139 = sbr.rel (%p137) target = $region20
      $region19: #{_detector_features_loss.3} parent=11 // pred_region
        _
      $region20: #{_detector_features_loss.3} parent=11 // pred_fallthru
        _
    $region12: #{_detector_features_loss.3} parent=5 // pred_fallthru
      _
    %p140 = scmp.lt.s32.totalorder %s9, 4
    // Predicated region
    $region21: #{_detector_features_loss.3} parent=5 // pred_check
      %p141 = pneg %p140
    $region22: #{_detector_features_loss.3} parent=5 // pred_check_branch
      %143 = sbr.rel (%p141) target = $region24
    $region23: #{_detector_features_loss.3} parent=5 // pred_region
      // Predicated region
      $region25: #{_detector_features_loss.3} parent=23 // pred_check
        %p144 = pneg %p43
      $region26: #{_detector_features_loss.3} parent=23 // pred_check_branch
        %146 = sbr.rel (%p144) target = $region28
      $region27: #{_detector_features_loss.3} parent=23 // pred_region
        %s147 = smul.u32 32, %s17
        %p148 = scmp.lt.s32.totalorder %s16, 3
        %s149 = scalar_select %p148, %s16, 3
        %p150 = scmp.lt.s32.totalorder %s147, 31
        %s151 = scalar_select %p150, %s147, 31
        %s152 = smul.addr %s149, 32
        %s153 = sadd.s32 %s151, %s152
        %s154 = smul.addr %s153, 4
        %s155 = scalar_lea.vmem %s0, %s154
        %s156 = smul.u32 32, %s17
      $region28: #{_detector_features_loss.3} parent=23 // pred_fallthru
        _
    $region24: #{_detector_features_loss.3} parent=5 // pred_fallthru
      _
    %p157 = scmp.le.s32.totalorder 1, %s9
    %p158 = scmp.lt.s32.totalorder %s9, 5
    %p159 = pnand %p157, %p158
    %p160 = pneg %p159
    // Predicated region
    $region29: #{_detector_features_loss.3} parent=5 // pred_check
      _
    $region30: #{_detector_features_loss.3} parent=5 // pred_check_branch
      %162 = sbr.rel (%p159) target = $region32
    $region31: #{_detector_features_loss.3} parent=5 // pred_region
      %s163 = ssub.s32 %s9, 1
      %s164 = smul.u32 32, %s19
      %p165 = scmp.lt.s32.totalorder %s18, 3
      %s166 = scalar_select %p165, %s18, 3
      %p167 = scmp.lt.s32.totalorder %s164, 31
      %s168 = scalar_select %p167, %s164, 31
      %s169 = smul.addr %s166, 32
      %s170 = sadd.s32 %s168, %s169
      %s171 = smul.addr %s170, 4
      %s172 = scalar_lea.vmem %s0, %s171
      %p173 = pneg %p49
      %p174 = pneg %p46
      %p175 = pneg %p70
      %p176 = pneg %p67
      %p177 = pneg %p91
      %p178 = pneg %p88
      %p179 = pneg %p119
      %p180 = pneg %p116
      %s181 = smul.u32 32, %s19
      %p182 = scmp.lt.s32.totalorder %s18, 3
      %s183 = scalar_select %p182, %s18, 3
      %p184 = scmp.lt.s32.totalorder %s181, 31
      %s185 = scalar_select %p184, %s181, 31
      %s186 = smul.addr %s183, 32
      %s187 = sadd.s32 %s185, %s186
      %s188 = smul.addr %s187, 4
      %s189 = scalar_lea.vmem %s3, %s188
      %s190 = smul.u32 32, %s19
      %p191 = scmp.lt.s32.totalorder %s18, 3
      %s192 = scalar_select %p191, %s18, 3
      %p193 = scmp.lt.s32.totalorder %s190, 31
      %s194 = scalar_select %p193, %s190, 31
      %s195 = smul.addr %s192, 32
      %s196 = sadd.s32 %s194, %s195
      %s197 = smul.addr %s196, 4
      %s198 = scalar_lea.vmem %s0, %s197
      %s199 = smul.u32 32, %s19
      %s200 = smul.u32 32, %s19
      %p201 = scmp.lt.s32.totalorder %s18, 3
      %s202 = scalar_select %p201, %s18, 3
      %p203 = scmp.lt.s32.totalorder %s200, 31
      %s204 = scalar_select %p203, %s200, 31
      %s205 = smul.addr %s202, 32
      %s206 = sadd.s32 %s204, %s205
      %s207 = smul.addr %s206, 4
      %s208 = scalar_lea.vmem %s3, %s207
      %s209 = smul.u32 32, %s19
      %v211 = vld [vmem:[%s198] sm:$0xf]
      %v212 = vld [vmem:[%s198 + $0x4] sm:$0xf]
      %v213 = vld [vmem:[%s198 + $0x8] sm:$0xf]
      %v214 = vld [vmem:[%s198 + $0xc] sm:$0xf]
      %v215 = vld [vmem:[%s198 + $0x10] sm:$0xf]
      %v216 = vld [vmem:[%s198 + $0x14] sm:$0xf]
      %v217 = vld [vmem:[%s198 + $0x18] sm:$0xf]
      %v218 = vld [vmem:[%s198 + $0x1c] sm:$0xf]
      %v219 = vld [vmem:[%s198 + $0x20] sm:$0xf]
      %v220 = vld [vmem:[%s198 + $0x24] sm:$0xf]
      %v221 = vld [vmem:[%s198 + $0x28] sm:$0xf]
      %v222 = vld [vmem:[%s198 + $0x2c] sm:$0xf]
      %v223 = vld [vmem:[%s198 + $0x30] sm:$0xf]
      %v224 = vld [vmem:[%s198 + $0x34] sm:$0xf]
      %v225 = vld [vmem:[%s198 + $0x38] sm:$0xf]
      %v226 = vld [vmem:[%s198 + $0x3c] sm:$0xf]
      %v227 = vld [vmem:[%s198 + $0x40] sm:$0xf]
      %v228 = vld [vmem:[%s198 + $0x44] sm:$0xf]
      %v229 = vld [vmem:[%s198 + $0x48] sm:$0xf]
      %v230 = vld [vmem:[%s198 + $0x4c] sm:$0xf]
      %v231 = vld [vmem:[%s198 + $0x50] sm:$0xf]
      %v232 = vld [vmem:[%s198 + $0x54] sm:$0xf]
      %v233 = vld [vmem:[%s198 + $0x58] sm:$0xf]
      %v234 = vld [vmem:[%s198 + $0x5c] sm:$0xf]
      %v235 = vld [vmem:[%s198 + $0x60] sm:$0xf]
      %v236 = vld [vmem:[%s198 + $0x64] sm:$0xf]
      %v237 = vld [vmem:[%s198 + $0x68] sm:$0xf]
      %v238 = vld [vmem:[%s198 + $0x6c] sm:$0xf]
      %v239 = vld [vmem:[%s198 + $0x70] sm:$0xf]
      %v240 = vld [vmem:[%s198 + $0x74] sm:$0xf]
      %v241 = vld [vmem:[%s198 + $0x78] sm:$0xf]
      %v242 = vld [vmem:[%s198 + $0x7c] sm:$0xf]
      %v243 = vld [vmem:[%s1] sm:$0xf]
      %v244 = vld [vmem:[%s1 + $0x4] sm:$0xf]
      %v245 = vld [vmem:[%s1 + $0x8] sm:$0xf]
      %v246 = vld [vmem:[%s1 + $0xc] sm:$0xf]
      %v247 = vld [vmem:[%s1 + $0x10] sm:$0xf]
      %v248 = vld [vmem:[%s1 + $0x14] sm:$0xf]
      %v249 = vld [vmem:[%s1 + $0x18] sm:$0xf]
      %v250 = vld [vmem:[%s1 + $0x1c] sm:$0xf]
      %v251 = vld [vmem:[%s1 + $0x20] sm:$0xf]
      %v252 = vld [vmem:[%s1 + $0x24] sm:$0xf]
      %v253 = vld [vmem:[%s1 + $0x28] sm:$0xf]
      %v254 = vld [vmem:[%s1 + $0x2c] sm:$0xf]
      %v255 = vld [vmem:[%s1 + $0x30] sm:$0xf]
      %v256 = vld [vmem:[%s1 + $0x34] sm:$0xf]
      %v257 = vld [vmem:[%s1 + $0x38] sm:$0xf]
      %v258 = vld [vmem:[%s1 + $0x3c] sm:$0xf]
      %v259 = vld [vmem:[%s2] sm:$0x1]
      %v261 = vlaneseq
      %v262 = vshrl.u32 %v261, 7
      %v263 = vsub.s32 0, %v262
      %v264 = vrot.slane %v259, %v263
      %v298 = vunpack.c.l.b16 %v211
      %v299 = vunpack.c.l.b16 %v212
      %v300 = vunpack.c.l.b16 %v213
      %v301 = vunpack.c.l.b16 %v214
      %v302 = vunpack.c.l.b16 %v215
      %v303 = vunpack.c.l.b16 %v216
      %v304 = vunpack.c.l.b16 %v217
      %v305 = vunpack.c.l.b16 %v218
      %v306 = vunpack.c.l.b16 %v219
      %v307 = vunpack.c.l.b16 %v220
      %v308 = vunpack.c.l.b16 %v221
      %v309 = vunpack.c.l.b16 %v222
      %v310 = vunpack.c.l.b16 %v223
      %v311 = vunpack.c.l.b16 %v224
      %v312 = vunpack.c.l.b16 %v225
      %v313 = vunpack.c.l.b16 %v226
      %v314 = vunpack.c.l.b16 %v227
      %v315 = vunpack.c.l.b16 %v228
      %v316 = vunpack.c.l.b16 %v229
      %v317 = vunpack.c.l.b16 %v230
      %v318 = vunpack.c.l.b16 %v231
      %v319 = vunpack.c.l.b16 %v232
      %v320 = vunpack.c.l.b16 %v233
      %v321 = vunpack.c.l.b16 %v234
      %v322 = vunpack.c.l.b16 %v235
      %v323 = vunpack.c.l.b16 %v236
      %v324 = vunpack.c.l.b16 %v237
      %v325 = vunpack.c.l.b16 %v238
      %v326 = vunpack.c.l.b16 %v239
      %v327 = vunpack.c.l.b16 %v240
      %v328 = vunpack.c.l.b16 %v241
      %v329 = vunpack.c.l.b16 %v242
      %v330 = vpack.c.b16 %v299, %v298
      %v331 = vpack.c.b16 %v301, %v300
      %v332 = vpack.c.b16 %v303, %v302
      %v333 = vpack.c.b16 %v305, %v304
      %v334 = vpack.c.b16 %v307, %v306
      %v335 = vpack.c.b16 %v309, %v308
      %v336 = vpack.c.b16 %v311, %v310
      %v337 = vpack.c.b16 %v313, %v312
      %v338 = vpack.c.b16 %v315, %v314
      %v339 = vpack.c.b16 %v317, %v316
      %v340 = vpack.c.b16 %v319, %v318
      %v341 = vpack.c.b16 %v321, %v320
      %v342 = vpack.c.b16 %v323, %v322
      %v343 = vpack.c.b16 %v325, %v324
      %v344 = vpack.c.b16 %v327, %v326
      %v345 = vpack.c.b16 %v329, %v328
      %v378 = vunpack.c.l.b16 %v243
      %v379 = vunpack.c.l.b16 %v244
      %v380 = vunpack.c.l.b16 %v245
      %v381 = vunpack.c.l.b16 %v246
      %v382 = vunpack.c.l.b16 %v247
      %v383 = vunpack.c.l.b16 %v248
      %v384 = vunpack.c.l.b16 %v249
      %v385 = vunpack.c.l.b16 %v250
      %v386 = vunpack.c.l.b16 %v251
      %v387 = vunpack.c.l.b16 %v252
      %v388 = vunpack.c.l.b16 %v253
      %v389 = vunpack.c.l.b16 %v254
      %v390 = vunpack.c.l.b16 %v255
      %v391 = vunpack.c.l.b16 %v256
      %v392 = vunpack.c.l.b16 %v257
      %v393 = vunpack.c.l.b16 %v258
      %v394 = vpack.c.b16 %v379, %v378
      %v395 = vpack.c.b16 %v381, %v380
      %v396 = vpack.c.b16 %v383, %v382
      %v397 = vpack.c.b16 %v385, %v384
      %v398 = vpack.c.b16 %v387, %v386
      %v399 = vpack.c.b16 %v389, %v388
      %v400 = vpack.c.b16 %v391, %v390
      %v401 = vpack.c.b16 %v393, %v392
      %410 = vmatprep.subr.bf16.mxu0 0
      %411 = vmatpush1.bf16.msra.mxu0 %v401
      %412 = vmatprep.subr.bf16.mxu0 0
      %413 = vmatpush1.bf16.msra.mxu0 %v400
      %414 = vmatprep.subr.bf16.mxu0 0
      %415 = vmatpush1.bf16.msra.mxu0 %v399
      %416 = vmatprep.subr.bf16.mxu0 0
      %417 = vmatpush1.bf16.msra.mxu0 %v398
      %418 = vmatprep.subr.bf16.mxu0 0
      %419 = vmatpush1.bf16.msra.mxu0 %v397
      %420 = vmatprep.subr.bf16.mxu0 0
      %421 = vmatpush1.bf16.msra.mxu0 %v396
      %422 = vmatprep.subr.bf16.mxu0 0
      %423 = vmatpush1.bf16.msra.mxu0 %v395
      %424 = vmatprep.subr.bf16.mxu0 0
      %425 = vmatpush1.bf16.msra.mxu0 %v394
      %426 = vmatprep.subr.bf16.mxu0 0
      %427 = vmatpush2.bf16.msra.mxu0 0
      %428 = vmatprep.subr.bf16.mxu0 0
      %429 = vmatpush2.bf16.msra.mxu0 0
      %430 = vmatprep.subr.bf16.mxu0 0
      %431 = vmatpush2.bf16.msra.mxu0 0
      %432 = vmatprep.subr.bf16.mxu0 0
      %433 = vmatpush2.bf16.msra.mxu0 0
      %434 = vmatprep.subr.bf16.mxu0 0
      %435 = vmatpush2.bf16.msra.mxu0 0
      %436 = vmatprep.subr.bf16.mxu0 0
      %437 = vmatpush2.bf16.msra.mxu0 0
      %438 = vmatprep.subr.bf16.mxu0 0
      %439 = vmatpush2.bf16.msra.mxu0 0
      %440 = vmatprep.subr.bf16.mxu0 0
      %441 = vmatpush2.bf16.msra.mxu0 0
      %442 = vmatprep.mubr.bf16.mxu0 0
      %443 = vmatmul.mubr.bf16.gmra.mxu0 %v330
      %v444 = vpop.f32.mrf.mxu0
      %v445 = vadd.f32 %v264, %v444
      %v446 = vpop.f32.mrf.mxu0
      %v447 = vpop.f32.mrf.mxu0
      %v448 = vadd.f32 %v264, %v447
      %v449 = vpop.f32.mrf.mxu0
      %450 = vmatprep.mubr.bf16.mxu0 0
      %451 = vmatmul.mubr.bf16.gmra.mxu0 %v331
      %v452 = vpop.f32.mrf.mxu0
      %v453 = vadd.f32 %v264, %v452
      %v454 = vpop.f32.mrf.mxu0
      %v455 = vpop.f32.mrf.mxu0
      %v456 = vadd.f32 %v264, %v455
      %v457 = vpop.f32.mrf.mxu0
      %458 = vmatprep.mubr.bf16.mxu0 0
      %459 = vmatmul.mubr.bf16.gmra.mxu0 %v332
      %v460 = vpop.f32.mrf.mxu0
      %v461 = vadd.f32 %v264, %v460
      %v462 = vpop.f32.mrf.mxu0
      %v463 = vpop.f32.mrf.mxu0
      %v464 = vadd.f32 %v264, %v463
      %v465 = vpop.f32.mrf.mxu0
      %466 = vmatprep.mubr.bf16.mxu0 0
      %467 = vmatmul.mubr.bf16.gmra.mxu0 %v333
      %v468 = vpop.f32.mrf.mxu0
      %v469 = vadd.f32 %v264, %v468
      %v470 = vpop.f32.mrf.mxu0
      %v471 = vpop.f32.mrf.mxu0
      %v472 = vadd.f32 %v264, %v471
      %v473 = vpop.f32.mrf.mxu0
      %474 = vmatprep.mubr.bf16.mxu0 0
      %475 = vmatmul.mubr.bf16.gmra.mxu0 %v334
      %v476 = vpop.f32.mrf.mxu0
      %v477 = vadd.f32 %v264, %v476
      %v478 = vpop.f32.mrf.mxu0
      %v479 = vpop.f32.mrf.mxu0
      %v480 = vadd.f32 %v264, %v479
      %v481 = vpop.f32.mrf.mxu0
      %482 = vmatprep.mubr.bf16.mxu0 0
      %483 = vmatmul.mubr.bf16.gmra.mxu0 %v335
      %v484 = vpop.f32.mrf.mxu0
      %v485 = vadd.f32 %v264, %v484
      %v486 = vpop.f32.mrf.mxu0
      %v487 = vpop.f32.mrf.mxu0
      %v488 = vadd.f32 %v264, %v487
      %v489 = vpop.f32.mrf.mxu0
      %490 = vmatprep.mubr.bf16.mxu0 0
      %491 = vmatmul.mubr.bf16.gmra.mxu0 %v336
      %v492 = vpop.f32.mrf.mxu0
      %v493 = vadd.f32 %v264, %v492
      %v494 = vpop.f32.mrf.mxu0
      %v495 = vpop.f32.mrf.mxu0
      %v496 = vadd.f32 %v264, %v495
      %v497 = vpop.f32.mrf.mxu0
      %498 = vmatprep.mubr.bf16.mxu0 0
      %499 = vmatmul.mubr.bf16.gmra.mxu0 %v337
      %v500 = vpop.f32.mrf.mxu0
      %v501 = vadd.f32 %v264, %v500
      %v502 = vpop.f32.mrf.mxu0
      %v503 = vpop.f32.mrf.mxu0
      %v504 = vadd.f32 %v264, %v503
      %v505 = vpop.f32.mrf.mxu0
      %506 = vmatprep.mubr.bf16.mxu0 0
      %507 = vmatmul.mubr.bf16.gmra.mxu0 %v338
      %v508 = vpop.f32.mrf.mxu0
      %v509 = vadd.f32 %v264, %v508
      %v510 = vpop.f32.mrf.mxu0
      %v511 = vpop.f32.mrf.mxu0
      %v512 = vadd.f32 %v264, %v511
      %v513 = vpop.f32.mrf.mxu0
      %514 = vmatprep.mubr.bf16.mxu0 0
      %515 = vmatmul.mubr.bf16.gmra.mxu0 %v339
      %v516 = vpop.f32.mrf.mxu0
      %v517 = vadd.f32 %v264, %v516
      %v518 = vpop.f32.mrf.mxu0
      %v519 = vpop.f32.mrf.mxu0
      %v520 = vadd.f32 %v264, %v519
      %v521 = vpop.f32.mrf.mxu0
      %522 = vmatprep.mubr.bf16.mxu0 0
      %523 = vmatmul.mubr.bf16.gmra.mxu0 %v340
      %v524 = vpop.f32.mrf.mxu0
      %v525 = vadd.f32 %v264, %v524
      %v526 = vpop.f32.mrf.mxu0
      %v527 = vpop.f32.mrf.mxu0
      %v528 = vadd.f32 %v264, %v527
      %v529 = vpop.f32.mrf.mxu0
      %530 = vmatprep.mubr.bf16.mxu0 0
      %531 = vmatmul.mubr.bf16.gmra.mxu0 %v341
      %v532 = vpop.f32.mrf.mxu0
      %v533 = vadd.f32 %v264, %v532
      %v534 = vpop.f32.mrf.mxu0
      %v535 = vpop.f32.mrf.mxu0
      %v536 = vadd.f32 %v264, %v535
      %v537 = vpop.f32.mrf.mxu0
      %538 = vmatprep.mubr.bf16.mxu0 0
      %539 = vmatmul.mubr.bf16.gmra.mxu0 %v342
      %v540 = vpop.f32.mrf.mxu0
      %v541 = vadd.f32 %v264, %v540
      %v542 = vpop.f32.mrf.mxu0
      %v543 = vpop.f32.mrf.mxu0
      %v544 = vadd.f32 %v264, %v543
      %v545 = vpop.f32.mrf.mxu0
      %546 = vmatprep.mubr.bf16.mxu0 0
      %547 = vmatmul.mubr.bf16.gmra.mxu0 %v343
      %v548 = vpop.f32.mrf.mxu0
      %v549 = vadd.f32 %v264, %v548
      %v550 = vpop.f32.mrf.mxu0
      %v551 = vpop.f32.mrf.mxu0
      %v552 = vadd.f32 %v264, %v551
      %v553 = vpop.f32.mrf.mxu0
      %554 = vmatprep.mubr.bf16.mxu0 0
      %555 = vmatmul.mubr.bf16.gmra.mxu0 %v344
      %v556 = vpop.f32.mrf.mxu0
      %v557 = vadd.f32 %v264, %v556
      %v558 = vpop.f32.mrf.mxu0
      %v559 = vpop.f32.mrf.mxu0
      %v560 = vadd.f32 %v264, %v559
      %v561 = vpop.f32.mrf.mxu0
      %562 = vmatprep.mubr.bf16.mxu0 0
      %563 = vmatmul.mubr.bf16.gmra.mxu0 %v345
      %v564 = vpop.f32.mrf.mxu0
      %v565 = vadd.f32 %v264, %v564
      %v566 = vpop.f32.mrf.mxu0
      %v567 = vpop.f32.mrf.mxu0
      %v568 = vadd.f32 %v264, %v567
      %v569 = vpop.f32.mrf.mxu0
      %570 = vdwg.mxu0
      %v571 = vmax.f32 %v445, 0.0
      %v572 = vmax.f32 %v448, 0.0
      %v573 = vmax.f32 %v453, 0.0
      %v574 = vmax.f32 %v456, 0.0
      %v575 = vmax.f32 %v461, 0.0
      %v576 = vmax.f32 %v464, 0.0
      %v577 = vmax.f32 %v469, 0.0
      %v578 = vmax.f32 %v472, 0.0
      %v579 = vmax.f32 %v477, 0.0
      %v580 = vmax.f32 %v480, 0.0
      %v581 = vmax.f32 %v485, 0.0
      %v582 = vmax.f32 %v488, 0.0
      %v583 = vmax.f32 %v493, 0.0
      %v584 = vmax.f32 %v496, 0.0
      %v585 = vmax.f32 %v501, 0.0
      %v586 = vmax.f32 %v504, 0.0
      %v587 = vmax.f32 %v509, 0.0
      %v588 = vmax.f32 %v512, 0.0
      %v589 = vmax.f32 %v517, 0.0
      %v590 = vmax.f32 %v520, 0.0
      %v591 = vmax.f32 %v525, 0.0
      %v592 = vmax.f32 %v528, 0.0
      %v593 = vmax.f32 %v533, 0.0
      %v594 = vmax.f32 %v536, 0.0
      %v595 = vmax.f32 %v541, 0.0
      %v596 = vmax.f32 %v544, 0.0
      %v597 = vmax.f32 %v549, 0.0
      %v598 = vmax.f32 %v552, 0.0
      %v599 = vmax.f32 %v557, 0.0
      %v600 = vmax.f32 %v560, 0.0
      %v601 = vmax.f32 %v565, 0.0
      %v602 = vmax.f32 %v568, 0.0
      %v603 = vpack.c.bf16 %v572, %v571
      %v604 = vpack.c.bf16 %v574, %v573
      %v605 = vpack.c.bf16 %v576, %v575
      %v606 = vpack.c.bf16 %v578, %v577
      %v607 = vpack.c.bf16 %v580, %v579
      %v608 = vpack.c.bf16 %v582, %v581
      %v609 = vpack.c.bf16 %v584, %v583
      %v610 = vpack.c.bf16 %v586, %v585
      %v611 = vpack.c.bf16 %v588, %v587
      %v612 = vpack.c.bf16 %v590, %v589
      %v613 = vpack.c.bf16 %v592, %v591
      %v614 = vpack.c.bf16 %v594, %v593
      %v615 = vpack.c.bf16 %v596, %v595
      %v616 = vpack.c.bf16 %v598, %v597
      %v617 = vpack.c.bf16 %v600, %v599
      %v618 = vpack.c.bf16 %v602, %v601
      %v635 = vunpack.c.l.b16 %v603
      %v636 = vunpack.c.h.b16 %v603
      %v637 = vunpack.c.l.b16 %v604
      %v638 = vunpack.c.h.b16 %v604
      %v639 = vunpack.c.l.b16 %v605
      %v640 = vunpack.c.h.b16 %v605
      %v641 = vunpack.c.l.b16 %v606
      %v642 = vunpack.c.h.b16 %v606
      %v643 = vunpack.c.l.b16 %v607
      %v644 = vunpack.c.h.b16 %v607
      %v645 = vunpack.c.l.b16 %v608
      %v646 = vunpack.c.h.b16 %v608
      %v647 = vunpack.c.l.b16 %v609
      %v648 = vunpack.c.h.b16 %v609
      %v649 = vunpack.c.l.b16 %v610
      %v650 = vunpack.c.h.b16 %v610
      %v651 = vunpack.c.l.b16 %v611
      %v652 = vunpack.c.h.b16 %v611
      %v653 = vunpack.c.l.b16 %v612
      %v654 = vunpack.c.h.b16 %v612
      %v655 = vunpack.c.l.b16 %v613
      %v656 = vunpack.c.h.b16 %v613
      %v657 = vunpack.c.l.b16 %v614
      %v658 = vunpack.c.h.b16 %v614
      %v659 = vunpack.c.l.b16 %v615
      %v660 = vunpack.c.h.b16 %v615
      %v661 = vunpack.c.l.b16 %v616
      %v662 = vunpack.c.h.b16 %v616
      %v663 = vunpack.c.l.b16 %v617
      %v664 = vunpack.c.h.b16 %v617
      %v665 = vunpack.c.l.b16 %v618
      %v666 = vunpack.c.h.b16 %v618
      %v667 = vpack.c.b16 %v635, %v635
      %v668 = vpack.c.b16 %v636, %v636
      %v669 = vpack.c.b16 %v637, %v637
      %v670 = vpack.c.b16 %v638, %v638
      %v671 = vpack.c.b16 %v639, %v639
      %v672 = vpack.c.b16 %v640, %v640
      %v673 = vpack.c.b16 %v641, %v641
      %v674 = vpack.c.b16 %v642, %v642
      %v675 = vpack.c.b16 %v643, %v643
      %v676 = vpack.c.b16 %v644, %v644
      %v677 = vpack.c.b16 %v645, %v645
      %v678 = vpack.c.b16 %v646, %v646
      %v679 = vpack.c.b16 %v647, %v647
      %v680 = vpack.c.b16 %v648, %v648
      %v681 = vpack.c.b16 %v649, %v649
      %v682 = vpack.c.b16 %v650, %v650
      %v683 = vpack.c.b16 %v651, %v651
      %v684 = vpack.c.b16 %v652, %v652
      %v685 = vpack.c.b16 %v653, %v653
      %v686 = vpack.c.b16 %v654, %v654
      %v687 = vpack.c.b16 %v655, %v655
      %v688 = vpack.c.b16 %v656, %v656
      %v689 = vpack.c.b16 %v657, %v657
      %v690 = vpack.c.b16 %v658, %v658
      %v691 = vpack.c.b16 %v659, %v659
      %v692 = vpack.c.b16 %v660, %v660
      %v693 = vpack.c.b16 %v661, %v661
      %v694 = vpack.c.b16 %v662, %v662
      %v695 = vpack.c.b16 %v663, %v663
      %v696 = vpack.c.b16 %v664, %v664
      %v697 = vpack.c.b16 %v665, %v665
      %v698 = vpack.c.b16 %v666, %v666
      %731 = vst [vmem:[%s208] sm:$0xf] %v667
      %732 = vst [vmem:[%s208 + $0x4] sm:$0xf] %v668
      %733 = vst [vmem:[%s208 + $0x8] sm:$0xf] %v669
      %734 = vst [vmem:[%s208 + $0xc] sm:$0xf] %v670
      %735 = vst [vmem:[%s208 + $0x10] sm:$0xf] %v671
      %736 = vst [vmem:[%s208 + $0x14] sm:$0xf] %v672
      %737 = vst [vmem:[%s208 + $0x18] sm:$0xf] %v673
      %738 = vst [vmem:[%s208 + $0x1c] sm:$0xf] %v674
      %739 = vst [vmem:[%s208 + $0x20] sm:$0xf] %v675
      %740 = vst [vmem:[%s208 + $0x24] sm:$0xf] %v676
      %741 = vst [vmem:[%s208 + $0x28] sm:$0xf] %v677
      %742 = vst [vmem:[%s208 + $0x2c] sm:$0xf] %v678
      %743 = vst [vmem:[%s208 + $0x30] sm:$0xf] %v679
      %744 = vst [vmem:[%s208 + $0x34] sm:$0xf] %v680
      %745 = vst [vmem:[%s208 + $0x38] sm:$0xf] %v681
      %746 = vst [vmem:[%s208 + $0x3c] sm:$0xf] %v682
      %747 = vst [vmem:[%s208 + $0x40] sm:$0xf] %v683
      %748 = vst [vmem:[%s208 + $0x44] sm:$0xf] %v684
      %749 = vst [vmem:[%s208 + $0x48] sm:$0xf] %v685
      %750 = vst [vmem:[%s208 + $0x4c] sm:$0xf] %v686
      %751 = vst [vmem:[%s208 + $0x50] sm:$0xf] %v687
      %752 = vst [vmem:[%s208 + $0x54] sm:$0xf] %v688
      %753 = vst [vmem:[%s208 + $0x58] sm:$0xf] %v689
      %754 = vst [vmem:[%s208 + $0x5c] sm:$0xf] %v690
      %755 = vst [vmem:[%s208 + $0x60] sm:$0xf] %v691
      %756 = vst [vmem:[%s208 + $0x64] sm:$0xf] %v692
      %757 = vst [vmem:[%s208 + $0x68] sm:$0xf] %v693
      %758 = vst [vmem:[%s208 + $0x6c] sm:$0xf] %v694
      %759 = vst [vmem:[%s208 + $0x70] sm:$0xf] %v695
      %760 = vst [vmem:[%s208 + $0x74] sm:$0xf] %v696
      %761 = vst [vmem:[%s208 + $0x78] sm:$0xf] %v697
      %762 = vst [vmem:[%s208 + $0x7c] sm:$0xf] %v698
      %s763 = smul.u32 32, %s19
      %p764 = scmp.lt.s32.totalorder %s18, 3
      %s765 = scalar_select %p764, %s18, 3
      %p766 = scmp.lt.s32.totalorder %s763, 31
      %s767 = scalar_select %p766, %s763, 31
      %s768 = smul.addr %s765, 32
      %s769 = sadd.s32 %s767, %s768
      %s770 = smul.addr %s769, 4
      %s771 = scalar_lea.vmem %s3, %s770
      // Predicated region
      $region33: #{_detector_features_loss.3} parent=31 // pred_check
        %p772 = pneg %p116
      $region34: #{_detector_features_loss.3} parent=31 // pred_check_branch
        %774 = sbr.rel (%p772) target = $region36
      $region35: #{_detector_features_loss.3} parent=31 // pred_region
        %s775 = smul.u32 32, %s19
      $region36: #{_detector_features_loss.3} parent=31 // pred_fallthru
        _
    $region32: #{_detector_features_loss.3} parent=5 // pred_fallthru
      _
    %p776 = scmp.le.s32.totalorder 2, %s9
    // Predicated region
    $region37: #{_detector_features_loss.3} parent=5 // pred_check
      %p777 = pneg %p776
    $region38: #{_detector_features_loss.3} parent=5 // pred_check_branch
      %779 = sbr.rel (%p777) target = $region40
    $region39: #{_detector_features_loss.3} parent=5 // pred_region
      %s780 = ssub.s32 %s9, 2
      // Predicated region
      $region41: #{_detector_features_loss.3} parent=39 // pred_check
        %p781 = pneg %p122
      $region42: #{_detector_features_loss.3} parent=39 // pred_check_branch
        %783 = sbr.rel (%p781) target = $region44
      $region43: #{_detector_features_loss.3} parent=39 // pred_region
        %s784 = smul.u32 32, %s21
        %p785 = scmp.lt.s32.totalorder %s20, 3
        %s786 = scalar_select %p785, %s20, 3
        %p787 = scmp.lt.s32.totalorder %s784, 31
        %s788 = scalar_select %p787, %s784, 31
        %s789 = smul.addr %s786, 32
        %s790 = sadd.s32 %s788, %s789
        %s791 = smul.addr %s790, 4
        %s792 = scalar_lea.vmem %s3, %s791
      $region44: #{_detector_features_loss.3} parent=39 // pred_fallthru
        _
    $region40: #{_detector_features_loss.3} parent=5 // pred_fallthru
      _
  $region6: #{_detector_features_loss.3} parent=0 // loop_footer
    %s13 = sadd.s32 1, %s9
  $region7: #{_detector_features_loss.3} parent=0 // loop_footer_branch
    %8 = sbr.rel target = $region3
  $region8: #{_detector_features_loss.3} parent=0 // loop_exit
    _

// kernel: _detector_features_loss.5
$region0: #{_detector_features_loss.5}
  #allocation0 [shape = 'u32[]', space=smem, size = 0x4, offset = 0x4, fixed_abs, tag = 'smem constant byte address 0x4 - core index']
  #allocation1 [shape = 'u32[144,128]{1,0:T(1,128)}', space=vmem, size = 0x12000, scoped, tag = 'internal scratch']
  %s0 = inlined_call_operand.vmem [shape: f32[4,128], index: 0, kind: input, shape index: {}]
  %s1 = inlined_call_operand.vmem [shape: bf16[128,512], index: 1, kind: input, shape index: {}]
  %s2 = inlined_call_operand.vmem [shape: f32[1,512], index: 2, kind: input, shape index: {}]
  %s3 = inlined_call_operand.hbm [shape: f32[1,1], index: 3, kind: output, shape index: {}]
  %s4 = sld [smem:[#allocation0]]
  $region22: #{_detector_features_loss.5} parent=0
    _
  %s6 = ssub.s32 1, %s4
  %s7 = scalar_select 0, %s6, %s4
  $region1: #{_detector_features_loss.5} parent=0
    #allocation2 [shape = 'u8[512]{0}', space=vmem, size = 0x400, scoped, tag = 'output window, operand 0, single buffered']
    #allocation3 [shape = 's32[1]{0}', space=sflag, size = 0x4, scoped, tag = 'scoped memory for _detector_features_loss.5']
    %8 = vsyncpa [#allocation3], 0
    // Predicated region
    $region2: #{_detector_features_loss.5} parent=1 // pred_check
      _
    $region3: #{_detector_features_loss.5} parent=1 // pred_check_branch
      %10 = sbr.rel (0) target = $region5
    $region4: #{_detector_features_loss.5} parent=1 // pred_region
      _
    $region5: #{_detector_features_loss.5} parent=1 // pred_fallthru
      _
    // Predicated region
    $region6: #{_detector_features_loss.5} parent=1 // pred_check
      _
    $region7: #{_detector_features_loss.5} parent=1 // pred_check_branch
      %12 = sbr.rel (0) target = $region9
    $region8: #{_detector_features_loss.5} parent=1 // pred_region
      _
    $region9: #{_detector_features_loss.5} parent=1 // pred_fallthru
      _
    // Predicated region
    $region10: #{_detector_features_loss.5} parent=1 // pred_check
      _
    $region11: #{_detector_features_loss.5} parent=1 // pred_check_branch
      %14 = sbr.rel (0) target = $region13
    $region12: #{_detector_features_loss.5} parent=1 // pred_region
      _
    $region13: #{_detector_features_loss.5} parent=1 // pred_fallthru
      _
    %v16 = vld [vmem:[%s0] sm:$0xf]
    %v17 = vmul.f32 %v16, 0.03125
    %v18 = vpack.c.bf16 %v17, %v17
    %v19 = vld [vmem:[%s1] sm:$0xff]
    %v20 = vld [vmem:[%s1 + $0x8] sm:$0xff]
    %v21 = vld [vmem:[%s1 + $0x10] sm:$0xff]
    %v22 = vld [vmem:[%s1 + $0x18] sm:$0xff]
    %v23 = vld [vmem:[%s1 + $0x20] sm:$0xff]
    %v24 = vld [vmem:[%s1 + $0x28] sm:$0xff]
    %v25 = vld [vmem:[%s1 + $0x30] sm:$0xff]
    %v26 = vld [vmem:[%s1 + $0x38] sm:$0xff]
    %v27 = vld [vmem:[%s1 + $0x40] sm:$0xff]
    %v28 = vld [vmem:[%s1 + $0x48] sm:$0xff]
    %v29 = vld [vmem:[%s1 + $0x50] sm:$0xff]
    %v30 = vld [vmem:[%s1 + $0x58] sm:$0xff]
    %v31 = vld [vmem:[%s1 + $0x60] sm:$0xff]
    %v32 = vld [vmem:[%s1 + $0x68] sm:$0xff]
    %v33 = vld [vmem:[%s1 + $0x70] sm:$0xff]
    %v34 = vld [vmem:[%s1 + $0x78] sm:$0xff]
    %v35 = vld [vmem:[%s1 + $0x80] sm:$0xff]
    %v36 = vld [vmem:[%s1 + $0x88] sm:$0xff]
    %v37 = vld [vmem:[%s1 + $0x90] sm:$0xff]
    %v38 = vld [vmem:[%s1 + $0x98] sm:$0xff]
    %v39 = vld [vmem:[%s1 + $0xa0] sm:$0xff]
    %v40 = vld [vmem:[%s1 + $0xa8] sm:$0xff]
    %v41 = vld [vmem:[%s1 + $0xb0] sm:$0xff]
    %v42 = vld [vmem:[%s1 + $0xb8] sm:$0xff]
    %v43 = vld [vmem:[%s1 + $0xc0] sm:$0xff]
    %v44 = vld [vmem:[%s1 + $0xc8] sm:$0xff]
    %v45 = vld [vmem:[%s1 + $0xd0] sm:$0xff]
    %v46 = vld [vmem:[%s1 + $0xd8] sm:$0xff]
    %v47 = vld [vmem:[%s1 + $0xe0] sm:$0xff]
    %v48 = vld [vmem:[%s1 + $0xe8] sm:$0xff]
    %v49 = vld [vmem:[%s1 + $0xf0] sm:$0xff]
    %v50 = vld [vmem:[%s1 + $0xf8] sm:$0xff]
    %v51 = vld [vmem:[%s2] sm:$0xf]
    %v53 = vlaneseq
    %v54 = vshrl.u32 %v53, 7
    %v55 = vsub.s32 0, %v54
    %v56 = vrot.slane %v51, %v55
    %v57 = vlaneseq
    %v58 = vshrl.u32 %v57, 7
    %v59 = vsub.s32 1, %v58
    %v60 = vrot.slane %v51, %v59
    %v61 = vlaneseq
    %v62 = vshrl.u32 %v61, 7
    %v63 = vsub.s32 2, %v62
    %v64 = vrot.slane %v51, %v63
    %v65 = vlaneseq
    %v66 = vshrl.u32 %v65, 7
    %v67 = vsub.s32 3, %v66
    %v68 = vrot.slane %v51, %v67
    %v105 = vunpack.c.l.b16 %v19
    %v106 = vunpack.c.h.b16 %v19
    %v107 = vunpack.c.l.b16 %v20
    %v108 = vunpack.c.h.b16 %v20
    %v109 = vunpack.c.l.b16 %v21
    %v110 = vunpack.c.h.b16 %v21
    %v111 = vunpack.c.l.b16 %v22
    %v112 = vunpack.c.h.b16 %v22
    %v113 = vunpack.c.l.b16 %v23
    %v114 = vunpack.c.h.b16 %v23
    %v115 = vunpack.c.l.b16 %v24
    %v116 = vunpack.c.h.b16 %v24
    %v117 = vunpack.c.l.b16 %v25
    %v118 = vunpack.c.h.b16 %v25
    %v119 = vunpack.c.l.b16 %v26
    %v120 = vunpack.c.h.b16 %v26
    %v121 = vunpack.c.l.b16 %v27
    %v122 = vunpack.c.h.b16 %v27
    %v123 = vunpack.c.l.b16 %v28
    %v124 = vunpack.c.h.b16 %v28
    %v125 = vunpack.c.l.b16 %v29
    %v126 = vunpack.c.h.b16 %v29
    %v127 = vunpack.c.l.b16 %v30
    %v128 = vunpack.c.h.b16 %v30
    %v129 = vunpack.c.l.b16 %v31
    %v130 = vunpack.c.h.b16 %v31
    %v131 = vunpack.c.l.b16 %v32
    %v132 = vunpack.c.h.b16 %v32
    %v133 = vunpack.c.l.b16 %v33
    %v134 = vunpack.c.h.b16 %v33
    %v135 = vunpack.c.l.b16 %v34
    %v136 = vunpack.c.h.b16 %v34
    %v137 = vunpack.c.l.b16 %v35
    %v138 = vunpack.c.h.b16 %v35
    %v139 = vunpack.c.l.b16 %v36
    %v140 = vunpack.c.h.b16 %v36
    %v141 = vunpack.c.l.b16 %v37
    %v142 = vunpack.c.h.b16 %v37
    %v143 = vunpack.c.l.b16 %v38
    %v144 = vunpack.c.h.b16 %v38
    %v145 = vunpack.c.l.b16 %v39
    %v146 = vunpack.c.h.b16 %v39
    %v147 = vunpack.c.l.b16 %v40
    %v148 = vunpack.c.h.b16 %v40
    %v149 = vunpack.c.l.b16 %v41
    %v150 = vunpack.c.h.b16 %v41
    %v151 = vunpack.c.l.b16 %v42
    %v152 = vunpack.c.h.b16 %v42
    %v153 = vunpack.c.l.b16 %v43
    %v154 = vunpack.c.h.b16 %v43
    %v155 = vunpack.c.l.b16 %v44
    %v156 = vunpack.c.h.b16 %v44
    %v157 = vunpack.c.l.b16 %v45
    %v158 = vunpack.c.h.b16 %v45
    %v159 = vunpack.c.l.b16 %v46
    %v160 = vunpack.c.h.b16 %v46
    %v161 = vunpack.c.l.b16 %v47
    %v162 = vunpack.c.h.b16 %v47
    %v163 = vunpack.c.l.b16 %v48
    %v164 = vunpack.c.h.b16 %v48
    %v165 = vunpack.c.l.b16 %v49
    %v166 = vunpack.c.h.b16 %v49
    %v167 = vunpack.c.l.b16 %v50
    %v168 = vunpack.c.h.b16 %v50
    %v169 = vpack.c.b16 %v109, %v105
    %v170 = vpack.c.b16 %v110, %v106
    %v171 = vpack.c.b16 %v111, %v107
    %v172 = vpack.c.b16 %v112, %v108
    %v173 = vpack.c.b16 %v117, %v113
    %v174 = vpack.c.b16 %v118, %v114
    %v175 = vpack.c.b16 %v119, %v115
    %v176 = vpack.c.b16 %v120, %v116
    %v177 = vpack.c.b16 %v125, %v121
    %v178 = vpack.c.b16 %v126, %v122
    %v179 = vpack.c.b16 %v127, %v123
    %v180 = vpack.c.b16 %v128, %v124
    %v181 = vpack.c.b16 %v133, %v129
    %v182 = vpack.c.b16 %v134, %v130
    %v183 = vpack.c.b16 %v135, %v131
    %v184 = vpack.c.b16 %v136, %v132
    %v185 = vpack.c.b16 %v141, %v137
    %v186 = vpack.c.b16 %v142, %v138
    %v187 = vpack.c.b16 %v143, %v139
    %v188 = vpack.c.b16 %v144, %v140
    %v189 = vpack.c.b16 %v149, %v145
    %v190 = vpack.c.b16 %v150, %v146
    %v191 = vpack.c.b16 %v151, %v147
    %v192 = vpack.c.b16 %v152, %v148
    %v193 = vpack.c.b16 %v157, %v153
    %v194 = vpack.c.b16 %v158, %v154
    %v195 = vpack.c.b16 %v159, %v155
    %v196 = vpack.c.b16 %v160, %v156
    %v197 = vpack.c.b16 %v165, %v161
    %v198 = vpack.c.b16 %v166, %v162
    %v199 = vpack.c.b16 %v167, %v163
    %v200 = vpack.c.b16 %v168, %v164
    %233 = vmatprep.subr.bf16.mxu0 %v198
    %234 = vmatpush1.bf16.msra.mxu0 %v197
    %235 = vmatprep.subr.bf16.mxu0 %v194
    %236 = vmatpush1.bf16.msra.mxu0 %v193
    %237 = vmatprep.subr.bf16.mxu0 %v190
    %238 = vmatpush1.bf16.msra.mxu0 %v189
    %239 = vmatprep.subr.bf16.mxu0 %v186
    %240 = vmatpush1.bf16.msra.mxu0 %v185
    %241 = vmatprep.subr.bf16.mxu0 %v182
    %242 = vmatpush1.bf16.msra.mxu0 %v181
    %243 = vmatprep.subr.bf16.mxu0 %v178
    %244 = vmatpush1.bf16.msra.mxu0 %v177
    %245 = vmatprep.subr.bf16.mxu0 %v174
    %246 = vmatpush1.bf16.msra.mxu0 %v173
    %247 = vmatprep.subr.bf16.mxu0 %v170
    %248 = vmatpush1.bf16.msra.mxu0 %v169
    %249 = vmatprep.subr.bf16.mxu0 0
    %250 = vmatpush2.bf16.msra.mxu0 0
    %251 = vmatprep.subr.bf16.mxu0 0
    %252 = vmatpush2.bf16.msra.mxu0 0
    %253 = vmatprep.subr.bf16.mxu0 0
    %254 = vmatpush2.bf16.msra.mxu0 0
    %255 = vmatprep.subr.bf16.mxu0 0
    %256 = vmatpush2.bf16.msra.mxu0 0
    %257 = vmatprep.subr.bf16.mxu0 0
    %258 = vmatpush2.bf16.msra.mxu0 0
    %259 = vmatprep.subr.bf16.mxu0 0
    %260 = vmatpush2.bf16.msra.mxu0 0
    %261 = vmatprep.subr.bf16.mxu0 0
    %262 = vmatpush2.bf16.msra.mxu0 0
    %263 = vmatprep.subr.bf16.mxu0 0
    %264 = vmatpush2.bf16.msra.mxu0 0
    %265 = vmatprep.mubr.bf16.mxu0 0
    %266 = vmatmul.mubr.bf16.gmra.mxu0 %v18
    %v267 = vpop.f32.mrf.mxu0
    %v268 = vadd.f32 %v56, %v267
    %v269 = vpop.f32.mrf.mxu0
    %v270 = vadd.f32 %v60, %v269
    %v271 = vpop.f32.mrf.mxu0
    %v272 = vpop.f32.mrf.mxu0
    %273 = vdwg.mxu0
    %274 = vmatprep.subr.bf16.mxu0 %v200
    %275 = vmatpush1.bf16.msra.mxu0 %v199
    %276 = vmatprep.subr.bf16.mxu0 %v196
    %277 = vmatpush1.bf16.msra.mxu0 %v195
    %278 = vmatprep.subr.bf16.mxu0 %v192
    %279 = vmatpush1.bf16.msra.mxu0 %v191
    %280 = vmatprep.subr.bf16.mxu0 %v188
    %281 = vmatpush1.bf16.msra.mxu0 %v187
    %282 = vmatprep.subr.bf16.mxu0 %v184
    %283 = vmatpush1.bf16.msra.mxu0 %v183
    %284 = vmatprep.subr.bf16.mxu0 %v180
    %285 = vmatpush1.bf16.msra.mxu0 %v179
    %286 = vmatprep.subr.bf16.mxu0 %v176
    %287 = vmatpush1.bf16.msra.mxu0 %v175
    %288 = vmatprep.subr.bf16.mxu0 %v172
    %289 = vmatpush1.bf16.msra.mxu0 %v171
    %290 = vmatprep.subr.bf16.mxu0 0
    %291 = vmatpush2.bf16.msra.mxu0 0
    %292 = vmatprep.subr.bf16.mxu0 0
    %293 = vmatpush2.bf16.msra.mxu0 0
    %294 = vmatprep.subr.bf16.mxu0 0
    %295 = vmatpush2.bf16.msra.mxu0 0
    %296 = vmatprep.subr.bf16.mxu0 0
    %297 = vmatpush2.bf16.msra.mxu0 0
    %298 = vmatprep.subr.bf16.mxu0 0
    %299 = vmatpush2.bf16.msra.mxu0 0
    %300 = vmatprep.subr.bf16.mxu0 0
    %301 = vmatpush2.bf16.msra.mxu0 0
    %302 = vmatprep.subr.bf16.mxu0 0
    %303 = vmatpush2.bf16.msra.mxu0 0
    %304 = vmatprep.subr.bf16.mxu0 0
    %305 = vmatpush2.bf16.msra.mxu0 0
    %306 = vmatprep.mubr.bf16.mxu0 0
    %307 = vmatmul.mubr.bf16.gmra.mxu0 %v18
    %v308 = vpop.f32.mrf.mxu0
    %v309 = vadd.f32 %v64, %v308
    %v310 = vpop.f32.mrf.mxu0
    %v311 = vadd.f32 %v68, %v310
    %v312 = vpop.f32.mrf.mxu0
    %v313 = vpop.f32.mrf.mxu0
    %314 = vdwg.mxu0
    %v319 = vrot.slane %v268, 2
    %v320 = vrot.slane %v270, 2
    %v321 = vrot.slane %v309, 2
    %v322 = vrot.slane %v311, 2
    %v327 = vsub.f32 %v268, %v319
    %v328 = vsub.f32 %v270, %v320
    %v329 = vsub.f32 %v309, %v321
    %v330 = vsub.f32 %v311, %v322
    %v331 = vmul.f32 %v327, %v327
    %v332 = vmul.f32 %v328, %v328
    %v333 = vmul.f32 %v329, %v329
    %v334 = vmul.f32 %v330, %v330
    %vm335 = vcmask 1041408
    %v336 = vsel %vm335, %v331, 0.0
    %v337 = vsel %vm335, %v332, 0.0
    %v338 = vadd.f32 %v336, %v337
    %v339 = vsel %vm335, %v333, 0.0
    %v340 = vadd.f32 %v338, %v339
    %v341 = vsel %vm335, %v334, 0.0
    %v342 = vadd.f32 %v340, %v341
    %343 = vadd.xlane.f32.xlu0 %v342
    %v344 = vpop.xlane.xlu0 %343
    %v345 = vsel %vm335, %v344, 0.0
    %v346 = vrot.slane %v345, 4
    %v347 = vadd.f32 %v345, %v346
    %v348 = vrot.slane %v347, 2
    %v349 = vadd.f32 %v347, %v348
    %v350 = vrot.slane %v349, 1
    %v351 = vadd.f32 %v349, %v350
    %v352 = vmul.f32 %v351, 0.00125
    %vm353 = vcmask 0
    %354 = vst.msk [vmem:[#allocation2] sm:$0x1] %vm353, %v352
    // Predicated region
    $region14: #{_detector_features_loss.5} parent=1 // pred_check
      _
    $region15: #{_detector_features_loss.5} parent=1 // pred_check_branch
      %356 = sbr.rel (0) target = $region17
    $region16: #{_detector_features_loss.5} parent=1 // pred_region
      %s358 = ssub.s32 16, 16
      %359 = vsyncadd [#allocation3], %s358
      %s361 = sshll.u32 [#allocation2], 4
      %s362 = int_to_ptr.vmem [resolvable:$true] %s361
      %364 = dma.vmem_to_hbm [thread:$0]  %s362, 16, %s3, [#allocation3]
    $region17: #{_detector_features_loss.5} parent=1 // pred_fallthru
      _
    // Predicated region
    $region18: #{_detector_features_loss.5} parent=1 // pred_check
      _
    $region19: #{_detector_features_loss.5} parent=1 // pred_check_branch
      %366 = sbr.rel (0) target = $region21
    $region20: #{_detector_features_loss.5} parent=1 // pred_region
      %367 = dma.done [#allocation3], 16
    $region21: #{_detector_features_loss.5} parent=1 // pred_fallthru
      _
    %368 = vsyncpa [#allocation3], 1

// kernel: _detector_features_loss.4
$region0: #{_detector_features_loss.4}
  #allocation0 [shape = 'u32[]', space=smem, size = 0x4, offset = 0x4, fixed_abs, tag = 'smem constant byte address 0x4 - core index']
  #allocation1 [shape = 'u32[144,128]{1,0:T(1,128)}', space=vmem, size = 0x12000, scoped, tag = 'internal scratch']
  #allocation2 [shape = 'bf16[8,3,5,5,128]{4,3,2,1,0:T(8,128)(2,1)}', space=vmem, size = 0x3c000, scoped, tag = 'scratch operand']
  #allocation3 [shape = 'bf16[32,256]{1,0:T(8,128)(2,1)}', space=vmem, size = 0x4000, scoped, tag = 'scratch operand']
  #allocation4 [shape = 'f32[32,128]{1,0:T(8,128)}', space=vmem, size = 0x4000, scoped, tag = 'scratch operand']
  %s0 = inlined_call_operand.vmem [shape: bf16[4,8,2,4,4,128], index: 0, kind: input, shape index: {}]
  %s1 = inlined_call_operand.vmem [shape: bf16[14,256,128], index: 1, kind: input, shape index: {}]
  %s2 = inlined_call_operand.vmem [shape: f32[1,128], index: 2, kind: input, shape index: {}]
  %s3 = inlined_call_operand.vmem [shape: f32[4,1,128], index: 3, kind: output, shape index: {}]
  %s4 = sld [smem:[#allocation0]]
  $region45: #{_detector_features_loss.4} parent=0
    _
  %s6 = ssub.s32 1, %s4
  %s7 = scalar_select 0, %s6, %s4
  loop: start=0, step=1, limit=6
  $region2: #{_detector_features_loss.4} parent=0 // loop_pre_header
    _
  $region3: #{_detector_features_loss.4} parent=0 // loop_header
    %s9 = sphi 0, %s13
    %p10 = scmp.ge.s32.totalorder %s9, 6
    %s19 = sphi 0, %s21
    %s22 = sphi 0, %s19
    %s23 = sphi 0, %s22
    %s39 = sphi 0, %s23
    %s43 = sphi 0, %s43
    %s45 = sphi 0, %s43
    %s46 = sphi 0, %s45
    %s60 = sphi 0, %s46
    %s64 = sphi 0, %s64
    %s66 = sphi 0, %s64
    %s67 = sphi 0, %s66
    %s81 = sphi 0, %s67
    %s87 = sphi 0, %s89
    %s90 = sphi 0, %s87
    %s91 = sphi 0, %s90
    %s107 = sphi 0, %s91
  $region4: #{_detector_features_loss.4} parent=0 // loop_header_branch
    %12 = sbr.rel (%p10) target = $region8
  $region5: #{_detector_features_loss.4} parent=0 // loop_body
    %s14 = ssub.s32 %s9, 1
    %s15 = ssub.s32 %s9, 2
    %s16 = sadd.s32 %s9, 1
    %s17 = ssub.s32 %s9, %s16
    %p18 = scmp.eq.s32.totalorder %s17, 0
    %s20 = sadd.s32 %s19, 1
    %s21 = scalar_select %p18, %s19, %s20
    %p24 = pneg %p18
    %p25 = scmp.eq.s32.totalorder %s9, 3
    %p26 = por %p24, %p25
    %p27 = scmp.ne.s32.totalorder %s19, %s22
    %p28 = scmp.eq.s32.totalorder %s9, 0
    %p29 = por %p27, %p28
    %p30 = scmp.ne.s32.totalorder %s19, %s22
    %p31 = scmp.eq.s32.totalorder %s14, 3
    %p32 = por %p30, %p31
    %p33 = scmp.ne.s32.totalorder %s22, %s23
    %p34 = scmp.eq.s32.totalorder %s14, 0
    %p35 = por %p33, %p34
    %p36 = scmp.ne.s32.totalorder %s22, %s23
    %p37 = scmp.eq.s32.totalorder %s15, 3
    %p38 = por %p36, %p37
    %p40 = scmp.ne.s32.totalorder %s23, %s39
    %p41 = scmp.eq.s32.totalorder %s15, 0
    %p42 = por %p40, %p41
    %s44 = sadd.s32 %s43, 1
    %p47 = scmp.eq.s32.totalorder %s9, 3
    %p48 = scmp.ne.s32.totalorder %s43, %s45
    %p49 = scmp.eq.s32.totalorder %s9, 0
    %p50 = por %p48, %p49
    %p51 = scmp.ne.s32.totalorder %s43, %s45
    %p52 = scmp.eq.s32.totalorder %s14, 3
    %p53 = por %p51, %p52
    %p54 = scmp.ne.s32.totalorder %s45, %s46
    %p55 = scmp.eq.s32.totalorder %s14, 0
    %p56 = por %p54, %p55
    %p57 = scmp.ne.s32.totalorder %s45, %s46
    %p58 = scmp.eq.s32.totalorder %s15, 3
    %p59 = por %p57, %p58
    %p61 = scmp.ne.s32.totalorder %s46, %s60
    %p62 = scmp.eq.s32.totalorder %s15, 0
    %p63 = por %p61, %p62
    %s65 = sadd.s32 %s64, 1
    %p68 = scmp.eq.s32.totalorder %s9, 3
    %p69 = scmp.ne.s32.totalorder %s64, %s66
    %p70 = scmp.eq.s32.totalorder %s9, 0
    %p71 = por %p69, %p70
    %p72 = scmp.ne.s32.totalorder %s64, %s66
    %p73 = scmp.eq.s32.totalorder %s14, 3
    %p74 = por %p72, %p73
    %p75 = scmp.ne.s32.totalorder %s66, %s67
    %p76 = scmp.eq.s32.totalorder %s14, 0
    %p77 = por %p75, %p76
    %p78 = scmp.ne.s32.totalorder %s66, %s67
    %p79 = scmp.eq.s32.totalorder %s15, 3
    %p80 = por %p78, %p79
    %p82 = scmp.ne.s32.totalorder %s67, %s81
    %p83 = scmp.eq.s32.totalorder %s15, 0
    %p84 = por %p82, %p83
    %s85 = ssub.s32 %s9, %s16
    %p86 = scmp.eq.s32.totalorder %s85, 0
    %s88 = sadd.s32 %s87, 1
    %s89 = scalar_select %p86, %s87, %s88
    %p92 = pneg %p86
    %p93 = scmp.eq.s32.totalorder %s9, 3
    %p94 = por %p92, %p93
    %p95 = scmp.ne.s32.totalorder %s87, %s90
    %p96 = scmp.eq.s32.totalorder %s9, 0
    %p97 = por %p95, %p96
    %p98 = scmp.ne.s32.totalorder %s87, %s90
    %p99 = scmp.eq.s32.totalorder %s14, 3
    %p100 = por %p98, %p99
    %p101 = scmp.ne.s32.totalorder %s90, %s91
    %p102 = scmp.eq.s32.totalorder %s14, 0
    %p103 = por %p101, %p102
    %p104 = scmp.ne.s32.totalorder %s90, %s91
    %p105 = scmp.eq.s32.totalorder %s15, 3
    %p106 = por %p104, %p105
    %p108 = scmp.ne.s32.totalorder %s91, %s107
    %p109 = scmp.eq.s32.totalorder %s15, 0
    %p110 = por %p108, %p109
    %p111 = scmp.le.s32.totalorder 1, %s9
    %p112 = scmp.lt.s32.totalorder %s9, 5
    %p113 = pnand %p111, %p112
    %p114 = pneg %p113
    // Predicated region
    $region9: #{_detector_features_loss.4} parent=5 // pred_check
      _
    $region10: #{_detector_features_loss.4} parent=5 // pred_check_branch
      %116 = sbr.rel (%p113) target = $region12
    $region11: #{_detector_features_loss.4} parent=5 // pred_region
      %s117 = ssub.s32 %s9, 1
      // Predicated region
      $region13: #{_detector_features_loss.4} parent=11 // pred_check
        %p118 = pneg %p56
      $region14: #{_detector_features_loss.4} parent=11 // pred_check_branch
        %120 = sbr.rel (%p118) target = $region16
      $region15: #{_detector_features_loss.4} parent=11 // pred_region
        _
      $region16: #{_detector_features_loss.4} parent=11 // pred_fallthru
        _
      // Predicated region
      $region17: #{_detector_features_loss.4} parent=11 // pred_check
        %p121 = pneg %p77
      $region18: #{_detector_features_loss.4} parent=11 // pred_check_branch
        %123 = sbr.rel (%p121) target = $region20
      $region19: #{_detector_features_loss.4} parent=11 // pred_region
        _
      $region20: #{_detector_features_loss.4} parent=11 // pred_fallthru
        _
    $region12: #{_detector_features_loss.4} parent=5 // pred_fallthru
      _
    %p124 = scmp.lt.s32.totalorder %s9, 4
    // Predicated region
    $region21: #{_detector_features_loss.4} parent=5 // pred_check
      %p125 = pneg %p124
    $region22: #{_detector_features_loss.4} parent=5 // pred_check_branch
      %127 = sbr.rel (%p125) target = $region24
    $region23: #{_detector_features_loss.4} parent=5 // pred_region
      // Predicated region
      $region25: #{_detector_features_loss.4} parent=23 // pred_check
        %p128 = pneg %p29
      $region26: #{_detector_features_loss.4} parent=23 // pred_check_branch
        %130 = sbr.rel (%p128) target = $region28
      $region27: #{_detector_features_loss.4} parent=23 // pred_region
        %p131 = scmp.lt.s32.totalorder %s9, 3
        %s132 = scalar_select %p131, %s9, 3
        %s133 = smul.addr %s132, 64
        %s134 = smul.addr %s133, 2
        %s135 = scalar_lea.vmem %s0, %s134
      $region28: #{_detector_features_loss.4} parent=23 // pred_fallthru
        _
    $region24: #{_detector_features_loss.4} parent=5 // pred_fallthru
      _
    %p136 = scmp.le.s32.totalorder 1, %s9
    %p137 = scmp.lt.s32.totalorder %s9, 5
    %p138 = pnand %p136, %p137
    %p139 = pneg %p138
    // Predicated region
    $region29: #{_detector_features_loss.4} parent=5 // pred_check
      _
    $region30: #{_detector_features_loss.4} parent=5 // pred_check_branch
      %141 = sbr.rel (%p138) target = $region32
    $region31: #{_detector_features_loss.4} parent=5 // pred_region
      %s142 = ssub.s32 %s9, 1
      %p143 = scmp.lt.s32.totalorder %s14, 3
      %s144 = scalar_select %p143, %s14, 3
      %s145 = smul.addr %s144, 64
      %s146 = smul.addr %s145, 2
      %s147 = scalar_lea.vmem %s0, %s146
      %p148 = pneg %p35
      %p149 = pneg %p32
      %p150 = pneg %p56
      %p151 = pneg %p53
      %p152 = pneg %p77
      %p153 = pneg %p74
      %p154 = pneg %p103
      %p155 = pneg %p100
      %p156 = scmp.lt.s32.totalorder %s14, 3
      %s157 = scalar_select %p156, %s14, 3
      %s158 = scalar_lea.vmem %s3, %s157
      %p159 = scmp.lt.s32.totalorder %s14, 3
      %s160 = scalar_select %p159, %s14, 3
      %s161 = smul.addr %s160, 64
      %s162 = smul.addr %s161, 2
      %s163 = scalar_lea.vmem %s0, %s162
      %p164 = scmp.lt.s32.totalorder %s14, 3
      %s165 = scalar_select %p164, %s14, 3
      %s166 = scalar_lea.vmem %s3, %s165
      %vm168 = vcmask 1042432
      %vm169 = vsmask.f32 2304
      %vm170 = vmand %vm168, %vm169
      %v171 = vld [vmem:[#allocation2] sm:$0x7]
      %v172 = vsel %vm170, 0, %v171
      %173 = vst [vmem:[#allocation2] sm:$0x7] %v172
      %v174 = vld [vmem:[#allocation2 + $0x4] sm:$0x7]
      %v175 = vsel %vm170, 0, %v174
      %176 = vst [vmem:[#allocation2 + $0x4] sm:$0x7] %v175
      %v177 = vld [vmem:[#allocation2 + $0x8] sm:$0x7]
      %v178 = vsel %vm170, 0, %v177
      %179 = vst [vmem:[#allocation2 + $0x8] sm:$0x7] %v178
      %v180 = vld [vmem:[#allocation2 + $0xc] sm:$0x7]
      %v181 = vsel %vm170, 0, %v180
      %182 = vst [vmem:[#allocation2 + $0xc] sm:$0x7] %v181
      %v183 = vld [vmem:[#allocation2 + $0x10] sm:$0x7]
      %v184 = vsel %vm170, 0, %v183
      %185 = vst [vmem:[#allocation2 + $0x10] sm:$0x7] %v184
      %v186 = vld [vmem:[#allocation2 + $0x14] sm:$0x7]
      %v187 = vsel %vm170, 0, %v186
      %188 = vst [vmem:[#allocation2 + $0x14] sm:$0x7] %v187
      %v189 = vld [vmem:[#allocation2 + $0x18] sm:$0x7]
      %v190 = vsel %vm170, 0, %v189
      %191 = vst [vmem:[#allocation2 + $0x18] sm:$0x7] %v190
      %v192 = vld [vmem:[#allocation2 + $0x1c] sm:$0x7]
      %v193 = vsel %vm170, 0, %v192
      %194 = vst [vmem:[#allocation2 + $0x1c] sm:$0x7] %v193
      %v195 = vld [vmem:[#allocation2 + $0x20] sm:$0x7]
      %v196 = vsel %vm170, 0, %v195
      %197 = vst [vmem:[#allocation2 + $0x20] sm:$0x7] %v196
      %v198 = vld [vmem:[#allocation2 + $0x24] sm:$0x7]
      %v199 = vsel %vm170, 0, %v198
      %200 = vst [vmem:[#allocation2 + $0x24] sm:$0x7] %v199
      %v201 = vld [vmem:[#allocation2 + $0x28] sm:$0x7]
      %v202 = vsel %vm170, 0, %v201
      %203 = vst [vmem:[#allocation2 + $0x28] sm:$0x7] %v202
      %v204 = vld [vmem:[#allocation2 + $0x2c] sm:$0x7]
      %v205 = vsel %vm170, 0, %v204
      %206 = vst [vmem:[#allocation2 + $0x2c] sm:$0x7] %v205
      %v207 = vld [vmem:[#allocation2 + $0x30] sm:$0x7]
      %v208 = vsel %vm170, 0, %v207
      %209 = vst [vmem:[#allocation2 + $0x30] sm:$0x7] %v208
      %v210 = vld [vmem:[#allocation2 + $0x34] sm:$0x7]
      %v211 = vsel %vm170, 0, %v210
      %212 = vst [vmem:[#allocation2 + $0x34] sm:$0x7] %v211
      %v213 = vld [vmem:[#allocation2 + $0x38] sm:$0x7]
      %v214 = vsel %vm170, 0, %v213
      %215 = vst [vmem:[#allocation2 + $0x38] sm:$0x7] %v214
      %v216 = vld [vmem:[#allocation2 + $0x3c] sm:$0x7]
      %v217 = vsel %vm170, 0, %v216
      %218 = vst [vmem:[#allocation2 + $0x3c] sm:$0x7] %v217
      %v219 = vld [vmem:[#allocation2 + $0x40] sm:$0x7]
      %v220 = vsel %vm170, 0, %v219
      %221 = vst [vmem:[#allocation2 + $0x40] sm:$0x7] %v220
      %v222 = vld [vmem:[#allocation2 + $0x44] sm:$0x7]
      %v223 = vsel %vm170, 0, %v222
      %224 = vst [vmem:[#allocation2 + $0x44] sm:$0x7] %v223
      %v225 = vld [vmem:[#allocation2 + $0x48] sm:$0x7]
      %v226 = vsel %vm170, 0, %v225
      %227 = vst [vmem:[#allocation2 + $0x48] sm:$0x7] %v226
      %v228 = vld [vmem:[#allocation2 + $0x4c] sm:$0x7]
      %v229 = vsel %vm170, 0, %v228
      %230 = vst [vmem:[#allocation2 + $0x4c] sm:$0x7] %v229
      %v231 = vld [vmem:[#allocation2 + $0x50] sm:$0x7]
      %v232 = vsel %vm170, 0, %v231
      %233 = vst [vmem:[#allocation2 + $0x50] sm:$0x7] %v232
      %v234 = vld [vmem:[#allocation2 + $0x54] sm:$0x7]
      %v235 = vsel %vm170, 0, %v234
      %236 = vst [vmem:[#allocation2 + $0x54] sm:$0x7] %v235
      %v237 = vld [vmem:[#allocation2 + $0x58] sm:$0x7]
      %v238 = vsel %vm170, 0, %v237
      %239 = vst [vmem:[#allocation2 + $0x58] sm:$0x7] %v238
      %v240 = vld [vmem:[#allocation2 + $0x5c] sm:$0x7]
      %v241 = vsel %vm170, 0, %v240
      %242 = vst [vmem:[#allocation2 + $0x5c] sm:$0x7] %v241
      %v243 = vld [vmem:[#allocation2 + $0x60] sm:$0x7]
      %v244 = vsel %vm170, 0, %v243
      %245 = vst [vmem:[#allocation2 + $0x60] sm:$0x7] %v244
      %v246 = vld [vmem:[#allocation2 + $0x64] sm:$0x7]
      %v247 = vsel %vm170, 0, %v246
      %248 = vst [vmem:[#allocation2 + $0x64] sm:$0x7] %v247
      %v249 = vld [vmem:[#allocation2 + $0x68] sm:$0x7]
      %v250 = vsel %vm170, 0, %v249
      %251 = vst [vmem:[#allocation2 + $0x68] sm:$0x7] %v250
      %v252 = vld [vmem:[#allocation2 + $0x6c] sm:$0x7]
      %v253 = vsel %vm170, 0, %v252
      %254 = vst [vmem:[#allocation2 + $0x6c] sm:$0x7] %v253
      %v255 = vld [vmem:[#allocation2 + $0x70] sm:$0x7]
      %v256 = vsel %vm170, 0, %v255
      %257 = vst [vmem:[#allocation2 + $0x70] sm:$0x7] %v256
      %v258 = vld [vmem:[#allocation2 + $0x74] sm:$0x7]
      %v259 = vsel %vm170, 0, %v258
      %260 = vst [vmem:[#allocation2 + $0x74] sm:$0x7] %v259
      %v261 = vld [vmem:[#allocation2 + $0x78] sm:$0x7]
      %v262 = vsel %vm170, 0, %v261
      %263 = vst [vmem:[#allocation2 + $0x78] sm:$0x7] %v262
      %v264 = vld [vmem:[#allocation2 + $0x7c] sm:$0x7]
      %v265 = vsel %vm170, 0, %v264
      %266 = vst [vmem:[#allocation2 + $0x7c] sm:$0x7] %v265
      %v267 = vld [vmem:[#allocation2 + $0x80] sm:$0x7]
      %v268 = vsel %vm170, 0, %v267
      %269 = vst [vmem:[#allocation2 + $0x80] sm:$0x7] %v268
      %v270 = vld [vmem:[#allocation2 + $0x84] sm:$0x7]
      %v271 = vsel %vm170, 0, %v270
      %272 = vst [vmem:[#allocation2 + $0x84] sm:$0x7] %v271
      %v273 = vld [vmem:[#allocation2 + $0x88] sm:$0x7]
      %v274 = vsel %vm170, 0, %v273
      %275 = vst [vmem:[#allocation2 + $0x88] sm:$0x7] %v274
      %v276 = vld [vmem:[#allocation2 + $0x8c] sm:$0x7]
      %v277 = vsel %vm170, 0, %v276
      %278 = vst [vmem:[#allocation2 + $0x8c] sm:$0x7] %v277
      %v279 = vld [vmem:[#allocation2 + $0x90] sm:$0x7]
      %v280 = vsel %vm170, 0, %v279
      %281 = vst [vmem:[#allocation2 + $0x90] sm:$0x7] %v280
      %v282 = vld [vmem:[#allocation2 + $0x94] sm:$0x7]
      %v283 = vsel %vm170, 0, %v282
      %284 = vst [vmem:[#allocation2 + $0x94] sm:$0x7] %v283
      %v285 = vld [vmem:[#allocation2 + $0x98] sm:$0x7]
      %v286 = vsel %vm170, 0, %v285
      %287 = vst [vmem:[#allocation2 + $0x98] sm:$0x7] %v286
      %v288 = vld [vmem:[#allocation2 + $0x9c] sm:$0x7]
      %v289 = vsel %vm170, 0, %v288
      %290 = vst [vmem:[#allocation2 + $0x9c] sm:$0x7] %v289
      %v291 = vld [vmem:[#allocation2 + $0xa0] sm:$0x7]
      %v292 = vsel %vm170, 0, %v291
      %293 = vst [vmem:[#allocation2 + $0xa0] sm:$0x7] %v292
      %v294 = vld [vmem:[#allocation2 + $0xa4] sm:$0x7]
      %v295 = vsel %vm170, 0, %v294
      %296 = vst [vmem:[#allocation2 + $0xa4] sm:$0x7] %v295
      %v297 = vld [vmem:[#allocation2 + $0xa8] sm:$0x7]
      %v298 = vsel %vm170, 0, %v297
      %299 = vst [vmem:[#allocation2 + $0xa8] sm:$0x7] %v298
      %v300 = vld [vmem:[#allocation2 + $0xac] sm:$0x7]
      %v301 = vsel %vm170, 0, %v300
      %302 = vst [vmem:[#allocation2 + $0xac] sm:$0x7] %v301
      %v303 = vld [vmem:[#allocation2 + $0xb0] sm:$0x7]
      %v304 = vsel %vm170, 0, %v303
      %305 = vst [vmem:[#allocation2 + $0xb0] sm:$0x7] %v304
      %v306 = vld [vmem:[#allocation2 + $0xb4] sm:$0x7]
      %v307 = vsel %vm170, 0, %v306
      %308 = vst [vmem:[#allocation2 + $0xb4] sm:$0x7] %v307
      %v309 = vld [vmem:[#allocation2 + $0xb8] sm:$0x7]
      %v310 = vsel %vm170, 0, %v309
      %311 = vst [vmem:[#allocation2 + $0xb8] sm:$0x7] %v310
      %v312 = vld [vmem:[#allocation2 + $0xbc] sm:$0x7]
      %v313 = vsel %vm170, 0, %v312
      %314 = vst [vmem:[#allocation2 + $0xbc] sm:$0x7] %v313
      %v315 = vld [vmem:[#allocation2 + $0xc0] sm:$0x7]
      %v316 = vsel %vm170, 0, %v315
      %317 = vst [vmem:[#allocation2 + $0xc0] sm:$0x7] %v316
      %v318 = vld [vmem:[#allocation2 + $0xc4] sm:$0x7]
      %v319 = vsel %vm170, 0, %v318
      %320 = vst [vmem:[#allocation2 + $0xc4] sm:$0x7] %v319
      %v321 = vld [vmem:[#allocation2 + $0xc8] sm:$0x7]
      %v322 = vsel %vm170, 0, %v321
      %323 = vst [vmem:[#allocation2 + $0xc8] sm:$0x7] %v322
      %v324 = vld [vmem:[#allocation2 + $0xcc] sm:$0x7]
      %v325 = vsel %vm170, 0, %v324
      %326 = vst [vmem:[#allocation2 + $0xcc] sm:$0x7] %v325
      %v327 = vld [vmem:[#allocation2 + $0xd0] sm:$0x7]
      %v328 = vsel %vm170, 0, %v327
      %329 = vst [vmem:[#allocation2 + $0xd0] sm:$0x7] %v328
      %v330 = vld [vmem:[#allocation2 + $0xd4] sm:$0x7]
      %v331 = vsel %vm170, 0, %v330
      %332 = vst [vmem:[#allocation2 + $0xd4] sm:$0x7] %v331
      %v333 = vld [vmem:[#allocation2 + $0xd8] sm:$0x7]
      %v334 = vsel %vm170, 0, %v333
      %335 = vst [vmem:[#allocation2 + $0xd8] sm:$0x7] %v334
      %v336 = vld [vmem:[#allocation2 + $0xdc] sm:$0x7]
      %v337 = vsel %vm170, 0, %v336
      %338 = vst [vmem:[#allocation2 + $0xdc] sm:$0x7] %v337
      %v339 = vld [vmem:[#allocation2 + $0xe0] sm:$0x7]
      %v340 = vsel %vm170, 0, %v339
      %341 = vst [vmem:[#allocation2 + $0xe0] sm:$0x7] %v340
      %v342 = vld [vmem:[#allocation2 + $0xe4] sm:$0x7]
      %v343 = vsel %vm170, 0, %v342
      %344 = vst [vmem:[#allocation2 + $0xe4] sm:$0x7] %v343
      %v345 = vld [vmem:[#allocation2 + $0xe8] sm:$0x7]
      %v346 = vsel %vm170, 0, %v345
      %347 = vst [vmem:[#allocation2 + $0xe8] sm:$0x7] %v346
      %v348 = vld [vmem:[#allocation2 + $0xec] sm:$0x7]
      %v349 = vsel %vm170, 0, %v348
      %350 = vst [vmem:[#allocation2 + $0xec] sm:$0x7] %v349
      %v351 = vld [vmem:[#allocation2 + $0xf0] sm:$0x7]
      %v352 = vsel %vm170, 0, %v351
      %353 = vst [vmem:[#allocation2 + $0xf0] sm:$0x7] %v352
      %v354 = vld [vmem:[#allocation2 + $0xf4] sm:$0x7]
      %v355 = vsel %vm170, 0, %v354
      %356 = vst [vmem:[#allocation2 + $0xf4] sm:$0x7] %v355
      %v357 = vld [vmem:[#allocation2 + $0xf8] sm:$0x7]
      %v358 = vsel %vm170, 0, %v357
      %359 = vst [vmem:[#allocation2 + $0xf8] sm:$0x7] %v358
      %v360 = vld [vmem:[#allocation2 + $0xfc] sm:$0x7]
      %v361 = vsel %vm170, 0, %v360
      %362 = vst [vmem:[#allocation2 + $0xfc] sm:$0x7] %v361
      %v363 = vld [vmem:[#allocation2 + $0x100] sm:$0x7]
      %v364 = vsel %vm170, 0, %v363
      %365 = vst [vmem:[#allocation2 + $0x100] sm:$0x7] %v364
      %v366 = vld [vmem:[#allocation2 + $0x104] sm:$0x7]
      %v367 = vsel %vm170, 0, %v366
      %368 = vst [vmem:[#allocation2 + $0x104] sm:$0x7] %v367
      %v369 = vld [vmem:[#allocation2 + $0x108] sm:$0x7]
      %v370 = vsel %vm170, 0, %v369
      %371 = vst [vmem:[#allocation2 + $0x108] sm:$0x7] %v370
      %v372 = vld [vmem:[#allocation2 + $0x10c] sm:$0x7]
      %v373 = vsel %vm170, 0, %v372
      %374 = vst [vmem:[#allocation2 + $0x10c] sm:$0x7] %v373
      %v375 = vld [vmem:[#allocation2 + $0x110] sm:$0x7]
      %v376 = vsel %vm170, 0, %v375
      %377 = vst [vmem:[#allocation2 + $0x110] sm:$0x7] %v376
      %v378 = vld [vmem:[#allocation2 + $0x114] sm:$0x7]
      %v379 = vsel %vm170, 0, %v378
      %380 = vst [vmem:[#allocation2 + $0x114] sm:$0x7] %v379
      %v381 = vld [vmem:[#allocation2 + $0x118] sm:$0x7]
      %v382 = vsel %vm170, 0, %v381
      %383 = vst [vmem:[#allocation2 + $0x118] sm:$0x7] %v382
      %v384 = vld [vmem:[#allocation2 + $0x11c] sm:$0x7]
      %v385 = vsel %vm170, 0, %v384
      %386 = vst [vmem:[#allocation2 + $0x11c] sm:$0x7] %v385
      %v387 = vld [vmem:[#allocation2 + $0x120] sm:$0x7]
      %v388 = vsel %vm170, 0, %v387
      %389 = vst [vmem:[#allocation2 + $0x120] sm:$0x7] %v388
      %v390 = vld [vmem:[#allocation2 + $0x124] sm:$0x7]
      %v391 = vsel %vm170, 0, %v390
      %392 = vst [vmem:[#allocation2 + $0x124] sm:$0x7] %v391
      %v393 = vld [vmem:[#allocation2 + $0x128] sm:$0x7]
      %v394 = vsel %vm170, 0, %v393
      %395 = vst [vmem:[#allocation2 + $0x128] sm:$0x7] %v394
      %v396 = vld [vmem:[#allocation2 + $0x12c] sm:$0x7]
      %v397 = vsel %vm170, 0, %v396
      %398 = vst [vmem:[#allocation2 + $0x12c] sm:$0x7] %v397
      %v399 = vld [vmem:[#allocation2 + $0x130] sm:$0x7]
      %v400 = vsel %vm170, 0, %v399
      %401 = vst [vmem:[#allocation2 + $0x130] sm:$0x7] %v400
      %v402 = vld [vmem:[#allocation2 + $0x134] sm:$0x7]
      %v403 = vsel %vm170, 0, %v402
      %404 = vst [vmem:[#allocation2 + $0x134] sm:$0x7] %v403
      %v405 = vld [vmem:[#allocation2 + $0x138] sm:$0x7]
      %v406 = vsel %vm170, 0, %v405
      %407 = vst [vmem:[#allocation2 + $0x138] sm:$0x7] %v406
      %v408 = vld [vmem:[#allocation2 + $0x13c] sm:$0x7]
      %v409 = vsel %vm170, 0, %v408
      %410 = vst [vmem:[#allocation2 + $0x13c] sm:$0x7] %v409
      %v411 = vld [vmem:[#allocation2 + $0x140] sm:$0x7]
      %v412 = vsel %vm170, 0, %v411
      %413 = vst [vmem:[#allocation2 + $0x140] sm:$0x7] %v412
      %v414 = vld [vmem:[#allocation2 + $0x144] sm:$0x7]
      %v415 = vsel %vm170, 0, %v414
      %416 = vst [vmem:[#allocation2 + $0x144] sm:$0x7] %v415
      %v417 = vld [vmem:[#allocation2 + $0x148] sm:$0x7]
      %v418 = vsel %vm170, 0, %v417
      %419 = vst [vmem:[#allocation2 + $0x148] sm:$0x7] %v418
      %v420 = vld [vmem:[#allocation2 + $0x14c] sm:$0x7]
      %v421 = vsel %vm170, 0, %v420
      %422 = vst [vmem:[#allocation2 + $0x14c] sm:$0x7] %v421
      %v423 = vld [vmem:[#allocation2 + $0x150] sm:$0x7]
      %v424 = vsel %vm170, 0, %v423
      %425 = vst [vmem:[#allocation2 + $0x150] sm:$0x7] %v424
      %v426 = vld [vmem:[#allocation2 + $0x154] sm:$0x7]
      %v427 = vsel %vm170, 0, %v426
      %428 = vst [vmem:[#allocation2 + $0x154] sm:$0x7] %v427
      %v429 = vld [vmem:[#allocation2 + $0x158] sm:$0x7]
      %v430 = vsel %vm170, 0, %v429
      %431 = vst [vmem:[#allocation2 + $0x158] sm:$0x7] %v430
      %v432 = vld [vmem:[#allocation2 + $0x15c] sm:$0x7]
      %v433 = vsel %vm170, 0, %v432
      %434 = vst [vmem:[#allocation2 + $0x15c] sm:$0x7] %v433
      %v435 = vld [vmem:[#allocation2 + $0x160] sm:$0x7]
      %v436 = vsel %vm170, 0, %v435
      %437 = vst [vmem:[#allocation2 + $0x160] sm:$0x7] %v436
      %v438 = vld [vmem:[#allocation2 + $0x164] sm:$0x7]
      %v439 = vsel %vm170, 0, %v438
      %440 = vst [vmem:[#allocation2 + $0x164] sm:$0x7] %v439
      %v441 = vld [vmem:[#allocation2 + $0x168] sm:$0x7]
      %v442 = vsel %vm170, 0, %v441
      %443 = vst [vmem:[#allocation2 + $0x168] sm:$0x7] %v442
      %v444 = vld [vmem:[#allocation2 + $0x16c] sm:$0x7]
      %v445 = vsel %vm170, 0, %v444
      %446 = vst [vmem:[#allocation2 + $0x16c] sm:$0x7] %v445
      %v447 = vld [vmem:[#allocation2 + $0x170] sm:$0x7]
      %v448 = vsel %vm170, 0, %v447
      %449 = vst [vmem:[#allocation2 + $0x170] sm:$0x7] %v448
      %v450 = vld [vmem:[#allocation2 + $0x174] sm:$0x7]
      %v451 = vsel %vm170, 0, %v450
      %452 = vst [vmem:[#allocation2 + $0x174] sm:$0x7] %v451
      %v453 = vld [vmem:[#allocation2 + $0x178] sm:$0x7]
      %v454 = vsel %vm170, 0, %v453
      %455 = vst [vmem:[#allocation2 + $0x178] sm:$0x7] %v454
      %v456 = vld [vmem:[#allocation2 + $0x17c] sm:$0x7]
      %v457 = vsel %vm170, 0, %v456
      %458 = vst [vmem:[#allocation2 + $0x17c] sm:$0x7] %v457
      %v459 = vld [vmem:[#allocation2 + $0x180] sm:$0x7]
      %v460 = vsel %vm170, 0, %v459
      %461 = vst [vmem:[#allocation2 + $0x180] sm:$0x7] %v460
      %v462 = vld [vmem:[#allocation2 + $0x184] sm:$0x7]
      %v463 = vsel %vm170, 0, %v462
      %464 = vst [vmem:[#allocation2 + $0x184] sm:$0x7] %v463
      %v465 = vld [vmem:[#allocation2 + $0x188] sm:$0x7]
      %v466 = vsel %vm170, 0, %v465
      %467 = vst [vmem:[#allocation2 + $0x188] sm:$0x7] %v466
      %v468 = vld [vmem:[#allocation2 + $0x18c] sm:$0x7]
      %v469 = vsel %vm170, 0, %v468
      %470 = vst [vmem:[#allocation2 + $0x18c] sm:$0x7] %v469
      %v471 = vld [vmem:[#allocation2 + $0x190] sm:$0x7]
      %v472 = vsel %vm170, 0, %v471
      %473 = vst [vmem:[#allocation2 + $0x190] sm:$0x7] %v472
      %v474 = vld [vmem:[#allocation2 + $0x194] sm:$0x7]
      %v475 = vsel %vm170, 0, %v474
      %476 = vst [vmem:[#allocation2 + $0x194] sm:$0x7] %v475
      %v477 = vld [vmem:[#allocation2 + $0x198] sm:$0x7]
      %v478 = vsel %vm170, 0, %v477
      %479 = vst [vmem:[#allocation2 + $0x198] sm:$0x7] %v478
      %v480 = vld [vmem:[#allocation2 + $0x19c] sm:$0x7]
      %v481 = vsel %vm170, 0, %v480
      %482 = vst [vmem:[#allocation2 + $0x19c] sm:$0x7] %v481
      %v483 = vld [vmem:[#allocation2 + $0x1a0] sm:$0x7]
      %v484 = vsel %vm170, 0, %v483
      %485 = vst [vmem:[#allocation2 + $0x1a0] sm:$0x7] %v484
      %v486 = vld [vmem:[#allocation2 + $0x1a4] sm:$0x7]
      %v487 = vsel %vm170, 0, %v486
      %488 = vst [vmem:[#allocation2 + $0x1a4] sm:$0x7] %v487
      %v489 = vld [vmem:[#allocation2 + $0x1a8] sm:$0x7]
      %v490 = vsel %vm170, 0, %v489
      %491 = vst [vmem:[#allocation2 + $0x1a8] sm:$0x7] %v490
      %v492 = vld [vmem:[#allocation2 + $0x1ac] sm:$0x7]
      %v493 = vsel %vm170, 0, %v492
      %494 = vst [vmem:[#allocation2 + $0x1ac] sm:$0x7] %v493
      %v495 = vld [vmem:[#allocation2 + $0x1b0] sm:$0x7]
      %v496 = vsel %vm170, 0, %v495
      %497 = vst [vmem:[#allocation2 + $0x1b0] sm:$0x7] %v496
      %v498 = vld [vmem:[#allocation2 + $0x1b4] sm:$0x7]
      %v499 = vsel %vm170, 0, %v498
      %500 = vst [vmem:[#allocation2 + $0x1b4] sm:$0x7] %v499
      %v501 = vld [vmem:[#allocation2 + $0x1b8] sm:$0x7]
      %v502 = vsel %vm170, 0, %v501
      %503 = vst [vmem:[#allocation2 + $0x1b8] sm:$0x7] %v502
      %v504 = vld [vmem:[#allocation2 + $0x1bc] sm:$0x7]
      %v505 = vsel %vm170, 0, %v504
      %506 = vst [vmem:[#allocation2 + $0x1bc] sm:$0x7] %v505
      %v507 = vld [vmem:[#allocation2 + $0x1c0] sm:$0x7]
      %v508 = vsel %vm170, 0, %v507
      %509 = vst [vmem:[#allocation2 + $0x1c0] sm:$0x7] %v508
      %v510 = vld [vmem:[#allocation2 + $0x1c4] sm:$0x7]
      %v511 = vsel %vm170, 0, %v510
      %512 = vst [vmem:[#allocation2 + $0x1c4] sm:$0x7] %v511
      %v513 = vld [vmem:[#allocation2 + $0x1c8] sm:$0x7]
      %v514 = vsel %vm170, 0, %v513
      %515 = vst [vmem:[#allocation2 + $0x1c8] sm:$0x7] %v514
      %v516 = vld [vmem:[#allocation2 + $0x1cc] sm:$0x7]
      %v517 = vsel %vm170, 0, %v516
      %518 = vst [vmem:[#allocation2 + $0x1cc] sm:$0x7] %v517
      %v519 = vld [vmem:[#allocation2 + $0x1d0] sm:$0x7]
      %v520 = vsel %vm170, 0, %v519
      %521 = vst [vmem:[#allocation2 + $0x1d0] sm:$0x7] %v520
      %v522 = vld [vmem:[#allocation2 + $0x1d4] sm:$0x7]
      %v523 = vsel %vm170, 0, %v522
      %524 = vst [vmem:[#allocation2 + $0x1d4] sm:$0x7] %v523
      %v525 = vld [vmem:[#allocation2 + $0x1d8] sm:$0x7]
      %v526 = vsel %vm170, 0, %v525
      %527 = vst [vmem:[#allocation2 + $0x1d8] sm:$0x7] %v526
      %v528 = vld [vmem:[#allocation2 + $0x1dc] sm:$0x7]
      %v529 = vsel %vm170, 0, %v528
      %530 = vst [vmem:[#allocation2 + $0x1dc] sm:$0x7] %v529
      %v531 = vld [vmem:[%s163] sm:$0x3]
      %v532 = vld [vmem:[%s163 + $0x2] sm:$0x3]
      %v533 = vld [vmem:[%s163 + $0x4] sm:$0x3]
      %v534 = vld [vmem:[%s163 + $0x6] sm:$0x3]
      %v535 = vld [vmem:[%s163 + $0x8] sm:$0x3]
      %v536 = vld [vmem:[%s163 + $0xa] sm:$0x3]
      %v537 = vld [vmem:[%s163 + $0xc] sm:$0x3]
      %v538 = vld [vmem:[%s163 + $0xe] sm:$0x3]
      %539 = vst [vmem:[#allocation2] sm:$0x3] %v531
      %540 = vst [vmem:[#allocation2 + $0x4] sm:$0x3] %v532
      %541 = vst [vmem:[#allocation2 + $0x8] sm:$0x3] %v533
      %542 = vst [vmem:[#allocation2 + $0xc] sm:$0x3] %v534
      %543 = vst [vmem:[#allocation2 + $0x14] sm:$0x3] %v535
      %544 = vst [vmem:[#allocation2 + $0x18] sm:$0x3] %v536
      %545 = vst [vmem:[#allocation2 + $0x1c] sm:$0x3] %v537
      %546 = vst [vmem:[#allocation2 + $0x20] sm:$0x3] %v538
      %s547 = scalar_lea.vmem %s163, 16
      %v548 = vld [vmem:[%s547] sm:$0x3]
      %v549 = vld [vmem:[%s547 + $0x2] sm:$0x3]
      %v550 = vld [vmem:[%s547 + $0x4] sm:$0x3]
      %v551 = vld [vmem:[%s547 + $0x6] sm:$0x3]
      %v552 = vld [vmem:[%s547 + $0x8] sm:$0x3]
      %v553 = vld [vmem:[%s547 + $0xa] sm:$0x3]
      %v554 = vld [vmem:[%s547 + $0xc] sm:$0x3]
      %v555 = vld [vmem:[%s547 + $0xe] sm:$0x3]
      %v565 = vunpack.c.l.s4 1983009808
      %v566 = vunpack.c.0.s8 %v565
      %v567 = vlaneseq
      %v568 = vshrl.u32 %v567, 7
      %v569 = vsub.s32 %v566, %v568
      %v570 = vrot.slane %v548, %v569
      %v572 = vunpack.c.l.s4 1983009808
      %v573 = vunpack.c.0.s8 %v572
      %v574 = vlaneseq
      %v575 = vshrl.u32 %v574, 7
      %v576 = vsub.s32 %v573, %v575
      %v577 = vrot.slane %v549, %v576
      %v579 = vunpack.c.l.s4 1983009808
      %v580 = vunpack.c.0.s8 %v579
      %v581 = vlaneseq
      %v582 = vshrl.u32 %v581, 7
      %v583 = vsub.s32 %v580, %v582
      %v584 = vrot.slane %v550, %v583
      %v586 = vunpack.c.l.s4 1983009808
      %v587 = vunpack.c.0.s8 %v586
      %v588 = vlaneseq
      %v589 = vshrl.u32 %v588, 7
      %v590 = vsub.s32 %v587, %v589
      %v591 = vrot.slane %v551, %v590
      %v593 = vunpack.c.l.s4 1983009808
      %v594 = vunpack.c.0.s8 %v593
      %v595 = vlaneseq
      %v596 = vshrl.u32 %v595, 7
      %v597 = vsub.s32 %v594, %v596
      %v598 = vrot.slane %v552, %v597
      %v600 = vunpack.c.l.s4 1983009808
      %v601 = vunpack.c.0.s8 %v600
      %v602 = vlaneseq
      %v603 = vshrl.u32 %v602, 7
      %v604 = vsub.s32 %v601, %v603
      %v605 = vrot.slane %v553, %v604
      %v607 = vunpack.c.l.s4 1983009808
      %v608 = vunpack.c.0.s8 %v607
      %v609 = vlaneseq
      %v610 = vshrl.u32 %v609, 7
      %v611 = vsub.s32 %v608, %v610
      %v612 = vrot.slane %v554, %v611
      %v614 = vunpack.c.l.s4 1983009808
      %v615 = vunpack.c.0.s8 %v614
      %v616 = vlaneseq
      %v617 = vshrl.u32 %v616, 7
      %v618 = vsub.s32 %v615, %v617
      %v619 = vrot.slane %v555, %v618
      %v621 = vshrl.u32 %v570, 16
      %v623 = vrot.slane %v621, 7
      %v624 = vshll.u32 %v570, 16
      %v626 = vor.u32 %v623, %v624
      %v628 = vshrl.u32 %v577, 16
      %v630 = vrot.slane %v628, 7
      %v631 = vshll.u32 %v577, 16
      %v633 = vor.u32 %v630, %v631
      %v635 = vshrl.u32 %v584, 16
      %v637 = vrot.slane %v635, 7
      %v638 = vshll.u32 %v584, 16
      %v640 = vor.u32 %v637, %v638
      %v642 = vshrl.u32 %v591, 16
      %v644 = vrot.slane %v642, 7
      %v645 = vshll.u32 %v591, 16
      %v647 = vor.u32 %v644, %v645
      %v649 = vshrl.u32 %v598, 16
      %v651 = vrot.slane %v649, 7
      %v652 = vshll.u32 %v598, 16
      %v654 = vor.u32 %v651, %v652
      %v656 = vshrl.u32 %v605, 16
      %v658 = vrot.slane %v656, 7
      %v659 = vshll.u32 %v605, 16
      %v661 = vor.u32 %v658, %v659
      %v663 = vshrl.u32 %v612, 16
      %v665 = vrot.slane %v663, 7
      %v666 = vshll.u32 %v612, 16
      %v668 = vor.u32 %v665, %v666
      %v670 = vshrl.u32 %v619, 16
      %v672 = vrot.slane %v670, 7
      %v673 = vshll.u32 %v619, 16
      %v675 = vor.u32 %v672, %v673
      %s684 = scalar_lea.vmem [#allocation2], 60
      %vm685 = vsmask.f32 2306
      %vm686 = vmand %vm168, %vm685
      %v687 = vld [vmem:[%s684] sm:$0x7]
      %v688 = vsel %vm686, %v626, %v687
      %689 = vst [vmem:[%s684] sm:$0x7] %v688
      %v690 = vld [vmem:[%s684 + $0x4] sm:$0x7]
      %v691 = vsel %vm686, %v633, %v690
      %692 = vst [vmem:[%s684 + $0x4] sm:$0x7] %v691
      %v693 = vld [vmem:[%s684 + $0x8] sm:$0x7]
      %v694 = vsel %vm686, %v640, %v693
      %695 = vst [vmem:[%s684 + $0x8] sm:$0x7] %v694
      %v696 = vld [vmem:[%s684 + $0xc] sm:$0x7]
      %v697 = vsel %vm686, %v647, %v696
      %698 = vst [vmem:[%s684 + $0xc] sm:$0x7] %v697
      %v699 = vld [vmem:[%s684 + $0x14] sm:$0x7]
      %v700 = vsel %vm686, %v654, %v699
      %701 = vst [vmem:[%s684 + $0x14] sm:$0x7] %v700
      %v702 = vld [vmem:[%s684 + $0x18] sm:$0x7]
      %v703 = vsel %vm686, %v661, %v702
      %704 = vst [vmem:[%s684 + $0x18] sm:$0x7] %v703
      %v705 = vld [vmem:[%s684 + $0x1c] sm:$0x7]
      %v706 = vsel %vm686, %v668, %v705
      %707 = vst [vmem:[%s684 + $0x1c] sm:$0x7] %v706
      %v708 = vld [vmem:[%s684 + $0x20] sm:$0x7]
      %v709 = vsel %vm686, %v675, %v708
      %710 = vst [vmem:[%s684 + $0x20] sm:$0x7] %v709
      %s711 = scalar_lea.vmem %s163, 32
      %v712 = vld [vmem:[%s711] sm:$0x3]
      %v713 = vld [vmem:[%s711 + $0x2] sm:$0x3]
      %v714 = vld [vmem:[%s711 + $0x4] sm:$0x3]
      %v715 = vld [vmem:[%s711 + $0x6] sm:$0x3]
      %v716 = vld [vmem:[%s711 + $0x8] sm:$0x3]
      %v717 = vld [vmem:[%s711 + $0xa] sm:$0x3]
      %v718 = vld [vmem:[%s711 + $0xc] sm:$0x3]
      %v719 = vld [vmem:[%s711 + $0xe] sm:$0x3]
      %s720 = scalar_lea.vmem [#allocation2], 124
      %721 = vst [vmem:[%s720] sm:$0x3] %v712
      %722 = vst [vmem:[%s720 + $0x4] sm:$0x3] %v713
      %723 = vst [vmem:[%s720 + $0x8] sm:$0x3] %v714
      %724 = vst [vmem:[%s720 + $0xc] sm:$0x3] %v715
      %725 = vst [vmem:[%s720 + $0x14] sm:$0x3] %v716
      %726 = vst [vmem:[%s720 + $0x18] sm:$0x3] %v717
      %727 = vst [vmem:[%s720 + $0x1c] sm:$0x3] %v718
      %728 = vst [vmem:[%s720 + $0x20] sm:$0x3] %v719
      %s729 = scalar_lea.vmem %s163, 48
      %v730 = vld [vmem:[%s729] sm:$0x3]
      %v731 = vld [vmem:[%s729 + $0x2] sm:$0x3]
      %v732 = vld [vmem:[%s729 + $0x4] sm:$0x3]
      %v733 = vld [vmem:[%s729 + $0x6] sm:$0x3]
      %v734 = vld [vmem:[%s729 + $0x8] sm:$0x3]
      %v735 = vld [vmem:[%s729 + $0xa] sm:$0x3]
      %v736 = vld [vmem:[%s729 + $0xc] sm:$0x3]
      %v737 = vld [vmem:[%s729 + $0xe] sm:$0x3]
      %v747 = vunpack.c.l.s4 1983009808
      %v748 = vunpack.c.0.s8 %v747
      %v749 = vlaneseq
      %v750 = vshrl.u32 %v749, 7
      %v751 = vsub.s32 %v748, %v750
      %v752 = vrot.slane %v730, %v751
      %v754 = vunpack.c.l.s4 1983009808
      %v755 = vunpack.c.0.s8 %v754
      %v756 = vlaneseq
      %v757 = vshrl.u32 %v756, 7
      %v758 = vsub.s32 %v755, %v757
      %v759 = vrot.slane %v731, %v758
      %v761 = vunpack.c.l.s4 1983009808
      %v762 = vunpack.c.0.s8 %v761
      %v763 = vlaneseq
      %v764 = vshrl.u32 %v763, 7
      %v765 = vsub.s32 %v762, %v764
      %v766 = vrot.slane %v732, %v765
      %v768 = vunpack.c.l.s4 1983009808
      %v769 = vunpack.c.0.s8 %v768
      %v770 = vlaneseq
      %v771 = vshrl.u32 %v770, 7
      %v772 = vsub.s32 %v769, %v771
      %v773 = vrot.slane %v733, %v772
      %v775 = vunpack.c.l.s4 1983009808
      %v776 = vunpack.c.0.s8 %v775
      %v777 = vlaneseq
      %v778 = vshrl.u32 %v777, 7
      %v779 = vsub.s32 %v776, %v778
      %v780 = vrot.slane %v734, %v779
      %v782 = vunpack.c.l.s4 1983009808
      %v783 = vunpack.c.0.s8 %v782
      %v784 = vlaneseq
      %v785 = vshrl.u32 %v784, 7
      %v786 = vsub.s32 %v783, %v785
      %v787 = vrot.slane %v735, %v786
      %v789 = vunpack.c.l.s4 1983009808
      %v790 = vunpack.c.0.s8 %v789
      %v791 = vlaneseq
      %v792 = vshrl.u32 %v791, 7
      %v793 = vsub.s32 %v790, %v792
      %v794 = vrot.slane %v736, %v793
      %v796 = vunpack.c.l.s4 1983009808
      %v797 = vunpack.c.0.s8 %v796
      %v798 = vlaneseq
      %v799 = vshrl.u32 %v798, 7
      %v800 = vsub.s32 %v797, %v799
      %v801 = vrot.slane %v737, %v800
      %v803 = vshrl.u32 %v752, 16
      %v805 = vrot.slane %v803, 7
      %v806 = vshll.u32 %v752, 16
      %v808 = vor.u32 %v805, %v806
      %v810 = vshrl.u32 %v759, 16
      %v812 = vrot.slane %v810, 7
      %v813 = vshll.u32 %v759, 16
      %v815 = vor.u32 %v812, %v813
      %v817 = vshrl.u32 %v766, 16
      %v819 = vrot.slane %v817, 7
      %v820 = vshll.u32 %v766, 16
      %v822 = vor.u32 %v819, %v820
      %v824 = vshrl.u32 %v773, 16
      %v826 = vrot.slane %v824, 7
      %v827 = vshll.u32 %v773, 16
      %v829 = vor.u32 %v826, %v827
      %v831 = vshrl.u32 %v780, 16
      %v833 = vrot.slane %v831, 7
      %v834 = vshll.u32 %v780, 16
      %v836 = vor.u32 %v833, %v834
      %v838 = vshrl.u32 %v787, 16
      %v840 = vrot.slane %v838, 7
      %v841 = vshll.u32 %v787, 16
      %v843 = vor.u32 %v840, %v841
      %v845 = vshrl.u32 %v794, 16
      %v847 = vrot.slane %v845, 7
      %v848 = vshll.u32 %v794, 16
      %v850 = vor.u32 %v847, %v848
      %v852 = vshrl.u32 %v801, 16
      %v854 = vrot.slane %v852, 7
      %v855 = vshll.u32 %v801, 16
      %v857 = vor.u32 %v854, %v855
      %s866 = scalar_lea.vmem [#allocation2], 184
      %v867 = vld [vmem:[%s866] sm:$0x7]
      %v868 = vsel %vm686, %v808, %v867
      %869 = vst [vmem:[%s866] sm:$0x7] %v868
      %v870 = vld [vmem:[%s866 + $0x4] sm:$0x7]
      %v871 = vsel %vm686, %v815, %v870
      %872 = vst [vmem:[%s866 + $0x4] sm:$0x7] %v871
      %v873 = vld [vmem:[%s866 + $0x8] sm:$0x7]
      %v874 = vsel %vm686, %v822, %v873
      %875 = vst [vmem:[%s866 + $0x8] sm:$0x7] %v874
      %v876 = vld [vmem:[%s866 + $0xc] sm:$0x7]
      %v877 = vsel %vm686, %v829, %v876
      %878 = vst [vmem:[%s866 + $0xc] sm:$0x7] %v877
      %v879 = vld [vmem:[%s866 + $0x14] sm:$0x7]
      %v880 = vsel %vm686, %v836, %v879
      %881 = vst [vmem:[%s866 + $0x14] sm:$0x7] %v880
      %v882 = vld [vmem:[%s866 + $0x18] sm:$0x7]
      %v883 = vsel %vm686, %v843, %v882
      %884 = vst [vmem:[%s866 + $0x18] sm:$0x7] %v883
      %v885 = vld [vmem:[%s866 + $0x1c] sm:$0x7]
      %v886 = vsel %vm686, %v850, %v885
      %887 = vst [vmem:[%s866 + $0x1c] sm:$0x7] %v886
      %v888 = vld [vmem:[%s866 + $0x20] sm:$0x7]
      %v889 = vsel %vm686, %v857, %v888
      %890 = vst [vmem:[%s866 + $0x20] sm:$0x7] %v889
      %s891 = scalar_lea.vmem %s163, 64
      %v892 = vld [vmem:[%s891] sm:$0x3]
      %v893 = vld [vmem:[%s891 + $0x2] sm:$0x3]
      %v894 = vld [vmem:[%s891 + $0x4] sm:$0x3]
      %v895 = vld [vmem:[%s891 + $0x6] sm:$0x3]
      %v896 = vld [vmem:[%s891 + $0x8] sm:$0x3]
      %v897 = vld [vmem:[%s891 + $0xa] sm:$0x3]
      %v898 = vld [vmem:[%s891 + $0xc] sm:$0x3]
      %v899 = vld [vmem:[%s891 + $0xe] sm:$0x3]
      %s900 = scalar_lea.vmem [#allocation2], 260
      %901 = vst [vmem:[%s900] sm:$0x3] %v892
      %902 = vst [vmem:[%s900 + $0x4] sm:$0x3] %v893
      %903 = vst [vmem:[%s900 + $0x8] sm:$0x3] %v894
      %904 = vst [vmem:[%s900 + $0xc] sm:$0x3] %v895
      %905 = vst [vmem:[%s900 + $0x14] sm:$0x3] %v896
      %906 = vst [vmem:[%s900 + $0x18] sm:$0x3] %v897
      %907 = vst [vmem:[%s900 + $0x1c] sm:$0x3] %v898
      %908 = vst [vmem:[%s900 + $0x20] sm:$0x3] %v899
      %s909 = scalar_lea.vmem %s163, 80
      %v910 = vld [vmem:[%s909] sm:$0x3]
      %v911 = vld [vmem:[%s909 + $0x2] sm:$0x3]
      %v912 = vld [vmem:[%s909 + $0x4] sm:$0x3]
      %v913 = vld [vmem:[%s909 + $0x6] sm:$0x3]
      %v914 = vld [vmem:[%s909 + $0x8] sm:$0x3]
      %v915 = vld [vmem:[%s909 + $0xa] sm:$0x3]
      %v916 = vld [vmem:[%s909 + $0xc] sm:$0x3]
      %v917 = vld [vmem:[%s909 + $0xe] sm:$0x3]
      %v927 = vunpack.c.l.s4 1983009808
      %v928 = vunpack.c.0.s8 %v927
      %v929 = vlaneseq
      %v930 = vshrl.u32 %v929, 7
      %v931 = vsub.s32 %v928, %v930
      %v932 = vrot.slane %v910, %v931
      %v934 = vunpack.c.l.s4 1983009808
      %v935 = vunpack.c.0.s8 %v934
      %v936 = vlaneseq
      %v937 = vshrl.u32 %v936, 7
      %v938 = vsub.s32 %v935, %v937
      %v939 = vrot.slane %v911, %v938
      %v941 = vunpack.c.l.s4 1983009808
      %v942 = vunpack.c.0.s8 %v941
      %v943 = vlaneseq
      %v944 = vshrl.u32 %v943, 7
      %v945 = vsub.s32 %v942, %v944
      %v946 = vrot.slane %v912, %v945
      %v948 = vunpack.c.l.s4 1983009808
      %v949 = vunpack.c.0.s8 %v948
      %v950 = vlaneseq
      %v951 = vshrl.u32 %v950, 7
      %v952 = vsub.s32 %v949, %v951
      %v953 = vrot.slane %v913, %v952
      %v955 = vunpack.c.l.s4 1983009808
      %v956 = vunpack.c.0.s8 %v955
      %v957 = vlaneseq
      %v958 = vshrl.u32 %v957, 7
      %v959 = vsub.s32 %v956, %v958
      %v960 = vrot.slane %v914, %v959
      %v962 = vunpack.c.l.s4 1983009808
      %v963 = vunpack.c.0.s8 %v962
      %v964 = vlaneseq
      %v965 = vshrl.u32 %v964, 7
      %v966 = vsub.s32 %v963, %v965
      %v967 = vrot.slane %v915, %v966
      %v969 = vunpack.c.l.s4 1983009808
      %v970 = vunpack.c.0.s8 %v969
      %v971 = vlaneseq
      %v972 = vshrl.u32 %v971, 7
      %v973 = vsub.s32 %v970, %v972
      %v974 = vrot.slane %v916, %v973
      %v976 = vunpack.c.l.s4 1983009808
      %v977 = vunpack.c.0.s8 %v976
      %v978 = vlaneseq
      %v979 = vshrl.u32 %v978, 7
      %v980 = vsub.s32 %v977, %v979
      %v981 = vrot.slane %v917, %v980
      %v983 = vshrl.u32 %v932, 16
      %v985 = vrot.slane %v983, 7
      %v986 = vshll.u32 %v932, 16
      %v988 = vor.u32 %v985, %v986
      %v990 = vshrl.u32 %v939, 16
      %v992 = vrot.slane %v990, 7
      %v993 = vshll.u32 %v939, 16
      %v995 = vor.u32 %v992, %v993
      %v997 = vshrl.u32 %v946, 16
      %v999 = vrot.slane %v997, 7
      %v1000 = vshll.u32 %v946, 16
      %v1002 = vor.u32 %v999, %v1000
      %v1004 = vshrl.u32 %v953, 16
      %v1006 = vrot.slane %v1004, 7
      %v1007 = vshll.u32 %v953, 16
      %v1009 = vor.u32 %v1006, %v1007
      %v1011 = vshrl.u32 %v960, 16
      %v1013 = vrot.slane %v1011, 7
      %v1014 = vshll.u32 %v960, 16
      %v1016 = vor.u32 %v1013, %v1014
      %v1018 = vshrl.u32 %v967, 16
      %v1020 = vrot.slane %v1018, 7
      %v1021 = vshll.u32 %v967, 16
      %v1023 = vor.u32 %v1020, %v1021
      %v1025 = vshrl.u32 %v974, 16
      %v1027 = vrot.slane %v1025, 7
      %v1028 = vshll.u32 %v974, 16
      %v1030 = vor.u32 %v1027, %v1028
      %v1032 = vshrl.u32 %v981, 16
      %v1034 = vrot.slane %v1032, 7
      %v1035 = vshll.u32 %v981, 16
      %v1037 = vor.u32 %v1034, %v1035
      %s1046 = scalar_lea.vmem [#allocation2], 320
      %v1047 = vld [vmem:[%s1046] sm:$0x7]
      %v1048 = vsel %vm686, %v988, %v1047
      %1049 = vst [vmem:[%s1046] sm:$0x7] %v1048
      %v1050 = vld [vmem:[%s1046 + $0x4] sm:$0x7]
      %v1051 = vsel %vm686, %v995, %v1050
      %1052 = vst [vmem:[%s1046 + $0x4] sm:$0x7] %v1051
      %v1053 = vld [vmem:[%s1046 + $0x8] sm:$0x7]
      %v1054 = vsel %vm686, %v1002, %v1053
      %1055 = vst [vmem:[%s1046 + $0x8] sm:$0x7] %v1054
      %v1056 = vld [vmem:[%s1046 + $0xc] sm:$0x7]
      %v1057 = vsel %vm686, %v1009, %v1056
      %1058 = vst [vmem:[%s1046 + $0xc] sm:$0x7] %v1057
      %v1059 = vld [vmem:[%s1046 + $0x14] sm:$0x7]
      %v1060 = vsel %vm686, %v1016, %v1059
      %1061 = vst [vmem:[%s1046 + $0x14] sm:$0x7] %v1060
      %v1062 = vld [vmem:[%s1046 + $0x18] sm:$0x7]
      %v1063 = vsel %vm686, %v1023, %v1062
      %1064 = vst [vmem:[%s1046 + $0x18] sm:$0x7] %v1063
      %v1065 = vld [vmem:[%s1046 + $0x1c] sm:$0x7]
      %v1066 = vsel %vm686, %v1030, %v1065
      %1067 = vst [vmem:[%s1046 + $0x1c] sm:$0x7] %v1066
      %v1068 = vld [vmem:[%s1046 + $0x20] sm:$0x7]
      %v1069 = vsel %vm686, %v1037, %v1068
      %1070 = vst [vmem:[%s1046 + $0x20] sm:$0x7] %v1069
      %s1071 = scalar_lea.vmem %s163, 96
      %v1072 = vld [vmem:[%s1071] sm:$0x3]
      %v1073 = vld [vmem:[%s1071 + $0x2] sm:$0x3]
      %v1074 = vld [vmem:[%s1071 + $0x4] sm:$0x3]
      %v1075 = vld [vmem:[%s1071 + $0x6] sm:$0x3]
      %v1076 = vld [vmem:[%s1071 + $0x8] sm:$0x3]
      %v1077 = vld [vmem:[%s1071 + $0xa] sm:$0x3]
      %v1078 = vld [vmem:[%s1071 + $0xc] sm:$0x3]
      %v1079 = vld [vmem:[%s1071 + $0xe] sm:$0x3]
      %s1080 = scalar_lea.vmem [#allocation2], 384
      %1081 = vst [vmem:[%s1080] sm:$0x3] %v1072
      %1082 = vst [vmem:[%s1080 + $0x4] sm:$0x3] %v1073
      %1083 = vst [vmem:[%s1080 + $0x8] sm:$0x3] %v1074
      %1084 = vst [vmem:[%s1080 + $0xc] sm:$0x3] %v1075
      %1085 = vst [vmem:[%s1080 + $0x14] sm:$0x3] %v1076
      %1086 = vst [vmem:[%s1080 + $0x18] sm:$0x3] %v1077
      %1087 = vst [vmem:[%s1080 + $0x1c] sm:$0x3] %v1078
      %1088 = vst [vmem:[%s1080 + $0x20] sm:$0x3] %v1079
      %s1089 = scalar_lea.vmem %s163, 112
      %v1090 = vld [vmem:[%s1089] sm:$0x3]
      %v1091 = vld [vmem:[%s1089 + $0x2] sm:$0x3]
      %v1092 = vld [vmem:[%s1089 + $0x4] sm:$0x3]
      %v1093 = vld [vmem:[%s1089 + $0x6] sm:$0x3]
      %v1094 = vld [vmem:[%s1089 + $0x8] sm:$0x3]
      %v1095 = vld [vmem:[%s1089 + $0xa] sm:$0x3]
      %v1096 = vld [vmem:[%s1089 + $0xc] sm:$0x3]
      %v1097 = vld [vmem:[%s1089 + $0xe] sm:$0x3]
      %v1107 = vunpack.c.l.s4 1983009808
      %v1108 = vunpack.c.0.s8 %v1107
      %v1109 = vlaneseq
      %v1110 = vshrl.u32 %v1109, 7
      %v1111 = vsub.s32 %v1108, %v1110
      %v1112 = vrot.slane %v1090, %v1111
      %v1114 = vunpack.c.l.s4 1983009808
      %v1115 = vunpack.c.0.s8 %v1114
      %v1116 = vlaneseq
      %v1117 = vshrl.u32 %v1116, 7
      %v1118 = vsub.s32 %v1115, %v1117
      %v1119 = vrot.slane %v1091, %v1118
      %v1121 = vunpack.c.l.s4 1983009808
      %v1122 = vunpack.c.0.s8 %v1121
      %v1123 = vlaneseq
      %v1124 = vshrl.u32 %v1123, 7
      %v1125 = vsub.s32 %v1122, %v1124
      %v1126 = vrot.slane %v1092, %v1125
      %v1128 = vunpack.c.l.s4 1983009808
      %v1129 = vunpack.c.0.s8 %v1128
      %v1130 = vlaneseq
      %v1131 = vshrl.u32 %v1130, 7
      %v1132 = vsub.s32 %v1129, %v1131
      %v1133 = vrot.slane %v1093, %v1132
      %v1135 = vunpack.c.l.s4 1983009808
      %v1136 = vunpack.c.0.s8 %v1135
      %v1137 = vlaneseq
      %v1138 = vshrl.u32 %v1137, 7
      %v1139 = vsub.s32 %v1136, %v1138
      %v1140 = vrot.slane %v1094, %v1139
      %v1142 = vunpack.c.l.s4 1983009808
      %v1143 = vunpack.c.0.s8 %v1142
      %v1144 = vlaneseq
      %v1145 = vshrl.u32 %v1144, 7
      %v1146 = vsub.s32 %v1143, %v1145
      %v1147 = vrot.slane %v1095, %v1146
      %v1149 = vunpack.c.l.s4 1983009808
      %v1150 = vunpack.c.0.s8 %v1149
      %v1151 = vlaneseq
      %v1152 = vshrl.u32 %v1151, 7
      %v1153 = vsub.s32 %v1150, %v1152
      %v1154 = vrot.slane %v1096, %v1153
      %v1156 = vunpack.c.l.s4 1983009808
      %v1157 = vunpack.c.0.s8 %v1156
      %v1158 = vlaneseq
      %v1159 = vshrl.u32 %v1158, 7
      %v1160 = vsub.s32 %v1157, %v1159
      %v1161 = vrot.slane %v1097, %v1160
      %v1163 = vshrl.u32 %v1112, 16
      %v1165 = vrot.slane %v1163, 7
      %v1166 = vshll.u32 %v1112, 16
      %v1168 = vor.u32 %v1165, %v1166
      %v1170 = vshrl.u32 %v1119, 16
      %v1172 = vrot.slane %v1170, 7
      %v1173 = vshll.u32 %v1119, 16
      %v1175 = vor.u32 %v1172, %v1173
      %v1177 = vshrl.u32 %v1126, 16
      %v1179 = vrot.slane %v1177, 7
      %v1180 = vshll.u32 %v1126, 16
      %v1182 = vor.u32 %v1179, %v1180
      %v1184 = vshrl.u32 %v1133, 16
      %v1186 = vrot.slane %v1184, 7
      %v1187 = vshll.u32 %v1133, 16
      %v1189 = vor.u32 %v1186, %v1187
      %v1191 = vshrl.u32 %v1140, 16
      %v1193 = vrot.slane %v1191, 7
      %v1194 = vshll.u32 %v1140, 16
      %v1196 = vor.u32 %v1193, %v1194
      %v1198 = vshrl.u32 %v1147, 16
      %v1200 = vrot.slane %v1198, 7
      %v1201 = vshll.u32 %v1147, 16
      %v1203 = vor.u32 %v1200, %v1201
      %v1205 = vshrl.u32 %v1154, 16
      %v1207 = vrot.slane %v1205, 7
      %v1208 = vshll.u32 %v1154, 16
      %v1210 = vor.u32 %v1207, %v1208
      %v1212 = vshrl.u32 %v1161, 16
      %v1214 = vrot.slane %v1212, 7
      %v1215 = vshll.u32 %v1161, 16
      %v1217 = vor.u32 %v1214, %v1215
      %s1226 = scalar_lea.vmem [#allocation2], 444
      %v1227 = vld [vmem:[%s1226] sm:$0x7]
      %v1228 = vsel %vm686, %v1168, %v1227
      %1229 = vst [vmem:[%s1226] sm:$0x7] %v1228
      %v1230 = vld [vmem:[%s1226 + $0x4] sm:$0x7]
      %v1231 = vsel %vm686, %v1175, %v1230
      %1232 = vst [vmem:[%s1226 + $0x4] sm:$0x7] %v1231
      %v1233 = vld [vmem:[%s1226 + $0x8] sm:$0x7]
      %v1234 = vsel %vm686, %v1182, %v1233
      %1235 = vst [vmem:[%s1226 + $0x8] sm:$0x7] %v1234
      %v1236 = vld [vmem:[%s1226 + $0xc] sm:$0x7]
      %v1237 = vsel %vm686, %v1189, %v1236
      %1238 = vst [vmem:[%s1226 + $0xc] sm:$0x7] %v1237
      %v1239 = vld [vmem:[%s1226 + $0x14] sm:$0x7]
      %v1240 = vsel %vm686, %v1196, %v1239
      %1241 = vst [vmem:[%s1226 + $0x14] sm:$0x7] %v1240
      %v1242 = vld [vmem:[%s1226 + $0x18] sm:$0x7]
      %v1243 = vsel %vm686, %v1203, %v1242
      %1244 = vst [vmem:[%s1226 + $0x18] sm:$0x7] %v1243
      %v1245 = vld [vmem:[%s1226 + $0x1c] sm:$0x7]
      %v1246 = vsel %vm686, %v1210, %v1245
      %1247 = vst [vmem:[%s1226 + $0x1c] sm:$0x7] %v1246
      %v1248 = vld [vmem:[%s1226 + $0x20] sm:$0x7]
      %v1249 = vsel %vm686, %v1217, %v1248
      %1250 = vst [vmem:[%s1226 + $0x20] sm:$0x7] %v1249
      %v1251 = vld [vmem:[%s2] sm:$0x1]
      %v1253 = vlaneseq
      %v1254 = vshrl.u32 %v1253, 7
      %v1255 = vsub.s32 0, %v1254
      %v1256 = vrot.slane %v1251, %v1255
      %1258 = vst [vmem:[#allocation4] sm:$0xff] %v1256
      %1259 = vst [vmem:[#allocation4 + $0x8] sm:$0xff] %v1256
      %1260 = vst [vmem:[#allocation4 + $0x10] sm:$0xff] %v1256
      %1261 = vst [vmem:[#allocation4 + $0x18] sm:$0xff] %v1256
      %s1262 = scalar_lea.vmem [#allocation2], 420
      %v1263 = vld [vmem:[%s1262] sm:$0x3]
      %v1264 = vld [vmem:[%s1262 + $0x4] sm:$0x3]
      %v1265 = vld [vmem:[%s1262 + $0x8] sm:$0x3]
      %v1266 = vld [vmem:[%s1262 + $0xc] sm:$0x3]
      %v1267 = vld [vmem:[%s1262 + $0x14] sm:$0x3]
      %v1268 = vld [vmem:[%s1262 + $0x18] sm:$0x3]
      %v1269 = vld [vmem:[%s1262 + $0x1c] sm:$0x3]
      %v1270 = vld [vmem:[%s1262 + $0x20] sm:$0x3]
      %v1279 = vcombine.low %v1263, %v1264
      %v1281 = vunpack.c.l.s4 1983009808
      %v1282 = vunpack.c.0.s8 %v1281
      %v1283 = vlaneseq
      %v1284 = vshrl.u32 %v1283, 7
      %v1285 = vsub.s32 %v1282, %v1284
      %v1286 = vrot.slane %v1279, %v1285
      %v1287 = vcombine.low %v1265, %v1266
      %v1289 = vunpack.c.l.s4 1983009808
      %v1290 = vunpack.c.0.s8 %v1289
      %v1291 = vlaneseq
      %v1292 = vshrl.u32 %v1291, 7
      %v1293 = vsub.s32 %v1290, %v1292
      %v1294 = vrot.slane %v1287, %v1293
      %v1295 = vcombine.low %v1267, %v1268
      %v1297 = vunpack.c.l.s4 1983009808
      %v1298 = vunpack.c.0.s8 %v1297
      %v1299 = vlaneseq
      %v1300 = vshrl.u32 %v1299, 7
      %v1301 = vsub.s32 %v1298, %v1300
      %v1302 = vrot.slane %v1295, %v1301
      %v1303 = vcombine.low %v1269, %v1270
      %v1305 = vunpack.c.l.s4 1983009808
      %v1306 = vunpack.c.0.s8 %v1305
      %v1307 = vlaneseq
      %v1308 = vshrl.u32 %v1307, 7
      %v1309 = vsub.s32 %v1306, %v1308
      %v1310 = vrot.slane %v1303, %v1309
      %1315 = vst [vmem:[#allocation3] sm:$0xf] %v1286
      %1316 = vst [vmem:[#allocation3 + $0x8] sm:$0xf] %v1294
      %1317 = vst [vmem:[#allocation3 + $0x10] sm:$0xf] %v1302
      %1318 = vst [vmem:[#allocation3 + $0x18] sm:$0xf] %v1310
      %s1319 = scalar_lea.vmem [#allocation2], 360
      %v1320 = vld [vmem:[%s1319] sm:$0x3]
      %v1321 = vld [vmem:[%s1319 + $0x4] sm:$0x3]
      %v1322 = vld [vmem:[%s1319 + $0x8] sm:$0x3]
      %v1323 = vld [vmem:[%s1319 + $0xc] sm:$0x3]
      %v1324 = vld [vmem:[%s1319 + $0x14] sm:$0x3]
      %v1325 = vld [vmem:[%s1319 + $0x18] sm:$0x3]
      %v1326 = vld [vmem:[%s1319 + $0x1c] sm:$0x3]
      %v1327 = vld [vmem:[%s1319 + $0x20] sm:$0x3]
      %v1336 = vcombine.low %v1320, %v1321
      %v1338 = vunpack.c.l.s4 1983009808
      %v1339 = vunpack.c.0.s8 %v1338
      %v1340 = vlaneseq
      %v1341 = vshrl.u32 %v1340, 7
      %v1342 = vsub.s32 %v1339, %v1341
      %v1343 = vrot.slane %v1336, %v1342
      %v1344 = vcombine.low %v1322, %v1323
      %v1346 = vunpack.c.l.s4 1983009808
      %v1347 = vunpack.c.0.s8 %v1346
      %v1348 = vlaneseq
      %v1349 = vshrl.u32 %v1348, 7
      %v1350 = vsub.s32 %v1347, %v1349
      %v1351 = vrot.slane %v1344, %v1350
      %v1352 = vcombine.low %v1324, %v1325
      %v1354 = vunpack.c.l.s4 1983009808
      %v1355 = vunpack.c.0.s8 %v1354
      %v1356 = vlaneseq
      %v1357 = vshrl.u32 %v1356, 7
      %v1358 = vsub.s32 %v1355, %v1357
      %v1359 = vrot.slane %v1352, %v1358
      %v1360 = vcombine.low %v1326, %v1327
      %v1362 = vunpack.c.l.s4 1983009808
      %v1363 = vunpack.c.0.s8 %v1362
      %v1364 = vlaneseq
      %v1365 = vshrl.u32 %v1364, 7
      %v1366 = vsub.s32 %v1363, %v1365
      %v1367 = vrot.slane %v1360, %v1366
      %1372 = vst [vmem:[#allocation3 + $0x4] sm:$0xf] %v1343
      %1373 = vst [vmem:[#allocation3 + $0xc] sm:$0xf] %v1351
      %1374 = vst [vmem:[#allocation3 + $0x14] sm:$0xf] %v1359
      %1375 = vst [vmem:[#allocation3 + $0x1c] sm:$0xf] %v1367
      %v1376 = vld [vmem:[#allocation4] sm:$0xff]
      %v1377 = vld [vmem:[#allocation4 + $0x8] sm:$0xff]
      %v1378 = vld [vmem:[#allocation4 + $0x10] sm:$0xff]
      %v1379 = vld [vmem:[#allocation4 + $0x18] sm:$0xff]
      %v1380 = vld [vmem:[#allocation3] sm:$0xff]
      %v1381 = vld [vmem:[#allocation3 + $0x8] sm:$0xff]
      %v1382 = vld [vmem:[#allocation3 + $0x10] sm:$0xff]
      %v1383 = vld [vmem:[#allocation3 + $0x18] sm:$0xff]
      %v1384 = vld [vmem:[%s1] sm:$0xf]
      %v1385 = vld [vmem:[%s1 + $0x4] sm:$0xf]
      %v1386 = vld [vmem:[%s1 + $0x8] sm:$0xf]
      %v1387 = vld [vmem:[%s1 + $0xc] sm:$0xf]
      %v1388 = vld [vmem:[%s1 + $0x10] sm:$0xf]
      %v1389 = vld [vmem:[%s1 + $0x14] sm:$0xf]
      %v1390 = vld [vmem:[%s1 + $0x18] sm:$0xf]
      %v1391 = vld [vmem:[%s1 + $0x1c] sm:$0xf]
      %v1392 = vld [vmem:[%s1 + $0x20] sm:$0xf]
      %v1393 = vld [vmem:[%s1 + $0x24] sm:$0xf]
      %v1394 = vld [vmem:[%s1 + $0x28] sm:$0xf]
      %v1395 = vld [vmem:[%s1 + $0x2c] sm:$0xf]
      %v1396 = vld [vmem:[%s1 + $0x30] sm:$0xf]
      %v1397 = vld [vmem:[%s1 + $0x34] sm:$0xf]
      %v1398 = vld [vmem:[%s1 + $0x38] sm:$0xf]
      %v1399 = vld [vmem:[%s1 + $0x3c] sm:$0xf]
      %v1400 = vld [vmem:[%s1 + $0x40] sm:$0xf]
      %v1401 = vld [vmem:[%s1 + $0x44] sm:$0xf]
      %v1402 = vld [vmem:[%s1 + $0x48] sm:$0xf]
      %v1403 = vld [vmem:[%s1 + $0x4c] sm:$0xf]
      %v1404 = vld [vmem:[%s1 + $0x50] sm:$0xf]
      %v1405 = vld [vmem:[%s1 + $0x54] sm:$0xf]
      %v1406 = vld [vmem:[%s1 + $0x58] sm:$0xf]
      %v1407 = vld [vmem:[%s1 + $0x5c] sm:$0xf]
      %v1408 = vld [vmem:[%s1 + $0x60] sm:$0xf]
      %v1409 = vld [vmem:[%s1 + $0x64] sm:$0xf]
      %v1410 = vld [vmem:[%s1 + $0x68] sm:$0xf]
      %v1411 = vld [vmem:[%s1 + $0x6c] sm:$0xf]
      %v1412 = vld [vmem:[%s1 + $0x70] sm:$0xf]
      %v1413 = vld [vmem:[%s1 + $0x74] sm:$0xf]
      %v1414 = vld [vmem:[%s1 + $0x78] sm:$0xf]
      %v1415 = vld [vmem:[%s1 + $0x7c] sm:$0xf]
      %v1420 = vunpack.c.l.b16 %v1380
      %v1421 = vunpack.c.h.b16 %v1380
      %v1422 = vunpack.c.l.b16 %v1381
      %v1423 = vunpack.c.h.b16 %v1381
      %v1424 = vunpack.c.l.b16 %v1382
      %v1425 = vunpack.c.h.b16 %v1382
      %v1426 = vunpack.c.l.b16 %v1383
      %v1427 = vunpack.c.h.b16 %v1383
      %v1428 = vpack.c.b16 %v1422, %v1420
      %v1429 = vpack.c.b16 %v1423, %v1421
      %v1430 = vpack.c.b16 %v1426, %v1424
      %v1431 = vpack.c.b16 %v1427, %v1425
      %v1468 = vunpack.c.l.b16 %v1384
      %v1469 = vunpack.c.l.b16 %v1385
      %v1470 = vunpack.c.l.b16 %v1386
      %v1471 = vunpack.c.l.b16 %v1387
      %v1472 = vunpack.c.l.b16 %v1388
      %v1473 = vunpack.c.l.b16 %v1389
      %v1474 = vunpack.c.l.b16 %v1390
      %v1475 = vunpack.c.l.b16 %v1391
      %v1476 = vunpack.c.l.b16 %v1392
      %v1477 = vunpack.c.l.b16 %v1393
      %v1478 = vunpack.c.l.b16 %v1394
      %v1479 = vunpack.c.l.b16 %v1395
      %v1480 = vunpack.c.l.b16 %v1396
      %v1481 = vunpack.c.l.b16 %v1397
      %v1482 = vunpack.c.l.b16 %v1398
      %v1483 = vunpack.c.l.b16 %v1399
      %v1484 = vunpack.c.l.b16 %v1400
      %v1485 = vunpack.c.l.b16 %v1401
      %v1486 = vunpack.c.l.b16 %v1402
      %v1487 = vunpack.c.l.b16 %v1403
      %v1488 = vunpack.c.l.b16 %v1404
      %v1489 = vunpack.c.l.b16 %v1405
      %v1490 = vunpack.c.l.b16 %v1406
      %v1491 = vunpack.c.l.b16 %v1407
      %v1492 = vunpack.c.l.b16 %v1408
      %v1493 = vunpack.c.l.b16 %v1409
      %v1494 = vunpack.c.l.b16 %v1410
      %v1495 = vunpack.c.l.b16 %v1411
      %v1496 = vunpack.c.l.b16 %v1412
      %v1497 = vunpack.c.l.b16 %v1413
      %v1498 = vunpack.c.l.b16 %v1414
      %v1499 = vunpack.c.l.b16 %v1415
      %v1500 = vpack.c.b16 %v1469, %v1468
      %v1501 = vpack.c.b16 %v1471, %v1470
      %v1502 = vpack.c.b16 %v1473, %v1472
      %v1503 = vpack.c.b16 %v1475, %v1474
      %v1504 = vpack.c.b16 %v1477, %v1476
      %v1505 = vpack.c.b16 %v1479, %v1478
      %v1506 = vpack.c.b16 %v1481, %v1480
      %v1507 = vpack.c.b16 %v1483, %v1482
      %v1508 = vpack.c.b16 %v1485, %v1484
      %v1509 = vpack.c.b16 %v1487, %v1486
      %v1510 = vpack.c.b16 %v1489, %v1488
      %v1511 = vpack.c.b16 %v1491, %v1490
      %v1512 = vpack.c.b16 %v1493, %v1492
      %v1513 = vpack.c.b16 %v1495, %v1494
      %v1514 = vpack.c.b16 %v1497, %v1496
      %v1515 = vpack.c.b16 %v1499, %v1498
      %1532 = vmatprep.subr.bf16.mxu0 0
      %1533 = vmatpush1.bf16.msra.mxu0 %v1507
      %1534 = vmatprep.subr.bf16.mxu0 0
      %1535 = vmatpush1.bf16.msra.mxu0 %v1506
      %1536 = vmatprep.subr.bf16.mxu0 0
      %1537 = vmatpush1.bf16.msra.mxu0 %v1505
      %1538 = vmatprep.subr.bf16.mxu0 0
      %1539 = vmatpush1.bf16.msra.mxu0 %v1504
      %1540 = vmatprep.subr.bf16.mxu0 0
      %1541 = vmatpush1.bf16.msra.mxu0 %v1503
      %1542 = vmatprep.subr.bf16.mxu0 0
      %1543 = vmatpush1.bf16.msra.mxu0 %v1502
      %1544 = vmatprep.subr.bf16.mxu0 0
      %1545 = vmatpush1.bf16.msra.mxu0 %v1501
      %1546 = vmatprep.subr.bf16.mxu0 0
      %1547 = vmatpush1.bf16.msra.mxu0 %v1500
      %1548 = vmatprep.subr.bf16.mxu0 0
      %1549 = vmatpush2.bf16.msra.mxu0 %v1515
      %1550 = vmatprep.subr.bf16.mxu0 0
      %1551 = vmatpush2.bf16.msra.mxu0 %v1514
      %1552 = vmatprep.subr.bf16.mxu0 0
      %1553 = vmatpush2.bf16.msra.mxu0 %v1513
      %1554 = vmatprep.subr.bf16.mxu0 0
      %1555 = vmatpush2.bf16.msra.mxu0 %v1512
      %1556 = vmatprep.subr.bf16.mxu0 0
      %1557 = vmatpush2.bf16.msra.mxu0 %v1511
      %1558 = vmatprep.subr.bf16.mxu0 0
      %1559 = vmatpush2.bf16.msra.mxu0 %v1510
      %1560 = vmatprep.subr.bf16.mxu0 0
      %1561 = vmatpush2.bf16.msra.mxu0 %v1509
      %1562 = vmatprep.subr.bf16.mxu0 0
      %1563 = vmatpush2.bf16.msra.mxu0 %v1508
      %1564 = vmatprep.mubr.bf16.mxu0 %v1429
      %1565 = vmatmul.mubr.bf16.gmra.mxu0 %v1428
      %v1566 = vpop.f32.mrf.mxu0
      %v1567 = vadd.f32 0.0, %v1566
      %v1568 = vpop.f32.mrf.mxu0
      %v1569 = vpop.f32.mrf.mxu0
      %v1570 = vadd.f32 0.0, %v1569
      %v1571 = vpop.f32.mrf.mxu0
      %1572 = vmatprep.mubr.bf16.mxu0 %v1431
      %1573 = vmatmul.mubr.bf16.gmra.mxu0 %v1430
      %v1574 = vpop.f32.mrf.mxu0
      %v1575 = vadd.f32 0.0, %v1574
      %v1576 = vpop.f32.mrf.mxu0
      %v1577 = vpop.f32.mrf.mxu0
      %v1578 = vadd.f32 0.0, %v1577
      %v1579 = vpop.f32.mrf.mxu0
      %1580 = vdwg.mxu0
      %v1581 = vadd.f32 %v1376, %v1567
      %v1582 = vadd.f32 %v1377, %v1570
      %v1583 = vadd.f32 %v1378, %v1575
      %v1584 = vadd.f32 %v1379, %v1578
      %1585 = vst [vmem:[#allocation4] sm:$0xff] %v1581
      %1586 = vst [vmem:[#allocation4 + $0x8] sm:$0xff] %v1582
      %1587 = vst [vmem:[#allocation4 + $0x10] sm:$0xff] %v1583
      %1588 = vst [vmem:[#allocation4 + $0x18] sm:$0xff] %v1584
      %v1589 = vld [vmem:[%s1262] sm:$0x7]
      %v1590 = vld [vmem:[%s1262 + $0x4] sm:$0x7]
      %v1591 = vld [vmem:[%s1262 + $0x8] sm:$0x7]
      %v1592 = vld [vmem:[%s1262 + $0xc] sm:$0x7]
      %v1593 = vld [vmem:[%s1262 + $0x14] sm:$0x7]
      %v1594 = vld [vmem:[%s1262 + $0x18] sm:$0x7]
      %v1595 = vld [vmem:[%s1262 + $0x1c] sm:$0x7]
      %v1596 = vld [vmem:[%s1262 + $0x20] sm:$0x7]
      %v1606 = vunpack.c.l.s4 1983009808
      %v1607 = vunpack.c.0.s8 %v1606
      %v1608 = vlaneseq
      %v1609 = vshrl.u32 %v1608, 7
      %v1610 = vsub.s32 %v1607, %v1609
      %v1611 = vrot.slane %v1589, %v1610
      %v1612 = vcombine.high %v1611, %v1611
      %v1614 = vunpack.c.l.s4 1983009808
      %v1615 = vunpack.c.0.s8 %v1614
      %v1616 = vlaneseq
      %v1617 = vshrl.u32 %v1616, 7
      %v1618 = vsub.s32 %v1615, %v1617
      %v1619 = vrot.slane %v1590, %v1618
      %v1620 = vcombine.high %v1619, %v1619
      %v1622 = vunpack.c.l.s4 1983009808
      %v1623 = vunpack.c.0.s8 %v1622
      %v1624 = vlaneseq
      %v1625 = vshrl.u32 %v1624, 7
      %v1626 = vsub.s32 %v1623, %v1625
      %v1627 = vrot.slane %v1591, %v1626
      %v1628 = vcombine.high %v1627, %v1627
      %v1630 = vunpack.c.l.s4 1983009808
      %v1631 = vunpack.c.0.s8 %v1630
      %v1632 = vlaneseq
      %v1633 = vshrl.u32 %v1632, 7
      %v1634 = vsub.s32 %v1631, %v1633
      %v1635 = vrot.slane %v1592, %v1634
      %v1636 = vcombine.high %v1635, %v1635
      %v1638 = vunpack.c.l.s4 1983009808
      %v1639 = vunpack.c.0.s8 %v1638
      %v1640 = vlaneseq
      %v1641 = vshrl.u32 %v1640, 7
      %v1642 = vsub.s32 %v1639, %v1641
      %v1643 = vrot.slane %v1593, %v1642
      %v1644 = vcombine.high %v1643, %v1643
      %v1646 = vunpack.c.l.s4 1983009808
      %v1647 = vunpack.c.0.s8 %v1646
      %v1648 = vlaneseq
      %v1649 = vshrl.u32 %v1648, 7
      %v1650 = vsub.s32 %v1647, %v1649
      %v1651 = vrot.slane %v1594, %v1650
      %v1652 = vcombine.high %v1651, %v1651
      %v1654 = vunpack.c.l.s4 1983009808
      %v1655 = vunpack.c.0.s8 %v1654
      %v1656 = vlaneseq
      %v1657 = vshrl.u32 %v1656, 7
      %v1658 = vsub.s32 %v1655, %v1657
      %v1659 = vrot.slane %v1595, %v1658
      %v1660 = vcombine.high %v1659, %v1659
      %v1662 = vunpack.c.l.s4 1983009808
      %v1663 = vunpack.c.0.s8 %v1662
      %v1664 = vlaneseq
      %v1665 = vshrl.u32 %v1664, 7
      %v1666 = vsub.s32 %v1663, %v1665
      %v1667 = vrot.slane %v1596, %v1666
      %v1668 = vcombine.high %v1667, %v1667
      %vm1669 = vsmask.f32 1280
      %vm1670 = vsmask.f32 3336
      %vm1671 = vmor %vm1669, %vm1670
      %vm1672 = vsmask.f32 5392
      %vm1673 = vmor %vm1671, %vm1672
      %vm1674 = vsmask.f32 7448
      %vm1675 = vmor %vm1673, %vm1674
      %v1677 = vshrl.u32 %v1611, 16
      %v1679 = vrot.slane %v1677, 6
      %v1680 = vshll.u32 %v1611, 16
      %v1682 = vrot.slane %v1680, 7
      %v1683 = vor.u32 %v1679, %v1682
      %v1684 = vrot.slane %v1683, 2
      %v1686 = vshll.u32 %v1612, 16
      %v1688 = vrot.slane %v1686, 7
      %v1689 = vsel %vm1675, %v1684, %v1688
      %v1691 = vshrl.u32 %v1619, 16
      %v1693 = vrot.slane %v1691, 6
      %v1694 = vshll.u32 %v1619, 16
      %v1696 = vrot.slane %v1694, 7
      %v1697 = vor.u32 %v1693, %v1696
      %v1698 = vrot.slane %v1697, 2
      %v1700 = vshll.u32 %v1620, 16
      %v1702 = vrot.slane %v1700, 7
      %v1703 = vsel %vm1675, %v1698, %v1702
      %v1705 = vshrl.u32 %v1627, 16
      %v1707 = vrot.slane %v1705, 6
      %v1708 = vshll.u32 %v1627, 16
      %v1710 = vrot.slane %v1708, 7
      %v1711 = vor.u32 %v1707, %v1710
      %v1712 = vrot.slane %v1711, 2
      %v1714 = vshll.u32 %v1628, 16
      %v1716 = vrot.slane %v1714, 7
      %v1717 = vsel %vm1675, %v1712, %v1716
      %v1719 = vshrl.u32 %v1635, 16
      %v1721 = vrot.slane %v1719, 6
      %v1722 = vshll.u32 %v1635, 16
      %v1724 = vrot.slane %v1722, 7
      %v1725 = vor.u32 %v1721, %v1724
      %v1726 = vrot.slane %v1725, 2
      %v1728 = vshll.u32 %v1636, 16
      %v1730 = vrot.slane %v1728, 7
      %v1731 = vsel %vm1675, %v1726, %v1730
      %v1733 = vshrl.u32 %v1643, 16
      %v1735 = vrot.slane %v1733, 6
      %v1736 = vshll.u32 %v1643, 16
      %v1738 = vrot.slane %v1736, 7
      %v1739 = vor.u32 %v1735, %v1738
      %v1740 = vrot.slane %v1739, 2
      %v1742 = vshll.u32 %v1644, 16
      %v1744 = vrot.slane %v1742, 7
      %v1745 = vsel %vm1675, %v1740, %v1744
      %v1747 = vshrl.u32 %v1651, 16
      %v1749 = vrot.slane %v1747, 6
      %v1750 = vshll.u32 %v1651, 16
      %v1752 = vrot.slane %v1750, 7
      %v1753 = vor.u32 %v1749, %v1752
      %v1754 = vrot.slane %v1753, 2
      %v1756 = vshll.u32 %v1652, 16
      %v1758 = vrot.slane %v1756, 7
      %v1759 = vsel %vm1675, %v1754, %v1758
      %v1761 = vshrl.u32 %v1659, 16
      %v1763 = vrot.slane %v1761, 6
      %v1764 = vshll.u32 %v1659, 16
      %v1766 = vrot.slane %v1764, 7
      %v1767 = vor.u32 %v1763, %v1766
      %v1768 = vrot.slane %v1767, 2
      %v1770 = vshll.u32 %v1660, 16
      %v1772 = vrot.slane %v1770, 7
      %v1773 = vsel %vm1675, %v1768, %v1772
      %v1775 = vshrl.u32 %v1667, 16
      %v1777 = vrot.slane %v1775, 6
      %v1778 = vshll.u32 %v1667, 16
      %v1780 = vrot.slane %v1778, 7
      %v1781 = vor.u32 %v1777, %v1780
      %v1782 = vrot.slane %v1781, 2
      %v1784 = vshll.u32 %v1668, 16
      %v1786 = vrot.slane %v1784, 7
      %v1787 = vsel %vm1675, %v1782, %v1786
      %v1788 = vcombine.low %v1689, %v1703
      %v1790 = vunpack.c.l.s4 1983009808
      %v1791 = vunpack.c.0.s8 %v1790
      %v1792 = vlaneseq
      %v1793 = vshrl.u32 %v1792, 7
      %v1794 = vsub.s32 %v1791, %v1793
      %v1795 = vrot.slane %v1788, %v1794
      %v1796 = vcombine.low %v1717, %v1731
      %v1798 = vunpack.c.l.s4 1983009808
      %v1799 = vunpack.c.0.s8 %v1798
      %v1800 = vlaneseq
      %v1801 = vshrl.u32 %v1800, 7
      %v1802 = vsub.s32 %v1799, %v1801
      %v1803 = vrot.slane %v1796, %v1802
      %v1804 = vcombine.low %v1745, %v1759
      %v1806 = vunpack.c.l.s4 1983009808
      %v1807 = vunpack.c.0.s8 %v1806
      %v1808 = vlaneseq
      %v1809 = vshrl.u32 %v1808, 7
      %v1810 = vsub.s32 %v1807, %v1809
      %v1811 = vrot.slane %v1804, %v1810
      %v1812 = vcombine.low %v1773, %v1787
      %v1814 = vunpack.c.l.s4 1983009808
      %v1815 = vunpack.c.0.s8 %v1814
      %v1816 = vlaneseq
      %v1817 = vshrl.u32 %v1816, 7
      %v1818 = vsub.s32 %v1815, %v1817
      %v1819 = vrot.slane %v1812, %v1818
      %1824 = vst [vmem:[#allocation3] sm:$0xf] %v1795
      %1825 = vst [vmem:[#allocation3 + $0x8] sm:$0xf] %v1803
      %1826 = vst [vmem:[#allocation3 + $0x10] sm:$0xf] %v1811
      %1827 = vst [vmem:[#allocation3 + $0x18] sm:$0xf] %v1819
      %s1828 = scalar_lea.vmem [#allocation2], 300
      %v1829 = vld [vmem:[%s1828] sm:$0x3]
      %v1830 = vld [vmem:[%s1828 + $0x4] sm:$0x3]
      %v1831 = vld [vmem:[%s1828 + $0x8] sm:$0x3]
      %v1832 = vld [vmem:[%s1828 + $0xc] sm:$0x3]
      %v1833 = vld [vmem:[%s1828 + $0x14] sm:$0x3]
      %v1834 = vld [vmem:[%s1828 + $0x18] sm:$0x3]
      %v1835 = vld [vmem:[%s1828 + $0x1c] sm:$0x3]
      %v1836 = vld [vmem:[%s1828 + $0x20] sm:$0x3]
      %v1845 = vcombine.low %v1829, %v1830
      %v1847 = vunpack.c.l.s4 1983009808
      %v1848 = vunpack.c.0.s8 %v1847
      %v1849 = vlaneseq
      %v1850 = vshrl.u32 %v1849, 7
      %v1851 = vsub.s32 %v1848, %v1850
      %v1852 = vrot.slane %v1845, %v1851
      %v1853 = vcombine.low %v1831, %v1832
      %v1855 = vunpack.c.l.s4 1983009808
      %v1856 = vunpack.c.0.s8 %v1855
      %v1857 = vlaneseq
      %v1858 = vshrl.u32 %v1857, 7
      %v1859 = vsub.s32 %v1856, %v1858
      %v1860 = vrot.slane %v1853, %v1859
      %v1861 = vcombine.low %v1833, %v1834
      %v1863 = vunpack.c.l.s4 1983009808
      %v1864 = vunpack.c.0.s8 %v1863
      %v1865 = vlaneseq
      %v1866 = vshrl.u32 %v1865, 7
      %v1867 = vsub.s32 %v1864, %v1866
      %v1868 = vrot.slane %v1861, %v1867
      %v1869 = vcombine.low %v1835, %v1836
      %v1871 = vunpack.c.l.s4 1983009808
      %v1872 = vunpack.c.0.s8 %v1871
      %v1873 = vlaneseq
      %v1874 = vshrl.u32 %v1873, 7
      %v1875 = vsub.s32 %v1872, %v1874
      %v1876 = vrot.slane %v1869, %v1875
      %1881 = vst [vmem:[#allocation3 + $0x4] sm:$0xf] %v1852
      %1882 = vst [vmem:[#allocation3 + $0xc] sm:$0xf] %v1860
      %1883 = vst [vmem:[#allocation3 + $0x14] sm:$0xf] %v1868
      %1884 = vst [vmem:[#allocation3 + $0x1c] sm:$0xf] %v1876
      %v1885 = vld [vmem:[#allocation4] sm:$0xff]
      %v1886 = vld [vmem:[#allocation4 + $0x8] sm:$0xff]
      %v1887 = vld [vmem:[#allocation4 + $0x10] sm:$0xff]
      %v1888 = vld [vmem:[#allocation4 + $0x18] sm:$0xff]
      %v1889 = vld [vmem:[#allocation3] sm:$0xff]
      %v1890 = vld [vmem:[#allocation3 + $0x8] sm:$0xff]
      %v1891 = vld [vmem:[#allocation3 + $0x10] sm:$0xff]
      %v1892 = vld [vmem:[#allocation3 + $0x18] sm:$0xff]
      %s1893 = scalar_lea.vmem %s1, 128
      %v1894 = vld [vmem:[%s1893] sm:$0xf]
      %v1895 = vld [vmem:[%s1893 + $0x4] sm:$0xf]
      %v1896 = vld [vmem:[%s1893 + $0x8] sm:$0xf]
      %v1897 = vld [vmem:[%s1893 + $0xc] sm:$0xf]
      %v1898 = vld [vmem:[%s1893 + $0x10] sm:$0xf]
      %v1899 = vld [vmem:[%s1893 + $0x14] sm:$0xf]
      %v1900 = vld [vmem:[%s1893 + $0x18] sm:$0xf]
      %v1901 = vld [vmem:[%s1893 + $0x1c] sm:$0xf]
      %v1902 = vld [vmem:[%s1893 + $0x20] sm:$0xf]
      %v1903 = vld [vmem:[%s1893 + $0x24] sm:$0xf]
      %v1904 = vld [vmem:[%s1893 + $0x28] sm:$0xf]
      %v1905 = vld [vmem:[%s1893 + $0x2c] sm:$0xf]
      %v1906 = vld [vmem:[%s1893 + $0x30] sm:$0xf]
      %v1907 = vld [vmem:[%s1893 + $0x34] sm:$0xf]
      %v1908 = vld [vmem:[%s1893 + $0x38] sm:$0xf]
      %v1909 = vld [vmem:[%s1893 + $0x3c] sm:$0xf]
      %v1910 = vld [vmem:[%s1893 + $0x40] sm:$0xf]
      %v1911 = vld [vmem:[%s1893 + $0x44] sm:$0xf]
      %v1912 = vld [vmem:[%s1893 + $0x48] sm:$0xf]
      %v1913 = vld [vmem:[%s1893 + $0x4c] sm:$0xf]
      %v1914 = vld [vmem:[%s1893 + $0x50] sm:$0xf]
      %v1915 = vld [vmem:[%s1893 + $0x54] sm:$0xf]
      %v1916 = vld [vmem:[%s1893 + $0x58] sm:$0xf]
      %v1917 = vld [vmem:[%s1893 + $0x5c] sm:$0xf]
      %v1918 = vld [vmem:[%s1893 + $0x60] sm:$0xf]
      %v1919 = vld [vmem:[%s1893 + $0x64] sm:$0xf]
      %v1920 = vld [vmem:[%s1893 + $0x68] sm:$0xf]
      %v1921 = vld [vmem:[%s1893 + $0x6c] sm:$0xf]
      %v1922 = vld [vmem:[%s1893 + $0x70] sm:$0xf]
      %v1923 = vld [vmem:[%s1893 + $0x74] sm:$0xf]
      %v1924 = vld [vmem:[%s1893 + $0x78] sm:$0xf]
      %v1925 = vld [vmem:[%s1893 + $0x7c] sm:$0xf]
      %v1930 = vunpack.c.l.b16 %v1889
      %v1931 = vunpack.c.h.b16 %v1889
      %v1932 = vunpack.c.l.b16 %v1890
      %v1933 = vunpack.c.h.b16 %v1890
      %v1934 = vunpack.c.l.b16 %v1891
      %v1935 = vunpack.c.h.b16 %v1891
      %v1936 = vunpack.c.l.b16 %v1892
      %v1937 = vunpack.c.h.b16 %v1892
      %v1938 = vpack.c.b16 %v1932, %v1930
      %v1939 = vpack.c.b16 %v1933, %v1931
      %v1940 = vpack.c.b16 %v1936, %v1934
      %v1941 = vpack.c.b16 %v1937, %v1935
      %v1978 = vunpack.c.l.b16 %v1894
      %v1979 = vunpack.c.l.b16 %v1895
      %v1980 = vunpack.c.l.b16 %v1896
      %v1981 = vunpack.c.l.b16 %v1897
      %v1982 = vunpack.c.l.b16 %v1898
      %v1983 = vunpack.c.l.b16 %v1899
      %v1984 = vunpack.c.l.b16 %v1900
      %v1985 = vunpack.c.l.b16 %v1901
      %v1986 = vunpack.c.l.b16 %v1902
      %v1987 = vunpack.c.l.b16 %v1903
      %v1988 = vunpack.c.l.b16 %v1904
      %v1989 = vunpack.c.l.b16 %v1905
      %v1990 = vunpack.c.l.b16 %v1906
      %v1991 = vunpack.c.l.b16 %v1907
      %v1992 = vunpack.c.l.b16 %v1908
      %v1993 = vunpack.c.l.b16 %v1909
      %v1994 = vunpack.c.l.b16 %v1910
      %v1995 = vunpack.c.l.b16 %v1911
      %v1996 = vunpack.c.l.b16 %v1912
      %v1997 = vunpack.c.l.b16 %v1913
      %v1998 = vunpack.c.l.b16 %v1914
      %v1999 = vunpack.c.l.b16 %v1915
      %v2000 = vunpack.c.l.b16 %v1916
      %v2001 = vunpack.c.l.b16 %v1917
      %v2002 = vunpack.c.l.b16 %v1918
      %v2003 = vunpack.c.l.b16 %v1919
      %v2004 = vunpack.c.l.b16 %v1920
      %v2005 = vunpack.c.l.b16 %v1921
      %v2006 = vunpack.c.l.b16 %v1922
      %v2007 = vunpack.c.l.b16 %v1923
      %v2008 = vunpack.c.l.b16 %v1924
      %v2009 = vunpack.c.l.b16 %v1925
      %v2010 = vpack.c.b16 %v1979, %v1978
      %v2011 = vpack.c.b16 %v1981, %v1980
      %v2012 = vpack.c.b16 %v1983, %v1982
      %v2013 = vpack.c.b16 %v1985, %v1984
      %v2014 = vpack.c.b16 %v1987, %v1986
      %v2015 = vpack.c.b16 %v1989, %v1988
      %v2016 = vpack.c.b16 %v1991, %v1990
      %v2017 = vpack.c.b16 %v1993, %v1992
      %v2018 = vpack.c.b16 %v1995, %v1994
      %v2019 = vpack.c.b16 %v1997, %v1996
      %v2020 = vpack.c.b16 %v1999, %v1998
      %v2021 = vpack.c.b16 %v2001, %v2000
      %v2022 = vpack.c.b16 %v2003, %v2002
      %v2023 = vpack.c.b16 %v2005, %v2004
      %v2024 = vpack.c.b16 %v2007, %v2006
      %v2025 = vpack.c.b16 %v2009, %v2008
      %2042 = vmatprep.subr.bf16.mxu0 0
      %2043 = vmatpush1.bf16.msra.mxu0 %v2017
      %2044 = vmatprep.subr.bf16.mxu0 0
      %2045 = vmatpush1.bf16.msra.mxu0 %v2016
      %2046 = vmatprep.subr.bf16.mxu0 0
      %2047 = vmatpush1.bf16.msra.mxu0 %v2015
      %2048 = vmatprep.subr.bf16.mxu0 0
      %2049 = vmatpush1.bf16.msra.mxu0 %v2014
      %2050 = vmatprep.subr.bf16.mxu0 0
      %2051 = vmatpush1.bf16.msra.mxu0 %v2013
      %2052 = vmatprep.subr.bf16.mxu0 0
      %2053 = vmatpush1.bf16.msra.mxu0 %v2012
      %2054 = vmatprep.subr.bf16.mxu0 0
      %2055 = vmatpush1.bf16.msra.mxu0 %v2011
      %2056 = vmatprep.subr.bf16.mxu0 0
      %2057 = vmatpush1.bf16.msra.mxu0 %v2010
      %2058 = vmatprep.subr.bf16.mxu0 0
      %2059 = vmatpush2.bf16.msra.mxu0 %v2025
      %2060 = vmatprep.subr.bf16.mxu0 0
      %2061 = vmatpush2.bf16.msra.mxu0 %v2024
      %2062 = vmatprep.subr.bf16.mxu0 0
      %2063 = vmatpush2.bf16.msra.mxu0 %v2023
      %2064 = vmatprep.subr.bf16.mxu0 0
      %2065 = vmatpush2.bf16.msra.mxu0 %v2022
      %2066 = vmatprep.subr.bf16.mxu0 0
      %2067 = vmatpush2.bf16.msra.mxu0 %v2021
      %2068 = vmatprep.subr.bf16.mxu0 0
      %2069 = vmatpush2.bf16.msra.mxu0 %v2020
      %2070 = vmatprep.subr.bf16.mxu0 0
      %2071 = vmatpush2.bf16.msra.mxu0 %v2019
      %2072 = vmatprep.subr.bf16.mxu0 0
      %2073 = vmatpush2.bf16.msra.mxu0 %v2018
      %2074 = vmatprep.mubr.bf16.mxu0 %v1939
      %2075 = vmatmul.mubr.bf16.gmra.mxu0 %v1938
      %v2076 = vpop.f32.mrf.mxu0
      %v2077 = vadd.f32 0.0, %v2076
      %v2078 = vpop.f32.mrf.mxu0
      %v2079 = vpop.f32.mrf.mxu0
      %v2080 = vadd.f32 0.0, %v2079
      %v2081 = vpop.f32.mrf.mxu0
      %2082 = vmatprep.mubr.bf16.mxu0 %v1941
      %2083 = vmatmul.mubr.bf16.gmra.mxu0 %v1940
      %v2084 = vpop.f32.mrf.mxu0
      %v2085 = vadd.f32 0.0, %v2084
      %v2086 = vpop.f32.mrf.mxu0
      %v2087 = vpop.f32.mrf.mxu0
      %v2088 = vadd.f32 0.0, %v2087
      %v2089 = vpop.f32.mrf.mxu0
      %2090 = vdwg.mxu0
      %v2091 = vadd.f32 %v1885, %v2077
      %v2092 = vadd.f32 %v1886, %v2080
      %v2093 = vadd.f32 %v1887, %v2085
      %v2094 = vadd.f32 %v1888, %v2088
      %2095 = vst [vmem:[#allocation4] sm:$0xff] %v2091
      %2096 = vst [vmem:[#allocation4 + $0x8] sm:$0xff] %v2092
      %2097 = vst [vmem:[#allocation4 + $0x10] sm:$0xff] %v2093
      %2098 = vst [vmem:[#allocation4 + $0x18] sm:$0xff] %v2094
      %s2099 = scalar_lea.vmem [#allocation2], 240
      %v2100 = vld [vmem:[%s2099] sm:$0x3]
      %v2101 = vld [vmem:[%s2099 + $0x4] sm:$0x3]
      %v2102 = vld [vmem:[%s2099 + $0x8] sm:$0x3]
      %v2103 = vld [vmem:[%s2099 + $0xc] sm:$0x3]
      %v2104 = vld [vmem:[%s2099 + $0x14] sm:$0x3]
      %v2105 = vld [vmem:[%s2099 + $0x18] sm:$0x3]
      %v2106 = vld [vmem:[%s2099 + $0x1c] sm:$0x3]
      %v2107 = vld [vmem:[%s2099 + $0x20] sm:$0x3]
      %v2116 = vcombine.low %v2100, %v2101
      %v2118 = vunpack.c.l.s4 1983009808
      %v2119 = vunpack.c.0.s8 %v2118
      %v2120 = vlaneseq
      %v2121 = vshrl.u32 %v2120, 7
      %v2122 = vsub.s32 %v2119, %v2121
      %v2123 = vrot.slane %v2116, %v2122
      %v2124 = vcombine.low %v2102, %v2103
      %v2126 = vunpack.c.l.s4 1983009808
      %v2127 = vunpack.c.0.s8 %v2126
      %v2128 = vlaneseq
      %v2129 = vshrl.u32 %v2128, 7
      %v2130 = vsub.s32 %v2127, %v2129
      %v2131 = vrot.slane %v2124, %v2130
      %v2132 = vcombine.low %v2104, %v2105
      %v2134 = vunpack.c.l.s4 1983009808
      %v2135 = vunpack.c.0.s8 %v2134
      %v2136 = vlaneseq
      %v2137 = vshrl.u32 %v2136, 7
      %v2138 = vsub.s32 %v2135, %v2137
      %v2139 = vrot.slane %v2132, %v2138
      %v2140 = vcombine.low %v2106, %v2107
      %v2142 = vunpack.c.l.s4 1983009808
      %v2143 = vunpack.c.0.s8 %v2142
      %v2144 = vlaneseq
      %v2145 = vshrl.u32 %v2144, 7
      %v2146 = vsub.s32 %v2143, %v2145
      %v2147 = vrot.slane %v2140, %v2146
      %2152 = vst [vmem:[#allocation3] sm:$0xf] %v2123
      %2153 = vst [vmem:[#allocation3 + $0x8] sm:$0xf] %v2131
      %2154 = vst [vmem:[#allocation3 + $0x10] sm:$0xf] %v2139
      %2155 = vst [vmem:[#allocation3 + $0x18] sm:$0xf] %v2147
      %v2156 = vld [vmem:[%s1828] sm:$0x7]
      %v2157 = vld [vmem:[%s1828 + $0x4] sm:$0x7]
      %v2158 = vld [vmem:[%s1828 + $0x8] sm:$0x7]
      %v2159 = vld [vmem:[%s1828 + $0xc] sm:$0x7]
      %v2160 = vld [vmem:[%s1828 + $0x14] sm:$0x7]
      %v2161 = vld [vmem:[%s1828 + $0x18] sm:$0x7]
      %v2162 = vld [vmem:[%s1828 + $0x1c] sm:$0x7]
      %v2163 = vld [vmem:[%s1828 + $0x20] sm:$0x7]
      %v2173 = vunpack.c.l.s4 1983009808
      %v2174 = vunpack.c.0.s8 %v2173
      %v2175 = vlaneseq
      %v2176 = vshrl.u32 %v2175, 7
      %v2177 = vsub.s32 %v2174, %v2176
      %v2178 = vrot.slane %v2156, %v2177
      %v2179 = vcombine.high %v2178, %v2178
      %v2181 = vunpack.c.l.s4 1983009808
      %v2182 = vunpack.c.0.s8 %v2181
      %v2183 = vlaneseq
      %v2184 = vshrl.u32 %v2183, 7
      %v2185 = vsub.s32 %v2182, %v2184
      %v2186 = vrot.slane %v2157, %v2185
      %v2187 = vcombine.high %v2186, %v2186
      %v2189 = vunpack.c.l.s4 1983009808
      %v2190 = vunpack.c.0.s8 %v2189
      %v2191 = vlaneseq
      %v2192 = vshrl.u32 %v2191, 7
      %v2193 = vsub.s32 %v2190, %v2192
      %v2194 = vrot.slane %v2158, %v2193
      %v2195 = vcombine.high %v2194, %v2194
      %v2197 = vunpack.c.l.s4 1983009808
      %v2198 = vunpack.c.0.s8 %v2197
      %v2199 = vlaneseq
      %v2200 = vshrl.u32 %v2199, 7
      %v2201 = vsub.s32 %v2198, %v2200
      %v2202 = vrot.slane %v2159, %v2201
      %v2203 = vcombine.high %v2202, %v2202
      %v2205 = vunpack.c.l.s4 1983009808
      %v2206 = vunpack.c.0.s8 %v2205
      %v2207 = vlaneseq
      %v2208 = vshrl.u32 %v2207, 7
      %v2209 = vsub.s32 %v2206, %v2208
      %v2210 = vrot.slane %v2160, %v2209
      %v2211 = vcombine.high %v2210, %v2210
      %v2213 = vunpack.c.l.s4 1983009808
      %v2214 = vunpack.c.0.s8 %v2213
      %v2215 = vlaneseq
      %v2216 = vshrl.u32 %v2215, 7
      %v2217 = vsub.s32 %v2214, %v2216
      %v2218 = vrot.slane %v2161, %v2217
      %v2219 = vcombine.high %v2218, %v2218
      %v2221 = vunpack.c.l.s4 1983009808
      %v2222 = vunpack.c.0.s8 %v2221
      %v2223 = vlaneseq
      %v2224 = vshrl.u32 %v2223, 7
      %v2225 = vsub.s32 %v2222, %v2224
      %v2226 = vrot.slane %v2162, %v2225
      %v2227 = vcombine.high %v2226, %v2226
      %v2229 = vunpack.c.l.s4 1983009808
      %v2230 = vunpack.c.0.s8 %v2229
      %v2231 = vlaneseq
      %v2232 = vshrl.u32 %v2231, 7
      %v2233 = vsub.s32 %v2230, %v2232
      %v2234 = vrot.slane %v2163, %v2233
      %v2235 = vcombine.high %v2234, %v2234
      %v2237 = vshrl.u32 %v2178, 16
      %v2239 = vrot.slane %v2237, 6
      %v2240 = vshll.u32 %v2178, 16
      %v2242 = vrot.slane %v2240, 7
      %v2243 = vor.u32 %v2239, %v2242
      %v2244 = vrot.slane %v2243, 2
      %v2246 = vshll.u32 %v2179, 16
      %v2248 = vrot.slane %v2246, 7
      %v2249 = vsel %vm1675, %v2244, %v2248
      %v2251 = vshrl.u32 %v2186, 16
      %v2253 = vrot.slane %v2251, 6
      %v2254 = vshll.u32 %v2186, 16
      %v2256 = vrot.slane %v2254, 7
      %v2257 = vor.u32 %v2253, %v2256
      %v2258 = vrot.slane %v2257, 2
      %v2260 = vshll.u32 %v2187, 16
      %v2262 = vrot.slane %v2260, 7
      %v2263 = vsel %vm1675, %v2258, %v2262
      %v2265 = vshrl.u32 %v2194, 16
      %v2267 = vrot.slane %v2265, 6
      %v2268 = vshll.u32 %v2194, 16
      %v2270 = vrot.slane %v2268, 7
      %v2271 = vor.u32 %v2267, %v2270
      %v2272 = vrot.slane %v2271, 2
      %v2274 = vshll.u32 %v2195, 16
      %v2276 = vrot.slane %v2274, 7
      %v2277 = vsel %vm1675, %v2272, %v2276
      %v2279 = vshrl.u32 %v2202, 16
      %v2281 = vrot.slane %v2279, 6
      %v2282 = vshll.u32 %v2202, 16
      %v2284 = vrot.slane %v2282, 7
      %v2285 = vor.u32 %v2281, %v2284
      %v2286 = vrot.slane %v2285, 2
      %v2288 = vshll.u32 %v2203, 16
      %v2290 = vrot.slane %v2288, 7
      %v2291 = vsel %vm1675, %v2286, %v2290
      %v2293 = vshrl.u32 %v2210, 16
      %v2295 = vrot.slane %v2293, 6
      %v2296 = vshll.u32 %v2210, 16
      %v2298 = vrot.slane %v2296, 7
      %v2299 = vor.u32 %v2295, %v2298
      %v2300 = vrot.slane %v2299, 2
      %v2302 = vshll.u32 %v2211, 16
      %v2304 = vrot.slane %v2302, 7
      %v2305 = vsel %vm1675, %v2300, %v2304
      %v2307 = vshrl.u32 %v2218, 16
      %v2309 = vrot.slane %v2307, 6
      %v2310 = vshll.u32 %v2218, 16
      %v2312 = vrot.slane %v2310, 7
      %v2313 = vor.u32 %v2309, %v2312
      %v2314 = vrot.slane %v2313, 2
      %v2316 = vshll.u32 %v2219, 16
      %v2318 = vrot.slane %v2316, 7
      %v2319 = vsel %vm1675, %v2314, %v2318
      %v2321 = vshrl.u32 %v2226, 16
      %v2323 = vrot.slane %v2321, 6
      %v2324 = vshll.u32 %v2226, 16
      %v2326 = vrot.slane %v2324, 7
      %v2327 = vor.u32 %v2323, %v2326
      %v2328 = vrot.slane %v2327, 2
      %v2330 = vshll.u32 %v2227, 16
      %v2332 = vrot.slane %v2330, 7
      %v2333 = vsel %vm1675, %v2328, %v2332
      %v2335 = vshrl.u32 %v2234, 16
      %v2337 = vrot.slane %v2335, 6
      %v2338 = vshll.u32 %v2234, 16
      %v2340 = vrot.slane %v2338, 7
      %v2341 = vor.u32 %v2337, %v2340
      %v2342 = vrot.slane %v2341, 2
      %v2344 = vshll.u32 %v2235, 16
      %v2346 = vrot.slane %v2344, 7
      %v2347 = vsel %vm1675, %v2342, %v2346
      %v2348 = vcombine.low %v2249, %v2263
      %v2350 = vunpack.c.l.s4 1983009808
      %v2351 = vunpack.c.0.s8 %v2350
      %v2352 = vlaneseq
      %v2353 = vshrl.u32 %v2352, 7
      %v2354 = vsub.s32 %v2351, %v2353
      %v2355 = vrot.slane %v2348, %v2354
      %v2356 = vcombine.low %v2277, %v2291
      %v2358 = vunpack.c.l.s4 1983009808
      %v2359 = vunpack.c.0.s8 %v2358
      %v2360 = vlaneseq
      %v2361 = vshrl.u32 %v2360, 7
      %v2362 = vsub.s32 %v2359, %v2361
      %v2363 = vrot.slane %v2356, %v2362
      %v2364 = vcombine.low %v2305, %v2319
      %v2366 = vunpack.c.l.s4 1983009808
      %v2367 = vunpack.c.0.s8 %v2366
      %v2368 = vlaneseq
      %v2369 = vshrl.u32 %v2368, 7
      %v2370 = vsub.s32 %v2367, %v2369
      %v2371 = vrot.slane %v2364, %v2370
      %v2372 = vcombine.low %v2333, %v2347
      %v2374 = vunpack.c.l.s4 1983009808
      %v2375 = vunpack.c.0.s8 %v2374
      %v2376 = vlaneseq
      %v2377 = vshrl.u32 %v2376, 7
      %v2378 = vsub.s32 %v2375, %v2377
      %v2379 = vrot.slane %v2372, %v2378
      %2384 = vst [vmem:[#allocation3 + $0x4] sm:$0xf] %v2355
      %2385 = vst [vmem:[#allocation3 + $0xc] sm:$0xf] %v2363
      %2386 = vst [vmem:[#allocation3 + $0x14] sm:$0xf] %v2371
      %2387 = vst [vmem:[#allocation3 + $0x1c] sm:$0xf] %v2379
      %v2388 = vld [vmem:[#allocation4] sm:$0xff]
      %v2389 = vld [vmem:[#allocation4 + $0x8] sm:$0xff]
      %v2390 = vld [vmem:[#allocation4 + $0x10] sm:$0xff]
      %v2391 = vld [vmem:[#allocation4 + $0x18] sm:$0xff]
      %v2392 = vld [vmem:[#allocation3] sm:$0xff]
      %v2393 = vld [vmem:[#allocation3 + $0x8] sm:$0xff]
      %v2394 = vld [vmem:[#allocation3 + $0x10] sm:$0xff]
      %v2395 = vld [vmem:[#allocation3 + $0x18] sm:$0xff]
      %s2396 = scalar_lea.vmem %s1, 256
      %v2397 = vld [vmem:[%s2396] sm:$0xf]
      %v2398 = vld [vmem:[%s2396 + $0x4] sm:$0xf]
      %v2399 = vld [vmem:[%s2396 + $0x8] sm:$0xf]
      %v2400 = vld [vmem:[%s2396 + $0xc] sm:$0xf]
      %v2401 = vld [vmem:[%s2396 + $0x10] sm:$0xf]
      %v2402 = vld [vmem:[%s2396 + $0x14] sm:$0xf]
      %v2403 = vld [vmem:[%s2396 + $0x18] sm:$0xf]
      %v2404 = vld [vmem:[%s2396 + $0x1c] sm:$0xf]
      %v2405 = vld [vmem:[%s2396 + $0x20] sm:$0xf]
      %v2406 = vld [vmem:[%s2396 + $0x24] sm:$0xf]
      %v2407 = vld [vmem:[%s2396 + $0x28] sm:$0xf]
      %v2408 = vld [vmem:[%s2396 + $0x2c] sm:$0xf]
      %v2409 = vld [vmem:[%s2396 + $0x30] sm:$0xf]
      %v2410 = vld [vmem:[%s2396 + $0x34] sm:$0xf]
      %v2411 = vld [vmem:[%s2396 + $0x38] sm:$0xf]
      %v2412 = vld [vmem:[%s2396 + $0x3c] sm:$0xf]
      %v2413 = vld [vmem:[%s2396 + $0x40] sm:$0xf]
      %v2414 = vld [vmem:[%s2396 + $0x44] sm:$0xf]
      %v2415 = vld [vmem:[%s2396 + $0x48] sm:$0xf]
      %v2416 = vld [vmem:[%s2396 + $0x4c] sm:$0xf]
      %v2417 = vld [vmem:[%s2396 + $0x50] sm:$0xf]
      %v2418 = vld [vmem:[%s2396 + $0x54] sm:$0xf]
      %v2419 = vld [vmem:[%s2396 + $0x58] sm:$0xf]
      %v2420 = vld [vmem:[%s2396 + $0x5c] sm:$0xf]
      %v2421 = vld [vmem:[%s2396 + $0x60] sm:$0xf]
      %v2422 = vld [vmem:[%s2396 + $0x64] sm:$0xf]
      %v2423 = vld [vmem:[%s2396 + $0x68] sm:$0xf]
      %v2424 = vld [vmem:[%s2396 + $0x6c] sm:$0xf]
      %v2425 = vld [vmem:[%s2396 + $0x70] sm:$0xf]
      %v2426 = vld [vmem:[%s2396 + $0x74] sm:$0xf]
      %v2427 = vld [vmem:[%s2396 + $0x78] sm:$0xf]
      %v2428 = vld [vmem:[%s2396 + $0x7c] sm:$0xf]
      %v2433 = vunpack.c.l.b16 %v2392
      %v2434 = vunpack.c.h.b16 %v2392
      %v2435 = vunpack.c.l.b16 %v2393
      %v2436 = vunpack.c.h.b16 %v2393
      %v2437 = vunpack.c.l.b16 %v2394
      %v2438 = vunpack.c.h.b16 %v2394
      %v2439 = vunpack.c.l.b16 %v2395
      %v2440 = vunpack.c.h.b16 %v2395
      %v2441 = vpack.c.b16 %v2435, %v2433
      %v2442 = vpack.c.b16 %v2436, %v2434
      %v2443 = vpack.c.b16 %v2439, %v2437
      %v2444 = vpack.c.b16 %v2440, %v2438
      %v2481 = vunpack.c.l.b16 %v2397
      %v2482 = vunpack.c.l.b16 %v2398
      %v2483 = vunpack.c.l.b16 %v2399
      %v2484 = vunpack.c.l.b16 %v2400
      %v2485 = vunpack.c.l.b16 %v2401
      %v2486 = vunpack.c.l.b16 %v2402
      %v2487 = vunpack.c.l.b16 %v2403
      %v2488 = vunpack.c.l.b16 %v2404
      %v2489 = vunpack.c.l.b16 %v2405
      %v2490 = vunpack.c.l.b16 %v2406
      %v2491 = vunpack.c.l.b16 %v2407
      %v2492 = vunpack.c.l.b16 %v2408
      %v2493 = vunpack.c.l.b16 %v2409
      %v2494 = vunpack.c.l.b16 %v2410
      %v2495 = vunpack.c.l.b16 %v2411
      %v2496 = vunpack.c.l.b16 %v2412
      %v2497 = vunpack.c.l.b16 %v2413
      %v2498 = vunpack.c.l.b16 %v2414
      %v2499 = vunpack.c.l.b16 %v2415
      %v2500 = vunpack.c.l.b16 %v2416
      %v2501 = vunpack.c.l.b16 %v2417
      %v2502 = vunpack.c.l.b16 %v2418
      %v2503 = vunpack.c.l.b16 %v2419
      %v2504 = vunpack.c.l.b16 %v2420
      %v2505 = vunpack.c.l.b16 %v2421
      %v2506 = vunpack.c.l.b16 %v2422
      %v2507 = vunpack.c.l.b16 %v2423
      %v2508 = vunpack.c.l.b16 %v2424
      %v2509 = vunpack.c.l.b16 %v2425
      %v2510 = vunpack.c.l.b16 %v2426
      %v2511 = vunpack.c.l.b16 %v2427
      %v2512 = vunpack.c.l.b16 %v2428
      %v2513 = vpack.c.b16 %v2482, %v2481
      %v2514 = vpack.c.b16 %v2484, %v2483
      %v2515 = vpack.c.b16 %v2486, %v2485
      %v2516 = vpack.c.b16 %v2488, %v2487
      %v2517 = vpack.c.b16 %v2490, %v2489
      %v2518 = vpack.c.b16 %v2492, %v2491
      %v2519 = vpack.c.b16 %v2494, %v2493
      %v2520 = vpack.c.b16 %v2496, %v2495
      %v2521 = vpack.c.b16 %v2498, %v2497
      %v2522 = vpack.c.b16 %v2500, %v2499
      %v2523 = vpack.c.b16 %v2502, %v2501
      %v2524 = vpack.c.b16 %v2504, %v2503
      %v2525 = vpack.c.b16 %v2506, %v2505
      %v2526 = vpack.c.b16 %v2508, %v2507
      %v2527 = vpack.c.b16 %v2510, %v2509
      %v2528 = vpack.c.b16 %v2512, %v2511
      %2545 = vmatprep.subr.bf16.mxu0 0
      %2546 = vmatpush1.bf16.msra.mxu0 %v2520
      %2547 = vmatprep.subr.bf16.mxu0 0
      %2548 = vmatpush1.bf16.msra.mxu0 %v2519
      %2549 = vmatprep.subr.bf16.mxu0 0
      %2550 = vmatpush1.bf16.msra.mxu0 %v2518
      %2551 = vmatprep.subr.bf16.mxu0 0
      %2552 = vmatpush1.bf16.msra.mxu0 %v2517
      %2553 = vmatprep.subr.bf16.mxu0 0
      %2554 = vmatpush1.bf16.msra.mxu0 %v2516
      %2555 = vmatprep.subr.bf16.mxu0 0
      %2556 = vmatpush1.bf16.msra.mxu0 %v2515
      %2557 = vmatprep.subr.bf16.mxu0 0
      %2558 = vmatpush1.bf16.msra.mxu0 %v2514
      %2559 = vmatprep.subr.bf16.mxu0 0
      %2560 = vmatpush1.bf16.msra.mxu0 %v2513
      %2561 = vmatprep.subr.bf16.mxu0 0
      %2562 = vmatpush2.bf16.msra.mxu0 %v2528
      %2563 = vmatprep.subr.bf16.mxu0 0
      %2564 = vmatpush2.bf16.msra.mxu0 %v2527
      %2565 = vmatprep.subr.bf16.mxu0 0
      %2566 = vmatpush2.bf16.msra.mxu0 %v2526
      %2567 = vmatprep.subr.bf16.mxu0 0
      %2568 = vmatpush2.bf16.msra.mxu0 %v2525
      %2569 = vmatprep.subr.bf16.mxu0 0
      %2570 = vmatpush2.bf16.msra.mxu0 %v2524
      %2571 = vmatprep.subr.bf16.mxu0 0
      %2572 = vmatpush2.bf16.msra.mxu0 %v2523
      %2573 = vmatprep.subr.bf16.mxu0 0
      %2574 = vmatpush2.bf16.msra.mxu0 %v2522
      %2575 = vmatprep.subr.bf16.mxu0 0
      %2576 = vmatpush2.bf16.msra.mxu0 %v2521
      %2577 = vmatprep.mubr.bf16.mxu0 %v2442
      %2578 = vmatmul.mubr.bf16.gmra.mxu0 %v2441
      %v2579 = vpop.f32.mrf.mxu0
      %v2580 = vadd.f32 0.0, %v2579
      %v2581 = vpop.f32.mrf.mxu0
      %v2582 = vpop.f32.mrf.mxu0
      %v2583 = vadd.f32 0.0, %v2582
      %v2584 = vpop.f32.mrf.mxu0
      %2585 = vmatprep.mubr.bf16.mxu0 %v2444
      %2586 = vmatmul.mubr.bf16.gmra.mxu0 %v2443
      %v2587 = vpop.f32.mrf.mxu0
      %v2588 = vadd.f32 0.0, %v2587
      %v2589 = vpop.f32.mrf.mxu0
      %v2590 = vpop.f32.mrf.mxu0
      %v2591 = vadd.f32 0.0, %v2590
      %v2592 = vpop.f32.mrf.mxu0
      %2593 = vdwg.mxu0
      %v2594 = vadd.f32 %v2388, %v2580
      %v2595 = vadd.f32 %v2389, %v2583
      %v2596 = vadd.f32 %v2390, %v2588
      %v2597 = vadd.f32 %v2391, %v2591
      %2598 = vst [vmem:[#allocation4] sm:$0xff] %v2594
      %2599 = vst [vmem:[#allocation4 + $0x8] sm:$0xff] %v2595
      %2600 = vst [vmem:[#allocation4 + $0x10] sm:$0xff] %v2596
      %2601 = vst [vmem:[#allocation4 + $0x18] sm:$0xff] %v2597
      %s2602 = scalar_lea.vmem [#allocation2], 424
      %v2603 = vld [vmem:[%s2602] sm:$0x3]
      %v2604 = vld [vmem:[%s2602 + $0x4] sm:$0x3]
      %v2605 = vld [vmem:[%s2602 + $0x8] sm:$0x3]
      %v2606 = vld [vmem:[%s2602 + $0xc] sm:$0x3]
      %v2607 = vld [vmem:[%s2602 + $0x14] sm:$0x3]
      %v2608 = vld [vmem:[%s2602 + $0x18] sm:$0x3]
      %v2609 = vld [vmem:[%s2602 + $0x1c] sm:$0x3]
      %v2610 = vld [vmem:[%s2602 + $0x20] sm:$0x3]
      %v2619 = vcombine.low %v2603, %v2604
      %v2621 = vunpack.c.l.s4 1983009808
      %v2622 = vunpack.c.0.s8 %v2621
      %v2623 = vlaneseq
      %v2624 = vshrl.u32 %v2623, 7
      %v2625 = vsub.s32 %v2622, %v2624
      %v2626 = vrot.slane %v2619, %v2625
      %v2627 = vcombine.low %v2605, %v2606
      %v2629 = vunpack.c.l.s4 1983009808
      %v2630 = vunpack.c.0.s8 %v2629
      %v2631 = vlaneseq
      %v2632 = vshrl.u32 %v2631, 7
      %v2633 = vsub.s32 %v2630, %v2632
      %v2634 = vrot.slane %v2627, %v2633
      %v2635 = vcombine.low %v2607, %v2608
      %v2637 = vunpack.c.l.s4 1983009808
      %v2638 = vunpack.c.0.s8 %v2637
      %v2639 = vlaneseq
      %v2640 = vshrl.u32 %v2639, 7
      %v2641 = vsub.s32 %v2638, %v2640
      %v2642 = vrot.slane %v2635, %v2641
      %v2643 = vcombine.low %v2609, %v2610
      %v2645 = vunpack.c.l.s4 1983009808
      %v2646 = vunpack.c.0.s8 %v2645
      %v2647 = vlaneseq
      %v2648 = vshrl.u32 %v2647, 7
      %v2649 = vsub.s32 %v2646, %v2648
      %v2650 = vrot.slane %v2643, %v2649
      %2655 = vst [vmem:[#allocation3] sm:$0xf] %v2626
      %2656 = vst [vmem:[#allocation3 + $0x8] sm:$0xf] %v2634
      %2657 = vst [vmem:[#allocation3 + $0x10] sm:$0xf] %v2642
      %2658 = vst [vmem:[#allocation3 + $0x18] sm:$0xf] %v2650
      %s2659 = scalar_lea.vmem [#allocation2], 364
      %v2660 = vld [vmem:[%s2659] sm:$0x3]
      %v2661 = vld [vmem:[%s2659 + $0x4] sm:$0x3]
      %v2662 = vld [vmem:[%s2659 + $0x8] sm:$0x3]
      %v2663 = vld [vmem:[%s2659 + $0xc] sm:$0x3]
      %v2664 = vld [vmem:[%s2659 + $0x14] sm:$0x3]
      %v2665 = vld [vmem:[%s2659 + $0x18] sm:$0x3]
      %v2666 = vld [vmem:[%s2659 + $0x1c] sm:$0x3]
      %v2667 = vld [vmem:[%s2659 + $0x20] sm:$0x3]
      %v2676 = vcombine.low %v2660, %v2661
      %v2678 = vunpack.c.l.s4 1983009808
      %v2679 = vunpack.c.0.s8 %v2678
      %v2680 = vlaneseq
      %v2681 = vshrl.u32 %v2680, 7
      %v2682 = vsub.s32 %v2679, %v2681
      %v2683 = vrot.slane %v2676, %v2682
      %v2684 = vcombine.low %v2662, %v2663
      %v2686 = vunpack.c.l.s4 1983009808
      %v2687 = vunpack.c.0.s8 %v2686
      %v2688 = vlaneseq
      %v2689 = vshrl.u32 %v2688, 7
      %v2690 = vsub.s32 %v2687, %v2689
      %v2691 = vrot.slane %v2684, %v2690
      %v2692 = vcombine.low %v2664, %v2665
      %v2694 = vunpack.c.l.s4 1983009808
      %v2695 = vunpack.c.0.s8 %v2694
      %v2696 = vlaneseq
      %v2697 = vshrl.u32 %v2696, 7
      %v2698 = vsub.s32 %v2695, %v2697
      %v2699 = vrot.slane %v2692, %v2698
      %v2700 = vcombine.low %v2666, %v2667
      %v2702 = vunpack.c.l.s4 1983009808
      %v2703 = vunpack.c.0.s8 %v2702
      %v2704 = vlaneseq
      %v2705 = vshrl.u32 %v2704, 7
      %v2706 = vsub.s32 %v2703, %v2705
      %v2707 = vrot.slane %v2700, %v2706
      %2712 = vst [vmem:[#allocation3 + $0x4] sm:$0xf] %v2683
      %2713 = vst [vmem:[#allocation3 + $0xc] sm:$0xf] %v2691
      %2714 = vst [vmem:[#allocation3 + $0x14] sm:$0xf] %v2699
      %2715 = vst [vmem:[#allocation3 + $0x1c] sm:$0xf] %v2707
      %v2716 = vld [vmem:[#allocation4] sm:$0xff]
      %v2717 = vld [vmem:[#allocation4 + $0x8] sm:$0xff]
      %v2718 = vld [vmem:[#allocation4 + $0x10] sm:$0xff]
      %v2719 = vld [vmem:[#allocation4 + $0x18] sm:$0xff]
      %v2720 = vld [vmem:[#allocation3] sm:$0xff]
      %v2721 = vld [vmem:[#allocation3 + $0x8] sm:$0xff]
      %v2722 = vld [vmem:[#allocation3 + $0x10] sm:$0xff]
      %v2723 = vld [vmem:[#allocation3 + $0x18] sm:$0xff]
      %s2724 = scalar_lea.vmem %s1, 384
      %v2725 = vld [vmem:[%s2724] sm:$0xf]
      %v2726 = vld [vmem:[%s2724 + $0x4] sm:$0xf]
      %v2727 = vld [vmem:[%s2724 + $0x8] sm:$0xf]
      %v2728 = vld [vmem:[%s2724 + $0xc] sm:$0xf]
      %v2729 = vld [vmem:[%s2724 + $0x10] sm:$0xf]
      %v2730 = vld [vmem:[%s2724 + $0x14] sm:$0xf]
      %v2731 = vld [vmem:[%s2724 + $0x18] sm:$0xf]
      %v2732 = vld [vmem:[%s2724 + $0x1c] sm:$0xf]
      %v2733 = vld [vmem:[%s2724 + $0x20] sm:$0xf]
      %v2734 = vld [vmem:[%s2724 + $0x24] sm:$0xf]
      %v2735 = vld [vmem:[%s2724 + $0x28] sm:$0xf]
      %v2736 = vld [vmem:[%s2724 + $0x2c] sm:$0xf]
      %v2737 = vld [vmem:[%s2724 + $0x30] sm:$0xf]
      %v2738 = vld [vmem:[%s2724 + $0x34] sm:$0xf]
      %v2739 = vld [vmem:[%s2724 + $0x38] sm:$0xf]
      %v2740 = vld [vmem:[%s2724 + $0x3c] sm:$0xf]
      %v2741 = vld [vmem:[%s2724 + $0x40] sm:$0xf]
      %v2742 = vld [vmem:[%s2724 + $0x44] sm:$0xf]
      %v2743 = vld [vmem:[%s2724 + $0x48] sm:$0xf]
      %v2744 = vld [vmem:[%s2724 + $0x4c] sm:$0xf]
      %v2745 = vld [vmem:[%s2724 + $0x50] sm:$0xf]
      %v2746 = vld [vmem:[%s2724 + $0x54] sm:$0xf]
      %v2747 = vld [vmem:[%s2724 + $0x58] sm:$0xf]
      %v2748 = vld [vmem:[%s2724 + $0x5c] sm:$0xf]
      %v2749 = vld [vmem:[%s2724 + $0x60] sm:$0xf]
      %v2750 = vld [vmem:[%s2724 + $0x64] sm:$0xf]
      %v2751 = vld [vmem:[%s2724 + $0x68] sm:$0xf]
      %v2752 = vld [vmem:[%s2724 + $0x6c] sm:$0xf]
      %v2753 = vld [vmem:[%s2724 + $0x70] sm:$0xf]
      %v2754 = vld [vmem:[%s2724 + $0x74] sm:$0xf]
      %v2755 = vld [vmem:[%s2724 + $0x78] sm:$0xf]
      %v2756 = vld [vmem:[%s2724 + $0x7c] sm:$0xf]
      %v2761 = vunpack.c.l.b16 %v2720
      %v2762 = vunpack.c.h.b16 %v2720
      %v2763 = vunpack.c.l.b16 %v2721
      %v2764 = vunpack.c.h.b16 %v2721
      %v2765 = vunpack.c.l.b16 %v2722
      %v2766 = vunpack.c.h.b16 %v2722
      %v2767 = vunpack.c.l.b16 %v2723
      %v2768 = vunpack.c.h.b16 %v2723
      %v2769 = vpack.c.b16 %v2763, %v2761
      %v2770 = vpack.c.b16 %v2764, %v2762
      %v2771 = vpack.c.b16 %v2767, %v2765
      %v2772 = vpack.c.b16 %v2768, %v2766
      %v2809 = vunpack.c.l.b16 %v2725
      %v2810 = vunpack.c.l.b16 %v2726
      %v2811 = vunpack.c.l.b16 %v2727
      %v2812 = vunpack.c.l.b16 %v2728
      %v2813 = vunpack.c.l.b16 %v2729
      %v2814 = vunpack.c.l.b16 %v2730
      %v2815 = vunpack.c.l.b16 %v2731
      %v2816 = vunpack.c.l.b16 %v2732
      %v2817 = vunpack.c.l.b16 %v2733
      %v2818 = vunpack.c.l.b16 %v2734
      %v2819 = vunpack.c.l.b16 %v2735
      %v2820 = vunpack.c.l.b16 %v2736
      %v2821 = vunpack.c.l.b16 %v2737
      %v2822 = vunpack.c.l.b16 %v2738
      %v2823 = vunpack.c.l.b16 %v2739
      %v2824 = vunpack.c.l.b16 %v2740
      %v2825 = vunpack.c.l.b16 %v2741
      %v2826 = vunpack.c.l.b16 %v2742
      %v2827 = vunpack.c.l.b16 %v2743
      %v2828 = vunpack.c.l.b16 %v2744
      %v2829 = vunpack.c.l.b16 %v2745
      %v2830 = vunpack.c.l.b16 %v2746
      %v2831 = vunpack.c.l.b16 %v2747
      %v2832 = vunpack.c.l.b16 %v2748
      %v2833 = vunpack.c.l.b16 %v2749
      %v2834 = vunpack.c.l.b16 %v2750
      %v2835 = vunpack.c.l.b16 %v2751
      %v2836 = vunpack.c.l.b16 %v2752
      %v2837 = vunpack.c.l.b16 %v2753
      %v2838 = vunpack.c.l.b16 %v2754
      %v2839 = vunpack.c.l.b16 %v2755
      %v2840 = vunpack.c.l.b16 %v2756
      %v2841 = vpack.c.b16 %v2810, %v2809
      %v2842 = vpack.c.b16 %v2812, %v2811
      %v2843 = vpack.c.b16 %v2814, %v2813
      %v2844 = vpack.c.b16 %v2816, %v2815
      %v2845 = vpack.c.b16 %v2818, %v2817
      %v2846 = vpack.c.b16 %v2820, %v2819
      %v2847 = vpack.c.b16 %v2822, %v2821
      %v2848 = vpack.c.b16 %v2824, %v2823
      %v2849 = vpack.c.b16 %v2826, %v2825
      %v2850 = vpack.c.b16 %v2828, %v2827
      %v2851 = vpack.c.b16 %v2830, %v2829
      %v2852 = vpack.c.b16 %v2832, %v2831
      %v2853 = vpack.c.b16 %v2834, %v2833
      %v2854 = vpack.c.b16 %v2836, %v2835
      %v2855 = vpack.c.b16 %v2838, %v2837
      %v2856 = vpack.c.b16 %v2840, %v2839
      %2873 = vmatprep.subr.bf16.mxu0 0
      %2874 = vmatpush1.bf16.msra.mxu0 %v2848
      %2875 = vmatprep.subr.bf16.mxu0 0
      %2876 = vmatpush1.bf16.msra.mxu0 %v2847
      %2877 = vmatprep.subr.bf16.mxu0 0
      %2878 = vmatpush1.bf16.msra.mxu0 %v2846
      %2879 = vmatprep.subr.bf16.mxu0 0
      %2880 = vmatpush1.bf16.msra.mxu0 %v2845
      %2881 = vmatprep.subr.bf16.mxu0 0
      %2882 = vmatpush1.bf16.msra.mxu0 %v2844
      %2883 = vmatprep.subr.bf16.mxu0 0
      %2884 = vmatpush1.bf16.msra.mxu0 %v2843
      %2885 = vmatprep.subr.bf16.mxu0 0
      %2886 = vmatpush1.bf16.msra.mxu0 %v2842
      %2887 = vmatprep.subr.bf16.mxu0 0
      %2888 = vmatpush1.bf16.msra.mxu0 %v2841
      %2889 = vmatprep.subr.bf16.mxu0 0
      %2890 = vmatpush2.bf16.msra.mxu0 %v2856
      %2891 = vmatprep.subr.bf16.mxu0 0
      %2892 = vmatpush2.bf16.msra.mxu0 %v2855
      %2893 = vmatprep.subr.bf16.mxu0 0
      %2894 = vmatpush2.bf16.msra.mxu0 %v2854
      %2895 = vmatprep.subr.bf16.mxu0 0
      %2896 = vmatpush2.bf16.msra.mxu0 %v2853
      %2897 = vmatprep.subr.bf16.mxu0 0
      %2898 = vmatpush2.bf16.msra.mxu0 %v2852
      %2899 = vmatprep.subr.bf16.mxu0 0
      %2900 = vmatpush2.bf16.msra.mxu0 %v2851
      %2901 = vmatprep.subr.bf16.mxu0 0
      %2902 = vmatpush2.bf16.msra.mxu0 %v2850
      %2903 = vmatprep.subr.bf16.mxu0 0
      %2904 = vmatpush2.bf16.msra.mxu0 %v2849
      %2905 = vmatprep.mubr.bf16.mxu0 %v2770
      %2906 = vmatmul.mubr.bf16.gmra.mxu0 %v2769
      %v2907 = vpop.f32.mrf.mxu0
      %v2908 = vadd.f32 0.0, %v2907
      %v2909 = vpop.f32.mrf.mxu0
      %v2910 = vpop.f32.mrf.mxu0
      %v2911 = vadd.f32 0.0, %v2910
      %v2912 = vpop.f32.mrf.mxu0
      %2913 = vmatprep.mubr.bf16.mxu0 %v2772
      %2914 = vmatmul.mubr.bf16.gmra.mxu0 %v2771
      %v2915 = vpop.f32.mrf.mxu0
      %v2916 = vadd.f32 0.0, %v2915
      %v2917 = vpop.f32.mrf.mxu0
      %v2918 = vpop.f32.mrf.mxu0
      %v2919 = vadd.f32 0.0, %v2918
      %v2920 = vpop.f32.mrf.mxu0
      %2921 = vdwg.mxu0
      %v2922 = vadd.f32 %v2716, %v2908
      %v2923 = vadd.f32 %v2717, %v2911
      %v2924 = vadd.f32 %v2718, %v2916
      %v2925 = vadd.f32 %v2719, %v2919
      %2926 = vst [vmem:[#allocation4] sm:$0xff] %v2922
      %2927 = vst [vmem:[#allocation4 + $0x8] sm:$0xff] %v2923
      %2928 = vst [vmem:[#allocation4 + $0x10] sm:$0xff] %v2924
      %2929 = vst [vmem:[#allocation4 + $0x18] sm:$0xff] %v2925
      %v2930 = vld [vmem:[%s2602] sm:$0x7]
      %v2931 = vld [vmem:[%s2602 + $0x4] sm:$0x7]
      %v2932 = vld [vmem:[%s2602 + $0x8] sm:$0x7]
      %v2933 = vld [vmem:[%s2602 + $0xc] sm:$0x7]
      %v2934 = vld [vmem:[%s2602 + $0x14] sm:$0x7]
      %v2935 = vld [vmem:[%s2602 + $0x18] sm:$0x7]
      %v2936 = vld [vmem:[%s2602 + $0x1c] sm:$0x7]
      %v2937 = vld [vmem:[%s2602 + $0x20] sm:$0x7]
      %v2947 = vunpack.c.l.s4 1983009808
      %v2948 = vunpack.c.0.s8 %v2947
      %v2949 = vlaneseq
      %v2950 = vshrl.u32 %v2949, 7
      %v2951 = vsub.s32 %v2948, %v2950
      %v2952 = vrot.slane %v2930, %v2951
      %v2953 = vcombine.high %v2952, %v2952
      %v2955 = vunpack.c.l.s4 1983009808
      %v2956 = vunpack.c.0.s8 %v2955
      %v2957 = vlaneseq
      %v2958 = vshrl.u32 %v2957, 7
      %v2959 = vsub.s32 %v2956, %v2958
      %v2960 = vrot.slane %v2931, %v2959
      %v2961 = vcombine.high %v2960, %v2960
      %v2963 = vunpack.c.l.s4 1983009808
      %v2964 = vunpack.c.0.s8 %v2963
      %v2965 = vlaneseq
      %v2966 = vshrl.u32 %v2965, 7
      %v2967 = vsub.s32 %v2964, %v2966
      %v2968 = vrot.slane %v2932, %v2967
      %v2969 = vcombine.high %v2968, %v2968
      %v2971 = vunpack.c.l.s4 1983009808
      %v2972 = vunpack.c.0.s8 %v2971
      %v2973 = vlaneseq
      %v2974 = vshrl.u32 %v2973, 7
      %v2975 = vsub.s32 %v2972, %v2974
      %v2976 = vrot.slane %v2933, %v2975
      %v2977 = vcombine.high %v2976, %v2976
      %v2979 = vunpack.c.l.s4 1983009808
      %v2980 = vunpack.c.0.s8 %v2979
      %v2981 = vlaneseq
      %v2982 = vshrl.u32 %v2981, 7
      %v2983 = vsub.s32 %v2980, %v2982
      %v2984 = vrot.slane %v2934, %v2983
      %v2985 = vcombine.high %v2984, %v2984
      %v2987 = vunpack.c.l.s4 1983009808
      %v2988 = vunpack.c.0.s8 %v2987
      %v2989 = vlaneseq
      %v2990 = vshrl.u32 %v2989, 7
      %v2991 = vsub.s32 %v2988, %v2990
      %v2992 = vrot.slane %v2935, %v2991
      %v2993 = vcombine.high %v2992, %v2992
      %v2995 = vunpack.c.l.s4 1983009808
      %v2996 = vunpack.c.0.s8 %v2995
      %v2997 = vlaneseq
      %v2998 = vshrl.u32 %v2997, 7
      %v2999 = vsub.s32 %v2996, %v2998
      %v3000 = vrot.slane %v2936, %v2999
      %v3001 = vcombine.high %v3000, %v3000
      %v3003 = vunpack.c.l.s4 1983009808
      %v3004 = vunpack.c.0.s8 %v3003
      %v3005 = vlaneseq
      %v3006 = vshrl.u32 %v3005, 7
      %v3007 = vsub.s32 %v3004, %v3006
      %v3008 = vrot.slane %v2937, %v3007
      %v3009 = vcombine.high %v3008, %v3008
      %v3011 = vshrl.u32 %v2952, 16
      %v3013 = vrot.slane %v3011, 6
      %v3014 = vshll.u32 %v2952, 16
      %v3016 = vrot.slane %v3014, 7
      %v3017 = vor.u32 %v3013, %v3016
      %v3018 = vrot.slane %v3017, 2
      %v3020 = vshll.u32 %v2953, 16
      %v3022 = vrot.slane %v3020, 7
      %v3023 = vsel %vm1675, %v3018, %v3022
      %v3025 = vshrl.u32 %v2960, 16
      %v3027 = vrot.slane %v3025, 6
      %v3028 = vshll.u32 %v2960, 16
      %v3030 = vrot.slane %v3028, 7
      %v3031 = vor.u32 %v3027, %v3030
      %v3032 = vrot.slane %v3031, 2
      %v3034 = vshll.u32 %v2961, 16
      %v3036 = vrot.slane %v3034, 7
      %v3037 = vsel %vm1675, %v3032, %v3036
      %v3039 = vshrl.u32 %v2968, 16
      %v3041 = vrot.slane %v3039, 6
      %v3042 = vshll.u32 %v2968, 16
      %v3044 = vrot.slane %v3042, 7
      %v3045 = vor.u32 %v3041, %v3044
      %v3046 = vrot.slane %v3045, 2
      %v3048 = vshll.u32 %v2969, 16
      %v3050 = vrot.slane %v3048, 7
      %v3051 = vsel %vm1675, %v3046, %v3050
      %v3053 = vshrl.u32 %v2976, 16
      %v3055 = vrot.slane %v3053, 6
      %v3056 = vshll.u32 %v2976, 16
      %v3058 = vrot.slane %v3056, 7
      %v3059 = vor.u32 %v3055, %v3058
      %v3060 = vrot.slane %v3059, 2
      %v3062 = vshll.u32 %v2977, 16
      %v3064 = vrot.slane %v3062, 7
      %v3065 = vsel %vm1675, %v3060, %v3064
      %v3067 = vshrl.u32 %v2984, 16
      %v3069 = vrot.slane %v3067, 6
      %v3070 = vshll.u32 %v2984, 16
      %v3072 = vrot.slane %v3070, 7
      %v3073 = vor.u32 %v3069, %v3072
      %v3074 = vrot.slane %v3073, 2
      %v3076 = vshll.u32 %v2985, 16
      %v3078 = vrot.slane %v3076, 7
      %v3079 = vsel %vm1675, %v3074, %v3078
      %v3081 = vshrl.u32 %v2992, 16
      %v3083 = vrot.slane %v3081, 6
      %v3084 = vshll.u32 %v2992, 16
      %v3086 = vrot.slane %v3084, 7
      %v3087 = vor.u32 %v3083, %v3086
      %v3088 = vrot.slane %v3087, 2
      %v3090 = vshll.u32 %v2993, 16
      %v3092 = vrot.slane %v3090, 7
      %v3093 = vsel %vm1675, %v3088, %v3092
      %v3095 = vshrl.u32 %v3000, 16
      %v3097 = vrot.slane %v3095, 6
      %v3098 = vshll.u32 %v3000, 16
      %v3100 = vrot.slane %v3098, 7
      %v3101 = vor.u32 %v3097, %v3100
      %v3102 = vrot.slane %v3101, 2
      %v3104 = vshll.u32 %v3001, 16
      %v3106 = vrot.slane %v3104, 7
      %v3107 = vsel %vm1675, %v3102, %v3106
      %v3109 = vshrl.u32 %v3008, 16
      %v3111 = vrot.slane %v3109, 6
      %v3112 = vshll.u32 %v3008, 16
      %v3114 = vrot.slane %v3112, 7
      %v3115 = vor.u32 %v3111, %v3114
      %v3116 = vrot.slane %v3115, 2
      %v3118 = vshll.u32 %v3009, 16
      %v3120 = vrot.slane %v3118, 7
      %v3121 = vsel %vm1675, %v3116, %v3120
      %v3122 = vcombine.low %v3023, %v3037
      %v3124 = vunpack.c.l.s4 1983009808
      %v3125 = vunpack.c.0.s8 %v3124
      %v3126 = vlaneseq
      %v3127 = vshrl.u32 %v3126, 7
      %v3128 = vsub.s32 %v3125, %v3127
      %v3129 = vrot.slane %v3122, %v3128
      %v3130 = vcombine.low %v3051, %v3065
      %v3132 = vunpack.c.l.s4 1983009808
      %v3133 = vunpack.c.0.s8 %v3132
      %v3134 = vlaneseq
      %v3135 = vshrl.u32 %v3134, 7
      %v3136 = vsub.s32 %v3133, %v3135
      %v3137 = vrot.slane %v3130, %v3136
      %v3138 = vcombine.low %v3079, %v3093
      %v3140 = vunpack.c.l.s4 1983009808
      %v3141 = vunpack.c.0.s8 %v3140
      %v3142 = vlaneseq
      %v3143 = vshrl.u32 %v3142, 7
      %v3144 = vsub.s32 %v3141, %v3143
      %v3145 = vrot.slane %v3138, %v3144
      %v3146 = vcombine.low %v3107, %v3121
      %v3148 = vunpack.c.l.s4 1983009808
      %v3149 = vunpack.c.0.s8 %v3148
      %v3150 = vlaneseq
      %v3151 = vshrl.u32 %v3150, 7
      %v3152 = vsub.s32 %v3149, %v3151
      %v3153 = vrot.slane %v3146, %v3152
      %3158 = vst [vmem:[#allocation3] sm:$0xf] %v3129
      %3159 = vst [vmem:[#allocation3 + $0x8] sm:$0xf] %v3137
      %3160 = vst [vmem:[#allocation3 + $0x10] sm:$0xf] %v3145
      %3161 = vst [vmem:[#allocation3 + $0x18] sm:$0xf] %v3153
      %s3162 = scalar_lea.vmem [#allocation2], 180
      %v3163 = vld [vmem:[%s3162] sm:$0x3]
      %v3164 = vld [vmem:[%s3162 + $0x4] sm:$0x3]
      %v3165 = vld [vmem:[%s3162 + $0x8] sm:$0x3]
      %v3166 = vld [vmem:[%s3162 + $0xc] sm:$0x3]
      %v3167 = vld [vmem:[%s3162 + $0x14] sm:$0x3]
      %v3168 = vld [vmem:[%s3162 + $0x18] sm:$0x3]
      %v3169 = vld [vmem:[%s3162 + $0x1c] sm:$0x3]
      %v3170 = vld [vmem:[%s3162 + $0x20] sm:$0x3]
      %v3179 = vcombine.low %v3163, %v3164
      %v3181 = vunpack.c.l.s4 1983009808
      %v3182 = vunpack.c.0.s8 %v3181
      %v3183 = vlaneseq
      %v3184 = vshrl.u32 %v3183, 7
      %v3185 = vsub.s32 %v3182, %v3184
      %v3186 = vrot.slane %v3179, %v3185
      %v3187 = vcombine.low %v3165, %v3166
      %v3189 = vunpack.c.l.s4 1983009808
      %v3190 = vunpack.c.0.s8 %v3189
      %v3191 = vlaneseq
      %v3192 = vshrl.u32 %v3191, 7
      %v3193 = vsub.s32 %v3190, %v3192
      %v3194 = vrot.slane %v3187, %v3193
      %v3195 = vcombine.low %v3167, %v3168
      %v3197 = vunpack.c.l.s4 1983009808
      %v3198 = vunpack.c.0.s8 %v3197
      %v3199 = vlaneseq
      %v3200 = vshrl.u32 %v3199, 7
      %v3201 = vsub.s32 %v3198, %v3200
      %v3202 = vrot.slane %v3195, %v3201
      %v3203 = vcombine.low %v3169, %v3170
      %v3205 = vunpack.c.l.s4 1983009808
      %v3206 = vunpack.c.0.s8 %v3205
      %v3207 = vlaneseq
      %v3208 = vshrl.u32 %v3207, 7
      %v3209 = vsub.s32 %v3206, %v3208
      %v3210 = vrot.slane %v3203, %v3209
      %3215 = vst [vmem:[#allocation3 + $0x4] sm:$0xf] %v3186
      %3216 = vst [vmem:[#allocation3 + $0xc] sm:$0xf] %v3194
      %3217 = vst [vmem:[#allocation3 + $0x14] sm:$0xf] %v3202
      %3218 = vst [vmem:[#allocation3 + $0x1c] sm:$0xf] %v3210
      %v3219 = vld [vmem:[#allocation4] sm:$0xff]
      %v3220 = vld [vmem:[#allocation4 + $0x8] sm:$0xff]
      %v3221 = vld [vmem:[#allocation4 + $0x10] sm:$0xff]
      %v3222 = vld [vmem:[#allocation4 + $0x18] sm:$0xff]
      %v3223 = vld [vmem:[#allocation3] sm:$0xff]
      %v3224 = vld [vmem:[#allocation3 + $0x8] sm:$0xff]
      %v3225 = vld [vmem:[#allocation3 + $0x10] sm:$0xff]
      %v3226 = vld [vmem:[#allocation3 + $0x18] sm:$0xff]
      %s3227 = scalar_lea.vmem %s1, 512
      %v3228 = vld [vmem:[%s3227] sm:$0xf]
      %v3229 = vld [vmem:[%s3227 + $0x4] sm:$0xf]
      %v3230 = vld [vmem:[%s3227 + $0x8] sm:$0xf]
      %v3231 = vld [vmem:[%s3227 + $0xc] sm:$0xf]
      %v3232 = vld [vmem:[%s3227 + $0x10] sm:$0xf]
      %v3233 = vld [vmem:[%s3227 + $0x14] sm:$0xf]
      %v3234 = vld [vmem:[%s3227 + $0x18] sm:$0xf]
      %v3235 = vld [vmem:[%s3227 + $0x1c] sm:$0xf]
      %v3236 = vld [vmem:[%s3227 + $0x20] sm:$0xf]
      %v3237 = vld [vmem:[%s3227 + $0x24] sm:$0xf]
      %v3238 = vld [vmem:[%s3227 + $0x28] sm:$0xf]
      %v3239 = vld [vmem:[%s3227 + $0x2c] sm:$0xf]
      %v3240 = vld [vmem:[%s3227 + $0x30] sm:$0xf]
      %v3241 = vld [vmem:[%s3227 + $0x34] sm:$0xf]
      %v3242 = vld [vmem:[%s3227 + $0x38] sm:$0xf]
      %v3243 = vld [vmem:[%s3227 + $0x3c] sm:$0xf]
      %v3244 = vld [vmem:[%s3227 + $0x40] sm:$0xf]
      %v3245 = vld [vmem:[%s3227 + $0x44] sm:$0xf]
      %v3246 = vld [vmem:[%s3227 + $0x48] sm:$0xf]
      %v3247 = vld [vmem:[%s3227 + $0x4c] sm:$0xf]
      %v3248 = vld [vmem:[%s3227 + $0x50] sm:$0xf]
      %v3249 = vld [vmem:[%s3227 + $0x54] sm:$0xf]
      %v3250 = vld [vmem:[%s3227 + $0x58] sm:$0xf]
      %v3251 = vld [vmem:[%s3227 + $0x5c] sm:$0xf]
      %v3252 = vld [vmem:[%s3227 + $0x60] sm:$0xf]
      %v3253 = vld [vmem:[%s3227 + $0x64] sm:$0xf]
      %v3254 = vld [vmem:[%s3227 + $0x68] sm:$0xf]
      %v3255 = vld [vmem:[%s3227 + $0x6c] sm:$0xf]
      %v3256 = vld [vmem:[%s3227 + $0x70] sm:$0xf]
      %v3257 = vld [vmem:[%s3227 + $0x74] sm:$0xf]
      %v3258 = vld [vmem:[%s3227 + $0x78] sm:$0xf]
      %v3259 = vld [vmem:[%s3227 + $0x7c] sm:$0xf]
      %v3264 = vunpack.c.l.b16 %v3223
      %v3265 = vunpack.c.h.b16 %v3223
      %v3266 = vunpack.c.l.b16 %v3224
      %v3267 = vunpack.c.h.b16 %v3224
      %v3268 = vunpack.c.l.b16 %v3225
      %v3269 = vunpack.c.h.b16 %v3225
      %v3270 = vunpack.c.l.b16 %v3226
      %v3271 = vunpack.c.h.b16 %v3226
      %v3272 = vpack.c.b16 %v3266, %v3264
      %v3273 = vpack.c.b16 %v3267, %v3265
      %v3274 = vpack.c.b16 %v3270, %v3268
      %v3275 = vpack.c.b16 %v3271, %v3269
      %v3312 = vunpack.c.l.b16 %v3228
      %v3313 = vunpack.c.l.b16 %v3229
      %v3314 = vunpack.c.l.b16 %v3230
      %v3315 = vunpack.c.l.b16 %v3231
      %v3316 = vunpack.c.l.b16 %v3232
      %v3317 = vunpack.c.l.b16 %v3233
      %v3318 = vunpack.c.l.b16 %v3234
      %v3319 = vunpack.c.l.b16 %v3235
      %v3320 = vunpack.c.l.b16 %v3236
      %v3321 = vunpack.c.l.b16 %v3237
      %v3322 = vunpack.c.l.b16 %v3238
      %v3323 = vunpack.c.l.b16 %v3239
      %v3324 = vunpack.c.l.b16 %v3240
      %v3325 = vunpack.c.l.b16 %v3241
      %v3326 = vunpack.c.l.b16 %v3242
      %v3327 = vunpack.c.l.b16 %v3243
      %v3328 = vunpack.c.l.b16 %v3244
      %v3329 = vunpack.c.l.b16 %v3245
      %v3330 = vunpack.c.l.b16 %v3246
      %v3331 = vunpack.c.l.b16 %v3247
      %v3332 = vunpack.c.l.b16 %v3248
      %v3333 = vunpack.c.l.b16 %v3249
      %v3334 = vunpack.c.l.b16 %v3250
      %v3335 = vunpack.c.l.b16 %v3251
      %v3336 = vunpack.c.l.b16 %v3252
      %v3337 = vunpack.c.l.b16 %v3253
      %v3338 = vunpack.c.l.b16 %v3254
      %v3339 = vunpack.c.l.b16 %v3255
      %v3340 = vunpack.c.l.b16 %v3256
      %v3341 = vunpack.c.l.b16 %v3257
      %v3342 = vunpack.c.l.b16 %v3258
      %v3343 = vunpack.c.l.b16 %v3259
      %v3344 = vpack.c.b16 %v3313, %v3312
      %v3345 = vpack.c.b16 %v3315, %v3314
      %v3346 = vpack.c.b16 %v3317, %v3316
      %v3347 = vpack.c.b16 %v3319, %v3318
      %v3348 = vpack.c.b16 %v3321, %v3320
      %v3349 = vpack.c.b16 %v3323, %v3322
      %v3350 = vpack.c.b16 %v3325, %v3324
      %v3351 = vpack.c.b16 %v3327, %v3326
      %v3352 = vpack.c.b16 %v3329, %v3328
      %v3353 = vpack.c.b16 %v3331, %v3330
      %v3354 = vpack.c.b16 %v3333, %v3332
      %v3355 = vpack.c.b16 %v3335, %v3334
      %v3356 = vpack.c.b16 %v3337, %v3336
      %v3357 = vpack.c.b16 %v3339, %v3338
      %v3358 = vpack.c.b16 %v3341, %v3340
      %v3359 = vpack.c.b16 %v3343, %v3342
      %3376 = vmatprep.subr.bf16.mxu0 0
      %3377 = vmatpush1.bf16.msra.mxu0 %v3351
      %3378 = vmatprep.subr.bf16.mxu0 0
      %3379 = vmatpush1.bf16.msra.mxu0 %v3350
      %3380 = vmatprep.subr.bf16.mxu0 0
      %3381 = vmatpush1.bf16.msra.mxu0 %v3349
      %3382 = vmatprep.subr.bf16.mxu0 0
      %3383 = vmatpush1.bf16.msra.mxu0 %v3348
      %3384 = vmatprep.subr.bf16.mxu0 0
      %3385 = vmatpush1.bf16.msra.mxu0 %v3347
      %3386 = vmatprep.subr.bf16.mxu0 0
      %3387 = vmatpush1.bf16.msra.mxu0 %v3346
      %3388 = vmatprep.subr.bf16.mxu0 0
      %3389 = vmatpush1.bf16.msra.mxu0 %v3345
      %3390 = vmatprep.subr.bf16.mxu0 0
      %3391 = vmatpush1.bf16.msra.mxu0 %v3344
      %3392 = vmatprep.subr.bf16.mxu0 0
      %3393 = vmatpush2.bf16.msra.mxu0 %v3359
      %3394 = vmatprep.subr.bf16.mxu0 0
      %3395 = vmatpush2.bf16.msra.mxu0 %v3358
      %3396 = vmatprep.subr.bf16.mxu0 0
      %3397 = vmatpush2.bf16.msra.mxu0 %v3357
      %3398 = vmatprep.subr.bf16.mxu0 0
      %3399 = vmatpush2.bf16.msra.mxu0 %v3356
      %3400 = vmatprep.subr.bf16.mxu0 0
      %3401 = vmatpush2.bf16.msra.mxu0 %v3355
      %3402 = vmatprep.subr.bf16.mxu0 0
      %3403 = vmatpush2.bf16.msra.mxu0 %v3354
      %3404 = vmatprep.subr.bf16.mxu0 0
      %3405 = vmatpush2.bf16.msra.mxu0 %v3353
      %3406 = vmatprep.subr.bf16.mxu0 0
      %3407 = vmatpush2.bf16.msra.mxu0 %v3352
      %3408 = vmatprep.mubr.bf16.mxu0 %v3273
      %3409 = vmatmul.mubr.bf16.gmra.mxu0 %v3272
      %v3410 = vpop.f32.mrf.mxu0
      %v3411 = vadd.f32 0.0, %v3410
      %v3412 = vpop.f32.mrf.mxu0
      %v3413 = vpop.f32.mrf.mxu0
      %v3414 = vadd.f32 0.0, %v3413
      %v3415 = vpop.f32.mrf.mxu0
      %3416 = vmatprep.mubr.bf16.mxu0 %v3275
      %3417 = vmatmul.mubr.bf16.gmra.mxu0 %v3274
      %v3418 = vpop.f32.mrf.mxu0
      %v3419 = vadd.f32 0.0, %v3418
      %v3420 = vpop.f32.mrf.mxu0
      %v3421 = vpop.f32.mrf.mxu0
      %v3422 = vadd.f32 0.0, %v3421
      %v3423 = vpop.f32.mrf.mxu0
      %3424 = vdwg.mxu0
      %v3425 = vadd.f32 %v3219, %v3411
      %v3426 = vadd.f32 %v3220, %v3414
      %v3427 = vadd.f32 %v3221, %v3419
      %v3428 = vadd.f32 %v3222, %v3422
      %3429 = vst [vmem:[#allocation4] sm:$0xff] %v3425
      %3430 = vst [vmem:[#allocation4 + $0x8] sm:$0xff] %v3426
      %3431 = vst [vmem:[#allocation4 + $0x10] sm:$0xff] %v3427
      %3432 = vst [vmem:[#allocation4 + $0x18] sm:$0xff] %v3428
      %s3433 = scalar_lea.vmem [#allocation2], 120
      %v3434 = vld [vmem:[%s3433] sm:$0x3]
      %v3435 = vld [vmem:[%s3433 + $0x4] sm:$0x3]
      %v3436 = vld [vmem:[%s3433 + $0x8] sm:$0x3]
      %v3437 = vld [vmem:[%s3433 + $0xc] sm:$0x3]
      %v3438 = vld [vmem:[%s3433 + $0x14] sm:$0x3]
      %v3439 = vld [vmem:[%s3433 + $0x18] sm:$0x3]
      %v3440 = vld [vmem:[%s3433 + $0x1c] sm:$0x3]
      %v3441 = vld [vmem:[%s3433 + $0x20] sm:$0x3]
      %v3450 = vcombine.low %v3434, %v3435
      %v3452 = vunpack.c.l.s4 1983009808
      %v3453 = vunpack.c.0.s8 %v3452
      %v3454 = vlaneseq
      %v3455 = vshrl.u32 %v3454, 7
      %v3456 = vsub.s32 %v3453, %v3455
      %v3457 = vrot.slane %v3450, %v3456
      %v3458 = vcombine.low %v3436, %v3437
      %v3460 = vunpack.c.l.s4 1983009808
      %v3461 = vunpack.c.0.s8 %v3460
      %v3462 = vlaneseq
      %v3463 = vshrl.u32 %v3462, 7
      %v3464 = vsub.s32 %v3461, %v3463
      %v3465 = vrot.slane %v3458, %v3464
      %v3466 = vcombine.low %v3438, %v3439
      %v3468 = vunpack.c.l.s4 1983009808
      %v3469 = vunpack.c.0.s8 %v3468
      %v3470 = vlaneseq
      %v3471 = vshrl.u32 %v3470, 7
      %v3472 = vsub.s32 %v3469, %v3471
      %v3473 = vrot.slane %v3466, %v3472
      %v3474 = vcombine.low %v3440, %v3441
      %v3476 = vunpack.c.l.s4 1983009808
      %v3477 = vunpack.c.0.s8 %v3476
      %v3478 = vlaneseq
      %v3479 = vshrl.u32 %v3478, 7
      %v3480 = vsub.s32 %v3477, %v3479
      %v3481 = vrot.slane %v3474, %v3480
      %3486 = vst [vmem:[#allocation3] sm:$0xf] %v3457
      %3487 = vst [vmem:[#allocation3 + $0x8] sm:$0xf] %v3465
      %3488 = vst [vmem:[#allocation3 + $0x10] sm:$0xf] %v3473
      %3489 = vst [vmem:[#allocation3 + $0x18] sm:$0xf] %v3481
      %v3490 = vld [vmem:[%s3162] sm:$0x7]
      %v3491 = vld [vmem:[%s3162 + $0x4] sm:$0x7]
      %v3492 = vld [vmem:[%s3162 + $0x8] sm:$0x7]
      %v3493 = vld [vmem:[%s3162 + $0xc] sm:$0x7]
      %v3494 = vld [vmem:[%s3162 + $0x14] sm:$0x7]
      %v3495 = vld [vmem:[%s3162 + $0x18] sm:$0x7]
      %v3496 = vld [vmem:[%s3162 + $0x1c] sm:$0x7]
      %v3497 = vld [vmem:[%s3162 + $0x20] sm:$0x7]
      %v3507 = vunpack.c.l.s4 1983009808
      %v3508 = vunpack.c.0.s8 %v3507
      %v3509 = vlaneseq
      %v3510 = vshrl.u32 %v3509, 7
      %v3511 = vsub.s32 %v3508, %v3510
      %v3512 = vrot.slane %v3490, %v3511
      %v3513 = vcombine.high %v3512, %v3512
      %v3515 = vunpack.c.l.s4 1983009808
      %v3516 = vunpack.c.0.s8 %v3515
      %v3517 = vlaneseq
      %v3518 = vshrl.u32 %v3517, 7
      %v3519 = vsub.s32 %v3516, %v3518
      %v3520 = vrot.slane %v3491, %v3519
      %v3521 = vcombine.high %v3520, %v3520
      %v3523 = vunpack.c.l.s4 1983009808
      %v3524 = vunpack.c.0.s8 %v3523
      %v3525 = vlaneseq
      %v3526 = vshrl.u32 %v3525, 7
      %v3527 = vsub.s32 %v3524, %v3526
      %v3528 = vrot.slane %v3492, %v3527
      %v3529 = vcombine.high %v3528, %v3528
      %v3531 = vunpack.c.l.s4 1983009808
      %v3532 = vunpack.c.0.s8 %v3531
      %v3533 = vlaneseq
      %v3534 = vshrl.u32 %v3533, 7
      %v3535 = vsub.s32 %v3532, %v3534
      %v3536 = vrot.slane %v3493, %v3535
      %v3537 = vcombine.high %v3536, %v3536
      %v3539 = vunpack.c.l.s4 1983009808
      %v3540 = vunpack.c.0.s8 %v3539
      %v3541 = vlaneseq
      %v3542 = vshrl.u32 %v3541, 7
      %v3543 = vsub.s32 %v3540, %v3542
      %v3544 = vrot.slane %v3494, %v3543
      %v3545 = vcombine.high %v3544, %v3544
      %v3547 = vunpack.c.l.s4 1983009808
      %v3548 = vunpack.c.0.s8 %v3547
      %v3549 = vlaneseq
      %v3550 = vshrl.u32 %v3549, 7
      %v3551 = vsub.s32 %v3548, %v3550
      %v3552 = vrot.slane %v3495, %v3551
      %v3553 = vcombine.high %v3552, %v3552
      %v3555 = vunpack.c.l.s4 1983009808
      %v3556 = vunpack.c.0.s8 %v3555
      %v3557 = vlaneseq
      %v3558 = vshrl.u32 %v3557, 7
      %v3559 = vsub.s32 %v3556, %v3558
      %v3560 = vrot.slane %v3496, %v3559
      %v3561 = vcombine.high %v3560, %v3560
      %v3563 = vunpack.c.l.s4 1983009808
      %v3564 = vunpack.c.0.s8 %v3563
      %v3565 = vlaneseq
      %v3566 = vshrl.u32 %v3565, 7
      %v3567 = vsub.s32 %v3564, %v3566
      %v3568 = vrot.slane %v3497, %v3567
      %v3569 = vcombine.high %v3568, %v3568
      %v3571 = vshrl.u32 %v3512, 16
      %v3573 = vrot.slane %v3571, 6
      %v3574 = vshll.u32 %v3512, 16
      %v3576 = vrot.slane %v3574, 7
      %v3577 = vor.u32 %v3573, %v3576
      %v3578 = vrot.slane %v3577, 2
      %v3580 = vshll.u32 %v3513, 16
      %v3582 = vrot.slane %v3580, 7
      %v3583 = vsel %vm1675, %v3578, %v3582
      %v3585 = vshrl.u32 %v3520, 16
      %v3587 = vrot.slane %v3585, 6
      %v3588 = vshll.u32 %v3520, 16
      %v3590 = vrot.slane %v3588, 7
      %v3591 = vor.u32 %v3587, %v3590
      %v3592 = vrot.slane %v3591, 2
      %v3594 = vshll.u32 %v3521, 16
      %v3596 = vrot.slane %v3594, 7
      %v3597 = vsel %vm1675, %v3592, %v3596
      %v3599 = vshrl.u32 %v3528, 16
      %v3601 = vrot.slane %v3599, 6
      %v3602 = vshll.u32 %v3528, 16
      %v3604 = vrot.slane %v3602, 7
      %v3605 = vor.u32 %v3601, %v3604
      %v3606 = vrot.slane %v3605, 2
      %v3608 = vshll.u32 %v3529, 16
      %v3610 = vrot.slane %v3608, 7
      %v3611 = vsel %vm1675, %v3606, %v3610
      %v3613 = vshrl.u32 %v3536, 16
      %v3615 = vrot.slane %v3613, 6
      %v3616 = vshll.u32 %v3536, 16
      %v3618 = vrot.slane %v3616, 7
      %v3619 = vor.u32 %v3615, %v3618
      %v3620 = vrot.slane %v3619, 2
      %v3622 = vshll.u32 %v3537, 16
      %v3624 = vrot.slane %v3622, 7
      %v3625 = vsel %vm1675, %v3620, %v3624
      %v3627 = vshrl.u32 %v3544, 16
      %v3629 = vrot.slane %v3627, 6
      %v3630 = vshll.u32 %v3544, 16
      %v3632 = vrot.slane %v3630, 7
      %v3633 = vor.u32 %v3629, %v3632
      %v3634 = vrot.slane %v3633, 2
      %v3636 = vshll.u32 %v3545, 16
      %v3638 = vrot.slane %v3636, 7
      %v3639 = vsel %vm1675, %v3634, %v3638
      %v3641 = vshrl.u32 %v3552, 16
      %v3643 = vrot.slane %v3641, 6
      %v3644 = vshll.u32 %v3552, 16
      %v3646 = vrot.slane %v3644, 7
      %v3647 = vor.u32 %v3643, %v3646
      %v3648 = vrot.slane %v3647, 2
      %v3650 = vshll.u32 %v3553, 16
      %v3652 = vrot.slane %v3650, 7
      %v3653 = vsel %vm1675, %v3648, %v3652
      %v3655 = vshrl.u32 %v3560, 16
      %v3657 = vrot.slane %v3655, 6
      %v3658 = vshll.u32 %v3560, 16
      %v3660 = vrot.slane %v3658, 7
      %v3661 = vor.u32 %v3657, %v3660
      %v3662 = vrot.slane %v3661, 2
      %v3664 = vshll.u32 %v3561, 16
      %v3666 = vrot.slane %v3664, 7
      %v3667 = vsel %vm1675, %v3662, %v3666
      %v3669 = vshrl.u32 %v3568, 16
      %v3671 = vrot.slane %v3669, 6
      %v3672 = vshll.u32 %v3568, 16
      %v3674 = vrot.slane %v3672, 7
      %v3675 = vor.u32 %v3671, %v3674
      %v3676 = vrot.slane %v3675, 2
      %v3678 = vshll.u32 %v3569, 16
      %v3680 = vrot.slane %v3678, 7
      %v3681 = vsel %vm1675, %v3676, %v3680
      %v3682 = vcombine.low %v3583, %v3597
      %v3684 = vunpack.c.l.s4 1983009808
      %v3685 = vunpack.c.0.s8 %v3684
      %v3686 = vlaneseq
      %v3687 = vshrl.u32 %v3686, 7
      %v3688 = vsub.s32 %v3685, %v3687
      %v3689 = vrot.slane %v3682, %v3688
      %v3690 = vcombine.low %v3611, %v3625
      %v3692 = vunpack.c.l.s4 1983009808
      %v3693 = vunpack.c.0.s8 %v3692
      %v3694 = vlaneseq
      %v3695 = vshrl.u32 %v3694, 7
      %v3696 = vsub.s32 %v3693, %v3695
      %v3697 = vrot.slane %v3690, %v3696
      %v3698 = vcombine.low %v3639, %v3653
      %v3700 = vunpack.c.l.s4 1983009808
      %v3701 = vunpack.c.0.s8 %v3700
      %v3702 = vlaneseq
      %v3703 = vshrl.u32 %v3702, 7
      %v3704 = vsub.s32 %v3701, %v3703
      %v3705 = vrot.slane %v3698, %v3704
      %v3706 = vcombine.low %v3667, %v3681
      %v3708 = vunpack.c.l.s4 1983009808
      %v3709 = vunpack.c.0.s8 %v3708
      %v3710 = vlaneseq
      %v3711 = vshrl.u32 %v3710, 7
      %v3712 = vsub.s32 %v3709, %v3711
      %v3713 = vrot.slane %v3706, %v3712
      %3718 = vst [vmem:[#allocation3 + $0x4] sm:$0xf] %v3689
      %3719 = vst [vmem:[#allocation3 + $0xc] sm:$0xf] %v3697
      %3720 = vst [vmem:[#allocation3 + $0x14] sm:$0xf] %v3705
      %3721 = vst [vmem:[#allocation3 + $0x1c] sm:$0xf] %v3713
      %v3722 = vld [vmem:[#allocation4] sm:$0xff]
      %v3723 = vld [vmem:[#allocation4 + $0x8] sm:$0xff]
      %v3724 = vld [vmem:[#allocation4 + $0x10] sm:$0xff]
      %v3725 = vld [vmem:[#allocation4 + $0x18] sm:$0xff]
      %v3726 = vld [vmem:[#allocation3] sm:$0xff]
      %v3727 = vld [vmem:[#allocation3 + $0x8] sm:$0xff]
      %v3728 = vld [vmem:[#allocation3 + $0x10] sm:$0xff]
      %v3729 = vld [vmem:[#allocation3 + $0x18] sm:$0xff]
      %s3730 = scalar_lea.vmem %s1, 640
      %v3731 = vld [vmem:[%s3730] sm:$0xf]
      %v3732 = vld [vmem:[%s3730 + $0x4] sm:$0xf]
      %v3733 = vld [vmem:[%s3730 + $0x8] sm:$0xf]
      %v3734 = vld [vmem:[%s3730 + $0xc] sm:$0xf]
      %v3735 = vld [vmem:[%s3730 + $0x10] sm:$0xf]
      %v3736 = vld [vmem:[%s3730 + $0x14] sm:$0xf]
      %v3737 = vld [vmem:[%s3730 + $0x18] sm:$0xf]
      %v3738 = vld [vmem:[%s3730 + $0x1c] sm:$0xf]
      %v3739 = vld [vmem:[%s3730 + $0x20] sm:$0xf]
      %v3740 = vld [vmem:[%s3730 + $0x24] sm:$0xf]
      %v3741 = vld [vmem:[%s3730 + $0x28] sm:$0xf]
      %v3742 = vld [vmem:[%s3730 + $0x2c] sm:$0xf]
      %v3743 = vld [vmem:[%s3730 + $0x30] sm:$0xf]
      %v3744 = vld [vmem:[%s3730 + $0x34] sm:$0xf]
      %v3745 = vld [vmem:[%s3730 + $0x38] sm:$0xf]
      %v3746 = vld [vmem:[%s3730 + $0x3c] sm:$0xf]
      %v3747 = vld [vmem:[%s3730 + $0x40] sm:$0xf]
      %v3748 = vld [vmem:[%s3730 + $0x44] sm:$0xf]
      %v3749 = vld [vmem:[%s3730 + $0x48] sm:$0xf]
      %v3750 = vld [vmem:[%s3730 + $0x4c] sm:$0xf]
      %v3751 = vld [vmem:[%s3730 + $0x50] sm:$0xf]
      %v3752 = vld [vmem:[%s3730 + $0x54] sm:$0xf]
      %v3753 = vld [vmem:[%s3730 + $0x58] sm:$0xf]
      %v3754 = vld [vmem:[%s3730 + $0x5c] sm:$0xf]
      %v3755 = vld [vmem:[%s3730 + $0x60] sm:$0xf]
      %v3756 = vld [vmem:[%s3730 + $0x64] sm:$0xf]
      %v3757 = vld [vmem:[%s3730 + $0x68] sm:$0xf]
      %v3758 = vld [vmem:[%s3730 + $0x6c] sm:$0xf]
      %v3759 = vld [vmem:[%s3730 + $0x70] sm:$0xf]
      %v3760 = vld [vmem:[%s3730 + $0x74] sm:$0xf]
      %v3761 = vld [vmem:[%s3730 + $0x78] sm:$0xf]
      %v3762 = vld [vmem:[%s3730 + $0x7c] sm:$0xf]
      %v3767 = vunpack.c.l.b16 %v3726
      %v3768 = vunpack.c.h.b16 %v3726
      %v3769 = vunpack.c.l.b16 %v3727
      %v3770 = vunpack.c.h.b16 %v3727
      %v3771 = vunpack.c.l.b16 %v3728
      %v3772 = vunpack.c.h.b16 %v3728
      %v3773 = vunpack.c.l.b16 %v3729
      %v3774 = vunpack.c.h.b16 %v3729
      %v3775 = vpack.c.b16 %v3769, %v3767
      %v3776 = vpack.c.b16 %v3770, %v3768
      %v3777 = vpack.c.b16 %v3773, %v3771
      %v3778 = vpack.c.b16 %v3774, %v3772
      %v3815 = vunpack.c.l.b16 %v3731
      %v3816 = vunpack.c.l.b16 %v3732
      %v3817 = vunpack.c.l.b16 %v3733
      %v3818 = vunpack.c.l.b16 %v3734
      %v3819 = vunpack.c.l.b16 %v3735
      %v3820 = vunpack.c.l.b16 %v3736
      %v3821 = vunpack.c.l.b16 %v3737
      %v3822 = vunpack.c.l.b16 %v3738
      %v3823 = vunpack.c.l.b16 %v3739
      %v3824 = vunpack.c.l.b16 %v3740
      %v3825 = vunpack.c.l.b16 %v3741
      %v3826 = vunpack.c.l.b16 %v3742
      %v3827 = vunpack.c.l.b16 %v3743
      %v3828 = vunpack.c.l.b16 %v3744
      %v3829 = vunpack.c.l.b16 %v3745
      %v3830 = vunpack.c.l.b16 %v3746
      %v3831 = vunpack.c.l.b16 %v3747
      %v3832 = vunpack.c.l.b16 %v3748
      %v3833 = vunpack.c.l.b16 %v3749
      %v3834 = vunpack.c.l.b16 %v3750
      %v3835 = vunpack.c.l.b16 %v3751
      %v3836 = vunpack.c.l.b16 %v3752
      %v3837 = vunpack.c.l.b16 %v3753
      %v3838 = vunpack.c.l.b16 %v3754
      %v3839 = vunpack.c.l.b16 %v3755
      %v3840 = vunpack.c.l.b16 %v3756
      %v3841 = vunpack.c.l.b16 %v3757
      %v3842 = vunpack.c.l.b16 %v3758
      %v3843 = vunpack.c.l.b16 %v3759
      %v3844 = vunpack.c.l.b16 %v3760
      %v3845 = vunpack.c.l.b16 %v3761
      %v3846 = vunpack.c.l.b16 %v3762
      %v3847 = vpack.c.b16 %v3816, %v3815
      %v3848 = vpack.c.b16 %v3818, %v3817
      %v3849 = vpack.c.b16 %v3820, %v3819
      %v3850 = vpack.c.b16 %v3822, %v3821
      %v3851 = vpack.c.b16 %v3824, %v3823
      %v3852 = vpack.c.b16 %v3826, %v3825
      %v3853 = vpack.c.b16 %v3828, %v3827
      %v3854 = vpack.c.b16 %v3830, %v3829
      %v3855 = vpack.c.b16 %v3832, %v3831
      %v3856 = vpack.c.b16 %v3834, %v3833
      %v3857 = vpack.c.b16 %v3836, %v3835
      %v3858 = vpack.c.b16 %v3838, %v3837
      %v3859 = vpack.c.b16 %v3840, %v3839
      %v3860 = vpack.c.b16 %v3842, %v3841
      %v3861 = vpack.c.b16 %v3844, %v3843
      %v3862 = vpack.c.b16 %v3846, %v3845
      %3879 = vmatprep.subr.bf16.mxu0 0
      %3880 = vmatpush1.bf16.msra.mxu0 %v3854
      %3881 = vmatprep.subr.bf16.mxu0 0
      %3882 = vmatpush1.bf16.msra.mxu0 %v3853
      %3883 = vmatprep.subr.bf16.mxu0 0
      %3884 = vmatpush1.bf16.msra.mxu0 %v3852
      %3885 = vmatprep.subr.bf16.mxu0 0
      %3886 = vmatpush1.bf16.msra.mxu0 %v3851
      %3887 = vmatprep.subr.bf16.mxu0 0
      %3888 = vmatpush1.bf16.msra.mxu0 %v3850
      %3889 = vmatprep.subr.bf16.mxu0 0
      %3890 = vmatpush1.bf16.msra.mxu0 %v3849
      %3891 = vmatprep.subr.bf16.mxu0 0
      %3892 = vmatpush1.bf16.msra.mxu0 %v3848
      %3893 = vmatprep.subr.bf16.mxu0 0
      %3894 = vmatpush1.bf16.msra.mxu0 %v3847
      %3895 = vmatprep.subr.bf16.mxu0 0
      %3896 = vmatpush2.bf16.msra.mxu0 %v3862
      %3897 = vmatprep.subr.bf16.mxu0 0
      %3898 = vmatpush2.bf16.msra.mxu0 %v3861
      %3899 = vmatprep.subr.bf16.mxu0 0
      %3900 = vmatpush2.bf16.msra.mxu0 %v3860
      %3901 = vmatprep.subr.bf16.mxu0 0
      %3902 = vmatpush2.bf16.msra.mxu0 %v3859
      %3903 = vmatprep.subr.bf16.mxu0 0
      %3904 = vmatpush2.bf16.msra.mxu0 %v3858
      %3905 = vmatprep.subr.bf16.mxu0 0
      %3906 = vmatpush2.bf16.msra.mxu0 %v3857
      %3907 = vmatprep.subr.bf16.mxu0 0
      %3908 = vmatpush2.bf16.msra.mxu0 %v3856
      %3909 = vmatprep.subr.bf16.mxu0 0
      %3910 = vmatpush2.bf16.msra.mxu0 %v3855
      %3911 = vmatprep.mubr.bf16.mxu0 %v3776
      %3912 = vmatmul.mubr.bf16.gmra.mxu0 %v3775
      %v3913 = vpop.f32.mrf.mxu0
      %v3914 = vadd.f32 0.0, %v3913
      %v3915 = vpop.f32.mrf.mxu0
      %v3916 = vpop.f32.mrf.mxu0
      %v3917 = vadd.f32 0.0, %v3916
      %v3918 = vpop.f32.mrf.mxu0
      %3919 = vmatprep.mubr.bf16.mxu0 %v3778
      %3920 = vmatmul.mubr.bf16.gmra.mxu0 %v3777
      %v3921 = vpop.f32.mrf.mxu0
      %v3922 = vadd.f32 0.0, %v3921
      %v3923 = vpop.f32.mrf.mxu0
      %v3924 = vpop.f32.mrf.mxu0
      %v3925 = vadd.f32 0.0, %v3924
      %v3926 = vpop.f32.mrf.mxu0
      %3927 = vdwg.mxu0
      %v3928 = vadd.f32 %v3722, %v3914
      %v3929 = vadd.f32 %v3723, %v3917
      %v3930 = vadd.f32 %v3724, %v3922
      %v3931 = vadd.f32 %v3725, %v3925
      %3932 = vst [vmem:[#allocation4] sm:$0xff] %v3928
      %3933 = vst [vmem:[#allocation4 + $0x8] sm:$0xff] %v3929
      %3934 = vst [vmem:[#allocation4 + $0x10] sm:$0xff] %v3930
      %3935 = vst [vmem:[#allocation4 + $0x18] sm:$0xff] %v3931
      %v3936 = vld [vmem:[%s684] sm:$0x3]
      %v3937 = vld [vmem:[%s684 + $0x4] sm:$0x3]
      %v3938 = vld [vmem:[%s684 + $0x8] sm:$0x3]
      %v3939 = vld [vmem:[%s684 + $0xc] sm:$0x3]
      %v3940 = vld [vmem:[%s684 + $0x14] sm:$0x3]
      %v3941 = vld [vmem:[%s684 + $0x18] sm:$0x3]
      %v3942 = vld [vmem:[%s684 + $0x1c] sm:$0x3]
      %v3943 = vld [vmem:[%s684 + $0x20] sm:$0x3]
      %v3952 = vcombine.low %v3936, %v3937
      %v3954 = vunpack.c.l.s4 1983009808
      %v3955 = vunpack.c.0.s8 %v3954
      %v3956 = vlaneseq
      %v3957 = vshrl.u32 %v3956, 7
      %v3958 = vsub.s32 %v3955, %v3957
      %v3959 = vrot.slane %v3952, %v3958
      %v3960 = vcombine.low %v3938, %v3939
      %v3962 = vunpack.c.l.s4 1983009808
      %v3963 = vunpack.c.0.s8 %v3962
      %v3964 = vlaneseq
      %v3965 = vshrl.u32 %v3964, 7
      %v3966 = vsub.s32 %v3963, %v3965
      %v3967 = vrot.slane %v3960, %v3966
      %v3968 = vcombine.low %v3940, %v3941
      %v3970 = vunpack.c.l.s4 1983009808
      %v3971 = vunpack.c.0.s8 %v3970
      %v3972 = vlaneseq
      %v3973 = vshrl.u32 %v3972, 7
      %v3974 = vsub.s32 %v3971, %v3973
      %v3975 = vrot.slane %v3968, %v3974
      %v3976 = vcombine.low %v3942, %v3943
      %v3978 = vunpack.c.l.s4 1983009808
      %v3979 = vunpack.c.0.s8 %v3978
      %v3980 = vlaneseq
      %v3981 = vshrl.u32 %v3980, 7
      %v3982 = vsub.s32 %v3979, %v3981
      %v3983 = vrot.slane %v3976, %v3982
      %3988 = vst [vmem:[#allocation3] sm:$0xf] %v3959
      %3989 = vst [vmem:[#allocation3 + $0x8] sm:$0xf] %v3967
      %3990 = vst [vmem:[#allocation3 + $0x10] sm:$0xf] %v3975
      %3991 = vst [vmem:[#allocation3 + $0x18] sm:$0xf] %v3983
      %v3992 = vld [vmem:[#allocation2] sm:$0x3]
      %v3993 = vld [vmem:[#allocation2 + $0x4] sm:$0x3]
      %v3994 = vld [vmem:[#allocation2 + $0x8] sm:$0x3]
      %v3995 = vld [vmem:[#allocation2 + $0xc] sm:$0x3]
      %v3996 = vld [vmem:[#allocation2 + $0x14] sm:$0x3]
      %v3997 = vld [vmem:[#allocation2 + $0x18] sm:$0x3]
      %v3998 = vld [vmem:[#allocation2 + $0x1c] sm:$0x3]
      %v3999 = vld [vmem:[#allocation2 + $0x20] sm:$0x3]
      %v4008 = vcombine.low %v3992, %v3993
      %v4010 = vunpack.c.l.s4 1983009808
      %v4011 = vunpack.c.0.s8 %v4010
      %v4012 = vlaneseq
      %v4013 = vshrl.u32 %v4012, 7
      %v4014 = vsub.s32 %v4011, %v4013
      %v4015 = vrot.slane %v4008, %v4014
      %v4016 = vcombine.low %v3994, %v3995
      %v4018 = vunpack.c.l.s4 1983009808
      %v4019 = vunpack.c.0.s8 %v4018
      %v4020 = vlaneseq
      %v4021 = vshrl.u32 %v4020, 7
      %v4022 = vsub.s32 %v4019, %v4021
      %v4023 = vrot.slane %v4016, %v4022
      %v4024 = vcombine.low %v3996, %v3997
      %v4026 = vunpack.c.l.s4 1983009808
      %v4027 = vunpack.c.0.s8 %v4026
      %v4028 = vlaneseq
      %v4029 = vshrl.u32 %v4028, 7
      %v4030 = vsub.s32 %v4027, %v4029
      %v4031 = vrot.slane %v4024, %v4030
      %v4032 = vcombine.low %v3998, %v3999
      %v4034 = vunpack.c.l.s4 1983009808
      %v4035 = vunpack.c.0.s8 %v4034
      %v4036 = vlaneseq
      %v4037 = vshrl.u32 %v4036, 7
      %v4038 = vsub.s32 %v4035, %v4037
      %v4039 = vrot.slane %v4032, %v4038
      %4044 = vst [vmem:[#allocation3 + $0x4] sm:$0xf] %v4015
      %4045 = vst [vmem:[#allocation3 + $0xc] sm:$0xf] %v4023
      %4046 = vst [vmem:[#allocation3 + $0x14] sm:$0xf] %v4031
      %4047 = vst [vmem:[#allocation3 + $0x1c] sm:$0xf] %v4039
      %v4048 = vld [vmem:[#allocation4] sm:$0xff]
      %v4049 = vld [vmem:[#allocation4 + $0x8] sm:$0xff]
      %v4050 = vld [vmem:[#allocation4 + $0x10] sm:$0xff]
      %v4051 = vld [vmem:[#allocation4 + $0x18] sm:$0xff]
      %v4052 = vld [vmem:[#allocation3] sm:$0xff]
      %v4053 = vld [vmem:[#allocation3 + $0x8] sm:$0xff]
      %v4054 = vld [vmem:[#allocation3 + $0x10] sm:$0xff]
      %v4055 = vld [vmem:[#allocation3 + $0x18] sm:$0xff]
      %s4056 = scalar_lea.vmem %s1, 768
      %v4057 = vld [vmem:[%s4056] sm:$0xf]
      %v4058 = vld [vmem:[%s4056 + $0x4] sm:$0xf]
      %v4059 = vld [vmem:[%s4056 + $0x8] sm:$0xf]
      %v4060 = vld [vmem:[%s4056 + $0xc] sm:$0xf]
      %v4061 = vld [vmem:[%s4056 + $0x10] sm:$0xf]
      %v4062 = vld [vmem:[%s4056 + $0x14] sm:$0xf]
      %v4063 = vld [vmem:[%s4056 + $0x18] sm:$0xf]
      %v4064 = vld [vmem:[%s4056 + $0x1c] sm:$0xf]
      %v4065 = vld [vmem:[%s4056 + $0x20] sm:$0xf]
      %v4066 = vld [vmem:[%s4056 + $0x24] sm:$0xf]
      %v4067 = vld [vmem:[%s4056 + $0x28] sm:$0xf]
      %v4068 = vld [vmem:[%s4056 + $0x2c] sm:$0xf]
      %v4069 = vld [vmem:[%s4056 + $0x30] sm:$0xf]
      %v4070 = vld [vmem:[%s4056 + $0x34] sm:$0xf]
      %v4071 = vld [vmem:[%s4056 + $0x38] sm:$0xf]
      %v4072 = vld [vmem:[%s4056 + $0x3c] sm:$0xf]
      %v4073 = vld [vmem:[%s4056 + $0x40] sm:$0xf]
      %v4074 = vld [vmem:[%s4056 + $0x44] sm:$0xf]
      %v4075 = vld [vmem:[%s4056 + $0x48] sm:$0xf]
      %v4076 = vld [vmem:[%s4056 + $0x4c] sm:$0xf]
      %v4077 = vld [vmem:[%s4056 + $0x50] sm:$0xf]
      %v4078 = vld [vmem:[%s4056 + $0x54] sm:$0xf]
      %v4079 = vld [vmem:[%s4056 + $0x58] sm:$0xf]
      %v4080 = vld [vmem:[%s4056 + $0x5c] sm:$0xf]
      %v4081 = vld [vmem:[%s4056 + $0x60] sm:$0xf]
      %v4082 = vld [vmem:[%s4056 + $0x64] sm:$0xf]
      %v4083 = vld [vmem:[%s4056 + $0x68] sm:$0xf]
      %v4084 = vld [vmem:[%s4056 + $0x6c] sm:$0xf]
      %v4085 = vld [vmem:[%s4056 + $0x70] sm:$0xf]
      %v4086 = vld [vmem:[%s4056 + $0x74] sm:$0xf]
      %v4087 = vld [vmem:[%s4056 + $0x78] sm:$0xf]
      %v4088 = vld [vmem:[%s4056 + $0x7c] sm:$0xf]
      %v4093 = vunpack.c.l.b16 %v4052
      %v4094 = vunpack.c.h.b16 %v4052
      %v4095 = vunpack.c.l.b16 %v4053
      %v4096 = vunpack.c.h.b16 %v4053
      %v4097 = vunpack.c.l.b16 %v4054
      %v4098 = vunpack.c.h.b16 %v4054
      %v4099 = vunpack.c.l.b16 %v4055
      %v4100 = vunpack.c.h.b16 %v4055
      %v4101 = vpack.c.b16 %v4095, %v4093
      %v4102 = vpack.c.b16 %v4096, %v4094
      %v4103 = vpack.c.b16 %v4099, %v4097
      %v4104 = vpack.c.b16 %v4100, %v4098
      %v4141 = vunpack.c.l.b16 %v4057
      %v4142 = vunpack.c.l.b16 %v4058
      %v4143 = vunpack.c.l.b16 %v4059
      %v4144 = vunpack.c.l.b16 %v4060
      %v4145 = vunpack.c.l.b16 %v4061
      %v4146 = vunpack.c.l.b16 %v4062
      %v4147 = vunpack.c.l.b16 %v4063
      %v4148 = vunpack.c.l.b16 %v4064
      %v4149 = vunpack.c.l.b16 %v4065
      %v4150 = vunpack.c.l.b16 %v4066
      %v4151 = vunpack.c.l.b16 %v4067
      %v4152 = vunpack.c.l.b16 %v4068
      %v4153 = vunpack.c.l.b16 %v4069
      %v4154 = vunpack.c.l.b16 %v4070
      %v4155 = vunpack.c.l.b16 %v4071
      %v4156 = vunpack.c.l.b16 %v4072
      %v4157 = vunpack.c.l.b16 %v4073
      %v4158 = vunpack.c.l.b16 %v4074
      %v4159 = vunpack.c.l.b16 %v4075
      %v4160 = vunpack.c.l.b16 %v4076
      %v4161 = vunpack.c.l.b16 %v4077
      %v4162 = vunpack.c.l.b16 %v4078
      %v4163 = vunpack.c.l.b16 %v4079
      %v4164 = vunpack.c.l.b16 %v4080
      %v4165 = vunpack.c.l.b16 %v4081
      %v4166 = vunpack.c.l.b16 %v4082
      %v4167 = vunpack.c.l.b16 %v4083
      %v4168 = vunpack.c.l.b16 %v4084
      %v4169 = vunpack.c.l.b16 %v4085
      %v4170 = vunpack.c.l.b16 %v4086
      %v4171 = vunpack.c.l.b16 %v4087
      %v4172 = vunpack.c.l.b16 %v4088
      %v4173 = vpack.c.b16 %v4142, %v4141
      %v4174 = vpack.c.b16 %v4144, %v4143
      %v4175 = vpack.c.b16 %v4146, %v4145
      %v4176 = vpack.c.b16 %v4148, %v4147
      %v4177 = vpack.c.b16 %v4150, %v4149
      %v4178 = vpack.c.b16 %v4152, %v4151
      %v4179 = vpack.c.b16 %v4154, %v4153
      %v4180 = vpack.c.b16 %v4156, %v4155
      %v4181 = vpack.c.b16 %v4158, %v4157
      %v4182 = vpack.c.b16 %v4160, %v4159
      %v4183 = vpack.c.b16 %v4162, %v4161
      %v4184 = vpack.c.b16 %v4164, %v4163
      %v4185 = vpack.c.b16 %v4166, %v4165
      %v4186 = vpack.c.b16 %v4168, %v4167
      %v4187 = vpack.c.b16 %v4170, %v4169
      %v4188 = vpack.c.b16 %v4172, %v4171
      %4205 = vmatprep.subr.bf16.mxu0 0
      %4206 = vmatpush1.bf16.msra.mxu0 %v4180
      %4207 = vmatprep.subr.bf16.mxu0 0
      %4208 = vmatpush1.bf16.msra.mxu0 %v4179
      %4209 = vmatprep.subr.bf16.mxu0 0
      %4210 = vmatpush1.bf16.msra.mxu0 %v4178
      %4211 = vmatprep.subr.bf16.mxu0 0
      %4212 = vmatpush1.bf16.msra.mxu0 %v4177
      %4213 = vmatprep.subr.bf16.mxu0 0
      %4214 = vmatpush1.bf16.msra.mxu0 %v4176
      %4215 = vmatprep.subr.bf16.mxu0 0
      %4216 = vmatpush1.bf16.msra.mxu0 %v4175
      %4217 = vmatprep.subr.bf16.mxu0 0
      %4218 = vmatpush1.bf16.msra.mxu0 %v4174
      %4219 = vmatprep.subr.bf16.mxu0 0
      %4220 = vmatpush1.bf16.msra.mxu0 %v4173
      %4221 = vmatprep.subr.bf16.mxu0 0
      %4222 = vmatpush2.bf16.msra.mxu0 %v4188
      %4223 = vmatprep.subr.bf16.mxu0 0
      %4224 = vmatpush2.bf16.msra.mxu0 %v4187
      %4225 = vmatprep.subr.bf16.mxu0 0
      %4226 = vmatpush2.bf16.msra.mxu0 %v4186
      %4227 = vmatprep.subr.bf16.mxu0 0
      %4228 = vmatpush2.bf16.msra.mxu0 %v4185
      %4229 = vmatprep.subr.bf16.mxu0 0
      %4230 = vmatpush2.bf16.msra.mxu0 %v4184
      %4231 = vmatprep.subr.bf16.mxu0 0
      %4232 = vmatpush2.bf16.msra.mxu0 %v4183
      %4233 = vmatprep.subr.bf16.mxu0 0
      %4234 = vmatpush2.bf16.msra.mxu0 %v4182
      %4235 = vmatprep.subr.bf16.mxu0 0
      %4236 = vmatpush2.bf16.msra.mxu0 %v4181
      %4237 = vmatprep.mubr.bf16.mxu0 %v4102
      %4238 = vmatmul.mubr.bf16.gmra.mxu0 %v4101
      %v4239 = vpop.f32.mrf.mxu0
      %v4240 = vadd.f32 0.0, %v4239
      %v4241 = vpop.f32.mrf.mxu0
      %v4242 = vpop.f32.mrf.mxu0
      %v4243 = vadd.f32 0.0, %v4242
      %v4244 = vpop.f32.mrf.mxu0
      %4245 = vmatprep.mubr.bf16.mxu0 %v4104
      %4246 = vmatmul.mubr.bf16.gmra.mxu0 %v4103
      %v4247 = vpop.f32.mrf.mxu0
      %v4248 = vadd.f32 0.0, %v4247
      %v4249 = vpop.f32.mrf.mxu0
      %v4250 = vpop.f32.mrf.mxu0
      %v4251 = vadd.f32 0.0, %v4250
      %v4252 = vpop.f32.mrf.mxu0
      %4253 = vdwg.mxu0
      %v4254 = vadd.f32 %v4048, %v4240
      %v4255 = vadd.f32 %v4049, %v4243
      %v4256 = vadd.f32 %v4050, %v4248
      %v4257 = vadd.f32 %v4051, %v4251
      %4258 = vst [vmem:[#allocation4] sm:$0xff] %v4254
      %4259 = vst [vmem:[#allocation4 + $0x8] sm:$0xff] %v4255
      %4260 = vst [vmem:[#allocation4 + $0x10] sm:$0xff] %v4256
      %4261 = vst [vmem:[#allocation4 + $0x18] sm:$0xff] %v4257
      %v4262 = vld [vmem:[%s684] sm:$0x7]
      %v4263 = vld [vmem:[%s684 + $0x4] sm:$0x7]
      %v4264 = vld [vmem:[%s684 + $0x8] sm:$0x7]
      %v4265 = vld [vmem:[%s684 + $0xc] sm:$0x7]
      %v4266 = vld [vmem:[%s684 + $0x14] sm:$0x7]
      %v4267 = vld [vmem:[%s684 + $0x18] sm:$0x7]
      %v4268 = vld [vmem:[%s684 + $0x1c] sm:$0x7]
      %v4269 = vld [vmem:[%s684 + $0x20] sm:$0x7]
      %v4279 = vunpack.c.l.s4 1983009808
      %v4280 = vunpack.c.0.s8 %v4279
      %v4281 = vlaneseq
      %v4282 = vshrl.u32 %v4281, 7
      %v4283 = vsub.s32 %v4280, %v4282
      %v4284 = vrot.slane %v4262, %v4283
      %v4285 = vcombine.high %v4284, %v4284
      %v4287 = vunpack.c.l.s4 1983009808
      %v4288 = vunpack.c.0.s8 %v4287
      %v4289 = vlaneseq
      %v4290 = vshrl.u32 %v4289, 7
      %v4291 = vsub.s32 %v4288, %v4290
      %v4292 = vrot.slane %v4263, %v4291
      %v4293 = vcombine.high %v4292, %v4292
      %v4295 = vunpack.c.l.s4 1983009808
      %v4296 = vunpack.c.0.s8 %v4295
      %v4297 = vlaneseq
      %v4298 = vshrl.u32 %v4297, 7
      %v4299 = vsub.s32 %v4296, %v4298
      %v4300 = vrot.slane %v4264, %v4299
      %v4301 = vcombine.high %v4300, %v4300
      %v4303 = vunpack.c.l.s4 1983009808
      %v4304 = vunpack.c.0.s8 %v4303
      %v4305 = vlaneseq
      %v4306 = vshrl.u32 %v4305, 7
      %v4307 = vsub.s32 %v4304, %v4306
      %v4308 = vrot.slane %v4265, %v4307
      %v4309 = vcombine.high %v4308, %v4308
      %v4311 = vunpack.c.l.s4 1983009808
      %v4312 = vunpack.c.0.s8 %v4311
      %v4313 = vlaneseq
      %v4314 = vshrl.u32 %v4313, 7
      %v4315 = vsub.s32 %v4312, %v4314
      %v4316 = vrot.slane %v4266, %v4315
      %v4317 = vcombine.high %v4316, %v4316
      %v4319 = vunpack.c.l.s4 1983009808
      %v4320 = vunpack.c.0.s8 %v4319
      %v4321 = vlaneseq
      %v4322 = vshrl.u32 %v4321, 7
      %v4323 = vsub.s32 %v4320, %v4322
      %v4324 = vrot.slane %v4267, %v4323
      %v4325 = vcombine.high %v4324, %v4324
      %v4327 = vunpack.c.l.s4 1983009808
      %v4328 = vunpack.c.0.s8 %v4327
      %v4329 = vlaneseq
      %v4330 = vshrl.u32 %v4329, 7
      %v4331 = vsub.s32 %v4328, %v4330
      %v4332 = vrot.slane %v4268, %v4331
      %v4333 = vcombine.high %v4332, %v4332
      %v4335 = vunpack.c.l.s4 1983009808
      %v4336 = vunpack.c.0.s8 %v4335
      %v4337 = vlaneseq
      %v4338 = vshrl.u32 %v4337, 7
      %v4339 = vsub.s32 %v4336, %v4338
      %v4340 = vrot.slane %v4269, %v4339
      %v4341 = vcombine.high %v4340, %v4340
      %v4343 = vshrl.u32 %v4284, 16
      %v4345 = vrot.slane %v4343, 6
      %v4346 = vshll.u32 %v4284, 16
      %v4348 = vrot.slane %v4346, 7
      %v4349 = vor.u32 %v4345, %v4348
      %v4350 = vrot.slane %v4349, 2
      %v4352 = vshll.u32 %v4285, 16
      %v4354 = vrot.slane %v4352, 7
      %v4355 = vsel %vm1675, %v4350, %v4354
      %v4357 = vshrl.u32 %v4292, 16
      %v4359 = vrot.slane %v4357, 6
      %v4360 = vshll.u32 %v4292, 16
      %v4362 = vrot.slane %v4360, 7
      %v4363 = vor.u32 %v4359, %v4362
      %v4364 = vrot.slane %v4363, 2
      %v4366 = vshll.u32 %v4293, 16
      %v4368 = vrot.slane %v4366, 7
      %v4369 = vsel %vm1675, %v4364, %v4368
      %v4371 = vshrl.u32 %v4300, 16
      %v4373 = vrot.slane %v4371, 6
      %v4374 = vshll.u32 %v4300, 16
      %v4376 = vrot.slane %v4374, 7
      %v4377 = vor.u32 %v4373, %v4376
      %v4378 = vrot.slane %v4377, 2
      %v4380 = vshll.u32 %v4301, 16
      %v4382 = vrot.slane %v4380, 7
      %v4383 = vsel %vm1675, %v4378, %v4382
      %v4385 = vshrl.u32 %v4308, 16
      %v4387 = vrot.slane %v4385, 6
      %v4388 = vshll.u32 %v4308, 16
      %v4390 = vrot.slane %v4388, 7
      %v4391 = vor.u32 %v4387, %v4390
      %v4392 = vrot.slane %v4391, 2
      %v4394 = vshll.u32 %v4309, 16
      %v4396 = vrot.slane %v4394, 7
      %v4397 = vsel %vm1675, %v4392, %v4396
      %v4399 = vshrl.u32 %v4316, 16
      %v4401 = vrot.slane %v4399, 6
      %v4402 = vshll.u32 %v4316, 16
      %v4404 = vrot.slane %v4402, 7
      %v4405 = vor.u32 %v4401, %v4404
      %v4406 = vrot.slane %v4405, 2
      %v4408 = vshll.u32 %v4317, 16
      %v4410 = vrot.slane %v4408, 7
      %v4411 = vsel %vm1675, %v4406, %v4410
      %v4413 = vshrl.u32 %v4324, 16
      %v4415 = vrot.slane %v4413, 6
      %v4416 = vshll.u32 %v4324, 16
      %v4418 = vrot.slane %v4416, 7
      %v4419 = vor.u32 %v4415, %v4418
      %v4420 = vrot.slane %v4419, 2
      %v4422 = vshll.u32 %v4325, 16
      %v4424 = vrot.slane %v4422, 7
      %v4425 = vsel %vm1675, %v4420, %v4424
      %v4427 = vshrl.u32 %v4332, 16
      %v4429 = vrot.slane %v4427, 6
      %v4430 = vshll.u32 %v4332, 16
      %v4432 = vrot.slane %v4430, 7
      %v4433 = vor.u32 %v4429, %v4432
      %v4434 = vrot.slane %v4433, 2
      %v4436 = vshll.u32 %v4333, 16
      %v4438 = vrot.slane %v4436, 7
      %v4439 = vsel %vm1675, %v4434, %v4438
      %v4441 = vshrl.u32 %v4340, 16
      %v4443 = vrot.slane %v4441, 6
      %v4444 = vshll.u32 %v4340, 16
      %v4446 = vrot.slane %v4444, 7
      %v4447 = vor.u32 %v4443, %v4446
      %v4448 = vrot.slane %v4447, 2
      %v4450 = vshll.u32 %v4341, 16
      %v4452 = vrot.slane %v4450, 7
      %v4453 = vsel %vm1675, %v4448, %v4452
      %v4454 = vcombine.low %v4355, %v4369
      %v4456 = vunpack.c.l.s4 1983009808
      %v4457 = vunpack.c.0.s8 %v4456
      %v4458 = vlaneseq
      %v4459 = vshrl.u32 %v4458, 7
      %v4460 = vsub.s32 %v4457, %v4459
      %v4461 = vrot.slane %v4454, %v4460
      %v4462 = vcombine.low %v4383, %v4397
      %v4464 = vunpack.c.l.s4 1983009808
      %v4465 = vunpack.c.0.s8 %v4464
      %v4466 = vlaneseq
      %v4467 = vshrl.u32 %v4466, 7
      %v4468 = vsub.s32 %v4465, %v4467
      %v4469 = vrot.slane %v4462, %v4468
      %v4470 = vcombine.low %v4411, %v4425
      %v4472 = vunpack.c.l.s4 1983009808
      %v4473 = vunpack.c.0.s8 %v4472
      %v4474 = vlaneseq
      %v4475 = vshrl.u32 %v4474, 7
      %v4476 = vsub.s32 %v4473, %v4475
      %v4477 = vrot.slane %v4470, %v4476
      %v4478 = vcombine.low %v4439, %v4453
      %v4480 = vunpack.c.l.s4 1983009808
      %v4481 = vunpack.c.0.s8 %v4480
      %v4482 = vlaneseq
      %v4483 = vshrl.u32 %v4482, 7
      %v4484 = vsub.s32 %v4481, %v4483
      %v4485 = vrot.slane %v4478, %v4484
      %4490 = vst [vmem:[#allocation3] sm:$0xf] %v4461
      %4491 = vst [vmem:[#allocation3 + $0x8] sm:$0xf] %v4469
      %4492 = vst [vmem:[#allocation3 + $0x10] sm:$0xf] %v4477
      %4493 = vst [vmem:[#allocation3 + $0x18] sm:$0xf] %v4485
      %v4494 = vld [vmem:[%s866] sm:$0x3]
      %v4495 = vld [vmem:[%s866 + $0x4] sm:$0x3]
      %v4496 = vld [vmem:[%s866 + $0x8] sm:$0x3]
      %v4497 = vld [vmem:[%s866 + $0xc] sm:$0x3]
      %v4498 = vld [vmem:[%s866 + $0x14] sm:$0x3]
      %v4499 = vld [vmem:[%s866 + $0x18] sm:$0x3]
      %v4500 = vld [vmem:[%s866 + $0x1c] sm:$0x3]
      %v4501 = vld [vmem:[%s866 + $0x20] sm:$0x3]
      %v4510 = vcombine.low %v4494, %v4495
      %v4512 = vunpack.c.l.s4 1983009808
      %v4513 = vunpack.c.0.s8 %v4512
      %v4514 = vlaneseq
      %v4515 = vshrl.u32 %v4514, 7
      %v4516 = vsub.s32 %v4513, %v4515
      %v4517 = vrot.slane %v4510, %v4516
      %v4518 = vcombine.low %v4496, %v4497
      %v4520 = vunpack.c.l.s4 1983009808
      %v4521 = vunpack.c.0.s8 %v4520
      %v4522 = vlaneseq
      %v4523 = vshrl.u32 %v4522, 7
      %v4524 = vsub.s32 %v4521, %v4523
      %v4525 = vrot.slane %v4518, %v4524
      %v4526 = vcombine.low %v4498, %v4499
      %v4528 = vunpack.c.l.s4 1983009808
      %v4529 = vunpack.c.0.s8 %v4528
      %v4530 = vlaneseq
      %v4531 = vshrl.u32 %v4530, 7
      %v4532 = vsub.s32 %v4529, %v4531
      %v4533 = vrot.slane %v4526, %v4532
      %v4534 = vcombine.low %v4500, %v4501
      %v4536 = vunpack.c.l.s4 1983009808
      %v4537 = vunpack.c.0.s8 %v4536
      %v4538 = vlaneseq
      %v4539 = vshrl.u32 %v4538, 7
      %v4540 = vsub.s32 %v4537, %v4539
      %v4541 = vrot.slane %v4534, %v4540
      %4546 = vst [vmem:[#allocation3 + $0x4] sm:$0xf] %v4517
      %4547 = vst [vmem:[#allocation3 + $0xc] sm:$0xf] %v4525
      %4548 = vst [vmem:[#allocation3 + $0x14] sm:$0xf] %v4533
      %4549 = vst [vmem:[#allocation3 + $0x1c] sm:$0xf] %v4541
      %v4550 = vld [vmem:[#allocation4] sm:$0xff]
      %v4551 = vld [vmem:[#allocation4 + $0x8] sm:$0xff]
      %v4552 = vld [vmem:[#allocation4 + $0x10] sm:$0xff]
      %v4553 = vld [vmem:[#allocation4 + $0x18] sm:$0xff]
      %v4554 = vld [vmem:[#allocation3] sm:$0xff]
      %v4555 = vld [vmem:[#allocation3 + $0x8] sm:$0xff]
      %v4556 = vld [vmem:[#allocation3 + $0x10] sm:$0xff]
      %v4557 = vld [vmem:[#allocation3 + $0x18] sm:$0xff]
      %s4558 = scalar_lea.vmem %s1, 896
      %v4559 = vld [vmem:[%s4558] sm:$0xf]
      %v4560 = vld [vmem:[%s4558 + $0x4] sm:$0xf]
      %v4561 = vld [vmem:[%s4558 + $0x8] sm:$0xf]
      %v4562 = vld [vmem:[%s4558 + $0xc] sm:$0xf]
      %v4563 = vld [vmem:[%s4558 + $0x10] sm:$0xf]
      %v4564 = vld [vmem:[%s4558 + $0x14] sm:$0xf]
      %v4565 = vld [vmem:[%s4558 + $0x18] sm:$0xf]
      %v4566 = vld [vmem:[%s4558 + $0x1c] sm:$0xf]
      %v4567 = vld [vmem:[%s4558 + $0x20] sm:$0xf]
      %v4568 = vld [vmem:[%s4558 + $0x24] sm:$0xf]
      %v4569 = vld [vmem:[%s4558 + $0x28] sm:$0xf]
      %v4570 = vld [vmem:[%s4558 + $0x2c] sm:$0xf]
      %v4571 = vld [vmem:[%s4558 + $0x30] sm:$0xf]
      %v4572 = vld [vmem:[%s4558 + $0x34] sm:$0xf]
      %v4573 = vld [vmem:[%s4558 + $0x38] sm:$0xf]
      %v4574 = vld [vmem:[%s4558 + $0x3c] sm:$0xf]
      %v4575 = vld [vmem:[%s4558 + $0x40] sm:$0xf]
      %v4576 = vld [vmem:[%s4558 + $0x44] sm:$0xf]
      %v4577 = vld [vmem:[%s4558 + $0x48] sm:$0xf]
      %v4578 = vld [vmem:[%s4558 + $0x4c] sm:$0xf]
      %v4579 = vld [vmem:[%s4558 + $0x50] sm:$0xf]
      %v4580 = vld [vmem:[%s4558 + $0x54] sm:$0xf]
      %v4581 = vld [vmem:[%s4558 + $0x58] sm:$0xf]
      %v4582 = vld [vmem:[%s4558 + $0x5c] sm:$0xf]
      %v4583 = vld [vmem:[%s4558 + $0x60] sm:$0xf]
      %v4584 = vld [vmem:[%s4558 + $0x64] sm:$0xf]
      %v4585 = vld [vmem:[%s4558 + $0x68] sm:$0xf]
      %v4586 = vld [vmem:[%s4558 + $0x6c] sm:$0xf]
      %v4587 = vld [vmem:[%s4558 + $0x70] sm:$0xf]
      %v4588 = vld [vmem:[%s4558 + $0x74] sm:$0xf]
      %v4589 = vld [vmem:[%s4558 + $0x78] sm:$0xf]
      %v4590 = vld [vmem:[%s4558 + $0x7c] sm:$0xf]
      %v4595 = vunpack.c.l.b16 %v4554
      %v4596 = vunpack.c.h.b16 %v4554
      %v4597 = vunpack.c.l.b16 %v4555
      %v4598 = vunpack.c.h.b16 %v4555
      %v4599 = vunpack.c.l.b16 %v4556
      %v4600 = vunpack.c.h.b16 %v4556
      %v4601 = vunpack.c.l.b16 %v4557
      %v4602 = vunpack.c.h.b16 %v4557
      %v4603 = vpack.c.b16 %v4597, %v4595
      %v4604 = vpack.c.b16 %v4598, %v4596
      %v4605 = vpack.c.b16 %v4601, %v4599
      %v4606 = vpack.c.b16 %v4602, %v4600
      %v4643 = vunpack.c.l.b16 %v4559
      %v4644 = vunpack.c.l.b16 %v4560
      %v4645 = vunpack.c.l.b16 %v4561
      %v4646 = vunpack.c.l.b16 %v4562
      %v4647 = vunpack.c.l.b16 %v4563
      %v4648 = vunpack.c.l.b16 %v4564
      %v4649 = vunpack.c.l.b16 %v4565
      %v4650 = vunpack.c.l.b16 %v4566
      %v4651 = vunpack.c.l.b16 %v4567
      %v4652 = vunpack.c.l.b16 %v4568
      %v4653 = vunpack.c.l.b16 %v4569
      %v4654 = vunpack.c.l.b16 %v4570
      %v4655 = vunpack.c.l.b16 %v4571
      %v4656 = vunpack.c.l.b16 %v4572
      %v4657 = vunpack.c.l.b16 %v4573
      %v4658 = vunpack.c.l.b16 %v4574
      %v4659 = vunpack.c.l.b16 %v4575
      %v4660 = vunpack.c.l.b16 %v4576
      %v4661 = vunpack.c.l.b16 %v4577
      %v4662 = vunpack.c.l.b16 %v4578
      %v4663 = vunpack.c.l.b16 %v4579
      %v4664 = vunpack.c.l.b16 %v4580
      %v4665 = vunpack.c.l.b16 %v4581
      %v4666 = vunpack.c.l.b16 %v4582
      %v4667 = vunpack.c.l.b16 %v4583
      %v4668 = vunpack.c.l.b16 %v4584
      %v4669 = vunpack.c.l.b16 %v4585
      %v4670 = vunpack.c.l.b16 %v4586
      %v4671 = vunpack.c.l.b16 %v4587
      %v4672 = vunpack.c.l.b16 %v4588
      %v4673 = vunpack.c.l.b16 %v4589
      %v4674 = vunpack.c.l.b16 %v4590
      %v4675 = vpack.c.b16 %v4644, %v4643
      %v4676 = vpack.c.b16 %v4646, %v4645
      %v4677 = vpack.c.b16 %v4648, %v4647
      %v4678 = vpack.c.b16 %v4650, %v4649
      %v4679 = vpack.c.b16 %v4652, %v4651
      %v4680 = vpack.c.b16 %v4654, %v4653
      %v4681 = vpack.c.b16 %v4656, %v4655
      %v4682 = vpack.c.b16 %v4658, %v4657
      %v4683 = vpack.c.b16 %v4660, %v4659
      %v4684 = vpack.c.b16 %v4662, %v4661
      %v4685 = vpack.c.b16 %v4664, %v4663
      %v4686 = vpack.c.b16 %v4666, %v4665
      %v4687 = vpack.c.b16 %v4668, %v4667
      %v4688 = vpack.c.b16 %v4670, %v4669
      %v4689 = vpack.c.b16 %v4672, %v4671
      %v4690 = vpack.c.b16 %v4674, %v4673
      %4707 = vmatprep.subr.bf16.mxu0 0
      %4708 = vmatpush1.bf16.msra.mxu0 %v4682
      %4709 = vmatprep.subr.bf16.mxu0 0
      %4710 = vmatpush1.bf16.msra.mxu0 %v4681
      %4711 = vmatprep.subr.bf16.mxu0 0
      %4712 = vmatpush1.bf16.msra.mxu0 %v4680
      %4713 = vmatprep.subr.bf16.mxu0 0
      %4714 = vmatpush1.bf16.msra.mxu0 %v4679
      %4715 = vmatprep.subr.bf16.mxu0 0
      %4716 = vmatpush1.bf16.msra.mxu0 %v4678
      %4717 = vmatprep.subr.bf16.mxu0 0
      %4718 = vmatpush1.bf16.msra.mxu0 %v4677
      %4719 = vmatprep.subr.bf16.mxu0 0
      %4720 = vmatpush1.bf16.msra.mxu0 %v4676
      %4721 = vmatprep.subr.bf16.mxu0 0
      %4722 = vmatpush1.bf16.msra.mxu0 %v4675
      %4723 = vmatprep.subr.bf16.mxu0 0
      %4724 = vmatpush2.bf16.msra.mxu0 %v4690
      %4725 = vmatprep.subr.bf16.mxu0 0
      %4726 = vmatpush2.bf16.msra.mxu0 %v4689
      %4727 = vmatprep.subr.bf16.mxu0 0
      %4728 = vmatpush2.bf16.msra.mxu0 %v4688
      %4729 = vmatprep.subr.bf16.mxu0 0
      %4730 = vmatpush2.bf16.msra.mxu0 %v4687
      %4731 = vmatprep.subr.bf16.mxu0 0
      %4732 = vmatpush2.bf16.msra.mxu0 %v4686
      %4733 = vmatprep.subr.bf16.mxu0 0
      %4734 = vmatpush2.bf16.msra.mxu0 %v4685
      %4735 = vmatprep.subr.bf16.mxu0 0
      %4736 = vmatpush2.bf16.msra.mxu0 %v4684
      %4737 = vmatprep.subr.bf16.mxu0 0
      %4738 = vmatpush2.bf16.msra.mxu0 %v4683
      %4739 = vmatprep.mubr.bf16.mxu0 %v4604
      %4740 = vmatmul.mubr.bf16.gmra.mxu0 %v4603
      %v4741 = vpop.f32.mrf.mxu0
      %v4742 = vadd.f32 0.0, %v4741
      %v4743 = vpop.f32.mrf.mxu0
      %v4744 = vpop.f32.mrf.mxu0
      %v4745 = vadd.f32 0.0, %v4744
      %v4746 = vpop.f32.mrf.mxu0
      %4747 = vmatprep.mubr.bf16.mxu0 %v4606
      %4748 = vmatmul.mubr.bf16.gmra.mxu0 %v4605
      %v4749 = vpop.f32.mrf.mxu0
      %v4750 = vadd.f32 0.0, %v4749
      %v4751 = vpop.f32.mrf.mxu0
      %v4752 = vpop.f32.mrf.mxu0
      %v4753 = vadd.f32 0.0, %v4752
      %v4754 = vpop.f32.mrf.mxu0
      %4755 = vdwg.mxu0
      %v4756 = vadd.f32 %v4550, %v4742
      %v4757 = vadd.f32 %v4551, %v4745
      %v4758 = vadd.f32 %v4552, %v4750
      %v4759 = vadd.f32 %v4553, %v4753
      %4760 = vst [vmem:[#allocation4] sm:$0xff] %v4756
      %4761 = vst [vmem:[#allocation4 + $0x8] sm:$0xff] %v4757
      %4762 = vst [vmem:[#allocation4 + $0x10] sm:$0xff] %v4758
      %4763 = vst [vmem:[#allocation4 + $0x18] sm:$0xff] %v4759
      %v4764 = vld [vmem:[%s720] sm:$0x3]
      %v4765 = vld [vmem:[%s720 + $0x4] sm:$0x3]
      %v4766 = vld [vmem:[%s720 + $0x8] sm:$0x3]
      %v4767 = vld [vmem:[%s720 + $0xc] sm:$0x3]
      %v4768 = vld [vmem:[%s720 + $0x14] sm:$0x3]
      %v4769 = vld [vmem:[%s720 + $0x18] sm:$0x3]
      %v4770 = vld [vmem:[%s720 + $0x1c] sm:$0x3]
      %v4771 = vld [vmem:[%s720 + $0x20] sm:$0x3]
      %v4780 = vcombine.low %v4764, %v4765
      %v4782 = vunpack.c.l.s4 1983009808
      %v4783 = vunpack.c.0.s8 %v4782
      %v4784 = vlaneseq
      %v4785 = vshrl.u32 %v4784, 7
      %v4786 = vsub.s32 %v4783, %v4785
      %v4787 = vrot.slane %v4780, %v4786
      %v4788 = vcombine.low %v4766, %v4767
      %v4790 = vunpack.c.l.s4 1983009808
      %v4791 = vunpack.c.0.s8 %v4790
      %v4792 = vlaneseq
      %v4793 = vshrl.u32 %v4792, 7
      %v4794 = vsub.s32 %v4791, %v4793
      %v4795 = vrot.slane %v4788, %v4794
      %v4796 = vcombine.low %v4768, %v4769
      %v4798 = vunpack.c.l.s4 1983009808
      %v4799 = vunpack.c.0.s8 %v4798
      %v4800 = vlaneseq
      %v4801 = vshrl.u32 %v4800, 7
      %v4802 = vsub.s32 %v4799, %v4801
      %v4803 = vrot.slane %v4796, %v4802
      %v4804 = vcombine.low %v4770, %v4771
      %v4806 = vunpack.c.l.s4 1983009808
      %v4807 = vunpack.c.0.s8 %v4806
      %v4808 = vlaneseq
      %v4809 = vshrl.u32 %v4808, 7
      %v4810 = vsub.s32 %v4807, %v4809
      %v4811 = vrot.slane %v4804, %v4810
      %4816 = vst [vmem:[#allocation3] sm:$0xf] %v4787
      %4817 = vst [vmem:[#allocation3 + $0x8] sm:$0xf] %v4795
      %4818 = vst [vmem:[#allocation3 + $0x10] sm:$0xf] %v4803
      %4819 = vst [vmem:[#allocation3 + $0x18] sm:$0xf] %v4811
      %v4820 = vld [vmem:[%s866] sm:$0x7]
      %v4821 = vld [vmem:[%s866 + $0x4] sm:$0x7]
      %v4822 = vld [vmem:[%s866 + $0x8] sm:$0x7]
      %v4823 = vld [vmem:[%s866 + $0xc] sm:$0x7]
      %v4824 = vld [vmem:[%s866 + $0x14] sm:$0x7]
      %v4825 = vld [vmem:[%s866 + $0x18] sm:$0x7]
      %v4826 = vld [vmem:[%s866 + $0x1c] sm:$0x7]
      %v4827 = vld [vmem:[%s866 + $0x20] sm:$0x7]
      %v4837 = vunpack.c.l.s4 1983009808
      %v4838 = vunpack.c.0.s8 %v4837
      %v4839 = vlaneseq
      %v4840 = vshrl.u32 %v4839, 7
      %v4841 = vsub.s32 %v4838, %v4840
      %v4842 = vrot.slane %v4820, %v4841
      %v4843 = vcombine.high %v4842, %v4842
      %v4845 = vunpack.c.l.s4 1983009808
      %v4846 = vunpack.c.0.s8 %v4845
      %v4847 = vlaneseq
      %v4848 = vshrl.u32 %v4847, 7
      %v4849 = vsub.s32 %v4846, %v4848
      %v4850 = vrot.slane %v4821, %v4849
      %v4851 = vcombine.high %v4850, %v4850
      %v4853 = vunpack.c.l.s4 1983009808
      %v4854 = vunpack.c.0.s8 %v4853
      %v4855 = vlaneseq
      %v4856 = vshrl.u32 %v4855, 7
      %v4857 = vsub.s32 %v4854, %v4856
      %v4858 = vrot.slane %v4822, %v4857
      %v4859 = vcombine.high %v4858, %v4858
      %v4861 = vunpack.c.l.s4 1983009808
      %v4862 = vunpack.c.0.s8 %v4861
      %v4863 = vlaneseq
      %v4864 = vshrl.u32 %v4863, 7
      %v4865 = vsub.s32 %v4862, %v4864
      %v4866 = vrot.slane %v4823, %v4865
      %v4867 = vcombine.high %v4866, %v4866
      %v4869 = vunpack.c.l.s4 1983009808
      %v4870 = vunpack.c.0.s8 %v4869
      %v4871 = vlaneseq
      %v4872 = vshrl.u32 %v4871, 7
      %v4873 = vsub.s32 %v4870, %v4872
      %v4874 = vrot.slane %v4824, %v4873
      %v4875 = vcombine.high %v4874, %v4874
      %v4877 = vunpack.c.l.s4 1983009808
      %v4878 = vunpack.c.0.s8 %v4877
      %v4879 = vlaneseq
      %v4880 = vshrl.u32 %v4879, 7
      %v4881 = vsub.s32 %v4878, %v4880
      %v4882 = vrot.slane %v4825, %v4881
      %v4883 = vcombine.high %v4882, %v4882
      %v4885 = vunpack.c.l.s4 1983009808
      %v4886 = vunpack.c.0.s8 %v4885
      %v4887 = vlaneseq
      %v4888 = vshrl.u32 %v4887, 7
      %v4889 = vsub.s32 %v4886, %v4888
      %v4890 = vrot.slane %v4826, %v4889
      %v4891 = vcombine.high %v4890, %v4890
      %v4893 = vunpack.c.l.s4 1983009808
      %v4894 = vunpack.c.0.s8 %v4893
      %v4895 = vlaneseq
      %v4896 = vshrl.u32 %v4895, 7
      %v4897 = vsub.s32 %v4894, %v4896
      %v4898 = vrot.slane %v4827, %v4897
      %v4899 = vcombine.high %v4898, %v4898
      %v4901 = vshrl.u32 %v4842, 16
      %v4903 = vrot.slane %v4901, 6
      %v4904 = vshll.u32 %v4842, 16
      %v4906 = vrot.slane %v4904, 7
      %v4907 = vor.u32 %v4903, %v4906
      %v4908 = vrot.slane %v4907, 2
      %v4910 = vshll.u32 %v4843, 16
      %v4912 = vrot.slane %v4910, 7
      %v4913 = vsel %vm1675, %v4908, %v4912
      %v4915 = vshrl.u32 %v4850, 16
      %v4917 = vrot.slane %v4915, 6
      %v4918 = vshll.u32 %v4850, 16
      %v4920 = vrot.slane %v4918, 7
      %v4921 = vor.u32 %v4917, %v4920
      %v4922 = vrot.slane %v4921, 2
      %v4924 = vshll.u32 %v4851, 16
      %v4926 = vrot.slane %v4924, 7
      %v4927 = vsel %vm1675, %v4922, %v4926
      %v4929 = vshrl.u32 %v4858, 16
      %v4931 = vrot.slane %v4929, 6
      %v4932 = vshll.u32 %v4858, 16
      %v4934 = vrot.slane %v4932, 7
      %v4935 = vor.u32 %v4931, %v4934
      %v4936 = vrot.slane %v4935, 2
      %v4938 = vshll.u32 %v4859, 16
      %v4940 = vrot.slane %v4938, 7
      %v4941 = vsel %vm1675, %v4936, %v4940
      %v4943 = vshrl.u32 %v4866, 16
      %v4945 = vrot.slane %v4943, 6
      %v4946 = vshll.u32 %v4866, 16
      %v4948 = vrot.slane %v4946, 7
      %v4949 = vor.u32 %v4945, %v4948
      %v4950 = vrot.slane %v4949, 2
      %v4952 = vshll.u32 %v4867, 16
      %v4954 = vrot.slane %v4952, 7
      %v4955 = vsel %vm1675, %v4950, %v4954
      %v4957 = vshrl.u32 %v4874, 16
      %v4959 = vrot.slane %v4957, 6
      %v4960 = vshll.u32 %v4874, 16
      %v4962 = vrot.slane %v4960, 7
      %v4963 = vor.u32 %v4959, %v4962
      %v4964 = vrot.slane %v4963, 2
      %v4966 = vshll.u32 %v4875, 16
      %v4968 = vrot.slane %v4966, 7
      %v4969 = vsel %vm1675, %v4964, %v4968
      %v4971 = vshrl.u32 %v4882, 16
      %v4973 = vrot.slane %v4971, 6
      %v4974 = vshll.u32 %v4882, 16
      %v4976 = vrot.slane %v4974, 7
      %v4977 = vor.u32 %v4973, %v4976
      %v4978 = vrot.slane %v4977, 2
      %v4980 = vshll.u32 %v4883, 16
      %v4982 = vrot.slane %v4980, 7
      %v4983 = vsel %vm1675, %v4978, %v4982
      %v4985 = vshrl.u32 %v4890, 16
      %v4987 = vrot.slane %v4985, 6
      %v4988 = vshll.u32 %v4890, 16
      %v4990 = vrot.slane %v4988, 7
      %v4991 = vor.u32 %v4987, %v4990
      %v4992 = vrot.slane %v4991, 2
      %v4994 = vshll.u32 %v4891, 16
      %v4996 = vrot.slane %v4994, 7
      %v4997 = vsel %vm1675, %v4992, %v4996
      %v4999 = vshrl.u32 %v4898, 16
      %v5001 = vrot.slane %v4999, 6
      %v5002 = vshll.u32 %v4898, 16
      %v5004 = vrot.slane %v5002, 7
      %v5005 = vor.u32 %v5001, %v5004
      %v5006 = vrot.slane %v5005, 2
      %v5008 = vshll.u32 %v4899, 16
      %v5010 = vrot.slane %v5008, 7
      %v5011 = vsel %vm1675, %v5006, %v5010
      %v5012 = vcombine.low %v4913, %v4927
      %v5014 = vunpack.c.l.s4 1983009808
      %v5015 = vunpack.c.0.s8 %v5014
      %v5016 = vlaneseq
      %v5017 = vshrl.u32 %v5016, 7
      %v5018 = vsub.s32 %v5015, %v5017
      %v5019 = vrot.slane %v5012, %v5018
      %v5020 = vcombine.low %v4941, %v4955
      %v5022 = vunpack.c.l.s4 1983009808
      %v5023 = vunpack.c.0.s8 %v5022
      %v5024 = vlaneseq
      %v5025 = vshrl.u32 %v5024, 7
      %v5026 = vsub.s32 %v5023, %v5025
      %v5027 = vrot.slane %v5020, %v5026
      %v5028 = vcombine.low %v4969, %v4983
      %v5030 = vunpack.c.l.s4 1983009808
      %v5031 = vunpack.c.0.s8 %v5030
      %v5032 = vlaneseq
      %v5033 = vshrl.u32 %v5032, 7
      %v5034 = vsub.s32 %v5031, %v5033
      %v5035 = vrot.slane %v5028, %v5034
      %v5036 = vcombine.low %v4997, %v5011
      %v5038 = vunpack.c.l.s4 1983009808
      %v5039 = vunpack.c.0.s8 %v5038
      %v5040 = vlaneseq
      %v5041 = vshrl.u32 %v5040, 7
      %v5042 = vsub.s32 %v5039, %v5041
      %v5043 = vrot.slane %v5036, %v5042
      %5048 = vst [vmem:[#allocation3 + $0x4] sm:$0xf] %v5019
      %5049 = vst [vmem:[#allocation3 + $0xc] sm:$0xf] %v5027
      %5050 = vst [vmem:[#allocation3 + $0x14] sm:$0xf] %v5035
      %5051 = vst [vmem:[#allocation3 + $0x1c] sm:$0xf] %v5043
      %v5052 = vld [vmem:[#allocation4] sm:$0xff]
      %v5053 = vld [vmem:[#allocation4 + $0x8] sm:$0xff]
      %v5054 = vld [vmem:[#allocation4 + $0x10] sm:$0xff]
      %v5055 = vld [vmem:[#allocation4 + $0x18] sm:$0xff]
      %v5056 = vld [vmem:[#allocation3] sm:$0xff]
      %v5057 = vld [vmem:[#allocation3 + $0x8] sm:$0xff]
      %v5058 = vld [vmem:[#allocation3 + $0x10] sm:$0xff]
      %v5059 = vld [vmem:[#allocation3 + $0x18] sm:$0xff]
      %s5060 = scalar_lea.vmem %s1, 1024
      %v5061 = vld [vmem:[%s5060] sm:$0xf]
      %v5062 = vld [vmem:[%s5060 + $0x4] sm:$0xf]
      %v5063 = vld [vmem:[%s5060 + $0x8] sm:$0xf]
      %v5064 = vld [vmem:[%s5060 + $0xc] sm:$0xf]
      %v5065 = vld [vmem:[%s5060 + $0x10] sm:$0xf]
      %v5066 = vld [vmem:[%s5060 + $0x14] sm:$0xf]
      %v5067 = vld [vmem:[%s5060 + $0x18] sm:$0xf]
      %v5068 = vld [vmem:[%s5060 + $0x1c] sm:$0xf]
      %v5069 = vld [vmem:[%s5060 + $0x20] sm:$0xf]
      %v5070 = vld [vmem:[%s5060 + $0x24] sm:$0xf]
      %v5071 = vld [vmem:[%s5060 + $0x28] sm:$0xf]
      %v5072 = vld [vmem:[%s5060 + $0x2c] sm:$0xf]
      %v5073 = vld [vmem:[%s5060 + $0x30] sm:$0xf]
      %v5074 = vld [vmem:[%s5060 + $0x34] sm:$0xf]
      %v5075 = vld [vmem:[%s5060 + $0x38] sm:$0xf]
      %v5076 = vld [vmem:[%s5060 + $0x3c] sm:$0xf]
      %v5077 = vld [vmem:[%s5060 + $0x40] sm:$0xf]
      %v5078 = vld [vmem:[%s5060 + $0x44] sm:$0xf]
      %v5079 = vld [vmem:[%s5060 + $0x48] sm:$0xf]
      %v5080 = vld [vmem:[%s5060 + $0x4c] sm:$0xf]
      %v5081 = vld [vmem:[%s5060 + $0x50] sm:$0xf]
      %v5082 = vld [vmem:[%s5060 + $0x54] sm:$0xf]
      %v5083 = vld [vmem:[%s5060 + $0x58] sm:$0xf]
      %v5084 = vld [vmem:[%s5060 + $0x5c] sm:$0xf]
      %v5085 = vld [vmem:[%s5060 + $0x60] sm:$0xf]
      %v5086 = vld [vmem:[%s5060 + $0x64] sm:$0xf]
      %v5087 = vld [vmem:[%s5060 + $0x68] sm:$0xf]
      %v5088 = vld [vmem:[%s5060 + $0x6c] sm:$0xf]
      %v5089 = vld [vmem:[%s5060 + $0x70] sm:$0xf]
      %v5090 = vld [vmem:[%s5060 + $0x74] sm:$0xf]
      %v5091 = vld [vmem:[%s5060 + $0x78] sm:$0xf]
      %v5092 = vld [vmem:[%s5060 + $0x7c] sm:$0xf]
      %v5097 = vunpack.c.l.b16 %v5056
      %v5098 = vunpack.c.h.b16 %v5056
      %v5099 = vunpack.c.l.b16 %v5057
      %v5100 = vunpack.c.h.b16 %v5057
      %v5101 = vunpack.c.l.b16 %v5058
      %v5102 = vunpack.c.h.b16 %v5058
      %v5103 = vunpack.c.l.b16 %v5059
      %v5104 = vunpack.c.h.b16 %v5059
      %v5105 = vpack.c.b16 %v5099, %v5097
      %v5106 = vpack.c.b16 %v5100, %v5098
      %v5107 = vpack.c.b16 %v5103, %v5101
      %v5108 = vpack.c.b16 %v5104, %v5102
      %v5145 = vunpack.c.l.b16 %v5061
      %v5146 = vunpack.c.l.b16 %v5062
      %v5147 = vunpack.c.l.b16 %v5063
      %v5148 = vunpack.c.l.b16 %v5064
      %v5149 = vunpack.c.l.b16 %v5065
      %v5150 = vunpack.c.l.b16 %v5066
      %v5151 = vunpack.c.l.b16 %v5067
      %v5152 = vunpack.c.l.b16 %v5068
      %v5153 = vunpack.c.l.b16 %v5069
      %v5154 = vunpack.c.l.b16 %v5070
      %v5155 = vunpack.c.l.b16 %v5071
      %v5156 = vunpack.c.l.b16 %v5072
      %v5157 = vunpack.c.l.b16 %v5073
      %v5158 = vunpack.c.l.b16 %v5074
      %v5159 = vunpack.c.l.b16 %v5075
      %v5160 = vunpack.c.l.b16 %v5076
      %v5161 = vunpack.c.l.b16 %v5077
      %v5162 = vunpack.c.l.b16 %v5078
      %v5163 = vunpack.c.l.b16 %v5079
      %v5164 = vunpack.c.l.b16 %v5080
      %v5165 = vunpack.c.l.b16 %v5081
      %v5166 = vunpack.c.l.b16 %v5082
      %v5167 = vunpack.c.l.b16 %v5083
      %v5168 = vunpack.c.l.b16 %v5084
      %v5169 = vunpack.c.l.b16 %v5085
      %v5170 = vunpack.c.l.b16 %v5086
      %v5171 = vunpack.c.l.b16 %v5087
      %v5172 = vunpack.c.l.b16 %v5088
      %v5173 = vunpack.c.l.b16 %v5089
      %v5174 = vunpack.c.l.b16 %v5090
      %v5175 = vunpack.c.l.b16 %v5091
      %v5176 = vunpack.c.l.b16 %v5092
      %v5177 = vpack.c.b16 %v5146, %v5145
      %v5178 = vpack.c.b16 %v5148, %v5147
      %v5179 = vpack.c.b16 %v5150, %v5149
      %v5180 = vpack.c.b16 %v5152, %v5151
      %v5181 = vpack.c.b16 %v5154, %v5153
      %v5182 = vpack.c.b16 %v5156, %v5155
      %v5183 = vpack.c.b16 %v5158, %v5157
      %v5184 = vpack.c.b16 %v5160, %v5159
      %v5185 = vpack.c.b16 %v5162, %v5161
      %v5186 = vpack.c.b16 %v5164, %v5163
      %v5187 = vpack.c.b16 %v5166, %v5165
      %v5188 = vpack.c.b16 %v5168, %v5167
      %v5189 = vpack.c.b16 %v5170, %v5169
      %v5190 = vpack.c.b16 %v5172, %v5171
      %v5191 = vpack.c.b16 %v5174, %v5173
      %v5192 = vpack.c.b16 %v5176, %v5175
      %5209 = vmatprep.subr.bf16.mxu0 0
      %5210 = vmatpush1.bf16.msra.mxu0 %v5184
      %5211 = vmatprep.subr.bf16.mxu0 0
      %5212 = vmatpush1.bf16.msra.mxu0 %v5183
      %5213 = vmatprep.subr.bf16.mxu0 0
      %5214 = vmatpush1.bf16.msra.mxu0 %v5182
      %5215 = vmatprep.subr.bf16.mxu0 0
      %5216 = vmatpush1.bf16.msra.mxu0 %v5181
      %5217 = vmatprep.subr.bf16.mxu0 0
      %5218 = vmatpush1.bf16.msra.mxu0 %v5180
      %5219 = vmatprep.subr.bf16.mxu0 0
      %5220 = vmatpush1.bf16.msra.mxu0 %v5179
      %5221 = vmatprep.subr.bf16.mxu0 0
      %5222 = vmatpush1.bf16.msra.mxu0 %v5178
      %5223 = vmatprep.subr.bf16.mxu0 0
      %5224 = vmatpush1.bf16.msra.mxu0 %v5177
      %5225 = vmatprep.subr.bf16.mxu0 0
      %5226 = vmatpush2.bf16.msra.mxu0 %v5192
      %5227 = vmatprep.subr.bf16.mxu0 0
      %5228 = vmatpush2.bf16.msra.mxu0 %v5191
      %5229 = vmatprep.subr.bf16.mxu0 0
      %5230 = vmatpush2.bf16.msra.mxu0 %v5190
      %5231 = vmatprep.subr.bf16.mxu0 0
      %5232 = vmatpush2.bf16.msra.mxu0 %v5189
      %5233 = vmatprep.subr.bf16.mxu0 0
      %5234 = vmatpush2.bf16.msra.mxu0 %v5188
      %5235 = vmatprep.subr.bf16.mxu0 0
      %5236 = vmatpush2.bf16.msra.mxu0 %v5187
      %5237 = vmatprep.subr.bf16.mxu0 0
      %5238 = vmatpush2.bf16.msra.mxu0 %v5186
      %5239 = vmatprep.subr.bf16.mxu0 0
      %5240 = vmatpush2.bf16.msra.mxu0 %v5185
      %5241 = vmatprep.mubr.bf16.mxu0 %v5106
      %5242 = vmatmul.mubr.bf16.gmra.mxu0 %v5105
      %v5243 = vpop.f32.mrf.mxu0
      %v5244 = vadd.f32 0.0, %v5243
      %v5245 = vpop.f32.mrf.mxu0
      %v5246 = vpop.f32.mrf.mxu0
      %v5247 = vadd.f32 0.0, %v5246
      %v5248 = vpop.f32.mrf.mxu0
      %5249 = vmatprep.mubr.bf16.mxu0 %v5108
      %5250 = vmatmul.mubr.bf16.gmra.mxu0 %v5107
      %v5251 = vpop.f32.mrf.mxu0
      %v5252 = vadd.f32 0.0, %v5251
      %v5253 = vpop.f32.mrf.mxu0
      %v5254 = vpop.f32.mrf.mxu0
      %v5255 = vadd.f32 0.0, %v5254
      %v5256 = vpop.f32.mrf.mxu0
      %5257 = vdwg.mxu0
      %v5258 = vadd.f32 %v5052, %v5244
      %v5259 = vadd.f32 %v5053, %v5247
      %v5260 = vadd.f32 %v5054, %v5252
      %v5261 = vadd.f32 %v5055, %v5255
      %5262 = vst [vmem:[#allocation4] sm:$0xff] %v5258
      %5263 = vst [vmem:[#allocation4 + $0x8] sm:$0xff] %v5259
      %5264 = vst [vmem:[#allocation4 + $0x10] sm:$0xff] %v5260
      %5265 = vst [vmem:[#allocation4 + $0x18] sm:$0xff] %v5261
      %s5266 = scalar_lea.vmem [#allocation2], 440
      %v5267 = vld [vmem:[%s5266] sm:$0x3]
      %v5268 = vld [vmem:[%s5266 + $0x4] sm:$0x3]
      %v5269 = vld [vmem:[%s5266 + $0x8] sm:$0x3]
      %v5270 = vld [vmem:[%s5266 + $0xc] sm:$0x3]
      %v5271 = vld [vmem:[%s5266 + $0x14] sm:$0x3]
      %v5272 = vld [vmem:[%s5266 + $0x18] sm:$0x3]
      %v5273 = vld [vmem:[%s5266 + $0x1c] sm:$0x3]
      %v5274 = vld [vmem:[%s5266 + $0x20] sm:$0x3]
      %v5283 = vcombine.low %v5267, %v5268
      %v5285 = vunpack.c.l.s4 1983009808
      %v5286 = vunpack.c.0.s8 %v5285
      %v5287 = vlaneseq
      %v5288 = vshrl.u32 %v5287, 7
      %v5289 = vsub.s32 %v5286, %v5288
      %v5290 = vrot.slane %v5283, %v5289
      %v5291 = vcombine.low %v5269, %v5270
      %v5293 = vunpack.c.l.s4 1983009808
      %v5294 = vunpack.c.0.s8 %v5293
      %v5295 = vlaneseq
      %v5296 = vshrl.u32 %v5295, 7
      %v5297 = vsub.s32 %v5294, %v5296
      %v5298 = vrot.slane %v5291, %v5297
      %v5299 = vcombine.low %v5271, %v5272
      %v5301 = vunpack.c.l.s4 1983009808
      %v5302 = vunpack.c.0.s8 %v5301
      %v5303 = vlaneseq
      %v5304 = vshrl.u32 %v5303, 7
      %v5305 = vsub.s32 %v5302, %v5304
      %v5306 = vrot.slane %v5299, %v5305
      %v5307 = vcombine.low %v5273, %v5274
      %v5309 = vunpack.c.l.s4 1983009808
      %v5310 = vunpack.c.0.s8 %v5309
      %v5311 = vlaneseq
      %v5312 = vshrl.u32 %v5311, 7
      %v5313 = vsub.s32 %v5310, %v5312
      %v5314 = vrot.slane %v5307, %v5313
      %5319 = vst [vmem:[#allocation3] sm:$0xf] %v5290
      %5320 = vst [vmem:[#allocation3 + $0x8] sm:$0xf] %v5298
      %5321 = vst [vmem:[#allocation3 + $0x10] sm:$0xf] %v5306
      %5322 = vst [vmem:[#allocation3 + $0x18] sm:$0xf] %v5314
      %s5323 = scalar_lea.vmem [#allocation2], 380
      %v5324 = vld [vmem:[%s5323] sm:$0x3]
      %v5325 = vld [vmem:[%s5323 + $0x4] sm:$0x3]
      %v5326 = vld [vmem:[%s5323 + $0x8] sm:$0x3]
      %v5327 = vld [vmem:[%s5323 + $0xc] sm:$0x3]
      %v5328 = vld [vmem:[%s5323 + $0x14] sm:$0x3]
      %v5329 = vld [vmem:[%s5323 + $0x18] sm:$0x3]
      %v5330 = vld [vmem:[%s5323 + $0x1c] sm:$0x3]
      %v5331 = vld [vmem:[%s5323 + $0x20] sm:$0x3]
      %v5340 = vcombine.low %v5324, %v5325
      %v5342 = vunpack.c.l.s4 1983009808
      %v5343 = vunpack.c.0.s8 %v5342
      %v5344 = vlaneseq
      %v5345 = vshrl.u32 %v5344, 7
      %v5346 = vsub.s32 %v5343, %v5345
      %v5347 = vrot.slane %v5340, %v5346
      %v5348 = vcombine.low %v5326, %v5327
      %v5350 = vunpack.c.l.s4 1983009808
      %v5351 = vunpack.c.0.s8 %v5350
      %v5352 = vlaneseq
      %v5353 = vshrl.u32 %v5352, 7
      %v5354 = vsub.s32 %v5351, %v5353
      %v5355 = vrot.slane %v5348, %v5354
      %v5356 = vcombine.low %v5328, %v5329
      %v5358 = vunpack.c.l.s4 1983009808
      %v5359 = vunpack.c.0.s8 %v5358
      %v5360 = vlaneseq
      %v5361 = vshrl.u32 %v5360, 7
      %v5362 = vsub.s32 %v5359, %v5361
      %v5363 = vrot.slane %v5356, %v5362
      %v5364 = vcombine.low %v5330, %v5331
      %v5366 = vunpack.c.l.s4 1983009808
      %v5367 = vunpack.c.0.s8 %v5366
      %v5368 = vlaneseq
      %v5369 = vshrl.u32 %v5368, 7
      %v5370 = vsub.s32 %v5367, %v5369
      %v5371 = vrot.slane %v5364, %v5370
      %5376 = vst [vmem:[#allocation3 + $0x4] sm:$0xf] %v5347
      %5377 = vst [vmem:[#allocation3 + $0xc] sm:$0xf] %v5355
      %5378 = vst [vmem:[#allocation3 + $0x14] sm:$0xf] %v5363
      %5379 = vst [vmem:[#allocation3 + $0x1c] sm:$0xf] %v5371
      %v5380 = vld [vmem:[#allocation4] sm:$0xff]
      %v5381 = vld [vmem:[#allocation4 + $0x8] sm:$0xff]
      %v5382 = vld [vmem:[#allocation4 + $0x10] sm:$0xff]
      %v5383 = vld [vmem:[#allocation4 + $0x18] sm:$0xff]
      %v5384 = vld [vmem:[#allocation3] sm:$0xff]
      %v5385 = vld [vmem:[#allocation3 + $0x8] sm:$0xff]
      %v5386 = vld [vmem:[#allocation3 + $0x10] sm:$0xff]
      %v5387 = vld [vmem:[#allocation3 + $0x18] sm:$0xff]
      %s5388 = scalar_lea.vmem %s1, 1152
      %v5389 = vld [vmem:[%s5388] sm:$0xf]
      %v5390 = vld [vmem:[%s5388 + $0x4] sm:$0xf]
      %v5391 = vld [vmem:[%s5388 + $0x8] sm:$0xf]
      %v5392 = vld [vmem:[%s5388 + $0xc] sm:$0xf]
      %v5393 = vld [vmem:[%s5388 + $0x10] sm:$0xf]
      %v5394 = vld [vmem:[%s5388 + $0x14] sm:$0xf]
      %v5395 = vld [vmem:[%s5388 + $0x18] sm:$0xf]
      %v5396 = vld [vmem:[%s5388 + $0x1c] sm:$0xf]
      %v5397 = vld [vmem:[%s5388 + $0x20] sm:$0xf]
      %v5398 = vld [vmem:[%s5388 + $0x24] sm:$0xf]
      %v5399 = vld [vmem:[%s5388 + $0x28] sm:$0xf]
      %v5400 = vld [vmem:[%s5388 + $0x2c] sm:$0xf]
      %v5401 = vld [vmem:[%s5388 + $0x30] sm:$0xf]
      %v5402 = vld [vmem:[%s5388 + $0x34] sm:$0xf]
      %v5403 = vld [vmem:[%s5388 + $0x38] sm:$0xf]
      %v5404 = vld [vmem:[%s5388 + $0x3c] sm:$0xf]
      %v5405 = vld [vmem:[%s5388 + $0x40] sm:$0xf]
      %v5406 = vld [vmem:[%s5388 + $0x44] sm:$0xf]
      %v5407 = vld [vmem:[%s5388 + $0x48] sm:$0xf]
      %v5408 = vld [vmem:[%s5388 + $0x4c] sm:$0xf]
      %v5409 = vld [vmem:[%s5388 + $0x50] sm:$0xf]
      %v5410 = vld [vmem:[%s5388 + $0x54] sm:$0xf]
      %v5411 = vld [vmem:[%s5388 + $0x58] sm:$0xf]
      %v5412 = vld [vmem:[%s5388 + $0x5c] sm:$0xf]
      %v5413 = vld [vmem:[%s5388 + $0x60] sm:$0xf]
      %v5414 = vld [vmem:[%s5388 + $0x64] sm:$0xf]
      %v5415 = vld [vmem:[%s5388 + $0x68] sm:$0xf]
      %v5416 = vld [vmem:[%s5388 + $0x6c] sm:$0xf]
      %v5417 = vld [vmem:[%s5388 + $0x70] sm:$0xf]
      %v5418 = vld [vmem:[%s5388 + $0x74] sm:$0xf]
      %v5419 = vld [vmem:[%s5388 + $0x78] sm:$0xf]
      %v5420 = vld [vmem:[%s5388 + $0x7c] sm:$0xf]
      %v5425 = vunpack.c.l.b16 %v5384
      %v5426 = vunpack.c.h.b16 %v5384
      %v5427 = vunpack.c.l.b16 %v5385
      %v5428 = vunpack.c.h.b16 %v5385
      %v5429 = vunpack.c.l.b16 %v5386
      %v5430 = vunpack.c.h.b16 %v5386
      %v5431 = vunpack.c.l.b16 %v5387
      %v5432 = vunpack.c.h.b16 %v5387
      %v5433 = vpack.c.b16 %v5427, %v5425
      %v5434 = vpack.c.b16 %v5428, %v5426
      %v5435 = vpack.c.b16 %v5431, %v5429
      %v5436 = vpack.c.b16 %v5432, %v5430
      %v5473 = vunpack.c.l.b16 %v5389
      %v5474 = vunpack.c.l.b16 %v5390
      %v5475 = vunpack.c.l.b16 %v5391
      %v5476 = vunpack.c.l.b16 %v5392
      %v5477 = vunpack.c.l.b16 %v5393
      %v5478 = vunpack.c.l.b16 %v5394
      %v5479 = vunpack.c.l.b16 %v5395
      %v5480 = vunpack.c.l.b16 %v5396
      %v5481 = vunpack.c.l.b16 %v5397
      %v5482 = vunpack.c.l.b16 %v5398
      %v5483 = vunpack.c.l.b16 %v5399
      %v5484 = vunpack.c.l.b16 %v5400
      %v5485 = vunpack.c.l.b16 %v5401
      %v5486 = vunpack.c.l.b16 %v5402
      %v5487 = vunpack.c.l.b16 %v5403
      %v5488 = vunpack.c.l.b16 %v5404
      %v5489 = vunpack.c.l.b16 %v5405
      %v5490 = vunpack.c.l.b16 %v5406
      %v5491 = vunpack.c.l.b16 %v5407
      %v5492 = vunpack.c.l.b16 %v5408
      %v5493 = vunpack.c.l.b16 %v5409
      %v5494 = vunpack.c.l.b16 %v5410
      %v5495 = vunpack.c.l.b16 %v5411
      %v5496 = vunpack.c.l.b16 %v5412
      %v5497 = vunpack.c.l.b16 %v5413
      %v5498 = vunpack.c.l.b16 %v5414
      %v5499 = vunpack.c.l.b16 %v5415
      %v5500 = vunpack.c.l.b16 %v5416
      %v5501 = vunpack.c.l.b16 %v5417
      %v5502 = vunpack.c.l.b16 %v5418
      %v5503 = vunpack.c.l.b16 %v5419
      %v5504 = vunpack.c.l.b16 %v5420
      %v5505 = vpack.c.b16 %v5474, %v5473
      %v5506 = vpack.c.b16 %v5476, %v5475
      %v5507 = vpack.c.b16 %v5478, %v5477
      %v5508 = vpack.c.b16 %v5480, %v5479
      %v5509 = vpack.c.b16 %v5482, %v5481
      %v5510 = vpack.c.b16 %v5484, %v5483
      %v5511 = vpack.c.b16 %v5486, %v5485
      %v5512 = vpack.c.b16 %v5488, %v5487
      %v5513 = vpack.c.b16 %v5490, %v5489
      %v5514 = vpack.c.b16 %v5492, %v5491
      %v5515 = vpack.c.b16 %v5494, %v5493
      %v5516 = vpack.c.b16 %v5496, %v5495
      %v5517 = vpack.c.b16 %v5498, %v5497
      %v5518 = vpack.c.b16 %v5500, %v5499
      %v5519 = vpack.c.b16 %v5502, %v5501
      %v5520 = vpack.c.b16 %v5504, %v5503
      %5537 = vmatprep.subr.bf16.mxu0 0
      %5538 = vmatpush1.bf16.msra.mxu0 %v5512
      %5539 = vmatprep.subr.bf16.mxu0 0
      %5540 = vmatpush1.bf16.msra.mxu0 %v5511
      %5541 = vmatprep.subr.bf16.mxu0 0
      %5542 = vmatpush1.bf16.msra.mxu0 %v5510
      %5543 = vmatprep.subr.bf16.mxu0 0
      %5544 = vmatpush1.bf16.msra.mxu0 %v5509
      %5545 = vmatprep.subr.bf16.mxu0 0
      %5546 = vmatpush1.bf16.msra.mxu0 %v5508
      %5547 = vmatprep.subr.bf16.mxu0 0
      %5548 = vmatpush1.bf16.msra.mxu0 %v5507
      %5549 = vmatprep.subr.bf16.mxu0 0
      %5550 = vmatpush1.bf16.msra.mxu0 %v5506
      %5551 = vmatprep.subr.bf16.mxu0 0
      %5552 = vmatpush1.bf16.msra.mxu0 %v5505
      %5553 = vmatprep.subr.bf16.mxu0 0
      %5554 = vmatpush2.bf16.msra.mxu0 %v5520
      %5555 = vmatprep.subr.bf16.mxu0 0
      %5556 = vmatpush2.bf16.msra.mxu0 %v5519
      %5557 = vmatprep.subr.bf16.mxu0 0
      %5558 = vmatpush2.bf16.msra.mxu0 %v5518
      %5559 = vmatprep.subr.bf16.mxu0 0
      %5560 = vmatpush2.bf16.msra.mxu0 %v5517
      %5561 = vmatprep.subr.bf16.mxu0 0
      %5562 = vmatpush2.bf16.msra.mxu0 %v5516
      %5563 = vmatprep.subr.bf16.mxu0 0
      %5564 = vmatpush2.bf16.msra.mxu0 %v5515
      %5565 = vmatprep.subr.bf16.mxu0 0
      %5566 = vmatpush2.bf16.msra.mxu0 %v5514
      %5567 = vmatprep.subr.bf16.mxu0 0
      %5568 = vmatpush2.bf16.msra.mxu0 %v5513
      %5569 = vmatprep.mubr.bf16.mxu0 %v5434
      %5570 = vmatmul.mubr.bf16.gmra.mxu0 %v5433
      %v5571 = vpop.f32.mrf.mxu0
      %v5572 = vadd.f32 0.0, %v5571
      %v5573 = vpop.f32.mrf.mxu0
      %v5574 = vpop.f32.mrf.mxu0
      %v5575 = vadd.f32 0.0, %v5574
      %v5576 = vpop.f32.mrf.mxu0
      %5577 = vmatprep.mubr.bf16.mxu0 %v5436
      %5578 = vmatmul.mubr.bf16.gmra.mxu0 %v5435
      %v5579 = vpop.f32.mrf.mxu0
      %v5580 = vadd.f32 0.0, %v5579
      %v5581 = vpop.f32.mrf.mxu0
      %v5582 = vpop.f32.mrf.mxu0
      %v5583 = vadd.f32 0.0, %v5582
      %v5584 = vpop.f32.mrf.mxu0
      %5585 = vdwg.mxu0
      %v5586 = vadd.f32 %v5380, %v5572
      %v5587 = vadd.f32 %v5381, %v5575
      %v5588 = vadd.f32 %v5382, %v5580
      %v5589 = vadd.f32 %v5383, %v5583
      %5590 = vst [vmem:[#allocation4] sm:$0xff] %v5586
      %5591 = vst [vmem:[#allocation4 + $0x8] sm:$0xff] %v5587
      %5592 = vst [vmem:[#allocation4 + $0x10] sm:$0xff] %v5588
      %5593 = vst [vmem:[#allocation4 + $0x18] sm:$0xff] %v5589
      %v5594 = vld [vmem:[%s5266] sm:$0x7]
      %v5595 = vld [vmem:[%s5266 + $0x4] sm:$0x7]
      %v5596 = vld [vmem:[%s5266 + $0x8] sm:$0x7]
      %v5597 = vld [vmem:[%s5266 + $0xc] sm:$0x7]
      %v5598 = vld [vmem:[%s5266 + $0x14] sm:$0x7]
      %v5599 = vld [vmem:[%s5266 + $0x18] sm:$0x7]
      %v5600 = vld [vmem:[%s5266 + $0x1c] sm:$0x7]
      %v5601 = vld [vmem:[%s5266 + $0x20] sm:$0x7]
      %v5611 = vunpack.c.l.s4 1983009808
      %v5612 = vunpack.c.0.s8 %v5611
      %v5613 = vlaneseq
      %v5614 = vshrl.u32 %v5613, 7
      %v5615 = vsub.s32 %v5612, %v5614
      %v5616 = vrot.slane %v5594, %v5615
      %v5617 = vcombine.high %v5616, %v5616
      %v5619 = vunpack.c.l.s4 1983009808
      %v5620 = vunpack.c.0.s8 %v5619
      %v5621 = vlaneseq
      %v5622 = vshrl.u32 %v5621, 7
      %v5623 = vsub.s32 %v5620, %v5622
      %v5624 = vrot.slane %v5595, %v5623
      %v5625 = vcombine.high %v5624, %v5624
      %v5627 = vunpack.c.l.s4 1983009808
      %v5628 = vunpack.c.0.s8 %v5627
      %v5629 = vlaneseq
      %v5630 = vshrl.u32 %v5629, 7
      %v5631 = vsub.s32 %v5628, %v5630
      %v5632 = vrot.slane %v5596, %v5631
      %v5633 = vcombine.high %v5632, %v5632
      %v5635 = vunpack.c.l.s4 1983009808
      %v5636 = vunpack.c.0.s8 %v5635
      %v5637 = vlaneseq
      %v5638 = vshrl.u32 %v5637, 7
      %v5639 = vsub.s32 %v5636, %v5638
      %v5640 = vrot.slane %v5597, %v5639
      %v5641 = vcombine.high %v5640, %v5640
      %v5643 = vunpack.c.l.s4 1983009808
      %v5644 = vunpack.c.0.s8 %v5643
      %v5645 = vlaneseq
      %v5646 = vshrl.u32 %v5645, 7
      %v5647 = vsub.s32 %v5644, %v5646
      %v5648 = vrot.slane %v5598, %v5647
      %v5649 = vcombine.high %v5648, %v5648
      %v5651 = vunpack.c.l.s4 1983009808
      %v5652 = vunpack.c.0.s8 %v5651
      %v5653 = vlaneseq
      %v5654 = vshrl.u32 %v5653, 7
      %v5655 = vsub.s32 %v5652, %v5654
      %v5656 = vrot.slane %v5599, %v5655
      %v5657 = vcombine.high %v5656, %v5656
      %v5659 = vunpack.c.l.s4 1983009808
      %v5660 = vunpack.c.0.s8 %v5659
      %v5661 = vlaneseq
      %v5662 = vshrl.u32 %v5661, 7
      %v5663 = vsub.s32 %v5660, %v5662
      %v5664 = vrot.slane %v5600, %v5663
      %v5665 = vcombine.high %v5664, %v5664
      %v5667 = vunpack.c.l.s4 1983009808
      %v5668 = vunpack.c.0.s8 %v5667
      %v5669 = vlaneseq
      %v5670 = vshrl.u32 %v5669, 7
      %v5671 = vsub.s32 %v5668, %v5670
      %v5672 = vrot.slane %v5601, %v5671
      %v5673 = vcombine.high %v5672, %v5672
      %v5675 = vshrl.u32 %v5616, 16
      %v5677 = vrot.slane %v5675, 6
      %v5678 = vshll.u32 %v5616, 16
      %v5680 = vrot.slane %v5678, 7
      %v5681 = vor.u32 %v5677, %v5680
      %v5682 = vrot.slane %v5681, 2
      %v5684 = vshll.u32 %v5617, 16
      %v5686 = vrot.slane %v5684, 7
      %v5687 = vsel %vm1675, %v5682, %v5686
      %v5689 = vshrl.u32 %v5624, 16
      %v5691 = vrot.slane %v5689, 6
      %v5692 = vshll.u32 %v5624, 16
      %v5694 = vrot.slane %v5692, 7
      %v5695 = vor.u32 %v5691, %v5694
      %v5696 = vrot.slane %v5695, 2
      %v5698 = vshll.u32 %v5625, 16
      %v5700 = vrot.slane %v5698, 7
      %v5701 = vsel %vm1675, %v5696, %v5700
      %v5703 = vshrl.u32 %v5632, 16
      %v5705 = vrot.slane %v5703, 6
      %v5706 = vshll.u32 %v5632, 16
      %v5708 = vrot.slane %v5706, 7
      %v5709 = vor.u32 %v5705, %v5708
      %v5710 = vrot.slane %v5709, 2
      %v5712 = vshll.u32 %v5633, 16
      %v5714 = vrot.slane %v5712, 7
      %v5715 = vsel %vm1675, %v5710, %v5714
      %v5717 = vshrl.u32 %v5640, 16
      %v5719 = vrot.slane %v5717, 6
      %v5720 = vshll.u32 %v5640, 16
      %v5722 = vrot.slane %v5720, 7
      %v5723 = vor.u32 %v5719, %v5722
      %v5724 = vrot.slane %v5723, 2
      %v5726 = vshll.u32 %v5641, 16
      %v5728 = vrot.slane %v5726, 7
      %v5729 = vsel %vm1675, %v5724, %v5728
      %v5731 = vshrl.u32 %v5648, 16
      %v5733 = vrot.slane %v5731, 6
      %v5734 = vshll.u32 %v5648, 16
      %v5736 = vrot.slane %v5734, 7
      %v5737 = vor.u32 %v5733, %v5736
      %v5738 = vrot.slane %v5737, 2
      %v5740 = vshll.u32 %v5649, 16
      %v5742 = vrot.slane %v5740, 7
      %v5743 = vsel %vm1675, %v5738, %v5742
      %v5745 = vshrl.u32 %v5656, 16
      %v5747 = vrot.slane %v5745, 6
      %v5748 = vshll.u32 %v5656, 16
      %v5750 = vrot.slane %v5748, 7
      %v5751 = vor.u32 %v5747, %v5750
      %v5752 = vrot.slane %v5751, 2
      %v5754 = vshll.u32 %v5657, 16
      %v5756 = vrot.slane %v5754, 7
      %v5757 = vsel %vm1675, %v5752, %v5756
      %v5759 = vshrl.u32 %v5664, 16
      %v5761 = vrot.slane %v5759, 6
      %v5762 = vshll.u32 %v5664, 16
      %v5764 = vrot.slane %v5762, 7
      %v5765 = vor.u32 %v5761, %v5764
      %v5766 = vrot.slane %v5765, 2
      %v5768 = vshll.u32 %v5665, 16
      %v5770 = vrot.slane %v5768, 7
      %v5771 = vsel %vm1675, %v5766, %v5770
      %v5773 = vshrl.u32 %v5672, 16
      %v5775 = vrot.slane %v5773, 6
      %v5776 = vshll.u32 %v5672, 16
      %v5778 = vrot.slane %v5776, 7
      %v5779 = vor.u32 %v5775, %v5778
      %v5780 = vrot.slane %v5779, 2
      %v5782 = vshll.u32 %v5673, 16
      %v5784 = vrot.slane %v5782, 7
      %v5785 = vsel %vm1675, %v5780, %v5784
      %v5786 = vcombine.low %v5687, %v5701
      %v5788 = vunpack.c.l.s4 1983009808
      %v5789 = vunpack.c.0.s8 %v5788
      %v5790 = vlaneseq
      %v5791 = vshrl.u32 %v5790, 7
      %v5792 = vsub.s32 %v5789, %v5791
      %v5793 = vrot.slane %v5786, %v5792
      %v5794 = vcombine.low %v5715, %v5729
      %v5796 = vunpack.c.l.s4 1983009808
      %v5797 = vunpack.c.0.s8 %v5796
      %v5798 = vlaneseq
      %v5799 = vshrl.u32 %v5798, 7
      %v5800 = vsub.s32 %v5797, %v5799
      %v5801 = vrot.slane %v5794, %v5800
      %v5802 = vcombine.low %v5743, %v5757
      %v5804 = vunpack.c.l.s4 1983009808
      %v5805 = vunpack.c.0.s8 %v5804
      %v5806 = vlaneseq
      %v5807 = vshrl.u32 %v5806, 7
      %v5808 = vsub.s32 %v5805, %v5807
      %v5809 = vrot.slane %v5802, %v5808
      %v5810 = vcombine.low %v5771, %v5785
      %v5812 = vunpack.c.l.s4 1983009808
      %v5813 = vunpack.c.0.s8 %v5812
      %v5814 = vlaneseq
      %v5815 = vshrl.u32 %v5814, 7
      %v5816 = vsub.s32 %v5813, %v5815
      %v5817 = vrot.slane %v5810, %v5816
      %5822 = vst [vmem:[#allocation3] sm:$0xf] %v5793
      %5823 = vst [vmem:[#allocation3 + $0x8] sm:$0xf] %v5801
      %5824 = vst [vmem:[#allocation3 + $0x10] sm:$0xf] %v5809
      %5825 = vst [vmem:[#allocation3 + $0x18] sm:$0xf] %v5817
      %v5826 = vld [vmem:[%s1046] sm:$0x3]
      %v5827 = vld [vmem:[%s1046 + $0x4] sm:$0x3]
      %v5828 = vld [vmem:[%s1046 + $0x8] sm:$0x3]
      %v5829 = vld [vmem:[%s1046 + $0xc] sm:$0x3]
      %v5830 = vld [vmem:[%s1046 + $0x14] sm:$0x3]
      %v5831 = vld [vmem:[%s1046 + $0x18] sm:$0x3]
      %v5832 = vld [vmem:[%s1046 + $0x1c] sm:$0x3]
      %v5833 = vld [vmem:[%s1046 + $0x20] sm:$0x3]
      %v5842 = vcombine.low %v5826, %v5827
      %v5844 = vunpack.c.l.s4 1983009808
      %v5845 = vunpack.c.0.s8 %v5844
      %v5846 = vlaneseq
      %v5847 = vshrl.u32 %v5846, 7
      %v5848 = vsub.s32 %v5845, %v5847
      %v5849 = vrot.slane %v5842, %v5848
      %v5850 = vcombine.low %v5828, %v5829
      %v5852 = vunpack.c.l.s4 1983009808
      %v5853 = vunpack.c.0.s8 %v5852
      %v5854 = vlaneseq
      %v5855 = vshrl.u32 %v5854, 7
      %v5856 = vsub.s32 %v5853, %v5855
      %v5857 = vrot.slane %v5850, %v5856
      %v5858 = vcombine.low %v5830, %v5831
      %v5860 = vunpack.c.l.s4 1983009808
      %v5861 = vunpack.c.0.s8 %v5860
      %v5862 = vlaneseq
      %v5863 = vshrl.u32 %v5862, 7
      %v5864 = vsub.s32 %v5861, %v5863
      %v5865 = vrot.slane %v5858, %v5864
      %v5866 = vcombine.low %v5832, %v5833
      %v5868 = vunpack.c.l.s4 1983009808
      %v5869 = vunpack.c.0.s8 %v5868
      %v5870 = vlaneseq
      %v5871 = vshrl.u32 %v5870, 7
      %v5872 = vsub.s32 %v5869, %v5871
      %v5873 = vrot.slane %v5866, %v5872
      %5878 = vst [vmem:[#allocation3 + $0x4] sm:$0xf] %v5849
      %5879 = vst [vmem:[#allocation3 + $0xc] sm:$0xf] %v5857
      %5880 = vst [vmem:[#allocation3 + $0x14] sm:$0xf] %v5865
      %5881 = vst [vmem:[#allocation3 + $0x1c] sm:$0xf] %v5873
      %v5882 = vld [vmem:[#allocation4] sm:$0xff]
      %v5883 = vld [vmem:[#allocation4 + $0x8] sm:$0xff]
      %v5884 = vld [vmem:[#allocation4 + $0x10] sm:$0xff]
      %v5885 = vld [vmem:[#allocation4 + $0x18] sm:$0xff]
      %v5886 = vld [vmem:[#allocation3] sm:$0xff]
      %v5887 = vld [vmem:[#allocation3 + $0x8] sm:$0xff]
      %v5888 = vld [vmem:[#allocation3 + $0x10] sm:$0xff]
      %v5889 = vld [vmem:[#allocation3 + $0x18] sm:$0xff]
      %s5890 = scalar_lea.vmem %s1, 1280
      %v5891 = vld [vmem:[%s5890] sm:$0xf]
      %v5892 = vld [vmem:[%s5890 + $0x4] sm:$0xf]
      %v5893 = vld [vmem:[%s5890 + $0x8] sm:$0xf]
      %v5894 = vld [vmem:[%s5890 + $0xc] sm:$0xf]
      %v5895 = vld [vmem:[%s5890 + $0x10] sm:$0xf]
      %v5896 = vld [vmem:[%s5890 + $0x14] sm:$0xf]
      %v5897 = vld [vmem:[%s5890 + $0x18] sm:$0xf]
      %v5898 = vld [vmem:[%s5890 + $0x1c] sm:$0xf]
      %v5899 = vld [vmem:[%s5890 + $0x20] sm:$0xf]
      %v5900 = vld [vmem:[%s5890 + $0x24] sm:$0xf]
      %v5901 = vld [vmem:[%s5890 + $0x28] sm:$0xf]
      %v5902 = vld [vmem:[%s5890 + $0x2c] sm:$0xf]
      %v5903 = vld [vmem:[%s5890 + $0x30] sm:$0xf]
      %v5904 = vld [vmem:[%s5890 + $0x34] sm:$0xf]
      %v5905 = vld [vmem:[%s5890 + $0x38] sm:$0xf]
      %v5906 = vld [vmem:[%s5890 + $0x3c] sm:$0xf]
      %v5907 = vld [vmem:[%s5890 + $0x40] sm:$0xf]
      %v5908 = vld [vmem:[%s5890 + $0x44] sm:$0xf]
      %v5909 = vld [vmem:[%s5890 + $0x48] sm:$0xf]
      %v5910 = vld [vmem:[%s5890 + $0x4c] sm:$0xf]
      %v5911 = vld [vmem:[%s5890 + $0x50] sm:$0xf]
      %v5912 = vld [vmem:[%s5890 + $0x54] sm:$0xf]
      %v5913 = vld [vmem:[%s5890 + $0x58] sm:$0xf]
      %v5914 = vld [vmem:[%s5890 + $0x5c] sm:$0xf]
      %v5915 = vld [vmem:[%s5890 + $0x60] sm:$0xf]
      %v5916 = vld [vmem:[%s5890 + $0x64] sm:$0xf]
      %v5917 = vld [vmem:[%s5890 + $0x68] sm:$0xf]
      %v5918 = vld [vmem:[%s5890 + $0x6c] sm:$0xf]
      %v5919 = vld [vmem:[%s5890 + $0x70] sm:$0xf]
      %v5920 = vld [vmem:[%s5890 + $0x74] sm:$0xf]
      %v5921 = vld [vmem:[%s5890 + $0x78] sm:$0xf]
      %v5922 = vld [vmem:[%s5890 + $0x7c] sm:$0xf]
      %v5927 = vunpack.c.l.b16 %v5886
      %v5928 = vunpack.c.h.b16 %v5886
      %v5929 = vunpack.c.l.b16 %v5887
      %v5930 = vunpack.c.h.b16 %v5887
      %v5931 = vunpack.c.l.b16 %v5888
      %v5932 = vunpack.c.h.b16 %v5888
      %v5933 = vunpack.c.l.b16 %v5889
      %v5934 = vunpack.c.h.b16 %v5889
      %v5935 = vpack.c.b16 %v5929, %v5927
      %v5936 = vpack.c.b16 %v5930, %v5928
      %v5937 = vpack.c.b16 %v5933, %v5931
      %v5938 = vpack.c.b16 %v5934, %v5932
      %v5975 = vunpack.c.l.b16 %v5891
      %v5976 = vunpack.c.l.b16 %v5892
      %v5977 = vunpack.c.l.b16 %v5893
      %v5978 = vunpack.c.l.b16 %v5894
      %v5979 = vunpack.c.l.b16 %v5895
      %v5980 = vunpack.c.l.b16 %v5896
      %v5981 = vunpack.c.l.b16 %v5897
      %v5982 = vunpack.c.l.b16 %v5898
      %v5983 = vunpack.c.l.b16 %v5899
      %v5984 = vunpack.c.l.b16 %v5900
      %v5985 = vunpack.c.l.b16 %v5901
      %v5986 = vunpack.c.l.b16 %v5902
      %v5987 = vunpack.c.l.b16 %v5903
      %v5988 = vunpack.c.l.b16 %v5904
      %v5989 = vunpack.c.l.b16 %v5905
      %v5990 = vunpack.c.l.b16 %v5906
      %v5991 = vunpack.c.l.b16 %v5907
      %v5992 = vunpack.c.l.b16 %v5908
      %v5993 = vunpack.c.l.b16 %v5909
      %v5994 = vunpack.c.l.b16 %v5910
      %v5995 = vunpack.c.l.b16 %v5911
      %v5996 = vunpack.c.l.b16 %v5912
      %v5997 = vunpack.c.l.b16 %v5913
      %v5998 = vunpack.c.l.b16 %v5914
      %v5999 = vunpack.c.l.b16 %v5915
      %v6000 = vunpack.c.l.b16 %v5916
      %v6001 = vunpack.c.l.b16 %v5917
      %v6002 = vunpack.c.l.b16 %v5918
      %v6003 = vunpack.c.l.b16 %v5919
      %v6004 = vunpack.c.l.b16 %v5920
      %v6005 = vunpack.c.l.b16 %v5921
      %v6006 = vunpack.c.l.b16 %v5922
      %v6007 = vpack.c.b16 %v5976, %v5975
      %v6008 = vpack.c.b16 %v5978, %v5977
      %v6009 = vpack.c.b16 %v5980, %v5979
      %v6010 = vpack.c.b16 %v5982, %v5981
      %v6011 = vpack.c.b16 %v5984, %v5983
      %v6012 = vpack.c.b16 %v5986, %v5985
      %v6013 = vpack.c.b16 %v5988, %v5987
      %v6014 = vpack.c.b16 %v5990, %v5989
      %v6015 = vpack.c.b16 %v5992, %v5991
      %v6016 = vpack.c.b16 %v5994, %v5993
      %v6017 = vpack.c.b16 %v5996, %v5995
      %v6018 = vpack.c.b16 %v5998, %v5997
      %v6019 = vpack.c.b16 %v6000, %v5999
      %v6020 = vpack.c.b16 %v6002, %v6001
      %v6021 = vpack.c.b16 %v6004, %v6003
      %v6022 = vpack.c.b16 %v6006, %v6005
      %6039 = vmatprep.subr.bf16.mxu0 0
      %6040 = vmatpush1.bf16.msra.mxu0 %v6014
      %6041 = vmatprep.subr.bf16.mxu0 0
      %6042 = vmatpush1.bf16.msra.mxu0 %v6013
      %6043 = vmatprep.subr.bf16.mxu0 0
      %6044 = vmatpush1.bf16.msra.mxu0 %v6012
      %6045 = vmatprep.subr.bf16.mxu0 0
      %6046 = vmatpush1.bf16.msra.mxu0 %v6011
      %6047 = vmatprep.subr.bf16.mxu0 0
      %6048 = vmatpush1.bf16.msra.mxu0 %v6010
      %6049 = vmatprep.subr.bf16.mxu0 0
      %6050 = vmatpush1.bf16.msra.mxu0 %v6009
      %6051 = vmatprep.subr.bf16.mxu0 0
      %6052 = vmatpush1.bf16.msra.mxu0 %v6008
      %6053 = vmatprep.subr.bf16.mxu0 0
      %6054 = vmatpush1.bf16.msra.mxu0 %v6007
      %6055 = vmatprep.subr.bf16.mxu0 0
      %6056 = vmatpush2.bf16.msra.mxu0 %v6022
      %6057 = vmatprep.subr.bf16.mxu0 0
      %6058 = vmatpush2.bf16.msra.mxu0 %v6021
      %6059 = vmatprep.subr.bf16.mxu0 0
      %6060 = vmatpush2.bf16.msra.mxu0 %v6020
      %6061 = vmatprep.subr.bf16.mxu0 0
      %6062 = vmatpush2.bf16.msra.mxu0 %v6019
      %6063 = vmatprep.subr.bf16.mxu0 0
      %6064 = vmatpush2.bf16.msra.mxu0 %v6018
      %6065 = vmatprep.subr.bf16.mxu0 0
      %6066 = vmatpush2.bf16.msra.mxu0 %v6017
      %6067 = vmatprep.subr.bf16.mxu0 0
      %6068 = vmatpush2.bf16.msra.mxu0 %v6016
      %6069 = vmatprep.subr.bf16.mxu0 0
      %6070 = vmatpush2.bf16.msra.mxu0 %v6015
      %6071 = vmatprep.mubr.bf16.mxu0 %v5936
      %6072 = vmatmul.mubr.bf16.gmra.mxu0 %v5935
      %v6073 = vpop.f32.mrf.mxu0
      %v6074 = vadd.f32 0.0, %v6073
      %v6075 = vpop.f32.mrf.mxu0
      %v6076 = vpop.f32.mrf.mxu0
      %v6077 = vadd.f32 0.0, %v6076
      %v6078 = vpop.f32.mrf.mxu0
      %6079 = vmatprep.mubr.bf16.mxu0 %v5938
      %6080 = vmatmul.mubr.bf16.gmra.mxu0 %v5937
      %v6081 = vpop.f32.mrf.mxu0
      %v6082 = vadd.f32 0.0, %v6081
      %v6083 = vpop.f32.mrf.mxu0
      %v6084 = vpop.f32.mrf.mxu0
      %v6085 = vadd.f32 0.0, %v6084
      %v6086 = vpop.f32.mrf.mxu0
      %6087 = vdwg.mxu0
      %v6088 = vadd.f32 %v5882, %v6074
      %v6089 = vadd.f32 %v5883, %v6077
      %v6090 = vadd.f32 %v5884, %v6082
      %v6091 = vadd.f32 %v5885, %v6085
      %6092 = vst [vmem:[#allocation4] sm:$0xff] %v6088
      %6093 = vst [vmem:[#allocation4 + $0x8] sm:$0xff] %v6089
      %6094 = vst [vmem:[#allocation4 + $0x10] sm:$0xff] %v6090
      %6095 = vst [vmem:[#allocation4 + $0x18] sm:$0xff] %v6091
      %v6096 = vld [vmem:[%s900] sm:$0x3]
      %v6097 = vld [vmem:[%s900 + $0x4] sm:$0x3]
      %v6098 = vld [vmem:[%s900 + $0x8] sm:$0x3]
      %v6099 = vld [vmem:[%s900 + $0xc] sm:$0x3]
      %v6100 = vld [vmem:[%s900 + $0x14] sm:$0x3]
      %v6101 = vld [vmem:[%s900 + $0x18] sm:$0x3]
      %v6102 = vld [vmem:[%s900 + $0x1c] sm:$0x3]
      %v6103 = vld [vmem:[%s900 + $0x20] sm:$0x3]
      %v6112 = vcombine.low %v6096, %v6097
      %v6114 = vunpack.c.l.s4 1983009808
      %v6115 = vunpack.c.0.s8 %v6114
      %v6116 = vlaneseq
      %v6117 = vshrl.u32 %v6116, 7
      %v6118 = vsub.s32 %v6115, %v6117
      %v6119 = vrot.slane %v6112, %v6118
      %v6120 = vcombine.low %v6098, %v6099
      %v6122 = vunpack.c.l.s4 1983009808
      %v6123 = vunpack.c.0.s8 %v6122
      %v6124 = vlaneseq
      %v6125 = vshrl.u32 %v6124, 7
      %v6126 = vsub.s32 %v6123, %v6125
      %v6127 = vrot.slane %v6120, %v6126
      %v6128 = vcombine.low %v6100, %v6101
      %v6130 = vunpack.c.l.s4 1983009808
      %v6131 = vunpack.c.0.s8 %v6130
      %v6132 = vlaneseq
      %v6133 = vshrl.u32 %v6132, 7
      %v6134 = vsub.s32 %v6131, %v6133
      %v6135 = vrot.slane %v6128, %v6134
      %v6136 = vcombine.low %v6102, %v6103
      %v6138 = vunpack.c.l.s4 1983009808
      %v6139 = vunpack.c.0.s8 %v6138
      %v6140 = vlaneseq
      %v6141 = vshrl.u32 %v6140, 7
      %v6142 = vsub.s32 %v6139, %v6141
      %v6143 = vrot.slane %v6136, %v6142
      %6148 = vst [vmem:[#allocation3] sm:$0xf] %v6119
      %6149 = vst [vmem:[#allocation3 + $0x8] sm:$0xf] %v6127
      %6150 = vst [vmem:[#allocation3 + $0x10] sm:$0xf] %v6135
      %6151 = vst [vmem:[#allocation3 + $0x18] sm:$0xf] %v6143
      %v6152 = vld [vmem:[%s1046] sm:$0x7]
      %v6153 = vld [vmem:[%s1046 + $0x4] sm:$0x7]
      %v6154 = vld [vmem:[%s1046 + $0x8] sm:$0x7]
      %v6155 = vld [vmem:[%s1046 + $0xc] sm:$0x7]
      %v6156 = vld [vmem:[%s1046 + $0x14] sm:$0x7]
      %v6157 = vld [vmem:[%s1046 + $0x18] sm:$0x7]
      %v6158 = vld [vmem:[%s1046 + $0x1c] sm:$0x7]
      %v6159 = vld [vmem:[%s1046 + $0x20] sm:$0x7]
      %v6169 = vunpack.c.l.s4 1983009808
      %v6170 = vunpack.c.0.s8 %v6169
      %v6171 = vlaneseq
      %v6172 = vshrl.u32 %v6171, 7
      %v6173 = vsub.s32 %v6170, %v6172
      %v6174 = vrot.slane %v6152, %v6173
      %v6175 = vcombine.high %v6174, %v6174
      %v6177 = vunpack.c.l.s4 1983009808
      %v6178 = vunpack.c.0.s8 %v6177
      %v6179 = vlaneseq
      %v6180 = vshrl.u32 %v6179, 7
      %v6181 = vsub.s32 %v6178, %v6180
      %v6182 = vrot.slane %v6153, %v6181
      %v6183 = vcombine.high %v6182, %v6182
      %v6185 = vunpack.c.l.s4 1983009808
      %v6186 = vunpack.c.0.s8 %v6185
      %v6187 = vlaneseq
      %v6188 = vshrl.u32 %v6187, 7
      %v6189 = vsub.s32 %v6186, %v6188
      %v6190 = vrot.slane %v6154, %v6189
      %v6191 = vcombine.high %v6190, %v6190
      %v6193 = vunpack.c.l.s4 1983009808
      %v6194 = vunpack.c.0.s8 %v6193
      %v6195 = vlaneseq
      %v6196 = vshrl.u32 %v6195, 7
      %v6197 = vsub.s32 %v6194, %v6196
      %v6198 = vrot.slane %v6155, %v6197
      %v6199 = vcombine.high %v6198, %v6198
      %v6201 = vunpack.c.l.s4 1983009808
      %v6202 = vunpack.c.0.s8 %v6201
      %v6203 = vlaneseq
      %v6204 = vshrl.u32 %v6203, 7
      %v6205 = vsub.s32 %v6202, %v6204
      %v6206 = vrot.slane %v6156, %v6205
      %v6207 = vcombine.high %v6206, %v6206
      %v6209 = vunpack.c.l.s4 1983009808
      %v6210 = vunpack.c.0.s8 %v6209
      %v6211 = vlaneseq
      %v6212 = vshrl.u32 %v6211, 7
      %v6213 = vsub.s32 %v6210, %v6212
      %v6214 = vrot.slane %v6157, %v6213
      %v6215 = vcombine.high %v6214, %v6214
      %v6217 = vunpack.c.l.s4 1983009808
      %v6218 = vunpack.c.0.s8 %v6217
      %v6219 = vlaneseq
      %v6220 = vshrl.u32 %v6219, 7
      %v6221 = vsub.s32 %v6218, %v6220
      %v6222 = vrot.slane %v6158, %v6221
      %v6223 = vcombine.high %v6222, %v6222
      %v6225 = vunpack.c.l.s4 1983009808
      %v6226 = vunpack.c.0.s8 %v6225
      %v6227 = vlaneseq
      %v6228 = vshrl.u32 %v6227, 7
      %v6229 = vsub.s32 %v6226, %v6228
      %v6230 = vrot.slane %v6159, %v6229
      %v6231 = vcombine.high %v6230, %v6230
      %v6233 = vshrl.u32 %v6174, 16
      %v6235 = vrot.slane %v6233, 6
      %v6236 = vshll.u32 %v6174, 16
      %v6238 = vrot.slane %v6236, 7
      %v6239 = vor.u32 %v6235, %v6238
      %v6240 = vrot.slane %v6239, 2
      %v6242 = vshll.u32 %v6175, 16
      %v6244 = vrot.slane %v6242, 7
      %v6245 = vsel %vm1675, %v6240, %v6244
      %v6247 = vshrl.u32 %v6182, 16
      %v6249 = vrot.slane %v6247, 6
      %v6250 = vshll.u32 %v6182, 16
      %v6252 = vrot.slane %v6250, 7
      %v6253 = vor.u32 %v6249, %v6252
      %v6254 = vrot.slane %v6253, 2
      %v6256 = vshll.u32 %v6183, 16
      %v6258 = vrot.slane %v6256, 7
      %v6259 = vsel %vm1675, %v6254, %v6258
      %v6261 = vshrl.u32 %v6190, 16
      %v6263 = vrot.slane %v6261, 6
      %v6264 = vshll.u32 %v6190, 16
      %v6266 = vrot.slane %v6264, 7
      %v6267 = vor.u32 %v6263, %v6266
      %v6268 = vrot.slane %v6267, 2
      %v6270 = vshll.u32 %v6191, 16
      %v6272 = vrot.slane %v6270, 7
      %v6273 = vsel %vm1675, %v6268, %v6272
      %v6275 = vshrl.u32 %v6198, 16
      %v6277 = vrot.slane %v6275, 6
      %v6278 = vshll.u32 %v6198, 16
      %v6280 = vrot.slane %v6278, 7
      %v6281 = vor.u32 %v6277, %v6280
      %v6282 = vrot.slane %v6281, 2
      %v6284 = vshll.u32 %v6199, 16
      %v6286 = vrot.slane %v6284, 7
      %v6287 = vsel %vm1675, %v6282, %v6286
      %v6289 = vshrl.u32 %v6206, 16
      %v6291 = vrot.slane %v6289, 6
      %v6292 = vshll.u32 %v6206, 16
      %v6294 = vrot.slane %v6292, 7
      %v6295 = vor.u32 %v6291, %v6294
      %v6296 = vrot.slane %v6295, 2
      %v6298 = vshll.u32 %v6207, 16
      %v6300 = vrot.slane %v6298, 7
      %v6301 = vsel %vm1675, %v6296, %v6300
      %v6303 = vshrl.u32 %v6214, 16
      %v6305 = vrot.slane %v6303, 6
      %v6306 = vshll.u32 %v6214, 16
      %v6308 = vrot.slane %v6306, 7
      %v6309 = vor.u32 %v6305, %v6308
      %v6310 = vrot.slane %v6309, 2
      %v6312 = vshll.u32 %v6215, 16
      %v6314 = vrot.slane %v6312, 7
      %v6315 = vsel %vm1675, %v6310, %v6314
      %v6317 = vshrl.u32 %v6222, 16
      %v6319 = vrot.slane %v6317, 6
      %v6320 = vshll.u32 %v6222, 16
      %v6322 = vrot.slane %v6320, 7
      %v6323 = vor.u32 %v6319, %v6322
      %v6324 = vrot.slane %v6323, 2
      %v6326 = vshll.u32 %v6223, 16
      %v6328 = vrot.slane %v6326, 7
      %v6329 = vsel %vm1675, %v6324, %v6328
      %v6331 = vshrl.u32 %v6230, 16
      %v6333 = vrot.slane %v6331, 6
      %v6334 = vshll.u32 %v6230, 16
      %v6336 = vrot.slane %v6334, 7
      %v6337 = vor.u32 %v6333, %v6336
      %v6338 = vrot.slane %v6337, 2
      %v6340 = vshll.u32 %v6231, 16
      %v6342 = vrot.slane %v6340, 7
      %v6343 = vsel %vm1675, %v6338, %v6342
      %v6344 = vcombine.low %v6245, %v6259
      %v6346 = vunpack.c.l.s4 1983009808
      %v6347 = vunpack.c.0.s8 %v6346
      %v6348 = vlaneseq
      %v6349 = vshrl.u32 %v6348, 7
      %v6350 = vsub.s32 %v6347, %v6349
      %v6351 = vrot.slane %v6344, %v6350
      %v6352 = vcombine.low %v6273, %v6287
      %v6354 = vunpack.c.l.s4 1983009808
      %v6355 = vunpack.c.0.s8 %v6354
      %v6356 = vlaneseq
      %v6357 = vshrl.u32 %v6356, 7
      %v6358 = vsub.s32 %v6355, %v6357
      %v6359 = vrot.slane %v6352, %v6358
      %v6360 = vcombine.low %v6301, %v6315
      %v6362 = vunpack.c.l.s4 1983009808
      %v6363 = vunpack.c.0.s8 %v6362
      %v6364 = vlaneseq
      %v6365 = vshrl.u32 %v6364, 7
      %v6366 = vsub.s32 %v6363, %v6365
      %v6367 = vrot.slane %v6360, %v6366
      %v6368 = vcombine.low %v6329, %v6343
      %v6370 = vunpack.c.l.s4 1983009808
      %v6371 = vunpack.c.0.s8 %v6370
      %v6372 = vlaneseq
      %v6373 = vshrl.u32 %v6372, 7
      %v6374 = vsub.s32 %v6371, %v6373
      %v6375 = vrot.slane %v6368, %v6374
      %6380 = vst [vmem:[#allocation3 + $0x4] sm:$0xf] %v6351
      %6381 = vst [vmem:[#allocation3 + $0xc] sm:$0xf] %v6359
      %6382 = vst [vmem:[#allocation3 + $0x14] sm:$0xf] %v6367
      %6383 = vst [vmem:[#allocation3 + $0x1c] sm:$0xf] %v6375
      %v6384 = vld [vmem:[#allocation4] sm:$0xff]
      %v6385 = vld [vmem:[#allocation4 + $0x8] sm:$0xff]
      %v6386 = vld [vmem:[#allocation4 + $0x10] sm:$0xff]
      %v6387 = vld [vmem:[#allocation4 + $0x18] sm:$0xff]
      %v6388 = vld [vmem:[#allocation3] sm:$0xff]
      %v6389 = vld [vmem:[#allocation3 + $0x8] sm:$0xff]
      %v6390 = vld [vmem:[#allocation3 + $0x10] sm:$0xff]
      %v6391 = vld [vmem:[#allocation3 + $0x18] sm:$0xff]
      %s6392 = scalar_lea.vmem %s1, 1408
      %v6393 = vld [vmem:[%s6392] sm:$0xf]
      %v6394 = vld [vmem:[%s6392 + $0x4] sm:$0xf]
      %v6395 = vld [vmem:[%s6392 + $0x8] sm:$0xf]
      %v6396 = vld [vmem:[%s6392 + $0xc] sm:$0xf]
      %v6397 = vld [vmem:[%s6392 + $0x10] sm:$0xf]
      %v6398 = vld [vmem:[%s6392 + $0x14] sm:$0xf]
      %v6399 = vld [vmem:[%s6392 + $0x18] sm:$0xf]
      %v6400 = vld [vmem:[%s6392 + $0x1c] sm:$0xf]
      %v6401 = vld [vmem:[%s6392 + $0x20] sm:$0xf]
      %v6402 = vld [vmem:[%s6392 + $0x24] sm:$0xf]
      %v6403 = vld [vmem:[%s6392 + $0x28] sm:$0xf]
      %v6404 = vld [vmem:[%s6392 + $0x2c] sm:$0xf]
      %v6405 = vld [vmem:[%s6392 + $0x30] sm:$0xf]
      %v6406 = vld [vmem:[%s6392 + $0x34] sm:$0xf]
      %v6407 = vld [vmem:[%s6392 + $0x38] sm:$0xf]
      %v6408 = vld [vmem:[%s6392 + $0x3c] sm:$0xf]
      %v6409 = vld [vmem:[%s6392 + $0x40] sm:$0xf]
      %v6410 = vld [vmem:[%s6392 + $0x44] sm:$0xf]
      %v6411 = vld [vmem:[%s6392 + $0x48] sm:$0xf]
      %v6412 = vld [vmem:[%s6392 + $0x4c] sm:$0xf]
      %v6413 = vld [vmem:[%s6392 + $0x50] sm:$0xf]
      %v6414 = vld [vmem:[%s6392 + $0x54] sm:$0xf]
      %v6415 = vld [vmem:[%s6392 + $0x58] sm:$0xf]
      %v6416 = vld [vmem:[%s6392 + $0x5c] sm:$0xf]
      %v6417 = vld [vmem:[%s6392 + $0x60] sm:$0xf]
      %v6418 = vld [vmem:[%s6392 + $0x64] sm:$0xf]
      %v6419 = vld [vmem:[%s6392 + $0x68] sm:$0xf]
      %v6420 = vld [vmem:[%s6392 + $0x6c] sm:$0xf]
      %v6421 = vld [vmem:[%s6392 + $0x70] sm:$0xf]
      %v6422 = vld [vmem:[%s6392 + $0x74] sm:$0xf]
      %v6423 = vld [vmem:[%s6392 + $0x78] sm:$0xf]
      %v6424 = vld [vmem:[%s6392 + $0x7c] sm:$0xf]
      %v6429 = vunpack.c.l.b16 %v6388
      %v6430 = vunpack.c.h.b16 %v6388
      %v6431 = vunpack.c.l.b16 %v6389
      %v6432 = vunpack.c.h.b16 %v6389
      %v6433 = vunpack.c.l.b16 %v6390
      %v6434 = vunpack.c.h.b16 %v6390
      %v6435 = vunpack.c.l.b16 %v6391
      %v6436 = vunpack.c.h.b16 %v6391
      %v6437 = vpack.c.b16 %v6431, %v6429
      %v6438 = vpack.c.b16 %v6432, %v6430
      %v6439 = vpack.c.b16 %v6435, %v6433
      %v6440 = vpack.c.b16 %v6436, %v6434
      %v6477 = vunpack.c.l.b16 %v6393
      %v6478 = vunpack.c.l.b16 %v6394
      %v6479 = vunpack.c.l.b16 %v6395
      %v6480 = vunpack.c.l.b16 %v6396
      %v6481 = vunpack.c.l.b16 %v6397
      %v6482 = vunpack.c.l.b16 %v6398
      %v6483 = vunpack.c.l.b16 %v6399
      %v6484 = vunpack.c.l.b16 %v6400
      %v6485 = vunpack.c.l.b16 %v6401
      %v6486 = vunpack.c.l.b16 %v6402
      %v6487 = vunpack.c.l.b16 %v6403
      %v6488 = vunpack.c.l.b16 %v6404
      %v6489 = vunpack.c.l.b16 %v6405
      %v6490 = vunpack.c.l.b16 %v6406
      %v6491 = vunpack.c.l.b16 %v6407
      %v6492 = vunpack.c.l.b16 %v6408
      %v6493 = vunpack.c.l.b16 %v6409
      %v6494 = vunpack.c.l.b16 %v6410
      %v6495 = vunpack.c.l.b16 %v6411
      %v6496 = vunpack.c.l.b16 %v6412
      %v6497 = vunpack.c.l.b16 %v6413
      %v6498 = vunpack.c.l.b16 %v6414
      %v6499 = vunpack.c.l.b16 %v6415
      %v6500 = vunpack.c.l.b16 %v6416
      %v6501 = vunpack.c.l.b16 %v6417
      %v6502 = vunpack.c.l.b16 %v6418
      %v6503 = vunpack.c.l.b16 %v6419
      %v6504 = vunpack.c.l.b16 %v6420
      %v6505 = vunpack.c.l.b16 %v6421
      %v6506 = vunpack.c.l.b16 %v6422
      %v6507 = vunpack.c.l.b16 %v6423
      %v6508 = vunpack.c.l.b16 %v6424
      %v6509 = vpack.c.b16 %v6478, %v6477
      %v6510 = vpack.c.b16 %v6480, %v6479
      %v6511 = vpack.c.b16 %v6482, %v6481
      %v6512 = vpack.c.b16 %v6484, %v6483
      %v6513 = vpack.c.b16 %v6486, %v6485
      %v6514 = vpack.c.b16 %v6488, %v6487
      %v6515 = vpack.c.b16 %v6490, %v6489
      %v6516 = vpack.c.b16 %v6492, %v6491
      %v6517 = vpack.c.b16 %v6494, %v6493
      %v6518 = vpack.c.b16 %v6496, %v6495
      %v6519 = vpack.c.b16 %v6498, %v6497
      %v6520 = vpack.c.b16 %v6500, %v6499
      %v6521 = vpack.c.b16 %v6502, %v6501
      %v6522 = vpack.c.b16 %v6504, %v6503
      %v6523 = vpack.c.b16 %v6506, %v6505
      %v6524 = vpack.c.b16 %v6508, %v6507
      %6541 = vmatprep.subr.bf16.mxu0 0
      %6542 = vmatpush1.bf16.msra.mxu0 %v6516
      %6543 = vmatprep.subr.bf16.mxu0 0
      %6544 = vmatpush1.bf16.msra.mxu0 %v6515
      %6545 = vmatprep.subr.bf16.mxu0 0
      %6546 = vmatpush1.bf16.msra.mxu0 %v6514
      %6547 = vmatprep.subr.bf16.mxu0 0
      %6548 = vmatpush1.bf16.msra.mxu0 %v6513
      %6549 = vmatprep.subr.bf16.mxu0 0
      %6550 = vmatpush1.bf16.msra.mxu0 %v6512
      %6551 = vmatprep.subr.bf16.mxu0 0
      %6552 = vmatpush1.bf16.msra.mxu0 %v6511
      %6553 = vmatprep.subr.bf16.mxu0 0
      %6554 = vmatpush1.bf16.msra.mxu0 %v6510
      %6555 = vmatprep.subr.bf16.mxu0 0
      %6556 = vmatpush1.bf16.msra.mxu0 %v6509
      %6557 = vmatprep.subr.bf16.mxu0 0
      %6558 = vmatpush2.bf16.msra.mxu0 %v6524
      %6559 = vmatprep.subr.bf16.mxu0 0
      %6560 = vmatpush2.bf16.msra.mxu0 %v6523
      %6561 = vmatprep.subr.bf16.mxu0 0
      %6562 = vmatpush2.bf16.msra.mxu0 %v6522
      %6563 = vmatprep.subr.bf16.mxu0 0
      %6564 = vmatpush2.bf16.msra.mxu0 %v6521
      %6565 = vmatprep.subr.bf16.mxu0 0
      %6566 = vmatpush2.bf16.msra.mxu0 %v6520
      %6567 = vmatprep.subr.bf16.mxu0 0
      %6568 = vmatpush2.bf16.msra.mxu0 %v6519
      %6569 = vmatprep.subr.bf16.mxu0 0
      %6570 = vmatpush2.bf16.msra.mxu0 %v6518
      %6571 = vmatprep.subr.bf16.mxu0 0
      %6572 = vmatpush2.bf16.msra.mxu0 %v6517
      %6573 = vmatprep.mubr.bf16.mxu0 %v6438
      %6574 = vmatmul.mubr.bf16.gmra.mxu0 %v6437
      %v6575 = vpop.f32.mrf.mxu0
      %v6576 = vadd.f32 0.0, %v6575
      %v6577 = vpop.f32.mrf.mxu0
      %v6578 = vpop.f32.mrf.mxu0
      %v6579 = vadd.f32 0.0, %v6578
      %v6580 = vpop.f32.mrf.mxu0
      %6581 = vmatprep.mubr.bf16.mxu0 %v6440
      %6582 = vmatmul.mubr.bf16.gmra.mxu0 %v6439
      %v6583 = vpop.f32.mrf.mxu0
      %v6584 = vadd.f32 0.0, %v6583
      %v6585 = vpop.f32.mrf.mxu0
      %v6586 = vpop.f32.mrf.mxu0
      %v6587 = vadd.f32 0.0, %v6586
      %v6588 = vpop.f32.mrf.mxu0
      %6589 = vdwg.mxu0
      %v6590 = vadd.f32 %v6384, %v6576
      %v6591 = vadd.f32 %v6385, %v6579
      %v6592 = vadd.f32 %v6386, %v6584
      %v6593 = vadd.f32 %v6387, %v6587
      %6594 = vst [vmem:[#allocation4] sm:$0xff] %v6590
      %6595 = vst [vmem:[#allocation4 + $0x8] sm:$0xff] %v6591
      %6596 = vst [vmem:[#allocation4 + $0x10] sm:$0xff] %v6592
      %6597 = vst [vmem:[#allocation4 + $0x18] sm:$0xff] %v6593
      %v6598 = vld [vmem:[%s1226] sm:$0x3]
      %v6599 = vld [vmem:[%s1226 + $0x4] sm:$0x3]
      %v6600 = vld [vmem:[%s1226 + $0x8] sm:$0x3]
      %v6601 = vld [vmem:[%s1226 + $0xc] sm:$0x3]
      %v6602 = vld [vmem:[%s1226 + $0x14] sm:$0x3]
      %v6603 = vld [vmem:[%s1226 + $0x18] sm:$0x3]
      %v6604 = vld [vmem:[%s1226 + $0x1c] sm:$0x3]
      %v6605 = vld [vmem:[%s1226 + $0x20] sm:$0x3]
      %v6614 = vcombine.low %v6598, %v6599
      %v6616 = vunpack.c.l.s4 1983009808
      %v6617 = vunpack.c.0.s8 %v6616
      %v6618 = vlaneseq
      %v6619 = vshrl.u32 %v6618, 7
      %v6620 = vsub.s32 %v6617, %v6619
      %v6621 = vrot.slane %v6614, %v6620
      %v6622 = vcombine.low %v6600, %v6601
      %v6624 = vunpack.c.l.s4 1983009808
      %v6625 = vunpack.c.0.s8 %v6624
      %v6626 = vlaneseq
      %v6627 = vshrl.u32 %v6626, 7
      %v6628 = vsub.s32 %v6625, %v6627
      %v6629 = vrot.slane %v6622, %v6628
      %v6630 = vcombine.low %v6602, %v6603
      %v6632 = vunpack.c.l.s4 1983009808
      %v6633 = vunpack.c.0.s8 %v6632
      %v6634 = vlaneseq
      %v6635 = vshrl.u32 %v6634, 7
      %v6636 = vsub.s32 %v6633, %v6635
      %v6637 = vrot.slane %v6630, %v6636
      %v6638 = vcombine.low %v6604, %v6605
      %v6640 = vunpack.c.l.s4 1983009808
      %v6641 = vunpack.c.0.s8 %v6640
      %v6642 = vlaneseq
      %v6643 = vshrl.u32 %v6642, 7
      %v6644 = vsub.s32 %v6641, %v6643
      %v6645 = vrot.slane %v6638, %v6644
      %6650 = vst [vmem:[#allocation3] sm:$0xf] %v6621
      %6651 = vst [vmem:[#allocation3 + $0x8] sm:$0xf] %v6629
      %6652 = vst [vmem:[#allocation3 + $0x10] sm:$0xf] %v6637
      %6653 = vst [vmem:[#allocation3 + $0x18] sm:$0xf] %v6645
      %v6654 = vld [vmem:[%s1080] sm:$0x3]
      %v6655 = vld [vmem:[%s1080 + $0x4] sm:$0x3]
      %v6656 = vld [vmem:[%s1080 + $0x8] sm:$0x3]
      %v6657 = vld [vmem:[%s1080 + $0xc] sm:$0x3]
      %v6658 = vld [vmem:[%s1080 + $0x14] sm:$0x3]
      %v6659 = vld [vmem:[%s1080 + $0x18] sm:$0x3]
      %v6660 = vld [vmem:[%s1080 + $0x1c] sm:$0x3]
      %v6661 = vld [vmem:[%s1080 + $0x20] sm:$0x3]
      %v6670 = vcombine.low %v6654, %v6655
      %v6672 = vunpack.c.l.s4 1983009808
      %v6673 = vunpack.c.0.s8 %v6672
      %v6674 = vlaneseq
      %v6675 = vshrl.u32 %v6674, 7
      %v6676 = vsub.s32 %v6673, %v6675
      %v6677 = vrot.slane %v6670, %v6676
      %v6678 = vcombine.low %v6656, %v6657
      %v6680 = vunpack.c.l.s4 1983009808
      %v6681 = vunpack.c.0.s8 %v6680
      %v6682 = vlaneseq
      %v6683 = vshrl.u32 %v6682, 7
      %v6684 = vsub.s32 %v6681, %v6683
      %v6685 = vrot.slane %v6678, %v6684
      %v6686 = vcombine.low %v6658, %v6659
      %v6688 = vunpack.c.l.s4 1983009808
      %v6689 = vunpack.c.0.s8 %v6688
      %v6690 = vlaneseq
      %v6691 = vshrl.u32 %v6690, 7
      %v6692 = vsub.s32 %v6689, %v6691
      %v6693 = vrot.slane %v6686, %v6692
      %v6694 = vcombine.low %v6660, %v6661
      %v6696 = vunpack.c.l.s4 1983009808
      %v6697 = vunpack.c.0.s8 %v6696
      %v6698 = vlaneseq
      %v6699 = vshrl.u32 %v6698, 7
      %v6700 = vsub.s32 %v6697, %v6699
      %v6701 = vrot.slane %v6694, %v6700
      %6706 = vst [vmem:[#allocation3 + $0x4] sm:$0xf] %v6677
      %6707 = vst [vmem:[#allocation3 + $0xc] sm:$0xf] %v6685
      %6708 = vst [vmem:[#allocation3 + $0x14] sm:$0xf] %v6693
      %6709 = vst [vmem:[#allocation3 + $0x1c] sm:$0xf] %v6701
      %v6710 = vld [vmem:[#allocation4] sm:$0xff]
      %v6711 = vld [vmem:[#allocation4 + $0x8] sm:$0xff]
      %v6712 = vld [vmem:[#allocation4 + $0x10] sm:$0xff]
      %v6713 = vld [vmem:[#allocation4 + $0x18] sm:$0xff]
      %v6714 = vld [vmem:[#allocation3] sm:$0xff]
      %v6715 = vld [vmem:[#allocation3 + $0x8] sm:$0xff]
      %v6716 = vld [vmem:[#allocation3 + $0x10] sm:$0xff]
      %v6717 = vld [vmem:[#allocation3 + $0x18] sm:$0xff]
      %s6718 = scalar_lea.vmem %s1, 1536
      %v6719 = vld [vmem:[%s6718] sm:$0xf]
      %v6720 = vld [vmem:[%s6718 + $0x4] sm:$0xf]
      %v6721 = vld [vmem:[%s6718 + $0x8] sm:$0xf]
      %v6722 = vld [vmem:[%s6718 + $0xc] sm:$0xf]
      %v6723 = vld [vmem:[%s6718 + $0x10] sm:$0xf]
      %v6724 = vld [vmem:[%s6718 + $0x14] sm:$0xf]
      %v6725 = vld [vmem:[%s6718 + $0x18] sm:$0xf]
      %v6726 = vld [vmem:[%s6718 + $0x1c] sm:$0xf]
      %v6727 = vld [vmem:[%s6718 + $0x20] sm:$0xf]
      %v6728 = vld [vmem:[%s6718 + $0x24] sm:$0xf]
      %v6729 = vld [vmem:[%s6718 + $0x28] sm:$0xf]
      %v6730 = vld [vmem:[%s6718 + $0x2c] sm:$0xf]
      %v6731 = vld [vmem:[%s6718 + $0x30] sm:$0xf]
      %v6732 = vld [vmem:[%s6718 + $0x34] sm:$0xf]
      %v6733 = vld [vmem:[%s6718 + $0x38] sm:$0xf]
      %v6734 = vld [vmem:[%s6718 + $0x3c] sm:$0xf]
      %v6735 = vld [vmem:[%s6718 + $0x40] sm:$0xf]
      %v6736 = vld [vmem:[%s6718 + $0x44] sm:$0xf]
      %v6737 = vld [vmem:[%s6718 + $0x48] sm:$0xf]
      %v6738 = vld [vmem:[%s6718 + $0x4c] sm:$0xf]
      %v6739 = vld [vmem:[%s6718 + $0x50] sm:$0xf]
      %v6740 = vld [vmem:[%s6718 + $0x54] sm:$0xf]
      %v6741 = vld [vmem:[%s6718 + $0x58] sm:$0xf]
      %v6742 = vld [vmem:[%s6718 + $0x5c] sm:$0xf]
      %v6743 = vld [vmem:[%s6718 + $0x60] sm:$0xf]
      %v6744 = vld [vmem:[%s6718 + $0x64] sm:$0xf]
      %v6745 = vld [vmem:[%s6718 + $0x68] sm:$0xf]
      %v6746 = vld [vmem:[%s6718 + $0x6c] sm:$0xf]
      %v6747 = vld [vmem:[%s6718 + $0x70] sm:$0xf]
      %v6748 = vld [vmem:[%s6718 + $0x74] sm:$0xf]
      %v6749 = vld [vmem:[%s6718 + $0x78] sm:$0xf]
      %v6750 = vld [vmem:[%s6718 + $0x7c] sm:$0xf]
      %v6755 = vunpack.c.l.b16 %v6714
      %v6756 = vunpack.c.h.b16 %v6714
      %v6757 = vunpack.c.l.b16 %v6715
      %v6758 = vunpack.c.h.b16 %v6715
      %v6759 = vunpack.c.l.b16 %v6716
      %v6760 = vunpack.c.h.b16 %v6716
      %v6761 = vunpack.c.l.b16 %v6717
      %v6762 = vunpack.c.h.b16 %v6717
      %v6763 = vpack.c.b16 %v6757, %v6755
      %v6764 = vpack.c.b16 %v6758, %v6756
      %v6765 = vpack.c.b16 %v6761, %v6759
      %v6766 = vpack.c.b16 %v6762, %v6760
      %v6803 = vunpack.c.l.b16 %v6719
      %v6804 = vunpack.c.l.b16 %v6720
      %v6805 = vunpack.c.l.b16 %v6721
      %v6806 = vunpack.c.l.b16 %v6722
      %v6807 = vunpack.c.l.b16 %v6723
      %v6808 = vunpack.c.l.b16 %v6724
      %v6809 = vunpack.c.l.b16 %v6725
      %v6810 = vunpack.c.l.b16 %v6726
      %v6811 = vunpack.c.l.b16 %v6727
      %v6812 = vunpack.c.l.b16 %v6728
      %v6813 = vunpack.c.l.b16 %v6729
      %v6814 = vunpack.c.l.b16 %v6730
      %v6815 = vunpack.c.l.b16 %v6731
      %v6816 = vunpack.c.l.b16 %v6732
      %v6817 = vunpack.c.l.b16 %v6733
      %v6818 = vunpack.c.l.b16 %v6734
      %v6819 = vunpack.c.l.b16 %v6735
      %v6820 = vunpack.c.l.b16 %v6736
      %v6821 = vunpack.c.l.b16 %v6737
      %v6822 = vunpack.c.l.b16 %v6738
      %v6823 = vunpack.c.l.b16 %v6739
      %v6824 = vunpack.c.l.b16 %v6740
      %v6825 = vunpack.c.l.b16 %v6741
      %v6826 = vunpack.c.l.b16 %v6742
      %v6827 = vunpack.c.l.b16 %v6743
      %v6828 = vunpack.c.l.b16 %v6744
      %v6829 = vunpack.c.l.b16 %v6745
      %v6830 = vunpack.c.l.b16 %v6746
      %v6831 = vunpack.c.l.b16 %v6747
      %v6832 = vunpack.c.l.b16 %v6748
      %v6833 = vunpack.c.l.b16 %v6749
      %v6834 = vunpack.c.l.b16 %v6750
      %v6835 = vpack.c.b16 %v6804, %v6803
      %v6836 = vpack.c.b16 %v6806, %v6805
      %v6837 = vpack.c.b16 %v6808, %v6807
      %v6838 = vpack.c.b16 %v6810, %v6809
      %v6839 = vpack.c.b16 %v6812, %v6811
      %v6840 = vpack.c.b16 %v6814, %v6813
      %v6841 = vpack.c.b16 %v6816, %v6815
      %v6842 = vpack.c.b16 %v6818, %v6817
      %v6843 = vpack.c.b16 %v6820, %v6819
      %v6844 = vpack.c.b16 %v6822, %v6821
      %v6845 = vpack.c.b16 %v6824, %v6823
      %v6846 = vpack.c.b16 %v6826, %v6825
      %v6847 = vpack.c.b16 %v6828, %v6827
      %v6848 = vpack.c.b16 %v6830, %v6829
      %v6849 = vpack.c.b16 %v6832, %v6831
      %v6850 = vpack.c.b16 %v6834, %v6833
      %6867 = vmatprep.subr.bf16.mxu0 0
      %6868 = vmatpush1.bf16.msra.mxu0 %v6842
      %6869 = vmatprep.subr.bf16.mxu0 0
      %6870 = vmatpush1.bf16.msra.mxu0 %v6841
      %6871 = vmatprep.subr.bf16.mxu0 0
      %6872 = vmatpush1.bf16.msra.mxu0 %v6840
      %6873 = vmatprep.subr.bf16.mxu0 0
      %6874 = vmatpush1.bf16.msra.mxu0 %v6839
      %6875 = vmatprep.subr.bf16.mxu0 0
      %6876 = vmatpush1.bf16.msra.mxu0 %v6838
      %6877 = vmatprep.subr.bf16.mxu0 0
      %6878 = vmatpush1.bf16.msra.mxu0 %v6837
      %6879 = vmatprep.subr.bf16.mxu0 0
      %6880 = vmatpush1.bf16.msra.mxu0 %v6836
      %6881 = vmatprep.subr.bf16.mxu0 0
      %6882 = vmatpush1.bf16.msra.mxu0 %v6835
      %6883 = vmatprep.subr.bf16.mxu0 0
      %6884 = vmatpush2.bf16.msra.mxu0 %v6850
      %6885 = vmatprep.subr.bf16.mxu0 0
      %6886 = vmatpush2.bf16.msra.mxu0 %v6849
      %6887 = vmatprep.subr.bf16.mxu0 0
      %6888 = vmatpush2.bf16.msra.mxu0 %v6848
      %6889 = vmatprep.subr.bf16.mxu0 0
      %6890 = vmatpush2.bf16.msra.mxu0 %v6847
      %6891 = vmatprep.subr.bf16.mxu0 0
      %6892 = vmatpush2.bf16.msra.mxu0 %v6846
      %6893 = vmatprep.subr.bf16.mxu0 0
      %6894 = vmatpush2.bf16.msra.mxu0 %v6845
      %6895 = vmatprep.subr.bf16.mxu0 0
      %6896 = vmatpush2.bf16.msra.mxu0 %v6844
      %6897 = vmatprep.subr.bf16.mxu0 0
      %6898 = vmatpush2.bf16.msra.mxu0 %v6843
      %6899 = vmatprep.mubr.bf16.mxu0 %v6764
      %6900 = vmatmul.mubr.bf16.gmra.mxu0 %v6763
      %v6901 = vpop.f32.mrf.mxu0
      %v6902 = vadd.f32 0.0, %v6901
      %v6903 = vpop.f32.mrf.mxu0
      %v6904 = vpop.f32.mrf.mxu0
      %v6905 = vadd.f32 0.0, %v6904
      %v6906 = vpop.f32.mrf.mxu0
      %6907 = vmatprep.mubr.bf16.mxu0 %v6766
      %6908 = vmatmul.mubr.bf16.gmra.mxu0 %v6765
      %v6909 = vpop.f32.mrf.mxu0
      %v6910 = vadd.f32 0.0, %v6909
      %v6911 = vpop.f32.mrf.mxu0
      %v6912 = vpop.f32.mrf.mxu0
      %v6913 = vadd.f32 0.0, %v6912
      %v6914 = vpop.f32.mrf.mxu0
      %6915 = vdwg.mxu0
      %v6916 = vadd.f32 %v6710, %v6902
      %v6917 = vadd.f32 %v6711, %v6905
      %v6918 = vadd.f32 %v6712, %v6910
      %v6919 = vadd.f32 %v6713, %v6913
      %6920 = vst [vmem:[#allocation4] sm:$0xff] %v6916
      %6921 = vst [vmem:[#allocation4 + $0x8] sm:$0xff] %v6917
      %6922 = vst [vmem:[#allocation4 + $0x10] sm:$0xff] %v6918
      %6923 = vst [vmem:[#allocation4 + $0x18] sm:$0xff] %v6919
      %v6924 = vld [vmem:[%s1226] sm:$0x7]
      %v6925 = vld [vmem:[%s1226 + $0x4] sm:$0x7]
      %v6926 = vld [vmem:[%s1226 + $0x8] sm:$0x7]
      %v6927 = vld [vmem:[%s1226 + $0xc] sm:$0x7]
      %v6928 = vld [vmem:[%s1226 + $0x14] sm:$0x7]
      %v6929 = vld [vmem:[%s1226 + $0x18] sm:$0x7]
      %v6930 = vld [vmem:[%s1226 + $0x1c] sm:$0x7]
      %v6931 = vld [vmem:[%s1226 + $0x20] sm:$0x7]
      %v6941 = vunpack.c.l.s4 1983009808
      %v6942 = vunpack.c.0.s8 %v6941
      %v6943 = vlaneseq
      %v6944 = vshrl.u32 %v6943, 7
      %v6945 = vsub.s32 %v6942, %v6944
      %v6946 = vrot.slane %v6924, %v6945
      %v6947 = vcombine.high %v6946, %v6946
      %v6949 = vunpack.c.l.s4 1983009808
      %v6950 = vunpack.c.0.s8 %v6949
      %v6951 = vlaneseq
      %v6952 = vshrl.u32 %v6951, 7
      %v6953 = vsub.s32 %v6950, %v6952
      %v6954 = vrot.slane %v6925, %v6953
      %v6955 = vcombine.high %v6954, %v6954
      %v6957 = vunpack.c.l.s4 1983009808
      %v6958 = vunpack.c.0.s8 %v6957
      %v6959 = vlaneseq
      %v6960 = vshrl.u32 %v6959, 7
      %v6961 = vsub.s32 %v6958, %v6960
      %v6962 = vrot.slane %v6926, %v6961
      %v6963 = vcombine.high %v6962, %v6962
      %v6965 = vunpack.c.l.s4 1983009808
      %v6966 = vunpack.c.0.s8 %v6965
      %v6967 = vlaneseq
      %v6968 = vshrl.u32 %v6967, 7
      %v6969 = vsub.s32 %v6966, %v6968
      %v6970 = vrot.slane %v6927, %v6969
      %v6971 = vcombine.high %v6970, %v6970
      %v6973 = vunpack.c.l.s4 1983009808
      %v6974 = vunpack.c.0.s8 %v6973
      %v6975 = vlaneseq
      %v6976 = vshrl.u32 %v6975, 7
      %v6977 = vsub.s32 %v6974, %v6976
      %v6978 = vrot.slane %v6928, %v6977
      %v6979 = vcombine.high %v6978, %v6978
      %v6981 = vunpack.c.l.s4 1983009808
      %v6982 = vunpack.c.0.s8 %v6981
      %v6983 = vlaneseq
      %v6984 = vshrl.u32 %v6983, 7
      %v6985 = vsub.s32 %v6982, %v6984
      %v6986 = vrot.slane %v6929, %v6985
      %v6987 = vcombine.high %v6986, %v6986
      %v6989 = vunpack.c.l.s4 1983009808
      %v6990 = vunpack.c.0.s8 %v6989
      %v6991 = vlaneseq
      %v6992 = vshrl.u32 %v6991, 7
      %v6993 = vsub.s32 %v6990, %v6992
      %v6994 = vrot.slane %v6930, %v6993
      %v6995 = vcombine.high %v6994, %v6994
      %v6997 = vunpack.c.l.s4 1983009808
      %v6998 = vunpack.c.0.s8 %v6997
      %v6999 = vlaneseq
      %v7000 = vshrl.u32 %v6999, 7
      %v7001 = vsub.s32 %v6998, %v7000
      %v7002 = vrot.slane %v6931, %v7001
      %v7003 = vcombine.high %v7002, %v7002
      %v7005 = vshrl.u32 %v6946, 16
      %v7007 = vrot.slane %v7005, 6
      %v7008 = vshll.u32 %v6946, 16
      %v7010 = vrot.slane %v7008, 7
      %v7011 = vor.u32 %v7007, %v7010
      %v7012 = vrot.slane %v7011, 2
      %v7014 = vshll.u32 %v6947, 16
      %v7016 = vrot.slane %v7014, 7
      %v7017 = vsel %vm1675, %v7012, %v7016
      %v7019 = vshrl.u32 %v6954, 16
      %v7021 = vrot.slane %v7019, 6
      %v7022 = vshll.u32 %v6954, 16
      %v7024 = vrot.slane %v7022, 7
      %v7025 = vor.u32 %v7021, %v7024
      %v7026 = vrot.slane %v7025, 2
      %v7028 = vshll.u32 %v6955, 16
      %v7030 = vrot.slane %v7028, 7
      %v7031 = vsel %vm1675, %v7026, %v7030
      %v7033 = vshrl.u32 %v6962, 16
      %v7035 = vrot.slane %v7033, 6
      %v7036 = vshll.u32 %v6962, 16
      %v7038 = vrot.slane %v7036, 7
      %v7039 = vor.u32 %v7035, %v7038
      %v7040 = vrot.slane %v7039, 2
      %v7042 = vshll.u32 %v6963, 16
      %v7044 = vrot.slane %v7042, 7
      %v7045 = vsel %vm1675, %v7040, %v7044
      %v7047 = vshrl.u32 %v6970, 16
      %v7049 = vrot.slane %v7047, 6
      %v7050 = vshll.u32 %v6970, 16
      %v7052 = vrot.slane %v7050, 7
      %v7053 = vor.u32 %v7049, %v7052
      %v7054 = vrot.slane %v7053, 2
      %v7056 = vshll.u32 %v6971, 16
      %v7058 = vrot.slane %v7056, 7
      %v7059 = vsel %vm1675, %v7054, %v7058
      %v7061 = vshrl.u32 %v6978, 16
      %v7063 = vrot.slane %v7061, 6
      %v7064 = vshll.u32 %v6978, 16
      %v7066 = vrot.slane %v7064, 7
      %v7067 = vor.u32 %v7063, %v7066
      %v7068 = vrot.slane %v7067, 2
      %v7070 = vshll.u32 %v6979, 16
      %v7072 = vrot.slane %v7070, 7
      %v7073 = vsel %vm1675, %v7068, %v7072
      %v7075 = vshrl.u32 %v6986, 16
      %v7077 = vrot.slane %v7075, 6
      %v7078 = vshll.u32 %v6986, 16
      %v7080 = vrot.slane %v7078, 7
      %v7081 = vor.u32 %v7077, %v7080
      %v7082 = vrot.slane %v7081, 2
      %v7084 = vshll.u32 %v6987, 16
      %v7086 = vrot.slane %v7084, 7
      %v7087 = vsel %vm1675, %v7082, %v7086
      %v7089 = vshrl.u32 %v6994, 16
      %v7091 = vrot.slane %v7089, 6
      %v7092 = vshll.u32 %v6994, 16
      %v7094 = vrot.slane %v7092, 7
      %v7095 = vor.u32 %v7091, %v7094
      %v7096 = vrot.slane %v7095, 2
      %v7098 = vshll.u32 %v6995, 16
      %v7100 = vrot.slane %v7098, 7
      %v7101 = vsel %vm1675, %v7096, %v7100
      %v7103 = vshrl.u32 %v7002, 16
      %v7105 = vrot.slane %v7103, 6
      %v7106 = vshll.u32 %v7002, 16
      %v7108 = vrot.slane %v7106, 7
      %v7109 = vor.u32 %v7105, %v7108
      %v7110 = vrot.slane %v7109, 2
      %v7112 = vshll.u32 %v7003, 16
      %v7114 = vrot.slane %v7112, 7
      %v7115 = vsel %vm1675, %v7110, %v7114
      %v7116 = vcombine.low %v7017, %v7031
      %v7118 = vunpack.c.l.s4 1983009808
      %v7119 = vunpack.c.0.s8 %v7118
      %v7120 = vlaneseq
      %v7121 = vshrl.u32 %v7120, 7
      %v7122 = vsub.s32 %v7119, %v7121
      %v7123 = vrot.slane %v7116, %v7122
      %v7124 = vcombine.low %v7045, %v7059
      %v7126 = vunpack.c.l.s4 1983009808
      %v7127 = vunpack.c.0.s8 %v7126
      %v7128 = vlaneseq
      %v7129 = vshrl.u32 %v7128, 7
      %v7130 = vsub.s32 %v7127, %v7129
      %v7131 = vrot.slane %v7124, %v7130
      %v7132 = vcombine.low %v7073, %v7087
      %v7134 = vunpack.c.l.s4 1983009808
      %v7135 = vunpack.c.0.s8 %v7134
      %v7136 = vlaneseq
      %v7137 = vshrl.u32 %v7136, 7
      %v7138 = vsub.s32 %v7135, %v7137
      %v7139 = vrot.slane %v7132, %v7138
      %v7140 = vcombine.low %v7101, %v7115
      %v7142 = vunpack.c.l.s4 1983009808
      %v7143 = vunpack.c.0.s8 %v7142
      %v7144 = vlaneseq
      %v7145 = vshrl.u32 %v7144, 7
      %v7146 = vsub.s32 %v7143, %v7145
      %v7147 = vrot.slane %v7140, %v7146
      %7152 = vst [vmem:[#allocation3] sm:$0xf] %v7123
      %7153 = vst [vmem:[#allocation3 + $0x8] sm:$0xf] %v7131
      %7154 = vst [vmem:[#allocation3 + $0x10] sm:$0xf] %v7139
      %7155 = vst [vmem:[#allocation3 + $0x18] sm:$0xf] %v7147
      %v7156 = vld [vmem:[%s1226] sm:$0x7]
      %v7157 = vld [vmem:[%s1226 + $0x4] sm:$0x7]
      %v7158 = vld [vmem:[%s1226 + $0x8] sm:$0x7]
      %v7159 = vld [vmem:[%s1226 + $0xc] sm:$0x7]
      %v7160 = vld [vmem:[%s1226 + $0x14] sm:$0x7]
      %v7161 = vld [vmem:[%s1226 + $0x18] sm:$0x7]
      %v7162 = vld [vmem:[%s1226 + $0x1c] sm:$0x7]
      %v7163 = vld [vmem:[%s1226 + $0x20] sm:$0x7]
      %v7173 = vunpack.c.l.s4 1983009808
      %v7174 = vunpack.c.0.s8 %v7173
      %v7175 = vlaneseq
      %v7176 = vshrl.u32 %v7175, 7
      %v7177 = vsub.s32 %v7174, %v7176
      %v7178 = vrot.slane %v7156, %v7177
      %v7179 = vcombine.high %v7178, %v7178
      %v7181 = vunpack.c.l.s4 1983009808
      %v7182 = vunpack.c.0.s8 %v7181
      %v7183 = vlaneseq
      %v7184 = vshrl.u32 %v7183, 7
      %v7185 = vsub.s32 %v7182, %v7184
      %v7186 = vrot.slane %v7157, %v7185
      %v7187 = vcombine.high %v7186, %v7186
      %v7189 = vunpack.c.l.s4 1983009808
      %v7190 = vunpack.c.0.s8 %v7189
      %v7191 = vlaneseq
      %v7192 = vshrl.u32 %v7191, 7
      %v7193 = vsub.s32 %v7190, %v7192
      %v7194 = vrot.slane %v7158, %v7193
      %v7195 = vcombine.high %v7194, %v7194
      %v7197 = vunpack.c.l.s4 1983009808
      %v7198 = vunpack.c.0.s8 %v7197
      %v7199 = vlaneseq
      %v7200 = vshrl.u32 %v7199, 7
      %v7201 = vsub.s32 %v7198, %v7200
      %v7202 = vrot.slane %v7159, %v7201
      %v7203 = vcombine.high %v7202, %v7202
      %v7205 = vunpack.c.l.s4 1983009808
      %v7206 = vunpack.c.0.s8 %v7205
      %v7207 = vlaneseq
      %v7208 = vshrl.u32 %v7207, 7
      %v7209 = vsub.s32 %v7206, %v7208
      %v7210 = vrot.slane %v7160, %v7209
      %v7211 = vcombine.high %v7210, %v7210
      %v7213 = vunpack.c.l.s4 1983009808
      %v7214 = vunpack.c.0.s8 %v7213
      %v7215 = vlaneseq
      %v7216 = vshrl.u32 %v7215, 7
      %v7217 = vsub.s32 %v7214, %v7216
      %v7218 = vrot.slane %v7161, %v7217
      %v7219 = vcombine.high %v7218, %v7218
      %v7221 = vunpack.c.l.s4 1983009808
      %v7222 = vunpack.c.0.s8 %v7221
      %v7223 = vlaneseq
      %v7224 = vshrl.u32 %v7223, 7
      %v7225 = vsub.s32 %v7222, %v7224
      %v7226 = vrot.slane %v7162, %v7225
      %v7227 = vcombine.high %v7226, %v7226
      %v7229 = vunpack.c.l.s4 1983009808
      %v7230 = vunpack.c.0.s8 %v7229
      %v7231 = vlaneseq
      %v7232 = vshrl.u32 %v7231, 7
      %v7233 = vsub.s32 %v7230, %v7232
      %v7234 = vrot.slane %v7163, %v7233
      %v7235 = vcombine.high %v7234, %v7234
      %v7237 = vshrl.u32 %v7178, 16
      %v7239 = vrot.slane %v7237, 6
      %v7240 = vshll.u32 %v7178, 16
      %v7242 = vrot.slane %v7240, 7
      %v7243 = vor.u32 %v7239, %v7242
      %v7244 = vrot.slane %v7243, 2
      %v7246 = vshll.u32 %v7179, 16
      %v7248 = vrot.slane %v7246, 7
      %v7249 = vsel %vm1675, %v7244, %v7248
      %v7251 = vshrl.u32 %v7186, 16
      %v7253 = vrot.slane %v7251, 6
      %v7254 = vshll.u32 %v7186, 16
      %v7256 = vrot.slane %v7254, 7
      %v7257 = vor.u32 %v7253, %v7256
      %v7258 = vrot.slane %v7257, 2
      %v7260 = vshll.u32 %v7187, 16
      %v7262 = vrot.slane %v7260, 7
      %v7263 = vsel %vm1675, %v7258, %v7262
      %v7265 = vshrl.u32 %v7194, 16
      %v7267 = vrot.slane %v7265, 6
      %v7268 = vshll.u32 %v7194, 16
      %v7270 = vrot.slane %v7268, 7
      %v7271 = vor.u32 %v7267, %v7270
      %v7272 = vrot.slane %v7271, 2
      %v7274 = vshll.u32 %v7195, 16
      %v7276 = vrot.slane %v7274, 7
      %v7277 = vsel %vm1675, %v7272, %v7276
      %v7279 = vshrl.u32 %v7202, 16
      %v7281 = vrot.slane %v7279, 6
      %v7282 = vshll.u32 %v7202, 16
      %v7284 = vrot.slane %v7282, 7
      %v7285 = vor.u32 %v7281, %v7284
      %v7286 = vrot.slane %v7285, 2
      %v7288 = vshll.u32 %v7203, 16
      %v7290 = vrot.slane %v7288, 7
      %v7291 = vsel %vm1675, %v7286, %v7290
      %v7293 = vshrl.u32 %v7210, 16
      %v7295 = vrot.slane %v7293, 6
      %v7296 = vshll.u32 %v7210, 16
      %v7298 = vrot.slane %v7296, 7
      %v7299 = vor.u32 %v7295, %v7298
      %v7300 = vrot.slane %v7299, 2
      %v7302 = vshll.u32 %v7211, 16
      %v7304 = vrot.slane %v7302, 7
      %v7305 = vsel %vm1675, %v7300, %v7304
      %v7307 = vshrl.u32 %v7218, 16
      %v7309 = vrot.slane %v7307, 6
      %v7310 = vshll.u32 %v7218, 16
      %v7312 = vrot.slane %v7310, 7
      %v7313 = vor.u32 %v7309, %v7312
      %v7314 = vrot.slane %v7313, 2
      %v7316 = vshll.u32 %v7219, 16
      %v7318 = vrot.slane %v7316, 7
      %v7319 = vsel %vm1675, %v7314, %v7318
      %v7321 = vshrl.u32 %v7226, 16
      %v7323 = vrot.slane %v7321, 6
      %v7324 = vshll.u32 %v7226, 16
      %v7326 = vrot.slane %v7324, 7
      %v7327 = vor.u32 %v7323, %v7326
      %v7328 = vrot.slane %v7327, 2
      %v7330 = vshll.u32 %v7227, 16
      %v7332 = vrot.slane %v7330, 7
      %v7333 = vsel %vm1675, %v7328, %v7332
      %v7335 = vshrl.u32 %v7234, 16
      %v7337 = vrot.slane %v7335, 6
      %v7338 = vshll.u32 %v7234, 16
      %v7340 = vrot.slane %v7338, 7
      %v7341 = vor.u32 %v7337, %v7340
      %v7342 = vrot.slane %v7341, 2
      %v7344 = vshll.u32 %v7235, 16
      %v7346 = vrot.slane %v7344, 7
      %v7347 = vsel %vm1675, %v7342, %v7346
      %v7348 = vcombine.low %v7249, %v7263
      %v7350 = vunpack.c.l.s4 1983009808
      %v7351 = vunpack.c.0.s8 %v7350
      %v7352 = vlaneseq
      %v7353 = vshrl.u32 %v7352, 7
      %v7354 = vsub.s32 %v7351, %v7353
      %v7355 = vrot.slane %v7348, %v7354
      %v7356 = vcombine.low %v7277, %v7291
      %v7358 = vunpack.c.l.s4 1983009808
      %v7359 = vunpack.c.0.s8 %v7358
      %v7360 = vlaneseq
      %v7361 = vshrl.u32 %v7360, 7
      %v7362 = vsub.s32 %v7359, %v7361
      %v7363 = vrot.slane %v7356, %v7362
      %v7364 = vcombine.low %v7305, %v7319
      %v7366 = vunpack.c.l.s4 1983009808
      %v7367 = vunpack.c.0.s8 %v7366
      %v7368 = vlaneseq
      %v7369 = vshrl.u32 %v7368, 7
      %v7370 = vsub.s32 %v7367, %v7369
      %v7371 = vrot.slane %v7364, %v7370
      %v7372 = vcombine.low %v7333, %v7347
      %v7374 = vunpack.c.l.s4 1983009808
      %v7375 = vunpack.c.0.s8 %v7374
      %v7376 = vlaneseq
      %v7377 = vshrl.u32 %v7376, 7
      %v7378 = vsub.s32 %v7375, %v7377
      %v7379 = vrot.slane %v7372, %v7378
      %7384 = vst [vmem:[#allocation3 + $0x4] sm:$0xf] %v7355
      %7385 = vst [vmem:[#allocation3 + $0xc] sm:$0xf] %v7363
      %7386 = vst [vmem:[#allocation3 + $0x14] sm:$0xf] %v7371
      %7387 = vst [vmem:[#allocation3 + $0x1c] sm:$0xf] %v7379
      %v7388 = vld [vmem:[#allocation4] sm:$0xff]
      %v7389 = vld [vmem:[#allocation4 + $0x8] sm:$0xff]
      %v7390 = vld [vmem:[#allocation4 + $0x10] sm:$0xff]
      %v7391 = vld [vmem:[#allocation4 + $0x18] sm:$0xff]
      %v7392 = vld [vmem:[#allocation3] sm:$0xff]
      %v7393 = vld [vmem:[#allocation3 + $0x8] sm:$0xff]
      %v7394 = vld [vmem:[#allocation3 + $0x10] sm:$0xff]
      %v7395 = vld [vmem:[#allocation3 + $0x18] sm:$0xff]
      %s7396 = scalar_lea.vmem %s1, 1664
      %v7397 = vld [vmem:[%s7396] sm:$0xf]
      %v7398 = vld [vmem:[%s7396 + $0x4] sm:$0xf]
      %v7399 = vld [vmem:[%s7396 + $0x8] sm:$0xf]
      %v7400 = vld [vmem:[%s7396 + $0xc] sm:$0xf]
      %v7401 = vld [vmem:[%s7396 + $0x10] sm:$0xf]
      %v7402 = vld [vmem:[%s7396 + $0x14] sm:$0xf]
      %v7403 = vld [vmem:[%s7396 + $0x18] sm:$0xf]
      %v7404 = vld [vmem:[%s7396 + $0x1c] sm:$0xf]
      %v7405 = vld [vmem:[%s7396 + $0x20] sm:$0xf]
      %v7406 = vld [vmem:[%s7396 + $0x24] sm:$0xf]
      %v7407 = vld [vmem:[%s7396 + $0x28] sm:$0xf]
      %v7408 = vld [vmem:[%s7396 + $0x2c] sm:$0xf]
      %v7409 = vld [vmem:[%s7396 + $0x30] sm:$0xf]
      %v7410 = vld [vmem:[%s7396 + $0x34] sm:$0xf]
      %v7411 = vld [vmem:[%s7396 + $0x38] sm:$0xf]
      %v7412 = vld [vmem:[%s7396 + $0x3c] sm:$0xf]
      %v7413 = vld [vmem:[%s7396 + $0x40] sm:$0xf]
      %v7414 = vld [vmem:[%s7396 + $0x44] sm:$0xf]
      %v7415 = vld [vmem:[%s7396 + $0x48] sm:$0xf]
      %v7416 = vld [vmem:[%s7396 + $0x4c] sm:$0xf]
      %v7417 = vld [vmem:[%s7396 + $0x50] sm:$0xf]
      %v7418 = vld [vmem:[%s7396 + $0x54] sm:$0xf]
      %v7419 = vld [vmem:[%s7396 + $0x58] sm:$0xf]
      %v7420 = vld [vmem:[%s7396 + $0x5c] sm:$0xf]
      %v7421 = vld [vmem:[%s7396 + $0x60] sm:$0xf]
      %v7422 = vld [vmem:[%s7396 + $0x64] sm:$0xf]
      %v7423 = vld [vmem:[%s7396 + $0x68] sm:$0xf]
      %v7424 = vld [vmem:[%s7396 + $0x6c] sm:$0xf]
      %v7425 = vld [vmem:[%s7396 + $0x70] sm:$0xf]
      %v7426 = vld [vmem:[%s7396 + $0x74] sm:$0xf]
      %v7427 = vld [vmem:[%s7396 + $0x78] sm:$0xf]
      %v7428 = vld [vmem:[%s7396 + $0x7c] sm:$0xf]
      %v7433 = vunpack.c.l.b16 %v7392
      %v7434 = vunpack.c.h.b16 %v7392
      %v7435 = vunpack.c.l.b16 %v7393
      %v7436 = vunpack.c.h.b16 %v7393
      %v7437 = vunpack.c.l.b16 %v7394
      %v7438 = vunpack.c.h.b16 %v7394
      %v7439 = vunpack.c.l.b16 %v7395
      %v7440 = vunpack.c.h.b16 %v7395
      %v7441 = vpack.c.b16 %v7435, %v7433
      %v7442 = vpack.c.b16 %v7436, %v7434
      %v7443 = vpack.c.b16 %v7439, %v7437
      %v7444 = vpack.c.b16 %v7440, %v7438
      %v7481 = vunpack.c.l.b16 %v7397
      %v7482 = vunpack.c.l.b16 %v7398
      %v7483 = vunpack.c.l.b16 %v7399
      %v7484 = vunpack.c.l.b16 %v7400
      %v7485 = vunpack.c.l.b16 %v7401
      %v7486 = vunpack.c.l.b16 %v7402
      %v7487 = vunpack.c.l.b16 %v7403
      %v7488 = vunpack.c.l.b16 %v7404
      %v7489 = vunpack.c.l.b16 %v7405
      %v7490 = vunpack.c.l.b16 %v7406
      %v7491 = vunpack.c.l.b16 %v7407
      %v7492 = vunpack.c.l.b16 %v7408
      %v7493 = vunpack.c.l.b16 %v7409
      %v7494 = vunpack.c.l.b16 %v7410
      %v7495 = vunpack.c.l.b16 %v7411
      %v7496 = vunpack.c.l.b16 %v7412
      %v7497 = vunpack.c.l.b16 %v7413
      %v7498 = vunpack.c.l.b16 %v7414
      %v7499 = vunpack.c.l.b16 %v7415
      %v7500 = vunpack.c.l.b16 %v7416
      %v7501 = vunpack.c.l.b16 %v7417
      %v7502 = vunpack.c.l.b16 %v7418
      %v7503 = vunpack.c.l.b16 %v7419
      %v7504 = vunpack.c.l.b16 %v7420
      %v7505 = vunpack.c.l.b16 %v7421
      %v7506 = vunpack.c.l.b16 %v7422
      %v7507 = vunpack.c.l.b16 %v7423
      %v7508 = vunpack.c.l.b16 %v7424
      %v7509 = vunpack.c.l.b16 %v7425
      %v7510 = vunpack.c.l.b16 %v7426
      %v7511 = vunpack.c.l.b16 %v7427
      %v7512 = vunpack.c.l.b16 %v7428
      %v7513 = vpack.c.b16 %v7482, %v7481
      %v7514 = vpack.c.b16 %v7484, %v7483
      %v7515 = vpack.c.b16 %v7486, %v7485
      %v7516 = vpack.c.b16 %v7488, %v7487
      %v7517 = vpack.c.b16 %v7490, %v7489
      %v7518 = vpack.c.b16 %v7492, %v7491
      %v7519 = vpack.c.b16 %v7494, %v7493
      %v7520 = vpack.c.b16 %v7496, %v7495
      %v7521 = vpack.c.b16 %v7498, %v7497
      %v7522 = vpack.c.b16 %v7500, %v7499
      %v7523 = vpack.c.b16 %v7502, %v7501
      %v7524 = vpack.c.b16 %v7504, %v7503
      %v7525 = vpack.c.b16 %v7506, %v7505
      %v7526 = vpack.c.b16 %v7508, %v7507
      %v7527 = vpack.c.b16 %v7510, %v7509
      %v7528 = vpack.c.b16 %v7512, %v7511
      %7545 = vmatprep.subr.bf16.mxu0 0
      %7546 = vmatpush1.bf16.msra.mxu0 %v7520
      %7547 = vmatprep.subr.bf16.mxu0 0
      %7548 = vmatpush1.bf16.msra.mxu0 %v7519
      %7549 = vmatprep.subr.bf16.mxu0 0
      %7550 = vmatpush1.bf16.msra.mxu0 %v7518
      %7551 = vmatprep.subr.bf16.mxu0 0
      %7552 = vmatpush1.bf16.msra.mxu0 %v7517
      %7553 = vmatprep.subr.bf16.mxu0 0
      %7554 = vmatpush1.bf16.msra.mxu0 %v7516
      %7555 = vmatprep.subr.bf16.mxu0 0
      %7556 = vmatpush1.bf16.msra.mxu0 %v7515
      %7557 = vmatprep.subr.bf16.mxu0 0
      %7558 = vmatpush1.bf16.msra.mxu0 %v7514
      %7559 = vmatprep.subr.bf16.mxu0 0
      %7560 = vmatpush1.bf16.msra.mxu0 %v7513
      %7561 = vmatprep.subr.bf16.mxu0 0
      %7562 = vmatpush2.bf16.msra.mxu0 %v7528
      %7563 = vmatprep.subr.bf16.mxu0 0
      %7564 = vmatpush2.bf16.msra.mxu0 %v7527
      %7565 = vmatprep.subr.bf16.mxu0 0
      %7566 = vmatpush2.bf16.msra.mxu0 %v7526
      %7567 = vmatprep.subr.bf16.mxu0 0
      %7568 = vmatpush2.bf16.msra.mxu0 %v7525
      %7569 = vmatprep.subr.bf16.mxu0 0
      %7570 = vmatpush2.bf16.msra.mxu0 %v7524
      %7571 = vmatprep.subr.bf16.mxu0 0
      %7572 = vmatpush2.bf16.msra.mxu0 %v7523
      %7573 = vmatprep.subr.bf16.mxu0 0
      %7574 = vmatpush2.bf16.msra.mxu0 %v7522
      %7575 = vmatprep.subr.bf16.mxu0 0
      %7576 = vmatpush2.bf16.msra.mxu0 %v7521
      %7577 = vmatprep.mubr.bf16.mxu0 %v7442
      %7578 = vmatmul.mubr.bf16.gmra.mxu0 %v7441
      %v7579 = vpop.f32.mrf.mxu0
      %v7580 = vadd.f32 0.0, %v7579
      %v7581 = vpop.f32.mrf.mxu0
      %v7582 = vpop.f32.mrf.mxu0
      %v7583 = vadd.f32 0.0, %v7582
      %v7584 = vpop.f32.mrf.mxu0
      %7585 = vmatprep.mubr.bf16.mxu0 %v7444
      %7586 = vmatmul.mubr.bf16.gmra.mxu0 %v7443
      %v7587 = vpop.f32.mrf.mxu0
      %v7588 = vadd.f32 0.0, %v7587
      %v7589 = vpop.f32.mrf.mxu0
      %v7590 = vpop.f32.mrf.mxu0
      %v7591 = vadd.f32 0.0, %v7590
      %v7592 = vpop.f32.mrf.mxu0
      %7593 = vdwg.mxu0
      %v7594 = vadd.f32 %v7388, %v7580
      %v7595 = vadd.f32 %v7389, %v7583
      %v7596 = vadd.f32 %v7390, %v7588
      %v7597 = vadd.f32 %v7391, %v7591
      %7598 = vst [vmem:[#allocation4] sm:$0xff] %v7594
      %7599 = vst [vmem:[#allocation4 + $0x8] sm:$0xff] %v7595
      %7600 = vst [vmem:[#allocation4 + $0x10] sm:$0xff] %v7596
      %7601 = vst [vmem:[#allocation4 + $0x18] sm:$0xff] %v7597
      %v7602 = vld [vmem:[#allocation4] sm:$0xff]
      %v7603 = vld [vmem:[#allocation4 + $0x8] sm:$0xff]
      %v7604 = vld [vmem:[#allocation4 + $0x10] sm:$0xff]
      %v7605 = vld [vmem:[#allocation4 + $0x18] sm:$0xff]
      %v7606 = vmax.f32 %v7602, 0.0
      %v7607 = vmax.f32 %v7603, 0.0
      %v7608 = vmax.f32 %v7604, 0.0
      %v7609 = vmax.f32 %v7605, 0.0
      %v7610 = vadd.f32 %v7606, %v7607
      %v7611 = vadd.f32 %v7610, %v7608
      %v7612 = vadd.f32 %v7611, %v7609
      %v7613 = vrot.slane %v7612, 4
      %v7614 = vadd.f32 %v7612, %v7613
      %v7615 = vrot.slane %v7614, 2
      %v7616 = vadd.f32 %v7614, %v7615
      %v7617 = vrot.slane %v7616, 1
      %v7618 = vadd.f32 %v7616, %v7617
      %7619 = vst [vmem:[%s166] sm:$0x1] %v7618
      %p7620 = scmp.lt.s32.totalorder %s14, 3
      %s7621 = scalar_select %p7620, %s14, 3
      %s7622 = scalar_lea.vmem %s3, %s7621
      // Predicated region
      $region33: #{_detector_features_loss.4} parent=31 // pred_check
        %p7623 = pneg %p100
      $region34: #{_detector_features_loss.4} parent=31 // pred_check_branch
        %7625 = sbr.rel (%p7623) target = $region36
      $region35: #{_detector_features_loss.4} parent=31 // pred_region
        _
      $region36: #{_detector_features_loss.4} parent=31 // pred_fallthru
        _
    $region32: #{_detector_features_loss.4} parent=5 // pred_fallthru
      _
    %p7626 = scmp.le.s32.totalorder 2, %s9
    // Predicated region
    $region37: #{_detector_features_loss.4} parent=5 // pred_check
      %p7627 = pneg %p7626
    $region38: #{_detector_features_loss.4} parent=5 // pred_check_branch
      %7629 = sbr.rel (%p7627) target = $region40
    $region39: #{_detector_features_loss.4} parent=5 // pred_region
      %s7630 = ssub.s32 %s9, 2
      // Predicated region
      $region41: #{_detector_features_loss.4} parent=39 // pred_check
        %p7631 = pneg %p106
      $region42: #{_detector_features_loss.4} parent=39 // pred_check_branch
        %7633 = sbr.rel (%p7631) target = $region44
      $region43: #{_detector_features_loss.4} parent=39 // pred_region
        %p7634 = scmp.lt.s32.totalorder %s15, 3
        %s7635 = scalar_select %p7634, %s15, 3
        %s7636 = scalar_lea.vmem %s3, %s7635
      $region44: #{_detector_features_loss.4} parent=39 // pred_fallthru
        _
    $region40: #{_detector_features_loss.4} parent=5 // pred_fallthru
      _
  $region6: #{_detector_features_loss.4} parent=0 // loop_footer
    %s13 = sadd.s32 1, %s9
  $region7: #{_detector_features_loss.4} parent=0 // loop_footer_branch
    %8 = sbr.rel target = $region3
  $region8: #{_detector_features_loss.4} parent=0 // loop_exit
    _

</llo_original>
